<compile_context>
chip_gen: v6e
topology: v6e:2x2x1
jax: 0.10.0
libtpu: 0.0.40
codegen_flags: <defaults>
</compile_context>

<pallas_src>
import jax
import jax.numpy as jnp
import numpy as np
from jax.experimental import pallas as pl
from jax.experimental.pallas import tpu as pltpu

EPS = 1e-5
LANE = 128
GROUPS = 8


def _rup(x, m):
    return ((x + m - 1) // m) * m


# ------------------------------ in-kernel ops ------------------------------ #

def _conv3x3(e_ref, w_ref, b_ref, H, W, C):
    """3x3 'SAME' conv as 3 accumulated bf16 MXU matmuls with K = 3*C.

    e_ref : VMEM (H+2, W, 3*C) f32 scratch.  Lane block [C:2C] must already
            hold the zero-row-padded input (rows 1..H = image, rows 0/H+1 = 0).
    w_ref : (3, 3*C, Co) bf16 packed weights; w_ref[dy][dx*C + cin, cout].
    Returns the conv output as an (H*W, Co) f32 value.
    """
    center = e_ref[:, :, C:2 * C]                       # (H+2, W, C) f32
    zcol = jnp.zeros((H + 2, 1, C), jnp.float32)

    # lane block [0:C]   <- column w-1  (XLU sublane roll; wrapped col -> 0)
    e_ref[:, :, 0:C] = pltpu.roll(center, 1, 1)
    e_ref[:, 0:1, 0:C] = zcol
    # lane block [2C:3C] <- column w+1
    e_ref[:, :, 2 * C:3 * C] = pltpu.roll(center, W - 1, 1)
    e_ref[:, W - 1:W, 2 * C:3 * C] = zcol

    out = None
    for dy in range(3):                                 # 3 dots, K = 3*C
        patch = e_ref[dy:dy + H].reshape(H * W, 3 * C).astype(jnp.bfloat16)
        part = jnp.dot(patch, w_ref[dy], preferred_element_type=jnp.float32)
        out = part if out is None else out + part
    return out + b_ref[...]


def _group_sum(s, gsz, cp):
    """Per-lane sum over contiguous power-of-two channel groups (XLU rolls)."""
    lane = jax.lax.broadcasted_iota(jnp.int32, s.shape, 1)
    step = 1
    while step < gsz:
        fwd = pltpu.roll(s, cp - step, 1)               # s[c + step]
        bwd = pltpu.roll(s, step, 1)                    # s[c - step]
        s = s + jnp.where((lane & step) == 0, fwd, bwd)
        step *= 2
    return s


def _group_norm(y, gamma, beta, gsz, cp, inv_n):
    """GroupNorm folded to per-channel scale/shift; two-pass variance.

    y: (HW, Cp) f32.  gamma/beta are zero on padded lanes, so padded lanes of
    the result are exactly 0.
    """
    s = jnp.sum(y, axis=0, keepdims=True)                          # (1, Cp)
    mean_c = _group_sum(s, gsz, cp) * inv_n
    d = y - mean_c
    v = _group_sum(jnp.sum(d * d, axis=0, keepdims=True), gsz, cp) * inv_n
    scale = gamma * jax.lax.rsqrt(v + EPS)
    return d * scale + beta


# --------------------------- pallas_call wrapper ---------------------------- #

def _residual_block_lane_dense(x_up, skip, pk):
    """x_up: (N, H, W, cin) f32, skip: (N, H, W, cskip) f32 — NARROW inputs."""
    N, H, W, cin = x_up.shape
    cs = skip.shape[-1]
    ccat = cin + cs
    cc = pk["cc"]                       # padded concat width (one lane block)
    cop = pk["cop"]                     # padded mid == out width
    cm = cop
    gsz = pk["gsz"]
    inv_n = 1.0 / float(H * W * gsz)

    def kernel(x_ref, s_ref, w1_ref, b1_ref, g1_ref, be1_ref,
               w2_ref, b2_ref, g2_ref, be2_ref, ws_ref, bs_ref,
               o_ref, e1, e2):
        # ---- fused concat: stage [x | skip | 0-pad] into e1's center block
        zrow1 = jnp.zeros((1, W, cc), jnp.float32)
        e1[0:1, :, cc:2 * cc] = zrow1
        e1[H + 1:H + 2, :, cc:2 * cc] = zrow1
        parts = [x_ref[0], s_ref[0]]
        if cc > ccat:
            parts.append(jnp.zeros((H, W, cc - ccat), jnp.float32))
        e1[1:H + 1, :, cc:2 * cc] = jnp.concatenate(parts, axis=-1)

        # ---- conv3x3 -> GroupNorm(8) -> ReLU
        y1 = _conv3x3(e1, w1_ref, b1_ref, H, W, cc)              # (HW, Cm) f32
        y1 = jnp.maximum(
            _group_norm(y1, g1_ref[...], be1_ref[...], gsz, cop, inv_n), 0.0)

        # ---- conv3x3 -> GroupNorm(8)
        zrow2 = jnp.zeros((1, W, cm), jnp.float32)
        e2[0:1, :, cm:2 * cm] = zrow2
        e2[H + 1:H + 2, :, cm:2 * cm] = zrow2
        e2[1:H + 1, :, cm:2 * cm] = y1.reshape(H, W, cm)         # pads already 0
        y2 = _conv3x3(e2, w2_ref, b2_ref, H, W, cm)              # (HW, Co) f32
        y2 = _group_norm(y2, g2_ref[...], be2_ref[...], gsz, cop, inv_n)

        # ---- 1x1 skip conv (identity case packed as a padded identity matrix)
        cat = e1[1:H + 1, :, cc:2 * cc].reshape(H * W, cc).astype(jnp.bfloat16)
        xs = jnp.dot(cat, ws_ref[...],
                     preferred_element_type=jnp.float32) + bs_ref[...]

        o_ref[0] = jnp.maximum(y2 + xs, 0.0).reshape(H, W, cop)  # lane-dense vst

    def const_spec(a):
        return pl.BlockSpec(a.shape, lambda b, _nd=a.ndim: (0,) * _nd)

    weight_keys = ("w1", "b1", "g1", "be1", "w2", "b2", "g2", "be2", "ws", "bs")

    # Derive the VMEM budget from the actual footprint (+ headroom), instead of
    # a hard-coded limit.
    scratch_bytes = 4 * (H + 2) * W * 3 * (cc + cm)
    io_bytes = 2 * 4 * H * W * (cin + cs + cop)                  # double-buffered
    weight_bytes = 2 * sum(int(pk[k].size) * pk[k].dtype.itemsize
                           for k in weight_keys)
    vmem_limit = min(100 * 1024 * 1024,
                     max(32 * 1024 * 1024,
                         scratch_bytes + io_bytes + weight_bytes + (16 << 20)))

    return pl.pallas_call(
        kernel,
        out_shape=jax.ShapeDtypeStruct((N, H, W, cop), jnp.float32),
        grid=(N,),
        in_specs=[
            pl.BlockSpec((1, H, W, cin), lambda b: (b, 0, 0, 0)),   # narrow DMA
            pl.BlockSpec((1, H, W, cs), lambda b: (b, 0, 0, 0)),    # narrow DMA
        ] + [const_spec(pk[k]) for k in weight_keys],
        out_specs=pl.BlockSpec((1, H, W, cop), lambda b: (b, 0, 0, 0)),
        scratch_shapes=[
            pltpu.VMEM((H + 2, W, 3 * cc), jnp.float32),   # expanded conv1 input
            pltpu.VMEM((H + 2, W, 3 * cm), jnp.float32),   # expanded conv2 input
        ],
        compiler_params=pltpu.CompilerParams(
            dimension_semantics=("parallel",),             # v7x: split batch on 2 TCs
            vmem_limit_bytes=int(vmem_limit),
        ),
    )(x_up, skip, *[pk[k] for k in weight_keys])


# ------------------------------ JAX-side glue ------------------------------- #

def bilinear_resize_nhwc(x, out_h, out_w):
    """PyTorch bilinear, align_corners=False (half-pixel centers, src clamp)."""
    _, H, W, _ = x.shape

    def coords(out_size, in_size):
        o = jnp.arange(out_size, dtype=jnp.float32)
        src = (o + 0.5) * (in_size / out_size) - 0.5
        src = jnp.maximum(src, 0.0)
        lo = jnp.minimum(jnp.floor(src).astype(jnp.int32), in_size - 1)
        hi = jnp.minimum(lo + 1, in_size - 1)
        return lo, hi, src - lo.astype(jnp.float32)

    hl, hh, hw = coords(out_h, H)
    wl, wh, ww = coords(out_w, W)
    rows = (x[:, hl, :, :] * (1.0 - hw)[None, :, None, None]
            + x[:, hh, :, :] * hw[None, :, None, None])
    out = (rows[:, :, wl, :] * (1.0 - ww)[None, None, :, None]
           + rows[:, :, wh, :] * ww[None, None, :, None])
    return out


def decoder_block_forward(x_nchw, skip_nchw, pk):
    """DecoderBlock forward; NCHW in / NCHW out like the PyTorch module."""
    x = jnp.transpose(x_nchw, (0, 2, 3, 1)).astype(jnp.float32)
    skip = jnp.transpose(skip_nchw, (0, 2, 3, 1)).astype(jnp.float32)
    _, h, w, _ = x.shape
    _, H, W, _ = skip.shape

    # nn.Upsample(scale_factor=2, mode='bilinear', align_corners=False), plus
    # the module's conditional F.interpolate to the skip size.
    # TODO(synk): fold this fixed 4-tap stencil into the kernel (narrow-channel
    # round trip only, since inputs are no longer zero-padded in HBM).
    x = bilinear_resize_nhwc(x, 2 * h, 2 * w)
    if (2 * h, 2 * w) != (H, W):
        x = bilinear_resize_nhwc(x, H, W)

    # No channel padding in HBM: the kernel DMAs the narrow tensors and packs
    # them into a single 128-lane block in VMEM.
    y = _residual_block_lane_dense(x, skip, pk)        # (N, H, W, Cout_padded)
    return jnp.transpose(y[..., :pk["cout"]], (0, 3, 1, 2))


# ------------------------- params: init / pack / ref ------------------------ #

def init_decoder_params(key, cin, cskip, cout, groups=GROUPS):
    """Dense, PyTorch-layout parameters of DecoderBlock(cin, cskip, cout)."""
    assert cout % groups == 0
    ks = jax.random.split(key, 10)
    ccat = cin + cskip
    p = dict(
        conv1_w=0.1 * jax.random.normal(ks[0], (cout, ccat, 3, 3), jnp.float32),
        conv1_b=0.1 * jax.random.normal(ks[1], (cout,), jnp.float32),
        gn1_g=1.0 + 0.1 * jax.random.normal(ks[2], (cout,), jnp.float32),
        gn1_b=0.1 * jax.random.normal(ks[3], (cout,), jnp.float32),
        conv2_w=0.1 * jax.random.normal(ks[4], (cout, cout, 3, 3), jnp.float32),
        conv2_b=0.1 * jax.random.normal(ks[5], (cout,), jnp.float32),
        gn2_g=1.0 + 0.1 * jax.random.normal(ks[6], (cout,), jnp.float32),
        gn2_b=0.1 * jax.random.normal(ks[7], (cout,), jnp.float32),
        cin=cin, cskip=cskip, cout=cout, groups=groups,
    )
    if ccat != cout:
        p["skip_w"] = 0.1 * jax.random.normal(ks[8], (cout, ccat, 1, 1), jnp.float32)
        p["skip_b"] = 0.1 * jax.random.normal(ks[9], (cout,), jnp.float32)
    else:  # nn.Identity() skip
        p["skip_w"] = None
        p["skip_b"] = None
    return p


def pack_params(p, lane=LANE):
    """Pack dense params into the lane-dense layout used by the kernel."""
    cin, cskip, cout, groups = p["cin"], p["cskip"], p["cout"], p["groups"]
    ccat = cin + cskip
    cc = _rup(ccat, lane)               # single lane block for the concat
    cop = _rup(cout, lane)
    gsz = cout // groups
    # TODO(synk): non-power-of-two group sizes need a matmul-based group reduce.
    assert gsz > 0 and (gsz & (gsz - 1)) == 0, "group size must be a power of 2"

    # conv weights packed as (3, 3*Cin_p, Cout_p): [dy][dx*Cin_p + cin, cout]
    w1 = np.zeros((3, 3 * cc, cop), np.float32)
    wt1 = np.asarray(p["conv1_w"])                        # (cout, ccat, 3, 3)
    for dx in range(3):
        w1[:, dx * cc:dx * cc + ccat, :cout] = np.transpose(wt1[:, :, :, dx], (2, 1, 0))

    w2 = np.zeros((3, 3 * cop, cop), np.float32)
    wt2 = np.asarray(p["conv2_w"])                        # (cout, cout, 3, 3)
    for dx in range(3):
        w2[:, dx * cop:dx * cop + cout, :cout] = np.transpose(wt2[:, :, :, dx], (2, 1, 0))

    ws = np.zeros((cc, cop), np.float32)
    bs = np.zeros((1, cop), np.float32)
    if p["skip_w"] is not None:
        ws[:ccat, :cout] = np.asarray(p["skip_w"])[:, :, 0, 0].T
        bs[0, :cout] = np.asarray(p["skip_b"])
    else:  # identity skip as a padded identity matrix, zero bias (ccat == cout)
        for i in range(ccat):
            ws[i, i] = 1.0

    def vec(v, n):
        out = np.zeros((1, n), np.float32)   # zero pad (NOT ones): keeps GN inert
        out[0, :np.asarray(v).shape[0]] = np.asarray(v)
        return out

    # gamma/beta/bias/weight pads MUST be zero so padded lanes stay exactly 0.
    g1 = vec(p["gn1_g"], cop); g2 = vec(p["gn2_g"], cop)
    assert float(np.abs(g1[0, cout:]).max(initial=0.0)) == 0.0
    assert float(np.abs(g2[0, cout:]).max(initial=0.0)) == 0.0

    return dict(
        w1=jnp.asarray(w1, jnp.bfloat16), b1=jnp.asarray(vec(p["conv1_b"], cop)),
        g1=jnp.asarray(g1), be1=jnp.asarray(vec(p["gn1_b"], cop)),
        w2=jnp.asarray(w2, jnp.bfloat16), b2=jnp.asarray(vec(p["conv2_b"], cop)),
        g2=jnp.asarray(g2), be2=jnp.asarray(vec(p["gn2_b"], cop)),
        ws=jnp.asarray(ws, jnp.bfloat16), bs=jnp.asarray(bs),
        cin=cin, cskip=cskip, cout=cout, gsz=gsz, cc=cc, cop=cop,
    )


def _group_norm_ref(x, gamma, beta, groups, eps=EPS):
    N, C, H, W = x.shape
    xg = x.reshape(N, groups, C // groups, H, W)
    m = jnp.mean(xg, axis=(2, 3, 4), keepdims=True)
    v = jnp.mean((xg - m) ** 2, axis=(2, 3, 4), keepdims=True)
    xn = ((xg - m) * jax.lax.rsqrt(v + eps)).reshape(N, C, H, W)
    return xn * gamma[None, :, None, None] + beta[None, :, None, None]


def decoder_block_reference(x_nchw, skip_nchw, p):
    """Pure-JAX (XLA, f32) reference matching the PyTorch module."""
    x = jnp.transpose(x_nchw, (0, 2, 3, 1))
    skip = jnp.transpose(skip_nchw, (0, 2, 3, 1))
    x = bilinear_resize_nhwc(x, 2 * x.shape[1], 2 * x.shape[2])
    if x.shape[1:3] != skip.shape[1:3]:
        x = bilinear_resize_nhwc(x, skip.shape[1], skip.shape[2])
    cat = jnp.transpose(jnp.concatenate([x, skip], axis=-1), (0, 3, 1, 2))

    def conv(z, wgt, b):
        out = jax.lax.conv_general_dilated(
            z, wgt, (1, 1), "SAME", dimension_numbers=("NCHW", "OIHW", "NCHW"))
        return out + b[None, :, None, None]

    y = conv(cat, p["conv1_w"], p["conv1_b"])
    y = jnp.maximum(_group_norm_ref(y, p["gn1_g"], p["gn1_b"], p["groups"]), 0.0)
    y = conv(y, p["conv2_w"], p["conv2_b"])
    y = _group_norm_ref(y, p["gn2_g"], p["gn2_b"], p["groups"])
    s = cat if p["skip_w"] is None else conv(cat, p["skip_w"], p["skip_b"])
    return jnp.maximum(y + s, 0.0)


# ----------------------------------- main ----------------------------------- #

if __name__ == "__main__":
    key = jax.random.PRNGKey(0)
    kx, ksk, kp = jax.random.split(key, 3)

    in_channels, skip_channels, out_channels = 4, 4, 16
    x = jax.random.normal(kx, (2, in_channels, 8, 8), jnp.float32)
    skip = jax.random.normal(ksk, (2, skip_channels, 16, 16), jnp.float32)

    dense = init_decoder_params(kp, in_channels, skip_channels, out_channels)
    packed = pack_params(dense)

    fwd = jax.jit(lambda a, b: decoder_block_forward(a, b, packed))
    y = fwd(x, skip)
    jax.block_until_ready(y)

    assert y.shape == (2, out_channels, 16, 16), y.shape
    assert bool(jnp.all(jnp.isfinite(y)))

    y_ref = decoder_block_reference(x, skip, dense)
    err = float(jnp.max(jnp.abs(y - y_ref)))
    # Tolerance accounts for bf16 MXU operands (per the perf review); an f32
    # reference deviates by ~1e-2 absolute at these magnitudes.  4e-2 still
    # catches any layout / packing / halo bug.
    assert err < 4e-2, f"kernel vs reference mismatch: max abs err = {err}"
    print("KERNEL_OK")
</pallas_src>

<mosaic_0001>
module attributes {stable_mosaic.version = 11 : i64} {
  func.func @kernel(%arg0: i32, %arg1: memref<1x16x16x4xf32, #tpu.memory_space<vmem>>, %arg2: memref<1x16x16x4xf32, #tpu.memory_space<vmem>>, %arg3: memref<3x384x128xbf16, #tpu.memory_space<vmem>>, %arg4: memref<1x128xf32, #tpu.memory_space<vmem>>, %arg5: memref<1x128xf32, #tpu.memory_space<vmem>>, %arg6: memref<1x128xf32, #tpu.memory_space<vmem>>, %arg7: memref<3x384x128xbf16, #tpu.memory_space<vmem>>, %arg8: memref<1x128xf32, #tpu.memory_space<vmem>>, %arg9: memref<1x128xf32, #tpu.memory_space<vmem>>, %arg10: memref<1x128xf32, #tpu.memory_space<vmem>>, %arg11: memref<128x128xbf16, #tpu.memory_space<vmem>>, %arg12: memref<1x128xf32, #tpu.memory_space<vmem>>, %arg13: memref<1x16x16x128xf32, #tpu.memory_space<vmem>>, %arg14: memref<18x16x384xf32, #tpu.memory_space<vmem>>, %arg15: memref<18x16x384xf32, #tpu.memory_space<vmem>>) attributes {dimension_semantics = [#tpu.dimension_semantics<parallel>], iteration_bounds = array<i64: 2>, scalar_prefetch = 0 : i64, scratch_operands = 2 : i64, tpu.core_type = #tpu.core_type<tc>, window_params = [{transform_indices = @transform_0, window_bounds = array<i64: 1, 16, 16, 4>}, {transform_indices = @transform_1, window_bounds = array<i64: 1, 16, 16, 4>}, {pipeline_mode = #tpu.pipeline_mode<synchronous>, transform_indices = @transform_2, window_bounds = array<i64: 3, 384, 128>}, {pipeline_mode = #tpu.pipeline_mode<synchronous>, transform_indices = @transform_3, window_bounds = array<i64: 1, 128>}, {pipeline_mode = #tpu.pipeline_mode<synchronous>, transform_indices = @transform_4, window_bounds = array<i64: 1, 128>}, {pipeline_mode = #tpu.pipeline_mode<synchronous>, transform_indices = @transform_5, window_bounds = array<i64: 1, 128>}, {pipeline_mode = #tpu.pipeline_mode<synchronous>, transform_indices = @transform_6, window_bounds = array<i64: 3, 384, 128>}, {pipeline_mode = #tpu.pipeline_mode<synchronous>, transform_indices = @transform_7, window_bounds = array<i64: 1, 128>}, {pipeline_mode = #tpu.pipeline_mode<synchronous>, transform_indices = @transform_8, window_bounds = array<i64: 1, 128>}, {pipeline_mode = #tpu.pipeline_mode<synchronous>, transform_indices = @transform_9, window_bounds = array<i64: 1, 128>}, {pipeline_mode = #tpu.pipeline_mode<synchronous>, transform_indices = @transform_10, window_bounds = array<i64: 128, 128>}, {pipeline_mode = #tpu.pipeline_mode<synchronous>, transform_indices = @transform_11, window_bounds = array<i64: 1, 128>}, {transform_indices = @transform_12, window_bounds = array<i64: 1, 16, 16, 128>}]} {
    %cst = arith.constant 0.000000e+00 : f32
    %0 = vector.broadcast %cst : f32 to vector<1x16x128xf32>
    %c0 = arith.constant 0 : index
    %c0_0 = arith.constant 0 : index
    %c128 = arith.constant 128 : index
    %1 = vector.load %arg14[%c0, %c0_0, %c128] : memref<18x16x384xf32, #tpu.memory_space<vmem>>, vector<1x16x128xf32>
    tpu.vector_store %arg14[%c0, %c0_0, %c128], %0 {strides = array<i32>} : memref<18x16x384xf32, #tpu.memory_space<vmem>>, vector<1x16x128xf32>,
    %c17 = arith.constant 17 : index
    %c0_1 = arith.constant 0 : index
    %c128_2 = arith.constant 128 : index
    %2 = vector.load %arg14[%c17, %c0_1, %c128_2] : memref<18x16x384xf32, #tpu.memory_space<vmem>>, vector<1x16x128xf32>
    tpu.vector_store %arg14[%c17, %c0_1, %c128_2], %0 {strides = array<i32>} : memref<18x16x384xf32, #tpu.memory_space<vmem>>, vector<1x16x128xf32>,
    %c0_3 = arith.constant 0 : index
    %c0_4 = arith.constant 0 : index
    %c0_5 = arith.constant 0 : index
    %c0_6 = arith.constant 0 : index
    %3 = vector.load %arg1[%c0_3, %c0_4, %c0_5, %c0_6] : memref<1x16x16x4xf32, #tpu.memory_space<vmem>>, vector<1x16x16x4xf32>
    %4 = vector.shape_cast %3 : vector<1x16x16x4xf32> to vector<16x16x4xf32>
    %c0_7 = arith.constant 0 : index
    %c0_8 = arith.constant 0 : index
    %c0_9 = arith.constant 0 : index
    %c0_10 = arith.constant 0 : index
    %5 = vector.load %arg2[%c0_7, %c0_8, %c0_9, %c0_10] : memref<1x16x16x4xf32, #tpu.memory_space<vmem>>, vector<1x16x16x4xf32>
    %6 = vector.shape_cast %5 : vector<1x16x16x4xf32> to vector<16x16x4xf32>
    %cst_11 = arith.constant 0.000000e+00 : f32
    %7 = vector.broadcast %cst_11 : f32 to vector<16x16x120xf32>
    %8 = tpu.concatenate %4, %6, %7 in 2 : vector<16x16x4xf32>, vector<16x16x4xf32>, vector<16x16x120xf32> -> vector<16x16x128xf32>
    %c1 = arith.constant 1 : index
    %c0_12 = arith.constant 0 : index
    %c128_13 = arith.constant 128 : index
    %9 = vector.load %arg14[%c1, %c0_12, %c128_13] : memref<18x16x384xf32, #tpu.memory_space<vmem>>, vector<16x16x128xf32>
    tpu.vector_store %arg14[%c1, %c0_12, %c128_13], %8 {strides = array<i32>} : memref<18x16x384xf32, #tpu.memory_space<vmem>>, vector<16x16x128xf32>,
    %c0_14 = arith.constant 0 : index
    %c0_15 = arith.constant 0 : index
    %c128_16 = arith.constant 128 : index
    %10 = vector.load %arg14[%c0_14, %c0_15, %c128_16] : memref<18x16x384xf32, #tpu.memory_space<vmem>>, vector<18x16x128xf32>
    %cst_17 = arith.constant 0.000000e+00 : f32
    %11 = vector.broadcast %cst_17 : f32 to vector<18x1x128xf32>
    %c1_i32 = arith.constant 1 : i32
    %12 = tpu.dynamic_rotate %10 by %c1_i32 dim 1 : vector<18x16x128xf32>, i32 -> vector<18x16x128xf32>
    %c0_18 = arith.constant 0 : index
    %c0_19 = arith.constant 0 : index
    %c0_20 = arith.constant 0 : index
    %13 = vector.load %arg14[%c0_18, %c0_19, %c0_20] : memref<18x16x384xf32, #tpu.memory_space<vmem>>, vector<18x16x128xf32>
    tpu.vector_store %arg14[%c0_18, %c0_19, %c0_20], %12 {strides = array<i32>} : memref<18x16x384xf32, #tpu.memory_space<vmem>>, vector<18x16x128xf32>,
    %c0_21 = arith.constant 0 : index
    %c0_22 = arith.constant 0 : index
    %c0_23 = arith.constant 0 : index
    %14 = vector.load %arg14[%c0_21, %c0_22, %c0_23] : memref<18x16x384xf32, #tpu.memory_space<vmem>>, vector<18x1x128xf32>
    tpu.vector_store %arg14[%c0_21, %c0_22, %c0_23], %11 {strides = array<i32>} : memref<18x16x384xf32, #tpu.memory_space<vmem>>, vector<18x1x128xf32>,
    %c15_i32 = arith.constant 15 : i32
    %15 = tpu.dynamic_rotate %10 by %c15_i32 dim 1 : vector<18x16x128xf32>, i32 -> vector<18x16x128xf32>
    %c0_24 = arith.constant 0 : index
    %c0_25 = arith.constant 0 : index
    %c256 = arith.constant 256 : index
    %16 = vector.load %arg14[%c0_24, %c0_25, %c256] : memref<18x16x384xf32, #tpu.memory_space<vmem>>, vector<18x16x128xf32>
    tpu.vector_store %arg14[%c0_24, %c0_25, %c256], %15 {strides = array<i32>} : memref<18x16x384xf32, #tpu.memory_space<vmem>>, vector<18x16x128xf32>,
    %c0_26 = arith.constant 0 : index
    %c15 = arith.constant 15 : index
    %c256_27 = arith.constant 256 : index
    %17 = vector.load %arg14[%c0_26, %c15, %c256_27] : memref<18x16x384xf32, #tpu.memory_space<vmem>>, vector<18x1x128xf32>
    tpu.vector_store %arg14[%c0_26, %c15, %c256_27], %11 {strides = array<i32>} : memref<18x16x384xf32, #tpu.memory_space<vmem>>, vector<18x1x128xf32>,
    %c0_28 = arith.constant 0 : index
    %c0_29 = arith.constant 0 : index
    %c0_30 = arith.constant 0 : index
    %18 = vector.load %arg14[%c0_28, %c0_29, %c0_30] : memref<18x16x384xf32, #tpu.memory_space<vmem>>, vector<16x16x384xf32>
    %19 = vector.shape_cast %18 : vector<16x16x384xf32> to vector<256x384xf32>
    %20 = arith.truncf %19 : vector<256x384xf32> to vector<256x384xbf16>
    %c0_31 = arith.constant 0 : index
    %c0_32 = arith.constant 0 : index
    %c0_33 = arith.constant 0 : index
    %21 = vector.load %arg3[%c0_31, %c0_32, %c0_33] : memref<3x384x128xbf16, #tpu.memory_space<vmem>>, vector<1x384x128xbf16>
    %22 = vector.shape_cast %21 : vector<1x384x128xbf16> to vector<384x128xbf16>
    %cst_34 = arith.constant dense<0.000000e+00> : vector<256x128xf32>
    %23 = tpu.matmul %20, %22, %cst_34 {dimension_numbers = #tpu.dot_dimension_numbers<[1], [0], [0], [1], [0, 0, 1, 1], [], []>} : vector<256x384xbf16>, vector<384x128xbf16>, vector<256x128xf32> -> vector<256x128xf32>
    %c1_35 = arith.constant 1 : index
    %c0_36 = arith.constant 0 : index
    %c0_37 = arith.constant 0 : index
    %24 = vector.load %arg14[%c1_35, %c0_36, %c0_37] : memref<18x16x384xf32, #tpu.memory_space<vmem>>, vector<16x16x384xf32>
    %25 = vector.shape_cast %24 : vector<16x16x384xf32> to vector<256x384xf32>
    %26 = arith.truncf %25 : vector<256x384xf32> to vector<256x384xbf16>
    %c1_38 = arith.constant 1 : index
    %c0_39 = arith.constant 0 : index
    %c0_40 = arith.constant 0 : index
    %27 = vector.load %arg3[%c1_38, %c0_39, %c0_40] : memref<3x384x128xbf16, #tpu.memory_space<vmem>>, vector<1x384x128xbf16>
    %28 = vector.shape_cast %27 : vector<1x384x128xbf16> to vector<384x128xbf16>
    %cst_41 = arith.constant dense<0.000000e+00> : vector<256x128xf32>
    %29 = tpu.matmul %26, %28, %cst_41 {dimension_numbers = #tpu.dot_dimension_numbers<[1], [0], [0], [1], [0, 0, 1, 1], [], []>} : vector<256x384xbf16>, vector<384x128xbf16>, vector<256x128xf32> -> vector<256x128xf32>
    %30 = arith.addf %23, %29 : vector<256x128xf32>
    %c2 = arith.constant 2 : index
    %c0_42 = arith.constant 0 : index
    %c0_43 = arith.constant 0 : index
    %31 = vector.load %arg14[%c2, %c0_42, %c0_43] : memref<18x16x384xf32, #tpu.memory_space<vmem>>, vector<16x16x384xf32>
    %32 = vector.shape_cast %31 : vector<16x16x384xf32> to vector<256x384xf32>
    %33 = arith.truncf %32 : vector<256x384xf32> to vector<256x384xbf16>
    %c2_44 = arith.constant 2 : index
    %c0_45 = arith.constant 0 : index
    %c0_46 = arith.constant 0 : index
    %34 = vector.load %arg3[%c2_44, %c0_45, %c0_46] : memref<3x384x128xbf16, #tpu.memory_space<vmem>>, vector<1x384x128xbf16>
    %35 = vector.shape_cast %34 : vector<1x384x128xbf16> to vector<384x128xbf16>
    %cst_47 = arith.constant dense<0.000000e+00> : vector<256x128xf32>
    %36 = tpu.matmul %33, %35, %cst_47 {dimension_numbers = #tpu.dot_dimension_numbers<[1], [0], [0], [1], [0, 0, 1, 1], [], []>} : vector<256x384xbf16>, vector<384x128xbf16>, vector<256x128xf32> -> vector<256x128xf32>
    %37 = arith.addf %30, %36 : vector<256x128xf32>
    %c0_48 = arith.constant 0 : index
    %c0_49 = arith.constant 0 : index
    %38 = vector.load %arg4[%c0_48, %c0_49] : memref<1x128xf32, #tpu.memory_space<vmem>>, vector<1x128xf32>
    %39 = vector.broadcast %38 : vector<1x128xf32> to vector<256x128xf32>
    %40 = arith.addf %37, %39 : vector<256x128xf32>
    %c0_50 = arith.constant 0 : index
    %c0_51 = arith.constant 0 : index
    %41 = vector.load %arg5[%c0_50, %c0_51] : memref<1x128xf32, #tpu.memory_space<vmem>>, vector<1x128xf32>
    %c0_52 = arith.constant 0 : index
    %c0_53 = arith.constant 0 : index
    %42 = vector.load %arg6[%c0_52, %c0_53] : memref<1x128xf32, #tpu.memory_space<vmem>>, vector<1x128xf32>
    %cst_54 = arith.constant dense<0.000000e+00> : vector<128xf32>
    %43 = vector.multi_reduction <add>, %40, %cst_54 [0] : vector<256x128xf32> to vector<128xf32>
    %44 = vector.shape_cast %43 : vector<128xf32> to vector<1x128xf32>
    %45 = tpu.iota {dimensions = array<i32: 1>} : vector<1x128xi32>
    %c127_i32 = arith.constant 127 : i32
    %46 = tpu.dynamic_rotate %44 by %c127_i32 dim 1 : vector<1x128xf32>, i32 -> vector<1x128xf32>
    %c1_i32_55 = arith.constant 1 : i32
    %47 = tpu.dynamic_rotate %44 by %c1_i32_55 dim 1 : vector<1x128xf32>, i32 -> vector<1x128xf32>
    %c1_i32_56 = arith.constant 1 : i32
    %48 = vector.broadcast %c1_i32_56 : i32 to vector<1x128xi32>
    %49 = arith.andi %45, %48 : vector<1x128xi32>
    %c0_i32 = arith.constant 0 : i32
    %50 = vector.broadcast %c0_i32 : i32 to vector<1x128xi32>
    %51 = arith.cmpi eq, %49, %50 : vector<1x128xi32>
    %52 = arith.select %51, %46, %47 : vector<1x128xi1>, vector<1x128xf32>
    %53 = arith.addf %44, %52 : vector<1x128xf32>
    %cst_57 = arith.constant 0.001953125 : f32
    %54 = vector.broadcast %cst_57 : f32 to vector<1x128xf32>
    %55 = arith.mulf %53, %54 : vector<1x128xf32>
    %56 = vector.broadcast %55 : vector<1x128xf32> to vector<256x128xf32>
    %57 = arith.subf %40, %56 : vector<256x128xf32>
    %58 = arith.mulf %57, %57 : vector<256x128xf32>
    %cst_58 = arith.constant dense<0.000000e+00> : vector<128xf32>
    %59 = vector.multi_reduction <add>, %58, %cst_58 [0] : vector<256x128xf32> to vector<128xf32>
    %60 = vector.shape_cast %59 : vector<128xf32> to vector<1x128xf32>
    %61 = tpu.iota {dimensions = array<i32: 1>} : vector<1x128xi32>
    %c127_i32_59 = arith.constant 127 : i32
    %62 = tpu.dynamic_rotate %60 by %c127_i32_59 dim 1 : vector<1x128xf32>, i32 -> vector<1x128xf32>
    %c1_i32_60 = arith.constant 1 : i32
    %63 = tpu.dynamic_rotate %60 by %c1_i32_60 dim 1 : vector<1x128xf32>, i32 -> vector<1x128xf32>
    %c1_i32_61 = arith.constant 1 : i32
    %64 = vector.broadcast %c1_i32_61 : i32 to vector<1x128xi32>
    %65 = arith.andi %61, %64 : vector<1x128xi32>
    %c0_i32_62 = arith.constant 0 : i32
    %66 = vector.broadcast %c0_i32_62 : i32 to vector<1x128xi32>
    %67 = arith.cmpi eq, %65, %66 : vector<1x128xi32>
    %68 = arith.select %67, %62, %63 : vector<1x128xi1>, vector<1x128xf32>
    %69 = arith.addf %60, %68 : vector<1x128xf32>
    %cst_63 = arith.constant 0.001953125 : f32
    %70 = vector.broadcast %cst_63 : f32 to vector<1x128xf32>
    %71 = arith.mulf %69, %70 : vector<1x128xf32>
    %cst_64 = arith.constant 9.99999974E-6 : f32
    %72 = vector.broadcast %cst_64 : f32 to vector<1x128xf32>
    %73 = arith.addf %71, %72 : vector<1x128xf32>
    %74 = math.rsqrt %73 : vector<1x128xf32>
    %75 = arith.mulf %41, %74 : vector<1x128xf32>
    %76 = vector.broadcast %75 : vector<1x128xf32> to vector<256x128xf32>
    %77 = arith.mulf %57, %76 : vector<256x128xf32>
    %78 = vector.broadcast %42 : vector<1x128xf32> to vector<256x128xf32>
    %79 = arith.addf %77, %78 : vector<256x128xf32>
    %cst_65 = arith.constant 0.000000e+00 : f32
    %80 = vector.broadcast %cst_65 : f32 to vector<256x128xf32>
    %81 = arith.maximumf %79, %80 : vector<256x128xf32>
    %cst_66 = arith.constant 0.000000e+00 : f32
    %82 = vector.broadcast %cst_66 : f32 to vector<1x16x128xf32>
    %c0_67 = arith.constant 0 : index
    %c0_68 = arith.constant 0 : index
    %c128_69 = arith.constant 128 : index
    %83 = vector.load %arg15[%c0_67, %c0_68, %c128_69] : memref<18x16x384xf32, #tpu.memory_space<vmem>>, vector<1x16x128xf32>
    tpu.vector_store %arg15[%c0_67, %c0_68, %c128_69], %82 {strides = array<i32>} : memref<18x16x384xf32, #tpu.memory_space<vmem>>, vector<1x16x128xf32>,
    %c17_70 = arith.constant 17 : index
    %c0_71 = arith.constant 0 : index
    %c128_72 = arith.constant 128 : index
    %84 = vector.load %arg15[%c17_70, %c0_71, %c128_72] : memref<18x16x384xf32, #tpu.memory_space<vmem>>, vector<1x16x128xf32>
    tpu.vector_store %arg15[%c17_70, %c0_71, %c128_72], %82 {strides = array<i32>} : memref<18x16x384xf32, #tpu.memory_space<vmem>>, vector<1x16x128xf32>,
    %85 = vector.shape_cast %81 : vector<256x128xf32> to vector<16x16x128xf32>
    %c1_73 = arith.constant 1 : index
    %c0_74 = arith.constant 0 : index
    %c128_75 = arith.constant 128 : index
    %86 = vector.load %arg15[%c1_73, %c0_74, %c128_75] : memref<18x16x384xf32, #tpu.memory_space<vmem>>, vector<16x16x128xf32>
    tpu.vector_store %arg15[%c1_73, %c0_74, %c128_75], %85 {strides = array<i32>} : memref<18x16x384xf32, #tpu.memory_space<vmem>>, vector<16x16x128xf32>,
    %c0_76 = arith.constant 0 : index
    %c0_77 = arith.constant 0 : index
    %c128_78 = arith.constant 128 : index
    %87 = vector.load %arg15[%c0_76, %c0_77, %c128_78] : memref<18x16x384xf32, #tpu.memory_space<vmem>>, vector<18x16x128xf32>
    %cst_79 = arith.constant 0.000000e+00 : f32
    %88 = vector.broadcast %cst_79 : f32 to vector<18x1x128xf32>
    %c1_i32_80 = arith.constant 1 : i32
    %89 = tpu.dynamic_rotate %87 by %c1_i32_80 dim 1 : vector<18x16x128xf32>, i32 -> vector<18x16x128xf32>
    %c0_81 = arith.constant 0 : index
    %c0_82 = arith.constant 0 : index
    %c0_83 = arith.constant 0 : index
    %90 = vector.load %arg15[%c0_81, %c0_82, %c0_83] : memref<18x16x384xf32, #tpu.memory_space<vmem>>, vector<18x16x128xf32>
    tpu.vector_store %arg15[%c0_81, %c0_82, %c0_83], %89 {strides = array<i32>} : memref<18x16x384xf32, #tpu.memory_space<vmem>>, vector<18x16x128xf32>,
    %c0_84 = arith.constant 0 : index
    %c0_85 = arith.constant 0 : index
    %c0_86 = arith.constant 0 : index
    %91 = vector.load %arg15[%c0_84, %c0_85, %c0_86] : memref<18x16x384xf32, #tpu.memory_space<vmem>>, vector<18x1x128xf32>
    tpu.vector_store %arg15[%c0_84, %c0_85, %c0_86], %88 {strides = array<i32>} : memref<18x16x384xf32, #tpu.memory_space<vmem>>, vector<18x1x128xf32>,
    %c15_i32_87 = arith.constant 15 : i32
    %92 = tpu.dynamic_rotate %87 by %c15_i32_87 dim 1 : vector<18x16x128xf32>, i32 -> vector<18x16x128xf32>
    %c0_88 = arith.constant 0 : index
    %c0_89 = arith.constant 0 : index
    %c256_90 = arith.constant 256 : index
    %93 = vector.load %arg15[%c0_88, %c0_89, %c256_90] : memref<18x16x384xf32, #tpu.memory_space<vmem>>, vector<18x16x128xf32>
    tpu.vector_store %arg15[%c0_88, %c0_89, %c256_90], %92 {strides = array<i32>} : memref<18x16x384xf32, #tpu.memory_space<vmem>>, vector<18x16x128xf32>,
    %c0_91 = arith.constant 0 : index
    %c15_92 = arith.constant 15 : index
    %c256_93 = arith.constant 256 : index
    %94 = vector.load %arg15[%c0_91, %c15_92, %c256_93] : memref<18x16x384xf32, #tpu.memory_space<vmem>>, vector<18x1x128xf32>
    tpu.vector_store %arg15[%c0_91, %c15_92, %c256_93], %88 {strides = array<i32>} : memref<18x16x384xf32, #tpu.memory_space<vmem>>, vector<18x1x128xf32>,
    %c0_94 = arith.constant 0 : index
    %c0_95 = arith.constant 0 : index
    %c0_96 = arith.constant 0 : index
    %95 = vector.load %arg15[%c0_94, %c0_95, %c0_96] : memref<18x16x384xf32, #tpu.memory_space<vmem>>, vector<16x16x384xf32>
    %96 = vector.shape_cast %95 : vector<16x16x384xf32> to vector<256x384xf32>
    %97 = arith.truncf %96 : vector<256x384xf32> to vector<256x384xbf16>
    %c0_97 = arith.constant 0 : index
    %c0_98 = arith.constant 0 : index
    %c0_99 = arith.constant 0 : index
    %98 = vector.load %arg7[%c0_97, %c0_98, %c0_99] : memref<3x384x128xbf16, #tpu.memory_space<vmem>>, vector<1x384x128xbf16>
    %99 = vector.shape_cast %98 : vector<1x384x128xbf16> to vector<384x128xbf16>
    %cst_100 = arith.constant dense<0.000000e+00> : vector<256x128xf32>
    %100 = tpu.matmul %97, %99, %cst_100 {dimension_numbers = #tpu.dot_dimension_numbers<[1], [0], [0], [1], [0, 0, 1, 1], [], []>} : vector<256x384xbf16>, vector<384x128xbf16>, vector<256x128xf32> -> vector<256x128xf32>
    %c1_101 = arith.constant 1 : index
    %c0_102 = arith.constant 0 : index
    %c0_103 = arith.constant 0 : index
    %101 = vector.load %arg15[%c1_101, %c0_102, %c0_103] : memref<18x16x384xf32, #tpu.memory_space<vmem>>, vector<16x16x384xf32>
    %102 = vector.shape_cast %101 : vector<16x16x384xf32> to vector<256x384xf32>
    %103 = arith.truncf %102 : vector<256x384xf32> to vector<256x384xbf16>
    %c1_104 = arith.constant 1 : index
    %c0_105 = arith.constant 0 : index
    %c0_106 = arith.constant 0 : index
    %104 = vector.load %arg7[%c1_104, %c0_105, %c0_106] : memref<3x384x128xbf16, #tpu.memory_space<vmem>>, vector<1x384x128xbf16>
    %105 = vector.shape_cast %104 : vector<1x384x128xbf16> to vector<384x128xbf16>
    %cst_107 = arith.constant dense<0.000000e+00> : vector<256x128xf32>
    %106 = tpu.matmul %103, %105, %cst_107 {dimension_numbers = #tpu.dot_dimension_numbers<[1], [0], [0], [1], [0, 0, 1, 1], [], []>} : vector<256x384xbf16>, vector<384x128xbf16>, vector<256x128xf32> -> vector<256x128xf32>
    %107 = arith.addf %100, %106 : vector<256x128xf32>
    %c2_108 = arith.constant 2 : index
    %c0_109 = arith.constant 0 : index
    %c0_110 = arith.constant 0 : index
    %108 = vector.load %arg15[%c2_108, %c0_109, %c0_110] : memref<18x16x384xf32, #tpu.memory_space<vmem>>, vector<16x16x384xf32>
    %109 = vector.shape_cast %108 : vector<16x16x384xf32> to vector<256x384xf32>
    %110 = arith.truncf %109 : vector<256x384xf32> to vector<256x384xbf16>
    %c2_111 = arith.constant 2 : index
    %c0_112 = arith.constant 0 : index
    %c0_113 = arith.constant 0 : index
    %111 = vector.load %arg7[%c2_111, %c0_112, %c0_113] : memref<3x384x128xbf16, #tpu.memory_space<vmem>>, vector<1x384x128xbf16>
    %112 = vector.shape_cast %111 : vector<1x384x128xbf16> to vector<384x128xbf16>
    %cst_114 = arith.constant dense<0.000000e+00> : vector<256x128xf32>
    %113 = tpu.matmul %110, %112, %cst_114 {dimension_numbers = #tpu.dot_dimension_numbers<[1], [0], [0], [1], [0, 0, 1, 1], [], []>} : vector<256x384xbf16>, vector<384x128xbf16>, vector<256x128xf32> -> vector<256x128xf32>
    %114 = arith.addf %107, %113 : vector<256x128xf32>
    %c0_115 = arith.constant 0 : index
    %c0_116 = arith.constant 0 : index
    %115 = vector.load %arg8[%c0_115, %c0_116] : memref<1x128xf32, #tpu.memory_space<vmem>>, vector<1x128xf32>
    %116 = vector.broadcast %115 : vector<1x128xf32> to vector<256x128xf32>
    %117 = arith.addf %114, %116 : vector<256x128xf32>
    %c0_117 = arith.constant 0 : index
    %c0_118 = arith.constant 0 : index
    %118 = vector.load %arg9[%c0_117, %c0_118] : memref<1x128xf32, #tpu.memory_space<vmem>>, vector<1x128xf32>
    %c0_119 = arith.constant 0 : index
    %c0_120 = arith.constant 0 : index
    %119 = vector.load %arg10[%c0_119, %c0_120] : memref<1x128xf32, #tpu.memory_space<vmem>>, vector<1x128xf32>
    %cst_121 = arith.constant dense<0.000000e+00> : vector<128xf32>
    %120 = vector.multi_reduction <add>, %117, %cst_121 [0] : vector<256x128xf32> to vector<128xf32>
    %121 = vector.shape_cast %120 : vector<128xf32> to vector<1x128xf32>
    %122 = tpu.iota {dimensions = array<i32: 1>} : vector<1x128xi32>
    %c127_i32_122 = arith.constant 127 : i32
    %123 = tpu.dynamic_rotate %121 by %c127_i32_122 dim 1 : vector<1x128xf32>, i32 -> vector<1x128xf32>
    %c1_i32_123 = arith.constant 1 : i32
    %124 = tpu.dynamic_rotate %121 by %c1_i32_123 dim 1 : vector<1x128xf32>, i32 -> vector<1x128xf32>
    %c1_i32_124 = arith.constant 1 : i32
    %125 = vector.broadcast %c1_i32_124 : i32 to vector<1x128xi32>
    %126 = arith.andi %122, %125 : vector<1x128xi32>
    %c0_i32_125 = arith.constant 0 : i32
    %127 = vector.broadcast %c0_i32_125 : i32 to vector<1x128xi32>
    %128 = arith.cmpi eq, %126, %127 : vector<1x128xi32>
    %129 = arith.select %128, %123, %124 : vector<1x128xi1>, vector<1x128xf32>
    %130 = arith.addf %121, %129 : vector<1x128xf32>
    %cst_126 = arith.constant 0.001953125 : f32
    %131 = vector.broadcast %cst_126 : f32 to vector<1x128xf32>
    %132 = arith.mulf %130, %131 : vector<1x128xf32>
    %133 = vector.broadcast %132 : vector<1x128xf32> to vector<256x128xf32>
    %134 = arith.subf %117, %133 : vector<256x128xf32>
    %135 = arith.mulf %134, %134 : vector<256x128xf32>
    %cst_127 = arith.constant dense<0.000000e+00> : vector<128xf32>
    %136 = vector.multi_reduction <add>, %135, %cst_127 [0] : vector<256x128xf32> to vector<128xf32>
    %137 = vector.shape_cast %136 : vector<128xf32> to vector<1x128xf32>
    %138 = tpu.iota {dimensions = array<i32: 1>} : vector<1x128xi32>
    %c127_i32_128 = arith.constant 127 : i32
    %139 = tpu.dynamic_rotate %137 by %c127_i32_128 dim 1 : vector<1x128xf32>, i32 -> vector<1x128xf32>
    %c1_i32_129 = arith.constant 1 : i32
    %140 = tpu.dynamic_rotate %137 by %c1_i32_129 dim 1 : vector<1x128xf32>, i32 -> vector<1x128xf32>
    %c1_i32_130 = arith.constant 1 : i32
    %141 = vector.broadcast %c1_i32_130 : i32 to vector<1x128xi32>
    %142 = arith.andi %138, %141 : vector<1x128xi32>
    %c0_i32_131 = arith.constant 0 : i32
    %143 = vector.broadcast %c0_i32_131 : i32 to vector<1x128xi32>
    %144 = arith.cmpi eq, %142, %143 : vector<1x128xi32>
    %145 = arith.select %144, %139, %140 : vector<1x128xi1>, vector<1x128xf32>
    %146 = arith.addf %137, %145 : vector<1x128xf32>
    %cst_132 = arith.constant 0.001953125 : f32
    %147 = vector.broadcast %cst_132 : f32 to vector<1x128xf32>
    %148 = arith.mulf %146, %147 : vector<1x128xf32>
    %cst_133 = arith.constant 9.99999974E-6 : f32
    %149 = vector.broadcast %cst_133 : f32 to vector<1x128xf32>
    %150 = arith.addf %148, %149 : vector<1x128xf32>
    %151 = math.rsqrt %150 : vector<1x128xf32>
    %152 = arith.mulf %118, %151 : vector<1x128xf32>
    %153 = vector.broadcast %152 : vector<1x128xf32> to vector<256x128xf32>
    %154 = arith.mulf %134, %153 : vector<256x128xf32>
    %155 = vector.broadcast %119 : vector<1x128xf32> to vector<256x128xf32>
    %156 = arith.addf %154, %155 : vector<256x128xf32>
    %c1_134 = arith.constant 1 : index
    %c0_135 = arith.constant 0 : index
    %c128_136 = arith.constant 128 : index
    %157 = vector.load %arg14[%c1_134, %c0_135, %c128_136] : memref<18x16x384xf32, #tpu.memory_space<vmem>>, vector<16x16x128xf32>
    %158 = vector.shape_cast %157 : vector<16x16x128xf32> to vector<256x128xf32>
    %159 = arith.truncf %158 : vector<256x128xf32> to vector<256x128xbf16>
    %c0_137 = arith.constant 0 : index
    %c0_138 = arith.constant 0 : index
    %160 = vector.load %arg11[%c0_137, %c0_138] : memref<128x128xbf16, #tpu.memory_space<vmem>>, vector<128x128xbf16>
    %cst_139 = arith.constant dense<0.000000e+00> : vector<256x128xf32>
    %161 = tpu.matmul %159, %160, %cst_139 {dimension_numbers = #tpu.dot_dimension_numbers<[1], [0], [0], [1], [0, 0, 1, 1], [], []>} : vector<256x128xbf16>, vector<128x128xbf16>, vector<256x128xf32> -> vector<256x128xf32>
    %c0_140 = arith.constant 0 : index
    %c0_141 = arith.constant 0 : index
    %162 = vector.load %arg12[%c0_140, %c0_141] : memref<1x128xf32, #tpu.memory_space<vmem>>, vector<1x128xf32>
    %163 = vector.broadcast %162 : vector<1x128xf32> to vector<256x128xf32>
    %164 = arith.addf %161, %163 : vector<256x128xf32>
    %165 = arith.addf %156, %164 : vector<256x128xf32>
    %cst_142 = arith.constant 0.000000e+00 : f32
    %166 = vector.broadcast %cst_142 : f32 to vector<256x128xf32>
    %167 = arith.maximumf %165, %166 : vector<256x128xf32>
    %168 = vector.shape_cast %167 : vector<256x128xf32> to vector<16x16x128xf32>
    %c0_143 = arith.constant 0 : index
    %c0_144 = arith.constant 0 : index
    %c0_145 = arith.constant 0 : index
    %c0_146 = arith.constant 0 : index
    %169 = vector.load %arg13[%c0_143, %c0_144, %c0_145, %c0_146] : memref<1x16x16x128xf32, #tpu.memory_space<vmem>>, vector<1x16x16x128xf32>
    %170 = vector.shape_cast %169 : vector<1x16x16x128xf32> to vector<16x16x128xf32>
    %171 = vector.shape_cast %168 : vector<16x16x128xf32> to vector<1x16x16x128xf32>
    tpu.vector_store %arg13[%c0_143, %c0_144, %c0_145, %c0_146], %171 {strides = array<i32>} : memref<1x16x16x128xf32, #tpu.memory_space<vmem>>, vector<1x16x16x128xf32>,
    return
  }
  func.func @transform_0(%arg0: i32) -> (i32, i32, i32, i32) {
    %c0_i32 = arith.constant 0 : i32
    %c0_i32_0 = arith.constant 0 : i32
    %c0_i32_1 = arith.constant 0 : i32
    %c0_i32_2 = arith.constant 0 : i32
    return %arg0, %c0_i32, %c0_i32_0, %c0_i32_1 : i32, i32, i32, i32
  }
  func.func @transform_1(%arg0: i32) -> (i32, i32, i32, i32) {
    %c0_i32 = arith.constant 0 : i32
    %c0_i32_0 = arith.constant 0 : i32
    %c0_i32_1 = arith.constant 0 : i32
    %c0_i32_2 = arith.constant 0 : i32
    return %arg0, %c0_i32, %c0_i32_0, %c0_i32_1 : i32, i32, i32, i32
  }
  func.func @transform_2(%arg0: i32) -> (i32, i32, i32) {
    %c0_i32 = arith.constant 0 : i32
    %c0_i32_0 = arith.constant 0 : i32
    %c0_i32_1 = arith.constant 0 : i32
    %c0_i32_2 = arith.constant 0 : i32
    return %c0_i32, %c0_i32_0, %c0_i32_1 : i32, i32, i32
  }
  func.func @transform_3(%arg0: i32) -> (i32, i32) {
    %c0_i32 = arith.constant 0 : i32
    %c0_i32_0 = arith.constant 0 : i32
    %c0_i32_1 = arith.constant 0 : i32
    return %c0_i32, %c0_i32_0 : i32, i32
  }
  func.func @transform_4(%arg0: i32) -> (i32, i32) {
    %c0_i32 = arith.constant 0 : i32
    %c0_i32_0 = arith.constant 0 : i32
    %c0_i32_1 = arith.constant 0 : i32
    return %c0_i32, %c0_i32_0 : i32, i32
  }
  func.func @transform_5(%arg0: i32) -> (i32, i32) {
    %c0_i32 = arith.constant 0 : i32
    %c0_i32_0 = arith.constant 0 : i32
    %c0_i32_1 = arith.constant 0 : i32
    return %c0_i32, %c0_i32_0 : i32, i32
  }
  func.func @transform_6(%arg0: i32) -> (i32, i32, i32) {
    %c0_i32 = arith.constant 0 : i32
    %c0_i32_0 = arith.constant 0 : i32
    %c0_i32_1 = arith.constant 0 : i32
    %c0_i32_2 = arith.constant 0 : i32
    return %c0_i32, %c0_i32_0, %c0_i32_1 : i32, i32, i32
  }
  func.func @transform_7(%arg0: i32) -> (i32, i32) {
    %c0_i32 = arith.constant 0 : i32
    %c0_i32_0 = arith.constant 0 : i32
    %c0_i32_1 = arith.constant 0 : i32
    return %c0_i32, %c0_i32_0 : i32, i32
  }
  func.func @transform_8(%arg0: i32) -> (i32, i32) {
    %c0_i32 = arith.constant 0 : i32
    %c0_i32_0 = arith.constant 0 : i32
    %c0_i32_1 = arith.constant 0 : i32
    return %c0_i32, %c0_i32_0 : i32, i32
  }
  func.func @transform_9(%arg0: i32) -> (i32, i32) {
    %c0_i32 = arith.constant 0 : i32
    %c0_i32_0 = arith.constant 0 : i32
    %c0_i32_1 = arith.constant 0 : i32
    return %c0_i32, %c0_i32_0 : i32, i32
  }
  func.func @transform_10(%arg0: i32) -> (i32, i32) {
    %c0_i32 = arith.constant 0 : i32
    %c0_i32_0 = arith.constant 0 : i32
    %c0_i32_1 = arith.constant 0 : i32
    return %c0_i32, %c0_i32_0 : i32, i32
  }
  func.func @transform_11(%arg0: i32) -> (i32, i32) {
    %c0_i32 = arith.constant 0 : i32
    %c0_i32_0 = arith.constant 0 : i32
    %c0_i32_1 = arith.constant 0 : i32
    return %c0_i32, %c0_i32_0 : i32, i32
  }
  func.func @transform_12(%arg0: i32) -> (i32, i32, i32, i32) {
    %c0_i32 = arith.constant 0 : i32
    %c0_i32_0 = arith.constant 0 : i32
    %c0_i32_1 = arith.constant 0 : i32
    %c0_i32_2 = arith.constant 0 : i32
    return %arg0, %c0_i32, %c0_i32_0, %c0_i32_1 : i32, i32, i32, i32
  }
}

</mosaic_0001>

<llo_original>
// kernel: _lambda_.1
$region0: #{_lambda_.1}
  #allocation0 [shape = 'u32[]', space=smem, size = 0x4, offset = 0x4, fixed_abs, tag = 'smem constant byte address 0x4 - core index']
  #allocation1 [shape = 'u32[144,128]{1,0:T(1,128)}', space=vmem, size = 0x12000, scoped, tag = 'internal scratch']
  #allocation2 [shape = 'f32[18,16,384]{2,1,0:T(8,128)}', space=vmem, size = 0x6c000, scoped, tag = 'scratch operand']
  #allocation3 [shape = 'f32[18,16,384]{2,1,0:T(8,128)}', space=vmem, size = 0x6c000, scoped, tag = 'scratch operand']
  %s0 = inlined_call_operand.vmem [shape: f32[2,16,16,4], index: 0, kind: input, shape index: {}]
  %s1 = inlined_call_operand.vmem [shape: f32[2,16,16,4], index: 1, kind: input, shape index: {}]
  %s2 = inlined_call_operand.vmem [shape: bf16[3,384,128], index: 2, kind: input, shape index: {}]
  %s3 = inlined_call_operand.vmem [shape: f32[1,128], index: 3, kind: input, shape index: {}]
  %s4 = inlined_call_operand.vmem [shape: f32[1,128], index: 4, kind: input, shape index: {}]
  %s5 = inlined_call_operand.vmem [shape: f32[1,128], index: 5, kind: input, shape index: {}]
  %s6 = inlined_call_operand.vmem [shape: bf16[3,384,128], index: 6, kind: input, shape index: {}]
  %s7 = inlined_call_operand.vmem [shape: f32[1,128], index: 7, kind: input, shape index: {}]
  %s8 = inlined_call_operand.vmem [shape: f32[1,128], index: 8, kind: input, shape index: {}]
  %s9 = inlined_call_operand.vmem [shape: f32[1,128], index: 9, kind: input, shape index: {}]
  %s10 = inlined_call_operand.vmem [shape: bf16[128,128], index: 10, kind: input, shape index: {}]
  %s11 = inlined_call_operand.vmem [shape: f32[1,128], index: 11, kind: input, shape index: {}]
  %s12 = inlined_call_operand.vmem [shape: f32[2,16,16,128], index: 12, kind: output, shape index: {}]
  %s13 = sld [smem:[#allocation0]]
  $region81: #{_lambda_.1} parent=0
    _
  %s15 = ssub.s32 1, %s13
  %s16 = scalar_select 0, %s15, %s13
  loop: start=0, step=1, limit=4
  $region2: #{_lambda_.1} parent=0 // loop_pre_header
    _
  $region3: #{_lambda_.1} parent=0 // loop_header
    %s18 = sphi 0, %s22
    %p19 = scmp.ge.s32.totalorder %s18, 4
    %s28 = sphi 0, %s30
    %s31 = sphi 0, %s28
    %s32 = sphi 0, %s31
    %s48 = sphi 0, %s32
    %s54 = sphi 0, %s56
    %s57 = sphi 0, %s54
    %s58 = sphi 0, %s57
    %s74 = sphi 0, %s58
    %s78 = sphi 0, %s78
    %s80 = sphi 0, %s78
    %s81 = sphi 0, %s80
    %s95 = sphi 0, %s81
    %s99 = sphi 0, %s99
    %s101 = sphi 0, %s99
    %s102 = sphi 0, %s101
    %s116 = sphi 0, %s102
    %s120 = sphi 0, %s120
    %s122 = sphi 0, %s120
    %s123 = sphi 0, %s122
    %s137 = sphi 0, %s123
    %s141 = sphi 0, %s141
    %s143 = sphi 0, %s141
    %s144 = sphi 0, %s143
    %s158 = sphi 0, %s144
    %s162 = sphi 0, %s162
    %s164 = sphi 0, %s162
    %s165 = sphi 0, %s164
    %s179 = sphi 0, %s165
    %s183 = sphi 0, %s183
    %s185 = sphi 0, %s183
    %s186 = sphi 0, %s185
    %s200 = sphi 0, %s186
    %s204 = sphi 0, %s204
    %s206 = sphi 0, %s204
    %s207 = sphi 0, %s206
    %s221 = sphi 0, %s207
    %s225 = sphi 0, %s225
    %s227 = sphi 0, %s225
    %s228 = sphi 0, %s227
    %s242 = sphi 0, %s228
    %s246 = sphi 0, %s246
    %s248 = sphi 0, %s246
    %s249 = sphi 0, %s248
    %s263 = sphi 0, %s249
    %s267 = sphi 0, %s267
    %s269 = sphi 0, %s267
    %s270 = sphi 0, %s269
    %s284 = sphi 0, %s270
    %s290 = sphi 0, %s292
    %s293 = sphi 0, %s290
    %s294 = sphi 0, %s293
    %s310 = sphi 0, %s294
  $region4: #{_lambda_.1} parent=0 // loop_header_branch
    %21 = sbr.rel (%p19) target = $region8
  $region5: #{_lambda_.1} parent=0 // loop_body
    %s23 = ssub.s32 %s18, 1
    %s24 = ssub.s32 %s18, 2
    %s25 = sadd.s32 %s18, 1
    %s26 = ssub.s32 %s18, %s25
    %p27 = scmp.eq.s32.totalorder %s26, 0
    %s29 = sadd.s32 %s28, 1
    %s30 = scalar_select %p27, %s28, %s29
    %p33 = pneg %p27
    %p34 = scmp.eq.s32.totalorder %s18, 1
    %p35 = por %p33, %p34
    %p36 = scmp.ne.s32.totalorder %s28, %s31
    %p37 = scmp.eq.s32.totalorder %s18, 0
    %p38 = por %p36, %p37
    %p39 = scmp.ne.s32.totalorder %s28, %s31
    %p40 = scmp.eq.s32.totalorder %s23, 1
    %p41 = por %p39, %p40
    %p42 = scmp.ne.s32.totalorder %s31, %s32
    %p43 = scmp.eq.s32.totalorder %s23, 0
    %p44 = por %p42, %p43
    %p45 = scmp.ne.s32.totalorder %s31, %s32
    %p46 = scmp.eq.s32.totalorder %s24, 1
    %p47 = por %p45, %p46
    %p49 = scmp.ne.s32.totalorder %s32, %s48
    %p50 = scmp.eq.s32.totalorder %s24, 0
    %p51 = por %p49, %p50
    %s52 = ssub.s32 %s18, %s25
    %p53 = scmp.eq.s32.totalorder %s52, 0
    %s55 = sadd.s32 %s54, 1
    %s56 = scalar_select %p53, %s54, %s55
    %p59 = pneg %p53
    %p60 = scmp.eq.s32.totalorder %s18, 1
    %p61 = por %p59, %p60
    %p62 = scmp.ne.s32.totalorder %s54, %s57
    %p63 = scmp.eq.s32.totalorder %s18, 0
    %p64 = por %p62, %p63
    %p65 = scmp.ne.s32.totalorder %s54, %s57
    %p66 = scmp.eq.s32.totalorder %s23, 1
    %p67 = por %p65, %p66
    %p68 = scmp.ne.s32.totalorder %s57, %s58
    %p69 = scmp.eq.s32.totalorder %s23, 0
    %p70 = por %p68, %p69
    %p71 = scmp.ne.s32.totalorder %s57, %s58
    %p72 = scmp.eq.s32.totalorder %s24, 1
    %p73 = por %p71, %p72
    %p75 = scmp.ne.s32.totalorder %s58, %s74
    %p76 = scmp.eq.s32.totalorder %s24, 0
    %p77 = por %p75, %p76
    %s79 = sadd.s32 %s78, 1
    %p82 = scmp.eq.s32.totalorder %s18, 1
    %p83 = scmp.ne.s32.totalorder %s78, %s80
    %p84 = scmp.eq.s32.totalorder %s18, 0
    %p85 = por %p83, %p84
    %p86 = scmp.ne.s32.totalorder %s78, %s80
    %p87 = scmp.eq.s32.totalorder %s23, 1
    %p88 = por %p86, %p87
    %p89 = scmp.ne.s32.totalorder %s80, %s81
    %p90 = scmp.eq.s32.totalorder %s23, 0
    %p91 = por %p89, %p90
    %p92 = scmp.ne.s32.totalorder %s80, %s81
    %p93 = scmp.eq.s32.totalorder %s24, 1
    %p94 = por %p92, %p93
    %p96 = scmp.ne.s32.totalorder %s81, %s95
    %p97 = scmp.eq.s32.totalorder %s24, 0
    %p98 = por %p96, %p97
    %s100 = sadd.s32 %s99, 1
    %p103 = scmp.eq.s32.totalorder %s18, 1
    %p104 = scmp.ne.s32.totalorder %s99, %s101
    %p105 = scmp.eq.s32.totalorder %s18, 0
    %p106 = por %p104, %p105
    %p107 = scmp.ne.s32.totalorder %s99, %s101
    %p108 = scmp.eq.s32.totalorder %s23, 1
    %p109 = por %p107, %p108
    %p110 = scmp.ne.s32.totalorder %s101, %s102
    %p111 = scmp.eq.s32.totalorder %s23, 0
    %p112 = por %p110, %p111
    %p113 = scmp.ne.s32.totalorder %s101, %s102
    %p114 = scmp.eq.s32.totalorder %s24, 1
    %p115 = por %p113, %p114
    %p117 = scmp.ne.s32.totalorder %s102, %s116
    %p118 = scmp.eq.s32.totalorder %s24, 0
    %p119 = por %p117, %p118
    %s121 = sadd.s32 %s120, 1
    %p124 = scmp.eq.s32.totalorder %s18, 1
    %p125 = scmp.ne.s32.totalorder %s120, %s122
    %p126 = scmp.eq.s32.totalorder %s18, 0
    %p127 = por %p125, %p126
    %p128 = scmp.ne.s32.totalorder %s120, %s122
    %p129 = scmp.eq.s32.totalorder %s23, 1
    %p130 = por %p128, %p129
    %p131 = scmp.ne.s32.totalorder %s122, %s123
    %p132 = scmp.eq.s32.totalorder %s23, 0
    %p133 = por %p131, %p132
    %p134 = scmp.ne.s32.totalorder %s122, %s123
    %p135 = scmp.eq.s32.totalorder %s24, 1
    %p136 = por %p134, %p135
    %p138 = scmp.ne.s32.totalorder %s123, %s137
    %p139 = scmp.eq.s32.totalorder %s24, 0
    %p140 = por %p138, %p139
    %s142 = sadd.s32 %s141, 1
    %p145 = scmp.eq.s32.totalorder %s18, 1
    %p146 = scmp.ne.s32.totalorder %s141, %s143
    %p147 = scmp.eq.s32.totalorder %s18, 0
    %p148 = por %p146, %p147
    %p149 = scmp.ne.s32.totalorder %s141, %s143
    %p150 = scmp.eq.s32.totalorder %s23, 1
    %p151 = por %p149, %p150
    %p152 = scmp.ne.s32.totalorder %s143, %s144
    %p153 = scmp.eq.s32.totalorder %s23, 0
    %p154 = por %p152, %p153
    %p155 = scmp.ne.s32.totalorder %s143, %s144
    %p156 = scmp.eq.s32.totalorder %s24, 1
    %p157 = por %p155, %p156
    %p159 = scmp.ne.s32.totalorder %s144, %s158
    %p160 = scmp.eq.s32.totalorder %s24, 0
    %p161 = por %p159, %p160
    %s163 = sadd.s32 %s162, 1
    %p166 = scmp.eq.s32.totalorder %s18, 1
    %p167 = scmp.ne.s32.totalorder %s162, %s164
    %p168 = scmp.eq.s32.totalorder %s18, 0
    %p169 = por %p167, %p168
    %p170 = scmp.ne.s32.totalorder %s162, %s164
    %p171 = scmp.eq.s32.totalorder %s23, 1
    %p172 = por %p170, %p171
    %p173 = scmp.ne.s32.totalorder %s164, %s165
    %p174 = scmp.eq.s32.totalorder %s23, 0
    %p175 = por %p173, %p174
    %p176 = scmp.ne.s32.totalorder %s164, %s165
    %p177 = scmp.eq.s32.totalorder %s24, 1
    %p178 = por %p176, %p177
    %p180 = scmp.ne.s32.totalorder %s165, %s179
    %p181 = scmp.eq.s32.totalorder %s24, 0
    %p182 = por %p180, %p181
    %s184 = sadd.s32 %s183, 1
    %p187 = scmp.eq.s32.totalorder %s18, 1
    %p188 = scmp.ne.s32.totalorder %s183, %s185
    %p189 = scmp.eq.s32.totalorder %s18, 0
    %p190 = por %p188, %p189
    %p191 = scmp.ne.s32.totalorder %s183, %s185
    %p192 = scmp.eq.s32.totalorder %s23, 1
    %p193 = por %p191, %p192
    %p194 = scmp.ne.s32.totalorder %s185, %s186
    %p195 = scmp.eq.s32.totalorder %s23, 0
    %p196 = por %p194, %p195
    %p197 = scmp.ne.s32.totalorder %s185, %s186
    %p198 = scmp.eq.s32.totalorder %s24, 1
    %p199 = por %p197, %p198
    %p201 = scmp.ne.s32.totalorder %s186, %s200
    %p202 = scmp.eq.s32.totalorder %s24, 0
    %p203 = por %p201, %p202
    %s205 = sadd.s32 %s204, 1
    %p208 = scmp.eq.s32.totalorder %s18, 1
    %p209 = scmp.ne.s32.totalorder %s204, %s206
    %p210 = scmp.eq.s32.totalorder %s18, 0
    %p211 = por %p209, %p210
    %p212 = scmp.ne.s32.totalorder %s204, %s206
    %p213 = scmp.eq.s32.totalorder %s23, 1
    %p214 = por %p212, %p213
    %p215 = scmp.ne.s32.totalorder %s206, %s207
    %p216 = scmp.eq.s32.totalorder %s23, 0
    %p217 = por %p215, %p216
    %p218 = scmp.ne.s32.totalorder %s206, %s207
    %p219 = scmp.eq.s32.totalorder %s24, 1
    %p220 = por %p218, %p219
    %p222 = scmp.ne.s32.totalorder %s207, %s221
    %p223 = scmp.eq.s32.totalorder %s24, 0
    %p224 = por %p222, %p223
    %s226 = sadd.s32 %s225, 1
    %p229 = scmp.eq.s32.totalorder %s18, 1
    %p230 = scmp.ne.s32.totalorder %s225, %s227
    %p231 = scmp.eq.s32.totalorder %s18, 0
    %p232 = por %p230, %p231
    %p233 = scmp.ne.s32.totalorder %s225, %s227
    %p234 = scmp.eq.s32.totalorder %s23, 1
    %p235 = por %p233, %p234
    %p236 = scmp.ne.s32.totalorder %s227, %s228
    %p237 = scmp.eq.s32.totalorder %s23, 0
    %p238 = por %p236, %p237
    %p239 = scmp.ne.s32.totalorder %s227, %s228
    %p240 = scmp.eq.s32.totalorder %s24, 1
    %p241 = por %p239, %p240
    %p243 = scmp.ne.s32.totalorder %s228, %s242
    %p244 = scmp.eq.s32.totalorder %s24, 0
    %p245 = por %p243, %p244
    %s247 = sadd.s32 %s246, 1
    %p250 = scmp.eq.s32.totalorder %s18, 1
    %p251 = scmp.ne.s32.totalorder %s246, %s248
    %p252 = scmp.eq.s32.totalorder %s18, 0
    %p253 = por %p251, %p252
    %p254 = scmp.ne.s32.totalorder %s246, %s248
    %p255 = scmp.eq.s32.totalorder %s23, 1
    %p256 = por %p254, %p255
    %p257 = scmp.ne.s32.totalorder %s248, %s249
    %p258 = scmp.eq.s32.totalorder %s23, 0
    %p259 = por %p257, %p258
    %p260 = scmp.ne.s32.totalorder %s248, %s249
    %p261 = scmp.eq.s32.totalorder %s24, 1
    %p262 = por %p260, %p261
    %p264 = scmp.ne.s32.totalorder %s249, %s263
    %p265 = scmp.eq.s32.totalorder %s24, 0
    %p266 = por %p264, %p265
    %s268 = sadd.s32 %s267, 1
    %p271 = scmp.eq.s32.totalorder %s18, 1
    %p272 = scmp.ne.s32.totalorder %s267, %s269
    %p273 = scmp.eq.s32.totalorder %s18, 0
    %p274 = por %p272, %p273
    %p275 = scmp.ne.s32.totalorder %s267, %s269
    %p276 = scmp.eq.s32.totalorder %s23, 1
    %p277 = por %p275, %p276
    %p278 = scmp.ne.s32.totalorder %s269, %s270
    %p279 = scmp.eq.s32.totalorder %s23, 0
    %p280 = por %p278, %p279
    %p281 = scmp.ne.s32.totalorder %s269, %s270
    %p282 = scmp.eq.s32.totalorder %s24, 1
    %p283 = por %p281, %p282
    %p285 = scmp.ne.s32.totalorder %s270, %s284
    %p286 = scmp.eq.s32.totalorder %s24, 0
    %p287 = por %p285, %p286
    %s288 = ssub.s32 %s18, %s25
    %p289 = scmp.eq.s32.totalorder %s288, 0
    %s291 = sadd.s32 %s290, 1
    %s292 = scalar_select %p289, %s290, %s291
    %p295 = pneg %p289
    %p296 = scmp.eq.s32.totalorder %s18, 1
    %p297 = por %p295, %p296
    %p298 = scmp.ne.s32.totalorder %s290, %s293
    %p299 = scmp.eq.s32.totalorder %s18, 0
    %p300 = por %p298, %p299
    %p301 = scmp.ne.s32.totalorder %s290, %s293
    %p302 = scmp.eq.s32.totalorder %s23, 1
    %p303 = por %p301, %p302
    %p304 = scmp.ne.s32.totalorder %s293, %s294
    %p305 = scmp.eq.s32.totalorder %s23, 0
    %p306 = por %p304, %p305
    %p307 = scmp.ne.s32.totalorder %s293, %s294
    %p308 = scmp.eq.s32.totalorder %s24, 1
    %p309 = por %p307, %p308
    %p311 = scmp.ne.s32.totalorder %s294, %s310
    %p312 = scmp.eq.s32.totalorder %s24, 0
    %p313 = por %p311, %p312
    %p314 = scmp.le.s32.totalorder 1, %s18
    %p315 = scmp.lt.s32.totalorder %s18, 3
    %p316 = pnand %p314, %p315
    %p317 = pneg %p316
    // Predicated region
    $region9: #{_lambda_.1} parent=5 // pred_check
      _
    $region10: #{_lambda_.1} parent=5 // pred_check_branch
      %319 = sbr.rel (%p316) target = $region12
    $region11: #{_lambda_.1} parent=5 // pred_region
      %s320 = ssub.s32 %s18, 1
      // Predicated region
      $region13: #{_lambda_.1} parent=11 // pred_check
        %p321 = pneg %p91
      $region14: #{_lambda_.1} parent=11 // pred_check_branch
        %323 = sbr.rel (%p321) target = $region16
      $region15: #{_lambda_.1} parent=11 // pred_region
        _
      $region16: #{_lambda_.1} parent=11 // pred_fallthru
        _
      // Predicated region
      $region17: #{_lambda_.1} parent=11 // pred_check
        %p324 = pneg %p112
      $region18: #{_lambda_.1} parent=11 // pred_check_branch
        %326 = sbr.rel (%p324) target = $region20
      $region19: #{_lambda_.1} parent=11 // pred_region
        _
      $region20: #{_lambda_.1} parent=11 // pred_fallthru
        _
      // Predicated region
      $region21: #{_lambda_.1} parent=11 // pred_check
        %p327 = pneg %p133
      $region22: #{_lambda_.1} parent=11 // pred_check_branch
        %329 = sbr.rel (%p327) target = $region24
      $region23: #{_lambda_.1} parent=11 // pred_region
        _
      $region24: #{_lambda_.1} parent=11 // pred_fallthru
        _
      // Predicated region
      $region25: #{_lambda_.1} parent=11 // pred_check
        %p330 = pneg %p154
      $region26: #{_lambda_.1} parent=11 // pred_check_branch
        %332 = sbr.rel (%p330) target = $region28
      $region27: #{_lambda_.1} parent=11 // pred_region
        _
      $region28: #{_lambda_.1} parent=11 // pred_fallthru
        _
      // Predicated region
      $region29: #{_lambda_.1} parent=11 // pred_check
        %p333 = pneg %p175
      $region30: #{_lambda_.1} parent=11 // pred_check_branch
        %335 = sbr.rel (%p333) target = $region32
      $region31: #{_lambda_.1} parent=11 // pred_region
        _
      $region32: #{_lambda_.1} parent=11 // pred_fallthru
        _
      // Predicated region
      $region33: #{_lambda_.1} parent=11 // pred_check
        %p336 = pneg %p196
      $region34: #{_lambda_.1} parent=11 // pred_check_branch
        %338 = sbr.rel (%p336) target = $region36
      $region35: #{_lambda_.1} parent=11 // pred_region
        _
      $region36: #{_lambda_.1} parent=11 // pred_fallthru
        _
      // Predicated region
      $region37: #{_lambda_.1} parent=11 // pred_check
        %p339 = pneg %p217
      $region38: #{_lambda_.1} parent=11 // pred_check_branch
        %341 = sbr.rel (%p339) target = $region40
      $region39: #{_lambda_.1} parent=11 // pred_region
        _
      $region40: #{_lambda_.1} parent=11 // pred_fallthru
        _
      // Predicated region
      $region41: #{_lambda_.1} parent=11 // pred_check
        %p342 = pneg %p238
      $region42: #{_lambda_.1} parent=11 // pred_check_branch
        %344 = sbr.rel (%p342) target = $region44
      $region43: #{_lambda_.1} parent=11 // pred_region
        _
      $region44: #{_lambda_.1} parent=11 // pred_fallthru
        _
      // Predicated region
      $region45: #{_lambda_.1} parent=11 // pred_check
        %p345 = pneg %p259
      $region46: #{_lambda_.1} parent=11 // pred_check_branch
        %347 = sbr.rel (%p345) target = $region48
      $region47: #{_lambda_.1} parent=11 // pred_region
        _
      $region48: #{_lambda_.1} parent=11 // pred_fallthru
        _
      // Predicated region
      $region49: #{_lambda_.1} parent=11 // pred_check
        %p348 = pneg %p280
      $region50: #{_lambda_.1} parent=11 // pred_check_branch
        %350 = sbr.rel (%p348) target = $region52
      $region51: #{_lambda_.1} parent=11 // pred_region
        _
      $region52: #{_lambda_.1} parent=11 // pred_fallthru
        _
    $region12: #{_lambda_.1} parent=5 // pred_fallthru
      _
    %p351 = scmp.lt.s32.totalorder %s18, 2
    // Predicated region
    $region53: #{_lambda_.1} parent=5 // pred_check
      %p352 = pneg %p351
    $region54: #{_lambda_.1} parent=5 // pred_check_branch
      %354 = sbr.rel (%p352) target = $region56
    $region55: #{_lambda_.1} parent=5 // pred_region
      // Predicated region
      $region57: #{_lambda_.1} parent=55 // pred_check
        %p355 = pneg %p38
      $region58: #{_lambda_.1} parent=55 // pred_check_branch
        %357 = sbr.rel (%p355) target = $region60
      $region59: #{_lambda_.1} parent=55 // pred_region
        %p358 = scmp.lt.s32.totalorder %s18, 1
        %s359 = scalar_select %p358, %s18, 1
        %s360 = smul.addr %s359, 32
        %s361 = smul.addr %s360, 8
        %s362 = scalar_lea.vmem %s0, %s361
      $region60: #{_lambda_.1} parent=55 // pred_fallthru
        _
      // Predicated region
      $region61: #{_lambda_.1} parent=55 // pred_check
        %p363 = pneg %p64
      $region62: #{_lambda_.1} parent=55 // pred_check_branch
        %365 = sbr.rel (%p363) target = $region64
      $region63: #{_lambda_.1} parent=55 // pred_region
        %p366 = scmp.lt.s32.totalorder %s18, 1
        %s367 = scalar_select %p366, %s18, 1
        %s368 = smul.addr %s367, 32
        %s369 = smul.addr %s368, 8
        %s370 = scalar_lea.vmem %s1, %s369
      $region64: #{_lambda_.1} parent=55 // pred_fallthru
        _
    $region56: #{_lambda_.1} parent=5 // pred_fallthru
      _
    %p371 = scmp.le.s32.totalorder 1, %s18
    %p372 = scmp.lt.s32.totalorder %s18, 3
    %p373 = pnand %p371, %p372
    %p374 = pneg %p373
    // Predicated region
    $region65: #{_lambda_.1} parent=5 // pred_check
      _
    $region66: #{_lambda_.1} parent=5 // pred_check_branch
      %376 = sbr.rel (%p373) target = $region68
    $region67: #{_lambda_.1} parent=5 // pred_region
      %s377 = ssub.s32 %s18, 1
      %p378 = scmp.lt.s32.totalorder %s23, 1
      %s379 = scalar_select %p378, %s23, 1
      %s380 = smul.addr %s379, 32
      %s381 = smul.addr %s380, 8
      %s382 = scalar_lea.vmem %s0, %s381
      %p383 = pneg %p44
      %p384 = pneg %p41
      %p385 = scmp.lt.s32.totalorder %s23, 1
      %s386 = scalar_select %p385, %s23, 1
      %s387 = smul.addr %s386, 32
      %s388 = smul.addr %s387, 8
      %s389 = scalar_lea.vmem %s1, %s388
      %p390 = pneg %p70
      %p391 = pneg %p67
      %p392 = pneg %p91
      %p393 = pneg %p88
      %p394 = pneg %p112
      %p395 = pneg %p109
      %p396 = pneg %p133
      %p397 = pneg %p130
      %p398 = pneg %p154
      %p399 = pneg %p151
      %p400 = pneg %p175
      %p401 = pneg %p172
      %p402 = pneg %p196
      %p403 = pneg %p193
      %p404 = pneg %p217
      %p405 = pneg %p214
      %p406 = pneg %p238
      %p407 = pneg %p235
      %p408 = pneg %p259
      %p409 = pneg %p256
      %p410 = pneg %p280
      %p411 = pneg %p277
      %p412 = pneg %p306
      %p413 = pneg %p303
      %p414 = scmp.lt.s32.totalorder %s23, 1
      %s415 = scalar_select %p414, %s23, 1
      %s416 = smul.addr %s415, 32
      %s417 = smul.addr %s416, 8
      %s418 = scalar_lea.vmem %s12, %s417
      %p419 = scmp.lt.s32.totalorder %s23, 1
      %s420 = scalar_select %p419, %s23, 1
      %s421 = smul.addr %s420, 32
      %s422 = smul.addr %s421, 8
      %s423 = scalar_lea.vmem %s0, %s422
      %p424 = scmp.lt.s32.totalorder %s23, 1
      %s425 = scalar_select %p424, %s23, 1
      %s426 = smul.addr %s425, 32
      %s427 = smul.addr %s426, 8
      %s428 = scalar_lea.vmem %s1, %s427
      %p429 = scmp.lt.s32.totalorder %s23, 1
      %s430 = scalar_select %p429, %s23, 1
      %s431 = smul.addr %s430, 32
      %s432 = smul.addr %s431, 8
      %s433 = scalar_lea.vmem %s12, %s432
      %435 = vst [vmem:[#allocation2 + $0x8] sm:$0xff] 0.0
      %436 = vst [vmem:[#allocation2 + $0x20] sm:$0xff] 0.0
      %s437 = scalar_lea.vmem [#allocation2], 816
      %438 = vst [vmem:[%s437 + $0x8] sm:$0xff] 0.0
      %439 = vst [vmem:[%s437 + $0x20] sm:$0xff] 0.0
      %v440 = vld [vmem:[%s423] sm:$0xff]
      %v441 = vld [vmem:[%s423 + $0x8] sm:$0xff]
      %v442 = vld [vmem:[%s423 + $0x10] sm:$0xff]
      %v443 = vld [vmem:[%s423 + $0x18] sm:$0xff]
      %v444 = vld [vmem:[%s423 + $0x20] sm:$0xff]
      %v445 = vld [vmem:[%s423 + $0x28] sm:$0xff]
      %v446 = vld [vmem:[%s423 + $0x30] sm:$0xff]
      %v447 = vld [vmem:[%s423 + $0x38] sm:$0xff]
      %v448 = vld [vmem:[%s423 + $0x40] sm:$0xff]
      %v449 = vld [vmem:[%s423 + $0x48] sm:$0xff]
      %v450 = vld [vmem:[%s423 + $0x50] sm:$0xff]
      %v451 = vld [vmem:[%s423 + $0x58] sm:$0xff]
      %v452 = vld [vmem:[%s423 + $0x60] sm:$0xff]
      %v453 = vld [vmem:[%s423 + $0x68] sm:$0xff]
      %v454 = vld [vmem:[%s423 + $0x70] sm:$0xff]
      %v455 = vld [vmem:[%s423 + $0x78] sm:$0xff]
      %v456 = vld [vmem:[%s423 + $0x80] sm:$0xff]
      %v457 = vld [vmem:[%s423 + $0x88] sm:$0xff]
      %v458 = vld [vmem:[%s423 + $0x90] sm:$0xff]
      %v459 = vld [vmem:[%s423 + $0x98] sm:$0xff]
      %v460 = vld [vmem:[%s423 + $0xa0] sm:$0xff]
      %v461 = vld [vmem:[%s423 + $0xa8] sm:$0xff]
      %v462 = vld [vmem:[%s423 + $0xb0] sm:$0xff]
      %v463 = vld [vmem:[%s423 + $0xb8] sm:$0xff]
      %v464 = vld [vmem:[%s423 + $0xc0] sm:$0xff]
      %v465 = vld [vmem:[%s423 + $0xc8] sm:$0xff]
      %v466 = vld [vmem:[%s423 + $0xd0] sm:$0xff]
      %v467 = vld [vmem:[%s423 + $0xd8] sm:$0xff]
      %v468 = vld [vmem:[%s423 + $0xe0] sm:$0xff]
      %v469 = vld [vmem:[%s423 + $0xe8] sm:$0xff]
      %v470 = vld [vmem:[%s423 + $0xf0] sm:$0xff]
      %v471 = vld [vmem:[%s423 + $0xf8] sm:$0xff]
      %v472 = vld [vmem:[%s428] sm:$0xff]
      %v473 = vld [vmem:[%s428 + $0x8] sm:$0xff]
      %v474 = vld [vmem:[%s428 + $0x10] sm:$0xff]
      %v475 = vld [vmem:[%s428 + $0x18] sm:$0xff]
      %v476 = vld [vmem:[%s428 + $0x20] sm:$0xff]
      %v477 = vld [vmem:[%s428 + $0x28] sm:$0xff]
      %v478 = vld [vmem:[%s428 + $0x30] sm:$0xff]
      %v479 = vld [vmem:[%s428 + $0x38] sm:$0xff]
      %v480 = vld [vmem:[%s428 + $0x40] sm:$0xff]
      %v481 = vld [vmem:[%s428 + $0x48] sm:$0xff]
      %v482 = vld [vmem:[%s428 + $0x50] sm:$0xff]
      %v483 = vld [vmem:[%s428 + $0x58] sm:$0xff]
      %v484 = vld [vmem:[%s428 + $0x60] sm:$0xff]
      %v485 = vld [vmem:[%s428 + $0x68] sm:$0xff]
      %v486 = vld [vmem:[%s428 + $0x70] sm:$0xff]
      %v487 = vld [vmem:[%s428 + $0x78] sm:$0xff]
      %v488 = vld [vmem:[%s428 + $0x80] sm:$0xff]
      %v489 = vld [vmem:[%s428 + $0x88] sm:$0xff]
      %v490 = vld [vmem:[%s428 + $0x90] sm:$0xff]
      %v491 = vld [vmem:[%s428 + $0x98] sm:$0xff]
      %v492 = vld [vmem:[%s428 + $0xa0] sm:$0xff]
      %v493 = vld [vmem:[%s428 + $0xa8] sm:$0xff]
      %v494 = vld [vmem:[%s428 + $0xb0] sm:$0xff]
      %v495 = vld [vmem:[%s428 + $0xb8] sm:$0xff]
      %v496 = vld [vmem:[%s428 + $0xc0] sm:$0xff]
      %v497 = vld [vmem:[%s428 + $0xc8] sm:$0xff]
      %v498 = vld [vmem:[%s428 + $0xd0] sm:$0xff]
      %v499 = vld [vmem:[%s428 + $0xd8] sm:$0xff]
      %v500 = vld [vmem:[%s428 + $0xe0] sm:$0xff]
      %v501 = vld [vmem:[%s428 + $0xe8] sm:$0xff]
      %v502 = vld [vmem:[%s428 + $0xf0] sm:$0xff]
      %v503 = vld [vmem:[%s428 + $0xf8] sm:$0xff]
      %536 = vrot.lane.b32.xlu0 %v472, 4
      %v537 = vpop.permute.xlu0 %536
      %538 = vrot.lane.b32.xlu0 %v473, 4
      %v539 = vpop.permute.xlu0 %538
      %540 = vrot.lane.b32.xlu0 %v474, 4
      %v541 = vpop.permute.xlu0 %540
      %542 = vrot.lane.b32.xlu0 %v475, 4
      %v543 = vpop.permute.xlu0 %542
      %544 = vrot.lane.b32.xlu0 %v476, 4
      %v545 = vpop.permute.xlu0 %544
      %546 = vrot.lane.b32.xlu0 %v477, 4
      %v547 = vpop.permute.xlu0 %546
      %548 = vrot.lane.b32.xlu0 %v478, 4
      %v549 = vpop.permute.xlu0 %548
      %550 = vrot.lane.b32.xlu0 %v479, 4
      %v551 = vpop.permute.xlu0 %550
      %552 = vrot.lane.b32.xlu0 %v480, 4
      %v553 = vpop.permute.xlu0 %552
      %554 = vrot.lane.b32.xlu0 %v481, 4
      %v555 = vpop.permute.xlu0 %554
      %556 = vrot.lane.b32.xlu0 %v482, 4
      %v557 = vpop.permute.xlu0 %556
      %558 = vrot.lane.b32.xlu0 %v483, 4
      %v559 = vpop.permute.xlu0 %558
      %560 = vrot.lane.b32.xlu0 %v484, 4
      %v561 = vpop.permute.xlu0 %560
      %562 = vrot.lane.b32.xlu0 %v485, 4
      %v563 = vpop.permute.xlu0 %562
      %564 = vrot.lane.b32.xlu0 %v486, 4
      %v565 = vpop.permute.xlu0 %564
      %566 = vrot.lane.b32.xlu0 %v487, 4
      %v567 = vpop.permute.xlu0 %566
      %568 = vrot.lane.b32.xlu0 %v488, 4
      %v569 = vpop.permute.xlu0 %568
      %570 = vrot.lane.b32.xlu0 %v489, 4
      %v571 = vpop.permute.xlu0 %570
      %572 = vrot.lane.b32.xlu0 %v490, 4
      %v573 = vpop.permute.xlu0 %572
      %574 = vrot.lane.b32.xlu0 %v491, 4
      %v575 = vpop.permute.xlu0 %574
      %576 = vrot.lane.b32.xlu0 %v492, 4
      %v577 = vpop.permute.xlu0 %576
      %578 = vrot.lane.b32.xlu0 %v493, 4
      %v579 = vpop.permute.xlu0 %578
      %580 = vrot.lane.b32.xlu0 %v494, 4
      %v581 = vpop.permute.xlu0 %580
      %582 = vrot.lane.b32.xlu0 %v495, 4
      %v583 = vpop.permute.xlu0 %582
      %584 = vrot.lane.b32.xlu0 %v496, 4
      %v585 = vpop.permute.xlu0 %584
      %586 = vrot.lane.b32.xlu0 %v497, 4
      %v587 = vpop.permute.xlu0 %586
      %588 = vrot.lane.b32.xlu0 %v498, 4
      %v589 = vpop.permute.xlu0 %588
      %590 = vrot.lane.b32.xlu0 %v499, 4
      %v591 = vpop.permute.xlu0 %590
      %592 = vrot.lane.b32.xlu0 %v500, 4
      %v593 = vpop.permute.xlu0 %592
      %594 = vrot.lane.b32.xlu0 %v501, 4
      %v595 = vpop.permute.xlu0 %594
      %596 = vrot.lane.b32.xlu0 %v502, 4
      %v597 = vpop.permute.xlu0 %596
      %598 = vrot.lane.b32.xlu0 %v503, 4
      %v599 = vpop.permute.xlu0 %598
      %vm632 = vcmask 31744
      %v633 = vsel %vm632, %v440, %v537
      %v634 = vsel %vm632, %v441, %v539
      %v635 = vsel %vm632, %v442, %v541
      %v636 = vsel %vm632, %v443, %v543
      %v637 = vsel %vm632, %v444, %v545
      %v638 = vsel %vm632, %v445, %v547
      %v639 = vsel %vm632, %v446, %v549
      %v640 = vsel %vm632, %v447, %v551
      %v641 = vsel %vm632, %v448, %v553
      %v642 = vsel %vm632, %v449, %v555
      %v643 = vsel %vm632, %v450, %v557
      %v644 = vsel %vm632, %v451, %v559
      %v645 = vsel %vm632, %v452, %v561
      %v646 = vsel %vm632, %v453, %v563
      %v647 = vsel %vm632, %v454, %v565
      %v648 = vsel %vm632, %v455, %v567
      %v649 = vsel %vm632, %v456, %v569
      %v650 = vsel %vm632, %v457, %v571
      %v651 = vsel %vm632, %v458, %v573
      %v652 = vsel %vm632, %v459, %v575
      %v653 = vsel %vm632, %v460, %v577
      %v654 = vsel %vm632, %v461, %v579
      %v655 = vsel %vm632, %v462, %v581
      %v656 = vsel %vm632, %v463, %v583
      %v657 = vsel %vm632, %v464, %v585
      %v658 = vsel %vm632, %v465, %v587
      %v659 = vsel %vm632, %v466, %v589
      %v660 = vsel %vm632, %v467, %v591
      %v661 = vsel %vm632, %v468, %v593
      %v662 = vsel %vm632, %v469, %v595
      %v663 = vsel %vm632, %v470, %v597
      %v664 = vsel %vm632, %v471, %v599
      %vm665 = vcmask 64512
      %v666 = vsel %vm665, %v633, 0.0
      %v667 = vsel %vm665, %v634, 0.0
      %v668 = vsel %vm665, %v635, 0.0
      %v669 = vsel %vm665, %v636, 0.0
      %v670 = vsel %vm665, %v637, 0.0
      %v671 = vsel %vm665, %v638, 0.0
      %v672 = vsel %vm665, %v639, 0.0
      %v673 = vsel %vm665, %v640, 0.0
      %v674 = vsel %vm665, %v641, 0.0
      %v675 = vsel %vm665, %v642, 0.0
      %v676 = vsel %vm665, %v643, 0.0
      %v677 = vsel %vm665, %v644, 0.0
      %v678 = vsel %vm665, %v645, 0.0
      %v679 = vsel %vm665, %v646, 0.0
      %v680 = vsel %vm665, %v647, 0.0
      %v681 = vsel %vm665, %v648, 0.0
      %v682 = vsel %vm665, %v649, 0.0
      %v683 = vsel %vm665, %v650, 0.0
      %v684 = vsel %vm665, %v651, 0.0
      %v685 = vsel %vm665, %v652, 0.0
      %v686 = vsel %vm665, %v653, 0.0
      %v687 = vsel %vm665, %v654, 0.0
      %v688 = vsel %vm665, %v655, 0.0
      %v689 = vsel %vm665, %v656, 0.0
      %v690 = vsel %vm665, %v657, 0.0
      %v691 = vsel %vm665, %v658, 0.0
      %v692 = vsel %vm665, %v659, 0.0
      %v693 = vsel %vm665, %v660, 0.0
      %v694 = vsel %vm665, %v661, 0.0
      %v695 = vsel %vm665, %v662, 0.0
      %v696 = vsel %vm665, %v663, 0.0
      %v697 = vsel %vm665, %v664, 0.0
      %s698 = scalar_lea.vmem [#allocation2], 48
      %699 = vst [vmem:[%s698 + $0x8] sm:$0xff] %v666
      %700 = vst [vmem:[%s698 + $0x20] sm:$0xff] %v667
      %701 = vst [vmem:[%s698 + $0x38] sm:$0xff] %v668
      %702 = vst [vmem:[%s698 + $0x50] sm:$0xff] %v669
      %703 = vst [vmem:[%s698 + $0x68] sm:$0xff] %v670
      %704 = vst [vmem:[%s698 + $0x80] sm:$0xff] %v671
      %705 = vst [vmem:[%s698 + $0x98] sm:$0xff] %v672
      %706 = vst [vmem:[%s698 + $0xb0] sm:$0xff] %v673
      %707 = vst [vmem:[%s698 + $0xc8] sm:$0xff] %v674
      %708 = vst [vmem:[%s698 + $0xe0] sm:$0xff] %v675
      %709 = vst [vmem:[%s698 + $0xf8] sm:$0xff] %v676
      %710 = vst [vmem:[%s698 + $0x110] sm:$0xff] %v677
      %711 = vst [vmem:[%s698 + $0x128] sm:$0xff] %v678
      %712 = vst [vmem:[%s698 + $0x140] sm:$0xff] %v679
      %713 = vst [vmem:[%s698 + $0x158] sm:$0xff] %v680
      %714 = vst [vmem:[%s698 + $0x170] sm:$0xff] %v681
      %715 = vst [vmem:[%s698 + $0x188] sm:$0xff] %v682
      %716 = vst [vmem:[%s698 + $0x1a0] sm:$0xff] %v683
      %717 = vst [vmem:[%s698 + $0x1b8] sm:$0xff] %v684
      %718 = vst [vmem:[%s698 + $0x1d0] sm:$0xff] %v685
      %719 = vst [vmem:[%s698 + $0x1e8] sm:$0xff] %v686
      %720 = vst [vmem:[%s698 + $0x200] sm:$0xff] %v687
      %721 = vst [vmem:[%s698 + $0x218] sm:$0xff] %v688
      %722 = vst [vmem:[%s698 + $0x230] sm:$0xff] %v689
      %723 = vst [vmem:[%s698 + $0x248] sm:$0xff] %v690
      %724 = vst [vmem:[%s698 + $0x260] sm:$0xff] %v691
      %725 = vst [vmem:[%s698 + $0x278] sm:$0xff] %v692
      %726 = vst [vmem:[%s698 + $0x290] sm:$0xff] %v693
      %727 = vst [vmem:[%s698 + $0x2a8] sm:$0xff] %v694
      %728 = vst [vmem:[%s698 + $0x2c0] sm:$0xff] %v695
      %729 = vst [vmem:[%s698 + $0x2d8] sm:$0xff] %v696
      %730 = vst [vmem:[%s698 + $0x2f0] sm:$0xff] %v697
      %v731 = vld [vmem:[#allocation2 + $0x8] sm:$0xff]
      %v732 = vld [vmem:[#allocation2 + $0x20] sm:$0xff]
      %v733 = vld [vmem:[#allocation2 + $0x38] sm:$0xff]
      %v734 = vld [vmem:[#allocation2 + $0x50] sm:$0xff]
      %v735 = vld [vmem:[#allocation2 + $0x68] sm:$0xff]
      %v736 = vld [vmem:[#allocation2 + $0x80] sm:$0xff]
      %v737 = vld [vmem:[#allocation2 + $0x98] sm:$0xff]
      %v738 = vld [vmem:[#allocation2 + $0xb0] sm:$0xff]
      %v739 = vld [vmem:[#allocation2 + $0xc8] sm:$0xff]
      %v740 = vld [vmem:[#allocation2 + $0xe0] sm:$0xff]
      %v741 = vld [vmem:[#allocation2 + $0xf8] sm:$0xff]
      %v742 = vld [vmem:[#allocation2 + $0x110] sm:$0xff]
      %v743 = vld [vmem:[#allocation2 + $0x128] sm:$0xff]
      %v744 = vld [vmem:[#allocation2 + $0x140] sm:$0xff]
      %v745 = vld [vmem:[#allocation2 + $0x158] sm:$0xff]
      %v746 = vld [vmem:[#allocation2 + $0x170] sm:$0xff]
      %v747 = vld [vmem:[#allocation2 + $0x188] sm:$0xff]
      %v748 = vld [vmem:[#allocation2 + $0x1a0] sm:$0xff]
      %v749 = vld [vmem:[#allocation2 + $0x1b8] sm:$0xff]
      %v750 = vld [vmem:[#allocation2 + $0x1d0] sm:$0xff]
      %v751 = vld [vmem:[#allocation2 + $0x1e8] sm:$0xff]
      %v752 = vld [vmem:[#allocation2 + $0x200] sm:$0xff]
      %v753 = vld [vmem:[#allocation2 + $0x218] sm:$0xff]
      %v754 = vld [vmem:[#allocation2 + $0x230] sm:$0xff]
      %v755 = vld [vmem:[#allocation2 + $0x248] sm:$0xff]
      %v756 = vld [vmem:[#allocation2 + $0x260] sm:$0xff]
      %v757 = vld [vmem:[#allocation2 + $0x278] sm:$0xff]
      %v758 = vld [vmem:[#allocation2 + $0x290] sm:$0xff]
      %v759 = vld [vmem:[#allocation2 + $0x2a8] sm:$0xff]
      %v760 = vld [vmem:[#allocation2 + $0x2c0] sm:$0xff]
      %v761 = vld [vmem:[#allocation2 + $0x2d8] sm:$0xff]
      %v762 = vld [vmem:[#allocation2 + $0x2f0] sm:$0xff]
      %v763 = vld [vmem:[#allocation2 + $0x308] sm:$0xff]
      %v764 = vld [vmem:[#allocation2 + $0x320] sm:$0xff]
      %v765 = vld [vmem:[#allocation2 + $0x338] sm:$0xff]
      %v766 = vld [vmem:[#allocation2 + $0x350] sm:$0xff]
      %v767 = vrot.slane %v731, 7
      %v768 = vrot.slane %v733, 7
      %v769 = vrot.slane %v735, 7
      %v770 = vrot.slane %v737, 7
      %v771 = vrot.slane %v739, 7
      %v772 = vrot.slane %v741, 7
      %v773 = vrot.slane %v743, 7
      %v774 = vrot.slane %v745, 7
      %v775 = vrot.slane %v747, 7
      %v776 = vrot.slane %v749, 7
      %v777 = vrot.slane %v751, 7
      %v778 = vrot.slane %v753, 7
      %v779 = vrot.slane %v755, 7
      %v780 = vrot.slane %v757, 7
      %v781 = vrot.slane %v759, 7
      %v782 = vrot.slane %v761, 7
      %v783 = vrot.slane %v763, 7
      %v784 = vrot.slane %v765, 7
      %v785 = vrot.slane %v732, 7
      %v786 = vrot.slane %v734, 7
      %v787 = vrot.slane %v736, 7
      %v788 = vrot.slane %v738, 7
      %v789 = vrot.slane %v740, 7
      %v790 = vrot.slane %v742, 7
      %v791 = vrot.slane %v744, 7
      %v792 = vrot.slane %v746, 7
      %v793 = vrot.slane %v748, 7
      %v794 = vrot.slane %v750, 7
      %v795 = vrot.slane %v752, 7
      %v796 = vrot.slane %v754, 7
      %v797 = vrot.slane %v756, 7
      %v798 = vrot.slane %v758, 7
      %v799 = vrot.slane %v760, 7
      %v800 = vrot.slane %v762, 7
      %v801 = vrot.slane %v764, 7
      %v802 = vrot.slane %v766, 7
      %v803 = vlaneseq
      %v804 = vshrl.u32 %v803, 7
      %vm805 = vcmp.lt.s32.totalorder %v804, 1
      %v806 = vsel %vm805, %v767, %v785
      %v807 = vsel %vm805, %v768, %v786
      %v808 = vsel %vm805, %v769, %v787
      %v809 = vsel %vm805, %v770, %v788
      %v810 = vsel %vm805, %v771, %v789
      %v811 = vsel %vm805, %v772, %v790
      %v812 = vsel %vm805, %v773, %v791
      %v813 = vsel %vm805, %v774, %v792
      %v814 = vsel %vm805, %v775, %v793
      %v815 = vsel %vm805, %v776, %v794
      %v816 = vsel %vm805, %v777, %v795
      %v817 = vsel %vm805, %v778, %v796
      %v818 = vsel %vm805, %v779, %v797
      %v819 = vsel %vm805, %v780, %v798
      %v820 = vsel %vm805, %v781, %v799
      %v821 = vsel %vm805, %v782, %v800
      %v822 = vsel %vm805, %v783, %v801
      %v823 = vsel %vm805, %v784, %v802
      %v824 = vsel %vm805, %v785, %v767
      %v825 = vsel %vm805, %v786, %v768
      %v826 = vsel %vm805, %v787, %v769
      %v827 = vsel %vm805, %v788, %v770
      %v828 = vsel %vm805, %v789, %v771
      %v829 = vsel %vm805, %v790, %v772
      %v830 = vsel %vm805, %v791, %v773
      %v831 = vsel %vm805, %v792, %v774
      %v832 = vsel %vm805, %v793, %v775
      %v833 = vsel %vm805, %v794, %v776
      %v834 = vsel %vm805, %v795, %v777
      %v835 = vsel %vm805, %v796, %v778
      %v836 = vsel %vm805, %v797, %v779
      %v837 = vsel %vm805, %v798, %v780
      %v838 = vsel %vm805, %v799, %v781
      %v839 = vsel %vm805, %v800, %v782
      %v840 = vsel %vm805, %v801, %v783
      %v841 = vsel %vm805, %v802, %v784
      %842 = vst [vmem:[#allocation2] sm:$0xff] %v824
      %843 = vst [vmem:[#allocation2 + $0x18] sm:$0xff] %v806
      %844 = vst [vmem:[#allocation2 + $0x30] sm:$0xff] %v825
      %845 = vst [vmem:[#allocation2 + $0x48] sm:$0xff] %v807
      %846 = vst [vmem:[#allocation2 + $0x60] sm:$0xff] %v826
      %847 = vst [vmem:[#allocation2 + $0x78] sm:$0xff] %v808
      %848 = vst [vmem:[#allocation2 + $0x90] sm:$0xff] %v827
      %849 = vst [vmem:[#allocation2 + $0xa8] sm:$0xff] %v809
      %850 = vst [vmem:[#allocation2 + $0xc0] sm:$0xff] %v828
      %851 = vst [vmem:[#allocation2 + $0xd8] sm:$0xff] %v810
      %852 = vst [vmem:[#allocation2 + $0xf0] sm:$0xff] %v829
      %853 = vst [vmem:[#allocation2 + $0x108] sm:$0xff] %v811
      %854 = vst [vmem:[#allocation2 + $0x120] sm:$0xff] %v830
      %855 = vst [vmem:[#allocation2 + $0x138] sm:$0xff] %v812
      %856 = vst [vmem:[#allocation2 + $0x150] sm:$0xff] %v831
      %857 = vst [vmem:[#allocation2 + $0x168] sm:$0xff] %v813
      %858 = vst [vmem:[#allocation2 + $0x180] sm:$0xff] %v832
      %859 = vst [vmem:[#allocation2 + $0x198] sm:$0xff] %v814
      %860 = vst [vmem:[#allocation2 + $0x1b0] sm:$0xff] %v833
      %861 = vst [vmem:[#allocation2 + $0x1c8] sm:$0xff] %v815
      %862 = vst [vmem:[#allocation2 + $0x1e0] sm:$0xff] %v834
      %863 = vst [vmem:[#allocation2 + $0x1f8] sm:$0xff] %v816
      %864 = vst [vmem:[#allocation2 + $0x210] sm:$0xff] %v835
      %865 = vst [vmem:[#allocation2 + $0x228] sm:$0xff] %v817
      %866 = vst [vmem:[#allocation2 + $0x240] sm:$0xff] %v836
      %867 = vst [vmem:[#allocation2 + $0x258] sm:$0xff] %v818
      %868 = vst [vmem:[#allocation2 + $0x270] sm:$0xff] %v837
      %869 = vst [vmem:[#allocation2 + $0x288] sm:$0xff] %v819
      %870 = vst [vmem:[#allocation2 + $0x2a0] sm:$0xff] %v838
      %871 = vst [vmem:[#allocation2 + $0x2b8] sm:$0xff] %v820
      %872 = vst [vmem:[#allocation2 + $0x2d0] sm:$0xff] %v839
      %873 = vst [vmem:[#allocation2 + $0x2e8] sm:$0xff] %v821
      %874 = vst [vmem:[#allocation2 + $0x300] sm:$0xff] %v840
      %875 = vst [vmem:[#allocation2 + $0x318] sm:$0xff] %v822
      %876 = vst [vmem:[#allocation2 + $0x330] sm:$0xff] %v841
      %877 = vst [vmem:[#allocation2 + $0x348] sm:$0xff] %v823
      %878 = vst [vmem:[#allocation2] sm:$0x1] 0.0
      %879 = vst [vmem:[#allocation2 + $0x30] sm:$0x1] 0.0
      %880 = vst [vmem:[#allocation2 + $0x60] sm:$0x1] 0.0
      %881 = vst [vmem:[#allocation2 + $0x90] sm:$0x1] 0.0
      %882 = vst [vmem:[#allocation2 + $0xc0] sm:$0x1] 0.0
      %883 = vst [vmem:[#allocation2 + $0xf0] sm:$0x1] 0.0
      %884 = vst [vmem:[#allocation2 + $0x120] sm:$0x1] 0.0
      %885 = vst [vmem:[#allocation2 + $0x150] sm:$0x1] 0.0
      %886 = vst [vmem:[#allocation2 + $0x180] sm:$0x1] 0.0
      %887 = vst [vmem:[#allocation2 + $0x1b0] sm:$0x1] 0.0
      %888 = vst [vmem:[#allocation2 + $0x1e0] sm:$0x1] 0.0
      %889 = vst [vmem:[#allocation2 + $0x210] sm:$0x1] 0.0
      %890 = vst [vmem:[#allocation2 + $0x240] sm:$0x1] 0.0
      %891 = vst [vmem:[#allocation2 + $0x270] sm:$0x1] 0.0
      %892 = vst [vmem:[#allocation2 + $0x2a0] sm:$0x1] 0.0
      %893 = vst [vmem:[#allocation2 + $0x2d0] sm:$0x1] 0.0
      %894 = vst [vmem:[#allocation2 + $0x300] sm:$0x1] 0.0
      %895 = vst [vmem:[#allocation2 + $0x330] sm:$0x1] 0.0
      %v896 = vrot.slane %v731, 1
      %v897 = vrot.slane %v733, 1
      %v898 = vrot.slane %v735, 1
      %v899 = vrot.slane %v737, 1
      %v900 = vrot.slane %v739, 1
      %v901 = vrot.slane %v741, 1
      %v902 = vrot.slane %v743, 1
      %v903 = vrot.slane %v745, 1
      %v904 = vrot.slane %v747, 1
      %v905 = vrot.slane %v749, 1
      %v906 = vrot.slane %v751, 1
      %v907 = vrot.slane %v753, 1
      %v908 = vrot.slane %v755, 1
      %v909 = vrot.slane %v757, 1
      %v910 = vrot.slane %v759, 1
      %v911 = vrot.slane %v761, 1
      %v912 = vrot.slane %v763, 1
      %v913 = vrot.slane %v765, 1
      %v914 = vrot.slane %v732, 1
      %v915 = vrot.slane %v734, 1
      %v916 = vrot.slane %v736, 1
      %v917 = vrot.slane %v738, 1
      %v918 = vrot.slane %v740, 1
      %v919 = vrot.slane %v742, 1
      %v920 = vrot.slane %v744, 1
      %v921 = vrot.slane %v746, 1
      %v922 = vrot.slane %v748, 1
      %v923 = vrot.slane %v750, 1
      %v924 = vrot.slane %v752, 1
      %v925 = vrot.slane %v754, 1
      %v926 = vrot.slane %v756, 1
      %v927 = vrot.slane %v758, 1
      %v928 = vrot.slane %v760, 1
      %v929 = vrot.slane %v762, 1
      %v930 = vrot.slane %v764, 1
      %v931 = vrot.slane %v766, 1
      %vm932 = vcmp.lt.s32.totalorder %v804, 7
      %v933 = vsel %vm932, %v896, %v914
      %v934 = vsel %vm932, %v897, %v915
      %v935 = vsel %vm932, %v898, %v916
      %v936 = vsel %vm932, %v899, %v917
      %v937 = vsel %vm932, %v900, %v918
      %v938 = vsel %vm932, %v901, %v919
      %v939 = vsel %vm932, %v902, %v920
      %v940 = vsel %vm932, %v903, %v921
      %v941 = vsel %vm932, %v904, %v922
      %v942 = vsel %vm932, %v905, %v923
      %v943 = vsel %vm932, %v906, %v924
      %v944 = vsel %vm932, %v907, %v925
      %v945 = vsel %vm932, %v908, %v926
      %v946 = vsel %vm932, %v909, %v927
      %v947 = vsel %vm932, %v910, %v928
      %v948 = vsel %vm932, %v911, %v929
      %v949 = vsel %vm932, %v912, %v930
      %v950 = vsel %vm932, %v913, %v931
      %v951 = vsel %vm932, %v914, %v896
      %v952 = vsel %vm932, %v915, %v897
      %v953 = vsel %vm932, %v916, %v898
      %v954 = vsel %vm932, %v917, %v899
      %v955 = vsel %vm932, %v918, %v900
      %v956 = vsel %vm932, %v919, %v901
      %v957 = vsel %vm932, %v920, %v902
      %v958 = vsel %vm932, %v921, %v903
      %v959 = vsel %vm932, %v922, %v904
      %v960 = vsel %vm932, %v923, %v905
      %v961 = vsel %vm932, %v924, %v906
      %v962 = vsel %vm932, %v925, %v907
      %v963 = vsel %vm932, %v926, %v908
      %v964 = vsel %vm932, %v927, %v909
      %v965 = vsel %vm932, %v928, %v910
      %v966 = vsel %vm932, %v929, %v911
      %v967 = vsel %vm932, %v930, %v912
      %v968 = vsel %vm932, %v931, %v913
      %969 = vst [vmem:[#allocation2 + $0x10] sm:$0xff] %v933
      %970 = vst [vmem:[#allocation2 + $0x28] sm:$0xff] %v951
      %971 = vst [vmem:[#allocation2 + $0x40] sm:$0xff] %v934
      %972 = vst [vmem:[#allocation2 + $0x58] sm:$0xff] %v952
      %973 = vst [vmem:[#allocation2 + $0x70] sm:$0xff] %v935
      %974 = vst [vmem:[#allocation2 + $0x88] sm:$0xff] %v953
      %975 = vst [vmem:[#allocation2 + $0xa0] sm:$0xff] %v936
      %976 = vst [vmem:[#allocation2 + $0xb8] sm:$0xff] %v954
      %977 = vst [vmem:[#allocation2 + $0xd0] sm:$0xff] %v937
      %978 = vst [vmem:[#allocation2 + $0xe8] sm:$0xff] %v955
      %979 = vst [vmem:[#allocation2 + $0x100] sm:$0xff] %v938
      %980 = vst [vmem:[#allocation2 + $0x118] sm:$0xff] %v956
      %981 = vst [vmem:[#allocation2 + $0x130] sm:$0xff] %v939
      %982 = vst [vmem:[#allocation2 + $0x148] sm:$0xff] %v957
      %983 = vst [vmem:[#allocation2 + $0x160] sm:$0xff] %v940
      %984 = vst [vmem:[#allocation2 + $0x178] sm:$0xff] %v958
      %985 = vst [vmem:[#allocation2 + $0x190] sm:$0xff] %v941
      %986 = vst [vmem:[#allocation2 + $0x1a8] sm:$0xff] %v959
      %987 = vst [vmem:[#allocation2 + $0x1c0] sm:$0xff] %v942
      %988 = vst [vmem:[#allocation2 + $0x1d8] sm:$0xff] %v960
      %989 = vst [vmem:[#allocation2 + $0x1f0] sm:$0xff] %v943
      %990 = vst [vmem:[#allocation2 + $0x208] sm:$0xff] %v961
      %991 = vst [vmem:[#allocation2 + $0x220] sm:$0xff] %v944
      %992 = vst [vmem:[#allocation2 + $0x238] sm:$0xff] %v962
      %993 = vst [vmem:[#allocation2 + $0x250] sm:$0xff] %v945
      %994 = vst [vmem:[#allocation2 + $0x268] sm:$0xff] %v963
      %995 = vst [vmem:[#allocation2 + $0x280] sm:$0xff] %v946
      %996 = vst [vmem:[#allocation2 + $0x298] sm:$0xff] %v964
      %997 = vst [vmem:[#allocation2 + $0x2b0] sm:$0xff] %v947
      %998 = vst [vmem:[#allocation2 + $0x2c8] sm:$0xff] %v965
      %999 = vst [vmem:[#allocation2 + $0x2e0] sm:$0xff] %v948
      %1000 = vst [vmem:[#allocation2 + $0x2f8] sm:$0xff] %v966
      %1001 = vst [vmem:[#allocation2 + $0x310] sm:$0xff] %v949
      %1002 = vst [vmem:[#allocation2 + $0x328] sm:$0xff] %v967
      %1003 = vst [vmem:[#allocation2 + $0x340] sm:$0xff] %v950
      %1004 = vst [vmem:[#allocation2 + $0x358] sm:$0xff] %v968
      %1005 = vst [vmem:[#allocation2 + $0x2f] sm:$0x1] 0.0
      %1006 = vst [vmem:[#allocation2 + $0x5f] sm:$0x1] 0.0
      %1007 = vst [vmem:[#allocation2 + $0x8f] sm:$0x1] 0.0
      %1008 = vst [vmem:[#allocation2 + $0xbf] sm:$0x1] 0.0
      %1009 = vst [vmem:[#allocation2 + $0xef] sm:$0x1] 0.0
      %1010 = vst [vmem:[#allocation2 + $0x11f] sm:$0x1] 0.0
      %1011 = vst [vmem:[#allocation2 + $0x14f] sm:$0x1] 0.0
      %1012 = vst [vmem:[#allocation2 + $0x17f] sm:$0x1] 0.0
      %1013 = vst [vmem:[#allocation2 + $0x1af] sm:$0x1] 0.0
      %1014 = vst [vmem:[#allocation2 + $0x1df] sm:$0x1] 0.0
      %1015 = vst [vmem:[#allocation2 + $0x20f] sm:$0x1] 0.0
      %1016 = vst [vmem:[#allocation2 + $0x23f] sm:$0x1] 0.0
      %1017 = vst [vmem:[#allocation2 + $0x26f] sm:$0x1] 0.0
      %1018 = vst [vmem:[#allocation2 + $0x29f] sm:$0x1] 0.0
      %1019 = vst [vmem:[#allocation2 + $0x2cf] sm:$0x1] 0.0
      %1020 = vst [vmem:[#allocation2 + $0x2ff] sm:$0x1] 0.0
      %1021 = vst [vmem:[#allocation2 + $0x32f] sm:$0x1] 0.0
      %1022 = vst [vmem:[#allocation2 + $0x35f] sm:$0x1] 0.0
      %v1023 = vld [vmem:[#allocation2] sm:$0xff]
      %v1024 = vld [vmem:[#allocation2 + $0x8] sm:$0xff]
      %v1025 = vld [vmem:[#allocation2 + $0x10] sm:$0xff]
      %v1026 = vld [vmem:[#allocation2 + $0x18] sm:$0xff]
      %v1027 = vld [vmem:[#allocation2 + $0x20] sm:$0xff]
      %v1028 = vld [vmem:[#allocation2 + $0x28] sm:$0xff]
      %v1029 = vld [vmem:[#allocation2 + $0x30] sm:$0xff]
      %v1030 = vld [vmem:[#allocation2 + $0x38] sm:$0xff]
      %v1031 = vld [vmem:[#allocation2 + $0x40] sm:$0xff]
      %v1032 = vld [vmem:[#allocation2 + $0x48] sm:$0xff]
      %v1033 = vld [vmem:[#allocation2 + $0x50] sm:$0xff]
      %v1034 = vld [vmem:[#allocation2 + $0x58] sm:$0xff]
      %v1035 = vld [vmem:[#allocation2 + $0x60] sm:$0xff]
      %v1036 = vld [vmem:[#allocation2 + $0x68] sm:$0xff]
      %v1037 = vld [vmem:[#allocation2 + $0x70] sm:$0xff]
      %v1038 = vld [vmem:[#allocation2 + $0x78] sm:$0xff]
      %v1039 = vld [vmem:[#allocation2 + $0x80] sm:$0xff]
      %v1040 = vld [vmem:[#allocation2 + $0x88] sm:$0xff]
      %v1041 = vld [vmem:[#allocation2 + $0x90] sm:$0xff]
      %v1042 = vld [vmem:[#allocation2 + $0x98] sm:$0xff]
      %v1043 = vld [vmem:[#allocation2 + $0xa0] sm:$0xff]
      %v1044 = vld [vmem:[#allocation2 + $0xa8] sm:$0xff]
      %v1045 = vld [vmem:[#allocation2 + $0xb0] sm:$0xff]
      %v1046 = vld [vmem:[#allocation2 + $0xb8] sm:$0xff]
      %v1047 = vld [vmem:[#allocation2 + $0xc0] sm:$0xff]
      %v1048 = vld [vmem:[#allocation2 + $0xc8] sm:$0xff]
      %v1049 = vld [vmem:[#allocation2 + $0xd0] sm:$0xff]
      %v1050 = vld [vmem:[#allocation2 + $0xd8] sm:$0xff]
      %v1051 = vld [vmem:[#allocation2 + $0xe0] sm:$0xff]
      %v1052 = vld [vmem:[#allocation2 + $0xe8] sm:$0xff]
      %v1053 = vld [vmem:[#allocation2 + $0xf0] sm:$0xff]
      %v1054 = vld [vmem:[#allocation2 + $0xf8] sm:$0xff]
      %v1055 = vld [vmem:[#allocation2 + $0x100] sm:$0xff]
      %v1056 = vld [vmem:[#allocation2 + $0x108] sm:$0xff]
      %v1057 = vld [vmem:[#allocation2 + $0x110] sm:$0xff]
      %v1058 = vld [vmem:[#allocation2 + $0x118] sm:$0xff]
      %v1059 = vld [vmem:[#allocation2 + $0x120] sm:$0xff]
      %v1060 = vld [vmem:[#allocation2 + $0x128] sm:$0xff]
      %v1061 = vld [vmem:[#allocation2 + $0x130] sm:$0xff]
      %v1062 = vld [vmem:[#allocation2 + $0x138] sm:$0xff]
      %v1063 = vld [vmem:[#allocation2 + $0x140] sm:$0xff]
      %v1064 = vld [vmem:[#allocation2 + $0x148] sm:$0xff]
      %v1065 = vld [vmem:[#allocation2 + $0x150] sm:$0xff]
      %v1066 = vld [vmem:[#allocation2 + $0x158] sm:$0xff]
      %v1067 = vld [vmem:[#allocation2 + $0x160] sm:$0xff]
      %v1068 = vld [vmem:[#allocation2 + $0x168] sm:$0xff]
      %v1069 = vld [vmem:[#allocation2 + $0x170] sm:$0xff]
      %v1070 = vld [vmem:[#allocation2 + $0x178] sm:$0xff]
      %v1071 = vld [vmem:[#allocation2 + $0x180] sm:$0xff]
      %v1072 = vld [vmem:[#allocation2 + $0x188] sm:$0xff]
      %v1073 = vld [vmem:[#allocation2 + $0x190] sm:$0xff]
      %v1074 = vld [vmem:[#allocation2 + $0x198] sm:$0xff]
      %v1075 = vld [vmem:[#allocation2 + $0x1a0] sm:$0xff]
      %v1076 = vld [vmem:[#allocation2 + $0x1a8] sm:$0xff]
      %v1077 = vld [vmem:[#allocation2 + $0x1b0] sm:$0xff]
      %v1078 = vld [vmem:[#allocation2 + $0x1b8] sm:$0xff]
      %v1079 = vld [vmem:[#allocation2 + $0x1c0] sm:$0xff]
      %v1080 = vld [vmem:[#allocation2 + $0x1c8] sm:$0xff]
      %v1081 = vld [vmem:[#allocation2 + $0x1d0] sm:$0xff]
      %v1082 = vld [vmem:[#allocation2 + $0x1d8] sm:$0xff]
      %v1083 = vld [vmem:[#allocation2 + $0x1e0] sm:$0xff]
      %v1084 = vld [vmem:[#allocation2 + $0x1e8] sm:$0xff]
      %v1085 = vld [vmem:[#allocation2 + $0x1f0] sm:$0xff]
      %v1086 = vld [vmem:[#allocation2 + $0x1f8] sm:$0xff]
      %v1087 = vld [vmem:[#allocation2 + $0x200] sm:$0xff]
      %v1088 = vld [vmem:[#allocation2 + $0x208] sm:$0xff]
      %v1089 = vld [vmem:[#allocation2 + $0x210] sm:$0xff]
      %v1090 = vld [vmem:[#allocation2 + $0x218] sm:$0xff]
      %v1091 = vld [vmem:[#allocation2 + $0x220] sm:$0xff]
      %v1092 = vld [vmem:[#allocation2 + $0x228] sm:$0xff]
      %v1093 = vld [vmem:[#allocation2 + $0x230] sm:$0xff]
      %v1094 = vld [vmem:[#allocation2 + $0x238] sm:$0xff]
      %v1095 = vld [vmem:[#allocation2 + $0x240] sm:$0xff]
      %v1096 = vld [vmem:[#allocation2 + $0x248] sm:$0xff]
      %v1097 = vld [vmem:[#allocation2 + $0x250] sm:$0xff]
      %v1098 = vld [vmem:[#allocation2 + $0x258] sm:$0xff]
      %v1099 = vld [vmem:[#allocation2 + $0x260] sm:$0xff]
      %v1100 = vld [vmem:[#allocation2 + $0x268] sm:$0xff]
      %v1101 = vld [vmem:[#allocation2 + $0x270] sm:$0xff]
      %v1102 = vld [vmem:[#allocation2 + $0x278] sm:$0xff]
      %v1103 = vld [vmem:[#allocation2 + $0x280] sm:$0xff]
      %v1104 = vld [vmem:[#allocation2 + $0x288] sm:$0xff]
      %v1105 = vld [vmem:[#allocation2 + $0x290] sm:$0xff]
      %v1106 = vld [vmem:[#allocation2 + $0x298] sm:$0xff]
      %v1107 = vld [vmem:[#allocation2 + $0x2a0] sm:$0xff]
      %v1108 = vld [vmem:[#allocation2 + $0x2a8] sm:$0xff]
      %v1109 = vld [vmem:[#allocation2 + $0x2b0] sm:$0xff]
      %v1110 = vld [vmem:[#allocation2 + $0x2b8] sm:$0xff]
      %v1111 = vld [vmem:[#allocation2 + $0x2c0] sm:$0xff]
      %v1112 = vld [vmem:[#allocation2 + $0x2c8] sm:$0xff]
      %v1113 = vld [vmem:[#allocation2 + $0x2d0] sm:$0xff]
      %v1114 = vld [vmem:[#allocation2 + $0x2d8] sm:$0xff]
      %v1115 = vld [vmem:[#allocation2 + $0x2e0] sm:$0xff]
      %v1116 = vld [vmem:[#allocation2 + $0x2e8] sm:$0xff]
      %v1117 = vld [vmem:[#allocation2 + $0x2f0] sm:$0xff]
      %v1118 = vld [vmem:[#allocation2 + $0x2f8] sm:$0xff]
      %v1119 = vpack.c.bf16 %v1026, %v1023
      %v1120 = vpack.c.bf16 %v1027, %v1024
      %v1121 = vpack.c.bf16 %v1028, %v1025
      %v1122 = vpack.c.bf16 %v1032, %v1029
      %v1123 = vpack.c.bf16 %v1033, %v1030
      %v1124 = vpack.c.bf16 %v1034, %v1031
      %v1125 = vpack.c.bf16 %v1038, %v1035
      %v1126 = vpack.c.bf16 %v1039, %v1036
      %v1127 = vpack.c.bf16 %v1040, %v1037
      %v1128 = vpack.c.bf16 %v1044, %v1041
      %v1129 = vpack.c.bf16 %v1045, %v1042
      %v1130 = vpack.c.bf16 %v1046, %v1043
      %v1131 = vpack.c.bf16 %v1050, %v1047
      %v1132 = vpack.c.bf16 %v1051, %v1048
      %v1133 = vpack.c.bf16 %v1052, %v1049
      %v1134 = vpack.c.bf16 %v1056, %v1053
      %v1135 = vpack.c.bf16 %v1057, %v1054
      %v1136 = vpack.c.bf16 %v1058, %v1055
      %v1137 = vpack.c.bf16 %v1062, %v1059
      %v1138 = vpack.c.bf16 %v1063, %v1060
      %v1139 = vpack.c.bf16 %v1064, %v1061
      %v1140 = vpack.c.bf16 %v1068, %v1065
      %v1141 = vpack.c.bf16 %v1069, %v1066
      %v1142 = vpack.c.bf16 %v1070, %v1067
      %v1143 = vpack.c.bf16 %v1074, %v1071
      %v1144 = vpack.c.bf16 %v1075, %v1072
      %v1145 = vpack.c.bf16 %v1076, %v1073
      %v1146 = vpack.c.bf16 %v1080, %v1077
      %v1147 = vpack.c.bf16 %v1081, %v1078
      %v1148 = vpack.c.bf16 %v1082, %v1079
      %v1149 = vpack.c.bf16 %v1086, %v1083
      %v1150 = vpack.c.bf16 %v1087, %v1084
      %v1151 = vpack.c.bf16 %v1088, %v1085
      %v1152 = vpack.c.bf16 %v1092, %v1089
      %v1153 = vpack.c.bf16 %v1093, %v1090
      %v1154 = vpack.c.bf16 %v1094, %v1091
      %v1155 = vpack.c.bf16 %v1098, %v1095
      %v1156 = vpack.c.bf16 %v1099, %v1096
      %v1157 = vpack.c.bf16 %v1100, %v1097
      %v1158 = vpack.c.bf16 %v1104, %v1101
      %v1159 = vpack.c.bf16 %v1105, %v1102
      %v1160 = vpack.c.bf16 %v1106, %v1103
      %v1161 = vpack.c.bf16 %v1110, %v1107
      %v1162 = vpack.c.bf16 %v1111, %v1108
      %v1163 = vpack.c.bf16 %v1112, %v1109
      %v1164 = vpack.c.bf16 %v1116, %v1113
      %v1165 = vpack.c.bf16 %v1117, %v1114
      %v1166 = vpack.c.bf16 %v1118, %v1115
      %v1167 = vld [vmem:[%s2] sm:$0xf]
      %v1168 = vld [vmem:[%s2 + $0x4] sm:$0xf]
      %v1169 = vld [vmem:[%s2 + $0x8] sm:$0xf]
      %v1170 = vld [vmem:[%s2 + $0xc] sm:$0xf]
      %v1171 = vld [vmem:[%s2 + $0x10] sm:$0xf]
      %v1172 = vld [vmem:[%s2 + $0x14] sm:$0xf]
      %v1173 = vld [vmem:[%s2 + $0x18] sm:$0xf]
      %v1174 = vld [vmem:[%s2 + $0x1c] sm:$0xf]
      %v1175 = vld [vmem:[%s2 + $0x20] sm:$0xf]
      %v1176 = vld [vmem:[%s2 + $0x24] sm:$0xf]
      %v1177 = vld [vmem:[%s2 + $0x28] sm:$0xf]
      %v1178 = vld [vmem:[%s2 + $0x2c] sm:$0xf]
      %v1179 = vld [vmem:[%s2 + $0x30] sm:$0xf]
      %v1180 = vld [vmem:[%s2 + $0x34] sm:$0xf]
      %v1181 = vld [vmem:[%s2 + $0x38] sm:$0xf]
      %v1182 = vld [vmem:[%s2 + $0x3c] sm:$0xf]
      %v1183 = vld [vmem:[%s2 + $0x40] sm:$0xf]
      %v1184 = vld [vmem:[%s2 + $0x44] sm:$0xf]
      %v1185 = vld [vmem:[%s2 + $0x48] sm:$0xf]
      %v1186 = vld [vmem:[%s2 + $0x4c] sm:$0xf]
      %v1187 = vld [vmem:[%s2 + $0x50] sm:$0xf]
      %v1188 = vld [vmem:[%s2 + $0x54] sm:$0xf]
      %v1189 = vld [vmem:[%s2 + $0x58] sm:$0xf]
      %v1190 = vld [vmem:[%s2 + $0x5c] sm:$0xf]
      %v1191 = vld [vmem:[%s2 + $0x60] sm:$0xf]
      %v1192 = vld [vmem:[%s2 + $0x64] sm:$0xf]
      %v1193 = vld [vmem:[%s2 + $0x68] sm:$0xf]
      %v1194 = vld [vmem:[%s2 + $0x6c] sm:$0xf]
      %v1195 = vld [vmem:[%s2 + $0x70] sm:$0xf]
      %v1196 = vld [vmem:[%s2 + $0x74] sm:$0xf]
      %v1197 = vld [vmem:[%s2 + $0x78] sm:$0xf]
      %v1198 = vld [vmem:[%s2 + $0x7c] sm:$0xf]
      %v1199 = vld [vmem:[%s2 + $0x80] sm:$0xf]
      %v1200 = vld [vmem:[%s2 + $0x84] sm:$0xf]
      %v1201 = vld [vmem:[%s2 + $0x88] sm:$0xf]
      %v1202 = vld [vmem:[%s2 + $0x8c] sm:$0xf]
      %v1203 = vld [vmem:[%s2 + $0x90] sm:$0xf]
      %v1204 = vld [vmem:[%s2 + $0x94] sm:$0xf]
      %v1205 = vld [vmem:[%s2 + $0x98] sm:$0xf]
      %v1206 = vld [vmem:[%s2 + $0x9c] sm:$0xf]
      %v1207 = vld [vmem:[%s2 + $0xa0] sm:$0xf]
      %v1208 = vld [vmem:[%s2 + $0xa4] sm:$0xf]
      %v1209 = vld [vmem:[%s2 + $0xa8] sm:$0xf]
      %v1210 = vld [vmem:[%s2 + $0xac] sm:$0xf]
      %v1211 = vld [vmem:[%s2 + $0xb0] sm:$0xf]
      %v1212 = vld [vmem:[%s2 + $0xb4] sm:$0xf]
      %v1213 = vld [vmem:[%s2 + $0xb8] sm:$0xf]
      %v1214 = vld [vmem:[%s2 + $0xbc] sm:$0xf]
      %v1215 = vld [vmem:[%s698] sm:$0xff]
      %v1216 = vld [vmem:[%s698 + $0x8] sm:$0xff]
      %v1217 = vld [vmem:[%s698 + $0x10] sm:$0xff]
      %v1218 = vld [vmem:[%s698 + $0x18] sm:$0xff]
      %v1219 = vld [vmem:[%s698 + $0x20] sm:$0xff]
      %v1220 = vld [vmem:[%s698 + $0x28] sm:$0xff]
      %v1221 = vld [vmem:[%s698 + $0x30] sm:$0xff]
      %v1222 = vld [vmem:[%s698 + $0x38] sm:$0xff]
      %v1223 = vld [vmem:[%s698 + $0x40] sm:$0xff]
      %v1224 = vld [vmem:[%s698 + $0x48] sm:$0xff]
      %v1225 = vld [vmem:[%s698 + $0x50] sm:$0xff]
      %v1226 = vld [vmem:[%s698 + $0x58] sm:$0xff]
      %v1227 = vld [vmem:[%s698 + $0x60] sm:$0xff]
      %v1228 = vld [vmem:[%s698 + $0x68] sm:$0xff]
      %v1229 = vld [vmem:[%s698 + $0x70] sm:$0xff]
      %v1230 = vld [vmem:[%s698 + $0x78] sm:$0xff]
      %v1231 = vld [vmem:[%s698 + $0x80] sm:$0xff]
      %v1232 = vld [vmem:[%s698 + $0x88] sm:$0xff]
      %v1233 = vld [vmem:[%s698 + $0x90] sm:$0xff]
      %v1234 = vld [vmem:[%s698 + $0x98] sm:$0xff]
      %v1235 = vld [vmem:[%s698 + $0xa0] sm:$0xff]
      %v1236 = vld [vmem:[%s698 + $0xa8] sm:$0xff]
      %v1237 = vld [vmem:[%s698 + $0xb0] sm:$0xff]
      %v1238 = vld [vmem:[%s698 + $0xb8] sm:$0xff]
      %v1239 = vld [vmem:[%s698 + $0xc0] sm:$0xff]
      %v1240 = vld [vmem:[%s698 + $0xc8] sm:$0xff]
      %v1241 = vld [vmem:[%s698 + $0xd0] sm:$0xff]
      %v1242 = vld [vmem:[%s698 + $0xd8] sm:$0xff]
      %v1243 = vld [vmem:[%s698 + $0xe0] sm:$0xff]
      %v1244 = vld [vmem:[%s698 + $0xe8] sm:$0xff]
      %v1245 = vld [vmem:[%s698 + $0xf0] sm:$0xff]
      %v1246 = vld [vmem:[%s698 + $0xf8] sm:$0xff]
      %v1247 = vld [vmem:[%s698 + $0x100] sm:$0xff]
      %v1248 = vld [vmem:[%s698 + $0x108] sm:$0xff]
      %v1249 = vld [vmem:[%s698 + $0x110] sm:$0xff]
      %v1250 = vld [vmem:[%s698 + $0x118] sm:$0xff]
      %v1251 = vld [vmem:[%s698 + $0x120] sm:$0xff]
      %v1252 = vld [vmem:[%s698 + $0x128] sm:$0xff]
      %v1253 = vld [vmem:[%s698 + $0x130] sm:$0xff]
      %v1254 = vld [vmem:[%s698 + $0x138] sm:$0xff]
      %v1255 = vld [vmem:[%s698 + $0x140] sm:$0xff]
      %v1256 = vld [vmem:[%s698 + $0x148] sm:$0xff]
      %v1257 = vld [vmem:[%s698 + $0x150] sm:$0xff]
      %v1258 = vld [vmem:[%s698 + $0x158] sm:$0xff]
      %v1259 = vld [vmem:[%s698 + $0x160] sm:$0xff]
      %v1260 = vld [vmem:[%s698 + $0x168] sm:$0xff]
      %v1261 = vld [vmem:[%s698 + $0x170] sm:$0xff]
      %v1262 = vld [vmem:[%s698 + $0x178] sm:$0xff]
      %v1263 = vld [vmem:[%s698 + $0x180] sm:$0xff]
      %v1264 = vld [vmem:[%s698 + $0x188] sm:$0xff]
      %v1265 = vld [vmem:[%s698 + $0x190] sm:$0xff]
      %v1266 = vld [vmem:[%s698 + $0x198] sm:$0xff]
      %v1267 = vld [vmem:[%s698 + $0x1a0] sm:$0xff]
      %v1268 = vld [vmem:[%s698 + $0x1a8] sm:$0xff]
      %v1269 = vld [vmem:[%s698 + $0x1b0] sm:$0xff]
      %v1270 = vld [vmem:[%s698 + $0x1b8] sm:$0xff]
      %v1271 = vld [vmem:[%s698 + $0x1c0] sm:$0xff]
      %v1272 = vld [vmem:[%s698 + $0x1c8] sm:$0xff]
      %v1273 = vld [vmem:[%s698 + $0x1d0] sm:$0xff]
      %v1274 = vld [vmem:[%s698 + $0x1d8] sm:$0xff]
      %v1275 = vld [vmem:[%s698 + $0x1e0] sm:$0xff]
      %v1276 = vld [vmem:[%s698 + $0x1e8] sm:$0xff]
      %v1277 = vld [vmem:[%s698 + $0x1f0] sm:$0xff]
      %v1278 = vld [vmem:[%s698 + $0x1f8] sm:$0xff]
      %v1279 = vld [vmem:[%s698 + $0x200] sm:$0xff]
      %v1280 = vld [vmem:[%s698 + $0x208] sm:$0xff]
      %v1281 = vld [vmem:[%s698 + $0x210] sm:$0xff]
      %v1282 = vld [vmem:[%s698 + $0x218] sm:$0xff]
      %v1283 = vld [vmem:[%s698 + $0x220] sm:$0xff]
      %v1284 = vld [vmem:[%s698 + $0x228] sm:$0xff]
      %v1285 = vld [vmem:[%s698 + $0x230] sm:$0xff]
      %v1286 = vld [vmem:[%s698 + $0x238] sm:$0xff]
      %v1287 = vld [vmem:[%s698 + $0x240] sm:$0xff]
      %v1288 = vld [vmem:[%s698 + $0x248] sm:$0xff]
      %v1289 = vld [vmem:[%s698 + $0x250] sm:$0xff]
      %v1290 = vld [vmem:[%s698 + $0x258] sm:$0xff]
      %v1291 = vld [vmem:[%s698 + $0x260] sm:$0xff]
      %v1292 = vld [vmem:[%s698 + $0x268] sm:$0xff]
      %v1293 = vld [vmem:[%s698 + $0x270] sm:$0xff]
      %v1294 = vld [vmem:[%s698 + $0x278] sm:$0xff]
      %v1295 = vld [vmem:[%s698 + $0x280] sm:$0xff]
      %v1296 = vld [vmem:[%s698 + $0x288] sm:$0xff]
      %v1297 = vld [vmem:[%s698 + $0x290] sm:$0xff]
      %v1298 = vld [vmem:[%s698 + $0x298] sm:$0xff]
      %v1299 = vld [vmem:[%s698 + $0x2a0] sm:$0xff]
      %v1300 = vld [vmem:[%s698 + $0x2a8] sm:$0xff]
      %v1301 = vld [vmem:[%s698 + $0x2b0] sm:$0xff]
      %v1302 = vld [vmem:[%s698 + $0x2b8] sm:$0xff]
      %v1303 = vld [vmem:[%s698 + $0x2c0] sm:$0xff]
      %v1304 = vld [vmem:[%s698 + $0x2c8] sm:$0xff]
      %v1305 = vld [vmem:[%s698 + $0x2d0] sm:$0xff]
      %v1306 = vld [vmem:[%s698 + $0x2d8] sm:$0xff]
      %v1307 = vld [vmem:[%s698 + $0x2e0] sm:$0xff]
      %v1308 = vld [vmem:[%s698 + $0x2e8] sm:$0xff]
      %v1309 = vld [vmem:[%s698 + $0x2f0] sm:$0xff]
      %v1310 = vld [vmem:[%s698 + $0x2f8] sm:$0xff]
      %v1311 = vpack.c.bf16 %v1218, %v1215
      %v1312 = vpack.c.bf16 %v1219, %v1216
      %v1313 = vpack.c.bf16 %v1220, %v1217
      %v1314 = vpack.c.bf16 %v1224, %v1221
      %v1315 = vpack.c.bf16 %v1225, %v1222
      %v1316 = vpack.c.bf16 %v1226, %v1223
      %v1317 = vpack.c.bf16 %v1230, %v1227
      %v1318 = vpack.c.bf16 %v1231, %v1228
      %v1319 = vpack.c.bf16 %v1232, %v1229
      %v1320 = vpack.c.bf16 %v1236, %v1233
      %v1321 = vpack.c.bf16 %v1237, %v1234
      %v1322 = vpack.c.bf16 %v1238, %v1235
      %v1323 = vpack.c.bf16 %v1242, %v1239
      %v1324 = vpack.c.bf16 %v1243, %v1240
      %v1325 = vpack.c.bf16 %v1244, %v1241
      %v1326 = vpack.c.bf16 %v1248, %v1245
      %v1327 = vpack.c.bf16 %v1249, %v1246
      %v1328 = vpack.c.bf16 %v1250, %v1247
      %v1329 = vpack.c.bf16 %v1254, %v1251
      %v1330 = vpack.c.bf16 %v1255, %v1252
      %v1331 = vpack.c.bf16 %v1256, %v1253
      %v1332 = vpack.c.bf16 %v1260, %v1257
      %v1333 = vpack.c.bf16 %v1261, %v1258
      %v1334 = vpack.c.bf16 %v1262, %v1259
      %v1335 = vpack.c.bf16 %v1266, %v1263
      %v1336 = vpack.c.bf16 %v1267, %v1264
      %v1337 = vpack.c.bf16 %v1268, %v1265
      %v1338 = vpack.c.bf16 %v1272, %v1269
      %v1339 = vpack.c.bf16 %v1273, %v1270
      %v1340 = vpack.c.bf16 %v1274, %v1271
      %v1341 = vpack.c.bf16 %v1278, %v1275
      %v1342 = vpack.c.bf16 %v1279, %v1276
      %v1343 = vpack.c.bf16 %v1280, %v1277
      %v1344 = vpack.c.bf16 %v1284, %v1281
      %v1345 = vpack.c.bf16 %v1285, %v1282
      %v1346 = vpack.c.bf16 %v1286, %v1283
      %v1347 = vpack.c.bf16 %v1290, %v1287
      %v1348 = vpack.c.bf16 %v1291, %v1288
      %v1349 = vpack.c.bf16 %v1292, %v1289
      %v1350 = vpack.c.bf16 %v1296, %v1293
      %v1351 = vpack.c.bf16 %v1297, %v1294
      %v1352 = vpack.c.bf16 %v1298, %v1295
      %v1353 = vpack.c.bf16 %v1302, %v1299
      %v1354 = vpack.c.bf16 %v1303, %v1300
      %v1355 = vpack.c.bf16 %v1304, %v1301
      %v1356 = vpack.c.bf16 %v1308, %v1305
      %v1357 = vpack.c.bf16 %v1309, %v1306
      %v1358 = vpack.c.bf16 %v1310, %v1307
      %s1359 = scalar_lea.vmem %s2, 192
      %v1360 = vld [vmem:[%s1359] sm:$0xf]
      %v1361 = vld [vmem:[%s1359 + $0x4] sm:$0xf]
      %v1362 = vld [vmem:[%s1359 + $0x8] sm:$0xf]
      %v1363 = vld [vmem:[%s1359 + $0xc] sm:$0xf]
      %v1364 = vld [vmem:[%s1359 + $0x10] sm:$0xf]
      %v1365 = vld [vmem:[%s1359 + $0x14] sm:$0xf]
      %v1366 = vld [vmem:[%s1359 + $0x18] sm:$0xf]
      %v1367 = vld [vmem:[%s1359 + $0x1c] sm:$0xf]
      %v1368 = vld [vmem:[%s1359 + $0x20] sm:$0xf]
      %v1369 = vld [vmem:[%s1359 + $0x24] sm:$0xf]
      %v1370 = vld [vmem:[%s1359 + $0x28] sm:$0xf]
      %v1371 = vld [vmem:[%s1359 + $0x2c] sm:$0xf]
      %v1372 = vld [vmem:[%s1359 + $0x30] sm:$0xf]
      %v1373 = vld [vmem:[%s1359 + $0x34] sm:$0xf]
      %v1374 = vld [vmem:[%s1359 + $0x38] sm:$0xf]
      %v1375 = vld [vmem:[%s1359 + $0x3c] sm:$0xf]
      %v1376 = vld [vmem:[%s1359 + $0x40] sm:$0xf]
      %v1377 = vld [vmem:[%s1359 + $0x44] sm:$0xf]
      %v1378 = vld [vmem:[%s1359 + $0x48] sm:$0xf]
      %v1379 = vld [vmem:[%s1359 + $0x4c] sm:$0xf]
      %v1380 = vld [vmem:[%s1359 + $0x50] sm:$0xf]
      %v1381 = vld [vmem:[%s1359 + $0x54] sm:$0xf]
      %v1382 = vld [vmem:[%s1359 + $0x58] sm:$0xf]
      %v1383 = vld [vmem:[%s1359 + $0x5c] sm:$0xf]
      %v1384 = vld [vmem:[%s1359 + $0x60] sm:$0xf]
      %v1385 = vld [vmem:[%s1359 + $0x64] sm:$0xf]
      %v1386 = vld [vmem:[%s1359 + $0x68] sm:$0xf]
      %v1387 = vld [vmem:[%s1359 + $0x6c] sm:$0xf]
      %v1388 = vld [vmem:[%s1359 + $0x70] sm:$0xf]
      %v1389 = vld [vmem:[%s1359 + $0x74] sm:$0xf]
      %v1390 = vld [vmem:[%s1359 + $0x78] sm:$0xf]
      %v1391 = vld [vmem:[%s1359 + $0x7c] sm:$0xf]
      %v1392 = vld [vmem:[%s1359 + $0x80] sm:$0xf]
      %v1393 = vld [vmem:[%s1359 + $0x84] sm:$0xf]
      %v1394 = vld [vmem:[%s1359 + $0x88] sm:$0xf]
      %v1395 = vld [vmem:[%s1359 + $0x8c] sm:$0xf]
      %v1396 = vld [vmem:[%s1359 + $0x90] sm:$0xf]
      %v1397 = vld [vmem:[%s1359 + $0x94] sm:$0xf]
      %v1398 = vld [vmem:[%s1359 + $0x98] sm:$0xf]
      %v1399 = vld [vmem:[%s1359 + $0x9c] sm:$0xf]
      %v1400 = vld [vmem:[%s1359 + $0xa0] sm:$0xf]
      %v1401 = vld [vmem:[%s1359 + $0xa4] sm:$0xf]
      %v1402 = vld [vmem:[%s1359 + $0xa8] sm:$0xf]
      %v1403 = vld [vmem:[%s1359 + $0xac] sm:$0xf]
      %v1404 = vld [vmem:[%s1359 + $0xb0] sm:$0xf]
      %v1405 = vld [vmem:[%s1359 + $0xb4] sm:$0xf]
      %v1406 = vld [vmem:[%s1359 + $0xb8] sm:$0xf]
      %v1407 = vld [vmem:[%s1359 + $0xbc] sm:$0xf]
      %v1456 = vunpack.c.l.b16 %v1360
      %v1457 = vunpack.c.l.b16 %v1361
      %v1458 = vunpack.c.l.b16 %v1362
      %v1459 = vunpack.c.l.b16 %v1363
      %v1460 = vunpack.c.l.b16 %v1364
      %v1461 = vunpack.c.l.b16 %v1365
      %v1462 = vunpack.c.l.b16 %v1366
      %v1463 = vunpack.c.l.b16 %v1367
      %v1464 = vunpack.c.l.b16 %v1368
      %v1465 = vunpack.c.l.b16 %v1369
      %v1466 = vunpack.c.l.b16 %v1370
      %v1467 = vunpack.c.l.b16 %v1371
      %v1468 = vunpack.c.l.b16 %v1372
      %v1469 = vunpack.c.l.b16 %v1373
      %v1470 = vunpack.c.l.b16 %v1374
      %v1471 = vunpack.c.l.b16 %v1375
      %v1472 = vunpack.c.l.b16 %v1376
      %v1473 = vunpack.c.l.b16 %v1377
      %v1474 = vunpack.c.l.b16 %v1378
      %v1475 = vunpack.c.l.b16 %v1379
      %v1476 = vunpack.c.l.b16 %v1380
      %v1477 = vunpack.c.l.b16 %v1381
      %v1478 = vunpack.c.l.b16 %v1382
      %v1479 = vunpack.c.l.b16 %v1383
      %v1480 = vunpack.c.l.b16 %v1384
      %v1481 = vunpack.c.l.b16 %v1385
      %v1482 = vunpack.c.l.b16 %v1386
      %v1483 = vunpack.c.l.b16 %v1387
      %v1484 = vunpack.c.l.b16 %v1388
      %v1485 = vunpack.c.l.b16 %v1389
      %v1486 = vunpack.c.l.b16 %v1390
      %v1487 = vunpack.c.l.b16 %v1391
      %v1488 = vunpack.c.l.b16 %v1392
      %v1489 = vunpack.c.l.b16 %v1393
      %v1490 = vunpack.c.l.b16 %v1394
      %v1491 = vunpack.c.l.b16 %v1395
      %v1492 = vunpack.c.l.b16 %v1396
      %v1493 = vunpack.c.l.b16 %v1397
      %v1494 = vunpack.c.l.b16 %v1398
      %v1495 = vunpack.c.l.b16 %v1399
      %v1496 = vunpack.c.l.b16 %v1400
      %v1497 = vunpack.c.l.b16 %v1401
      %v1498 = vunpack.c.l.b16 %v1402
      %v1499 = vunpack.c.l.b16 %v1403
      %v1500 = vunpack.c.l.b16 %v1404
      %v1501 = vunpack.c.l.b16 %v1405
      %v1502 = vunpack.c.l.b16 %v1406
      %v1503 = vunpack.c.l.b16 %v1407
      %v1504 = vpack.c.b16 %v1457, %v1456
      %v1505 = vpack.c.b16 %v1459, %v1458
      %v1506 = vpack.c.b16 %v1461, %v1460
      %v1507 = vpack.c.b16 %v1463, %v1462
      %v1508 = vpack.c.b16 %v1465, %v1464
      %v1509 = vpack.c.b16 %v1467, %v1466
      %v1510 = vpack.c.b16 %v1469, %v1468
      %v1511 = vpack.c.b16 %v1471, %v1470
      %v1512 = vpack.c.b16 %v1473, %v1472
      %v1513 = vpack.c.b16 %v1475, %v1474
      %v1514 = vpack.c.b16 %v1477, %v1476
      %v1515 = vpack.c.b16 %v1479, %v1478
      %v1516 = vpack.c.b16 %v1481, %v1480
      %v1517 = vpack.c.b16 %v1483, %v1482
      %v1518 = vpack.c.b16 %v1485, %v1484
      %v1519 = vpack.c.b16 %v1487, %v1486
      %v1520 = vpack.c.b16 %v1489, %v1488
      %v1521 = vpack.c.b16 %v1491, %v1490
      %v1522 = vpack.c.b16 %v1493, %v1492
      %v1523 = vpack.c.b16 %v1495, %v1494
      %v1524 = vpack.c.b16 %v1497, %v1496
      %v1525 = vpack.c.b16 %v1499, %v1498
      %v1526 = vpack.c.b16 %v1501, %v1500
      %v1527 = vpack.c.b16 %v1503, %v1502
      %1552 = vmatprep.subr.bf16.mxu0 0
      %1553 = vmatpush1.bf16.msra.mxu0 %v1511
      %1554 = vmatprep.subr.bf16.mxu0 0
      %1555 = vmatpush1.bf16.msra.mxu0 %v1510
      %1556 = vmatprep.subr.bf16.mxu0 0
      %1557 = vmatpush1.bf16.msra.mxu0 %v1509
      %1558 = vmatprep.subr.bf16.mxu0 0
      %1559 = vmatpush1.bf16.msra.mxu0 %v1508
      %1560 = vmatprep.subr.bf16.mxu0 0
      %1561 = vmatpush1.bf16.msra.mxu0 %v1507
      %1562 = vmatprep.subr.bf16.mxu0 0
      %1563 = vmatpush1.bf16.msra.mxu0 %v1506
      %1564 = vmatprep.subr.bf16.mxu0 0
      %1565 = vmatpush1.bf16.msra.mxu0 %v1505
      %1566 = vmatprep.subr.bf16.mxu0 0
      %1567 = vmatpush1.bf16.msra.mxu0 %v1504
      %1568 = vmatprep.subr.bf16.mxu0 0
      %1569 = vmatpush2.bf16.msra.mxu0 %v1519
      %1570 = vmatprep.subr.bf16.mxu0 0
      %1571 = vmatpush2.bf16.msra.mxu0 %v1518
      %1572 = vmatprep.subr.bf16.mxu0 0
      %1573 = vmatpush2.bf16.msra.mxu0 %v1517
      %1574 = vmatprep.subr.bf16.mxu0 0
      %1575 = vmatpush2.bf16.msra.mxu0 %v1516
      %1576 = vmatprep.subr.bf16.mxu0 0
      %1577 = vmatpush2.bf16.msra.mxu0 %v1515
      %1578 = vmatprep.subr.bf16.mxu0 0
      %1579 = vmatpush2.bf16.msra.mxu0 %v1514
      %1580 = vmatprep.subr.bf16.mxu0 0
      %1581 = vmatpush2.bf16.msra.mxu0 %v1513
      %1582 = vmatprep.subr.bf16.mxu0 0
      %1583 = vmatpush2.bf16.msra.mxu0 %v1512
      %1584 = vmatprep.mubr.bf16.mxu0 %v1312
      %1585 = vmatmul.mubr.bf16.gmra.mxu0 %v1311
      %v1586 = vpop.f32.mrf.mxu0
      %v1587 = vadd.f32 0.0, %v1586
      %v1588 = vpop.f32.mrf.mxu0
      %v1589 = vpop.f32.mrf.mxu0
      %v1590 = vadd.f32 0.0, %v1589
      %v1591 = vpop.f32.mrf.mxu0
      %1592 = vmatprep.mubr.bf16.mxu0 %v1315
      %1593 = vmatmul.mubr.bf16.gmra.mxu0 %v1314
      %v1594 = vpop.f32.mrf.mxu0
      %v1595 = vadd.f32 0.0, %v1594
      %v1596 = vpop.f32.mrf.mxu0
      %v1597 = vpop.f32.mrf.mxu0
      %v1598 = vadd.f32 0.0, %v1597
      %v1599 = vpop.f32.mrf.mxu0
      %1600 = vmatprep.mubr.bf16.mxu0 %v1318
      %1601 = vmatmul.mubr.bf16.gmra.mxu0 %v1317
      %v1602 = vpop.f32.mrf.mxu0
      %v1603 = vadd.f32 0.0, %v1602
      %v1604 = vpop.f32.mrf.mxu0
      %v1605 = vpop.f32.mrf.mxu0
      %v1606 = vadd.f32 0.0, %v1605
      %v1607 = vpop.f32.mrf.mxu0
      %1608 = vmatprep.mubr.bf16.mxu0 %v1321
      %1609 = vmatmul.mubr.bf16.gmra.mxu0 %v1320
      %v1610 = vpop.f32.mrf.mxu0
      %v1611 = vadd.f32 0.0, %v1610
      %v1612 = vpop.f32.mrf.mxu0
      %v1613 = vpop.f32.mrf.mxu0
      %v1614 = vadd.f32 0.0, %v1613
      %v1615 = vpop.f32.mrf.mxu0
      %1616 = vmatprep.mubr.bf16.mxu0 %v1324
      %1617 = vmatmul.mubr.bf16.gmra.mxu0 %v1323
      %v1618 = vpop.f32.mrf.mxu0
      %v1619 = vadd.f32 0.0, %v1618
      %v1620 = vpop.f32.mrf.mxu0
      %v1621 = vpop.f32.mrf.mxu0
      %v1622 = vadd.f32 0.0, %v1621
      %v1623 = vpop.f32.mrf.mxu0
      %1624 = vmatprep.mubr.bf16.mxu0 %v1327
      %1625 = vmatmul.mubr.bf16.gmra.mxu0 %v1326
      %v1626 = vpop.f32.mrf.mxu0
      %v1627 = vadd.f32 0.0, %v1626
      %v1628 = vpop.f32.mrf.mxu0
      %v1629 = vpop.f32.mrf.mxu0
      %v1630 = vadd.f32 0.0, %v1629
      %v1631 = vpop.f32.mrf.mxu0
      %1632 = vmatprep.mubr.bf16.mxu0 %v1330
      %1633 = vmatmul.mubr.bf16.gmra.mxu0 %v1329
      %v1634 = vpop.f32.mrf.mxu0
      %v1635 = vadd.f32 0.0, %v1634
      %v1636 = vpop.f32.mrf.mxu0
      %v1637 = vpop.f32.mrf.mxu0
      %v1638 = vadd.f32 0.0, %v1637
      %v1639 = vpop.f32.mrf.mxu0
      %1640 = vmatprep.mubr.bf16.mxu0 %v1333
      %1641 = vmatmul.mubr.bf16.gmra.mxu0 %v1332
      %v1642 = vpop.f32.mrf.mxu0
      %v1643 = vadd.f32 0.0, %v1642
      %v1644 = vpop.f32.mrf.mxu0
      %v1645 = vpop.f32.mrf.mxu0
      %v1646 = vadd.f32 0.0, %v1645
      %v1647 = vpop.f32.mrf.mxu0
      %1648 = vmatprep.mubr.bf16.mxu0 %v1336
      %1649 = vmatmul.mubr.bf16.gmra.mxu0 %v1335
      %v1650 = vpop.f32.mrf.mxu0
      %v1651 = vadd.f32 0.0, %v1650
      %v1652 = vpop.f32.mrf.mxu0
      %v1653 = vpop.f32.mrf.mxu0
      %v1654 = vadd.f32 0.0, %v1653
      %v1655 = vpop.f32.mrf.mxu0
      %1656 = vmatprep.mubr.bf16.mxu0 %v1339
      %1657 = vmatmul.mubr.bf16.gmra.mxu0 %v1338
      %v1658 = vpop.f32.mrf.mxu0
      %v1659 = vadd.f32 0.0, %v1658
      %v1660 = vpop.f32.mrf.mxu0
      %v1661 = vpop.f32.mrf.mxu0
      %v1662 = vadd.f32 0.0, %v1661
      %v1663 = vpop.f32.mrf.mxu0
      %1664 = vmatprep.mubr.bf16.mxu0 %v1342
      %1665 = vmatmul.mubr.bf16.gmra.mxu0 %v1341
      %v1666 = vpop.f32.mrf.mxu0
      %v1667 = vadd.f32 0.0, %v1666
      %v1668 = vpop.f32.mrf.mxu0
      %v1669 = vpop.f32.mrf.mxu0
      %v1670 = vadd.f32 0.0, %v1669
      %v1671 = vpop.f32.mrf.mxu0
      %1672 = vmatprep.mubr.bf16.mxu0 %v1345
      %1673 = vmatmul.mubr.bf16.gmra.mxu0 %v1344
      %v1674 = vpop.f32.mrf.mxu0
      %v1675 = vadd.f32 0.0, %v1674
      %v1676 = vpop.f32.mrf.mxu0
      %v1677 = vpop.f32.mrf.mxu0
      %v1678 = vadd.f32 0.0, %v1677
      %v1679 = vpop.f32.mrf.mxu0
      %1680 = vmatprep.mubr.bf16.mxu0 %v1348
      %1681 = vmatmul.mubr.bf16.gmra.mxu0 %v1347
      %v1682 = vpop.f32.mrf.mxu0
      %v1683 = vadd.f32 0.0, %v1682
      %v1684 = vpop.f32.mrf.mxu0
      %v1685 = vpop.f32.mrf.mxu0
      %v1686 = vadd.f32 0.0, %v1685
      %v1687 = vpop.f32.mrf.mxu0
      %1688 = vmatprep.mubr.bf16.mxu0 %v1351
      %1689 = vmatmul.mubr.bf16.gmra.mxu0 %v1350
      %v1690 = vpop.f32.mrf.mxu0
      %v1691 = vadd.f32 0.0, %v1690
      %v1692 = vpop.f32.mrf.mxu0
      %v1693 = vpop.f32.mrf.mxu0
      %v1694 = vadd.f32 0.0, %v1693
      %v1695 = vpop.f32.mrf.mxu0
      %1696 = vmatprep.mubr.bf16.mxu0 %v1354
      %1697 = vmatmul.mubr.bf16.gmra.mxu0 %v1353
      %v1698 = vpop.f32.mrf.mxu0
      %v1699 = vadd.f32 0.0, %v1698
      %v1700 = vpop.f32.mrf.mxu0
      %v1701 = vpop.f32.mrf.mxu0
      %v1702 = vadd.f32 0.0, %v1701
      %v1703 = vpop.f32.mrf.mxu0
      %1704 = vmatprep.mubr.bf16.mxu0 %v1357
      %1705 = vmatmul.mubr.bf16.gmra.mxu0 %v1356
      %v1706 = vpop.f32.mrf.mxu0
      %v1707 = vadd.f32 0.0, %v1706
      %v1708 = vpop.f32.mrf.mxu0
      %v1709 = vpop.f32.mrf.mxu0
      %v1710 = vadd.f32 0.0, %v1709
      %v1711 = vpop.f32.mrf.mxu0
      %1712 = vdwg.mxu0
      %1713 = vmatprep.subr.bf16.mxu0 0
      %1714 = vmatpush1.bf16.msra.mxu0 %v1527
      %1715 = vmatprep.subr.bf16.mxu0 0
      %1716 = vmatpush1.bf16.msra.mxu0 %v1526
      %1717 = vmatprep.subr.bf16.mxu0 0
      %1718 = vmatpush1.bf16.msra.mxu0 %v1525
      %1719 = vmatprep.subr.bf16.mxu0 0
      %1720 = vmatpush1.bf16.msra.mxu0 %v1524
      %1721 = vmatprep.subr.bf16.mxu0 0
      %1722 = vmatpush1.bf16.msra.mxu0 %v1523
      %1723 = vmatprep.subr.bf16.mxu0 0
      %1724 = vmatpush1.bf16.msra.mxu0 %v1522
      %1725 = vmatprep.subr.bf16.mxu0 0
      %1726 = vmatpush1.bf16.msra.mxu0 %v1521
      %1727 = vmatprep.subr.bf16.mxu0 0
      %1728 = vmatpush1.bf16.msra.mxu0 %v1520
      %1729 = vmatprep.subr.bf16.mxu0 0
      %1730 = vmatpush2.bf16.msra.mxu0 0
      %1731 = vmatprep.subr.bf16.mxu0 0
      %1732 = vmatpush2.bf16.msra.mxu0 0
      %1733 = vmatprep.subr.bf16.mxu0 0
      %1734 = vmatpush2.bf16.msra.mxu0 0
      %1735 = vmatprep.subr.bf16.mxu0 0
      %1736 = vmatpush2.bf16.msra.mxu0 0
      %1737 = vmatprep.subr.bf16.mxu0 0
      %1738 = vmatpush2.bf16.msra.mxu0 0
      %1739 = vmatprep.subr.bf16.mxu0 0
      %1740 = vmatpush2.bf16.msra.mxu0 0
      %1741 = vmatprep.subr.bf16.mxu0 0
      %1742 = vmatpush2.bf16.msra.mxu0 0
      %1743 = vmatprep.subr.bf16.mxu0 0
      %1744 = vmatpush2.bf16.msra.mxu0 0
      %1745 = vmatprep.mubr.bf16.mxu0 0
      %1746 = vmatmul.mubr.bf16.gmra.mxu0 %v1313
      %v1747 = vpop.f32.mrf.mxu0
      %v1748 = vadd.f32 %v1587, %v1747
      %v1749 = vpop.f32.mrf.mxu0
      %v1750 = vpop.f32.mrf.mxu0
      %v1751 = vadd.f32 %v1590, %v1750
      %v1752 = vpop.f32.mrf.mxu0
      %1753 = vmatprep.mubr.bf16.mxu0 0
      %1754 = vmatmul.mubr.bf16.gmra.mxu0 %v1316
      %v1755 = vpop.f32.mrf.mxu0
      %v1756 = vadd.f32 %v1595, %v1755
      %v1757 = vpop.f32.mrf.mxu0
      %v1758 = vpop.f32.mrf.mxu0
      %v1759 = vadd.f32 %v1598, %v1758
      %v1760 = vpop.f32.mrf.mxu0
      %1761 = vmatprep.mubr.bf16.mxu0 0
      %1762 = vmatmul.mubr.bf16.gmra.mxu0 %v1319
      %v1763 = vpop.f32.mrf.mxu0
      %v1764 = vadd.f32 %v1603, %v1763
      %v1765 = vpop.f32.mrf.mxu0
      %v1766 = vpop.f32.mrf.mxu0
      %v1767 = vadd.f32 %v1606, %v1766
      %v1768 = vpop.f32.mrf.mxu0
      %1769 = vmatprep.mubr.bf16.mxu0 0
      %1770 = vmatmul.mubr.bf16.gmra.mxu0 %v1322
      %v1771 = vpop.f32.mrf.mxu0
      %v1772 = vadd.f32 %v1611, %v1771
      %v1773 = vpop.f32.mrf.mxu0
      %v1774 = vpop.f32.mrf.mxu0
      %v1775 = vadd.f32 %v1614, %v1774
      %v1776 = vpop.f32.mrf.mxu0
      %1777 = vmatprep.mubr.bf16.mxu0 0
      %1778 = vmatmul.mubr.bf16.gmra.mxu0 %v1325
      %v1779 = vpop.f32.mrf.mxu0
      %v1780 = vadd.f32 %v1619, %v1779
      %v1781 = vpop.f32.mrf.mxu0
      %v1782 = vpop.f32.mrf.mxu0
      %v1783 = vadd.f32 %v1622, %v1782
      %v1784 = vpop.f32.mrf.mxu0
      %1785 = vmatprep.mubr.bf16.mxu0 0
      %1786 = vmatmul.mubr.bf16.gmra.mxu0 %v1328
      %v1787 = vpop.f32.mrf.mxu0
      %v1788 = vadd.f32 %v1627, %v1787
      %v1789 = vpop.f32.mrf.mxu0
      %v1790 = vpop.f32.mrf.mxu0
      %v1791 = vadd.f32 %v1630, %v1790
      %v1792 = vpop.f32.mrf.mxu0
      %1793 = vmatprep.mubr.bf16.mxu0 0
      %1794 = vmatmul.mubr.bf16.gmra.mxu0 %v1331
      %v1795 = vpop.f32.mrf.mxu0
      %v1796 = vadd.f32 %v1635, %v1795
      %v1797 = vpop.f32.mrf.mxu0
      %v1798 = vpop.f32.mrf.mxu0
      %v1799 = vadd.f32 %v1638, %v1798
      %v1800 = vpop.f32.mrf.mxu0
      %1801 = vmatprep.mubr.bf16.mxu0 0
      %1802 = vmatmul.mubr.bf16.gmra.mxu0 %v1334
      %v1803 = vpop.f32.mrf.mxu0
      %v1804 = vadd.f32 %v1643, %v1803
      %v1805 = vpop.f32.mrf.mxu0
      %v1806 = vpop.f32.mrf.mxu0
      %v1807 = vadd.f32 %v1646, %v1806
      %v1808 = vpop.f32.mrf.mxu0
      %1809 = vmatprep.mubr.bf16.mxu0 0
      %1810 = vmatmul.mubr.bf16.gmra.mxu0 %v1337
      %v1811 = vpop.f32.mrf.mxu0
      %v1812 = vadd.f32 %v1651, %v1811
      %v1813 = vpop.f32.mrf.mxu0
      %v1814 = vpop.f32.mrf.mxu0
      %v1815 = vadd.f32 %v1654, %v1814
      %v1816 = vpop.f32.mrf.mxu0
      %1817 = vmatprep.mubr.bf16.mxu0 0
      %1818 = vmatmul.mubr.bf16.gmra.mxu0 %v1340
      %v1819 = vpop.f32.mrf.mxu0
      %v1820 = vadd.f32 %v1659, %v1819
      %v1821 = vpop.f32.mrf.mxu0
      %v1822 = vpop.f32.mrf.mxu0
      %v1823 = vadd.f32 %v1662, %v1822
      %v1824 = vpop.f32.mrf.mxu0
      %1825 = vmatprep.mubr.bf16.mxu0 0
      %1826 = vmatmul.mubr.bf16.gmra.mxu0 %v1343
      %v1827 = vpop.f32.mrf.mxu0
      %v1828 = vadd.f32 %v1667, %v1827
      %v1829 = vpop.f32.mrf.mxu0
      %v1830 = vpop.f32.mrf.mxu0
      %v1831 = vadd.f32 %v1670, %v1830
      %v1832 = vpop.f32.mrf.mxu0
      %1833 = vmatprep.mubr.bf16.mxu0 0
      %1834 = vmatmul.mubr.bf16.gmra.mxu0 %v1346
      %v1835 = vpop.f32.mrf.mxu0
      %v1836 = vadd.f32 %v1675, %v1835
      %v1837 = vpop.f32.mrf.mxu0
      %v1838 = vpop.f32.mrf.mxu0
      %v1839 = vadd.f32 %v1678, %v1838
      %v1840 = vpop.f32.mrf.mxu0
      %1841 = vmatprep.mubr.bf16.mxu0 0
      %1842 = vmatmul.mubr.bf16.gmra.mxu0 %v1349
      %v1843 = vpop.f32.mrf.mxu0
      %v1844 = vadd.f32 %v1683, %v1843
      %v1845 = vpop.f32.mrf.mxu0
      %v1846 = vpop.f32.mrf.mxu0
      %v1847 = vadd.f32 %v1686, %v1846
      %v1848 = vpop.f32.mrf.mxu0
      %1849 = vmatprep.mubr.bf16.mxu0 0
      %1850 = vmatmul.mubr.bf16.gmra.mxu0 %v1352
      %v1851 = vpop.f32.mrf.mxu0
      %v1852 = vadd.f32 %v1691, %v1851
      %v1853 = vpop.f32.mrf.mxu0
      %v1854 = vpop.f32.mrf.mxu0
      %v1855 = vadd.f32 %v1694, %v1854
      %v1856 = vpop.f32.mrf.mxu0
      %1857 = vmatprep.mubr.bf16.mxu0 0
      %1858 = vmatmul.mubr.bf16.gmra.mxu0 %v1355
      %v1859 = vpop.f32.mrf.mxu0
      %v1860 = vadd.f32 %v1699, %v1859
      %v1861 = vpop.f32.mrf.mxu0
      %v1862 = vpop.f32.mrf.mxu0
      %v1863 = vadd.f32 %v1702, %v1862
      %v1864 = vpop.f32.mrf.mxu0
      %1865 = vmatprep.mubr.bf16.mxu0 0
      %1866 = vmatmul.mubr.bf16.gmra.mxu0 %v1358
      %v1867 = vpop.f32.mrf.mxu0
      %v1868 = vadd.f32 %v1707, %v1867
      %v1869 = vpop.f32.mrf.mxu0
      %v1870 = vpop.f32.mrf.mxu0
      %v1871 = vadd.f32 %v1710, %v1870
      %v1872 = vpop.f32.mrf.mxu0
      %1873 = vdwg.mxu0
      %v1922 = vunpack.c.l.b16 %v1167
      %v1923 = vunpack.c.l.b16 %v1168
      %v1924 = vunpack.c.l.b16 %v1169
      %v1925 = vunpack.c.l.b16 %v1170
      %v1926 = vunpack.c.l.b16 %v1171
      %v1927 = vunpack.c.l.b16 %v1172
      %v1928 = vunpack.c.l.b16 %v1173
      %v1929 = vunpack.c.l.b16 %v1174
      %v1930 = vunpack.c.l.b16 %v1175
      %v1931 = vunpack.c.l.b16 %v1176
      %v1932 = vunpack.c.l.b16 %v1177
      %v1933 = vunpack.c.l.b16 %v1178
      %v1934 = vunpack.c.l.b16 %v1179
      %v1935 = vunpack.c.l.b16 %v1180
      %v1936 = vunpack.c.l.b16 %v1181
      %v1937 = vunpack.c.l.b16 %v1182
      %v1938 = vunpack.c.l.b16 %v1183
      %v1939 = vunpack.c.l.b16 %v1184
      %v1940 = vunpack.c.l.b16 %v1185
      %v1941 = vunpack.c.l.b16 %v1186
      %v1942 = vunpack.c.l.b16 %v1187
      %v1943 = vunpack.c.l.b16 %v1188
      %v1944 = vunpack.c.l.b16 %v1189
      %v1945 = vunpack.c.l.b16 %v1190
      %v1946 = vunpack.c.l.b16 %v1191
      %v1947 = vunpack.c.l.b16 %v1192
      %v1948 = vunpack.c.l.b16 %v1193
      %v1949 = vunpack.c.l.b16 %v1194
      %v1950 = vunpack.c.l.b16 %v1195
      %v1951 = vunpack.c.l.b16 %v1196
      %v1952 = vunpack.c.l.b16 %v1197
      %v1953 = vunpack.c.l.b16 %v1198
      %v1954 = vunpack.c.l.b16 %v1199
      %v1955 = vunpack.c.l.b16 %v1200
      %v1956 = vunpack.c.l.b16 %v1201
      %v1957 = vunpack.c.l.b16 %v1202
      %v1958 = vunpack.c.l.b16 %v1203
      %v1959 = vunpack.c.l.b16 %v1204
      %v1960 = vunpack.c.l.b16 %v1205
      %v1961 = vunpack.c.l.b16 %v1206
      %v1962 = vunpack.c.l.b16 %v1207
      %v1963 = vunpack.c.l.b16 %v1208
      %v1964 = vunpack.c.l.b16 %v1209
      %v1965 = vunpack.c.l.b16 %v1210
      %v1966 = vunpack.c.l.b16 %v1211
      %v1967 = vunpack.c.l.b16 %v1212
      %v1968 = vunpack.c.l.b16 %v1213
      %v1969 = vunpack.c.l.b16 %v1214
      %v1970 = vpack.c.b16 %v1923, %v1922
      %v1971 = vpack.c.b16 %v1925, %v1924
      %v1972 = vpack.c.b16 %v1927, %v1926
      %v1973 = vpack.c.b16 %v1929, %v1928
      %v1974 = vpack.c.b16 %v1931, %v1930
      %v1975 = vpack.c.b16 %v1933, %v1932
      %v1976 = vpack.c.b16 %v1935, %v1934
      %v1977 = vpack.c.b16 %v1937, %v1936
      %v1978 = vpack.c.b16 %v1939, %v1938
      %v1979 = vpack.c.b16 %v1941, %v1940
      %v1980 = vpack.c.b16 %v1943, %v1942
      %v1981 = vpack.c.b16 %v1945, %v1944
      %v1982 = vpack.c.b16 %v1947, %v1946
      %v1983 = vpack.c.b16 %v1949, %v1948
      %v1984 = vpack.c.b16 %v1951, %v1950
      %v1985 = vpack.c.b16 %v1953, %v1952
      %v1986 = vpack.c.b16 %v1955, %v1954
      %v1987 = vpack.c.b16 %v1957, %v1956
      %v1988 = vpack.c.b16 %v1959, %v1958
      %v1989 = vpack.c.b16 %v1961, %v1960
      %v1990 = vpack.c.b16 %v1963, %v1962
      %v1991 = vpack.c.b16 %v1965, %v1964
      %v1992 = vpack.c.b16 %v1967, %v1966
      %v1993 = vpack.c.b16 %v1969, %v1968
      %2018 = vmatprep.subr.bf16.mxu0 0
      %2019 = vmatpush1.bf16.msra.mxu0 %v1977
      %2020 = vmatprep.subr.bf16.mxu0 0
      %2021 = vmatpush1.bf16.msra.mxu0 %v1976
      %2022 = vmatprep.subr.bf16.mxu0 0
      %2023 = vmatpush1.bf16.msra.mxu0 %v1975
      %2024 = vmatprep.subr.bf16.mxu0 0
      %2025 = vmatpush1.bf16.msra.mxu0 %v1974
      %2026 = vmatprep.subr.bf16.mxu0 0
      %2027 = vmatpush1.bf16.msra.mxu0 %v1973
      %2028 = vmatprep.subr.bf16.mxu0 0
      %2029 = vmatpush1.bf16.msra.mxu0 %v1972
      %2030 = vmatprep.subr.bf16.mxu0 0
      %2031 = vmatpush1.bf16.msra.mxu0 %v1971
      %2032 = vmatprep.subr.bf16.mxu0 0
      %2033 = vmatpush1.bf16.msra.mxu0 %v1970
      %2034 = vmatprep.subr.bf16.mxu0 0
      %2035 = vmatpush2.bf16.msra.mxu0 %v1985
      %2036 = vmatprep.subr.bf16.mxu0 0
      %2037 = vmatpush2.bf16.msra.mxu0 %v1984
      %2038 = vmatprep.subr.bf16.mxu0 0
      %2039 = vmatpush2.bf16.msra.mxu0 %v1983
      %2040 = vmatprep.subr.bf16.mxu0 0
      %2041 = vmatpush2.bf16.msra.mxu0 %v1982
      %2042 = vmatprep.subr.bf16.mxu0 0
      %2043 = vmatpush2.bf16.msra.mxu0 %v1981
      %2044 = vmatprep.subr.bf16.mxu0 0
      %2045 = vmatpush2.bf16.msra.mxu0 %v1980
      %2046 = vmatprep.subr.bf16.mxu0 0
      %2047 = vmatpush2.bf16.msra.mxu0 %v1979
      %2048 = vmatprep.subr.bf16.mxu0 0
      %2049 = vmatpush2.bf16.msra.mxu0 %v1978
      %2050 = vmatprep.mubr.bf16.mxu0 %v1120
      %2051 = vmatmul.mubr.bf16.gmra.mxu0 %v1119
      %v2052 = vpop.f32.mrf.mxu0
      %v2053 = vadd.f32 %v1748, %v2052
      %v2054 = vpop.f32.mrf.mxu0
      %v2055 = vpop.f32.mrf.mxu0
      %v2056 = vadd.f32 %v1751, %v2055
      %v2057 = vpop.f32.mrf.mxu0
      %2058 = vmatprep.mubr.bf16.mxu0 %v1123
      %2059 = vmatmul.mubr.bf16.gmra.mxu0 %v1122
      %v2060 = vpop.f32.mrf.mxu0
      %v2061 = vadd.f32 %v1756, %v2060
      %v2062 = vpop.f32.mrf.mxu0
      %v2063 = vpop.f32.mrf.mxu0
      %v2064 = vadd.f32 %v1759, %v2063
      %v2065 = vpop.f32.mrf.mxu0
      %2066 = vmatprep.mubr.bf16.mxu0 %v1126
      %2067 = vmatmul.mubr.bf16.gmra.mxu0 %v1125
      %v2068 = vpop.f32.mrf.mxu0
      %v2069 = vadd.f32 %v1764, %v2068
      %v2070 = vpop.f32.mrf.mxu0
      %v2071 = vpop.f32.mrf.mxu0
      %v2072 = vadd.f32 %v1767, %v2071
      %v2073 = vpop.f32.mrf.mxu0
      %2074 = vmatprep.mubr.bf16.mxu0 %v1129
      %2075 = vmatmul.mubr.bf16.gmra.mxu0 %v1128
      %v2076 = vpop.f32.mrf.mxu0
      %v2077 = vadd.f32 %v1772, %v2076
      %v2078 = vpop.f32.mrf.mxu0
      %v2079 = vpop.f32.mrf.mxu0
      %v2080 = vadd.f32 %v1775, %v2079
      %v2081 = vpop.f32.mrf.mxu0
      %2082 = vmatprep.mubr.bf16.mxu0 %v1132
      %2083 = vmatmul.mubr.bf16.gmra.mxu0 %v1131
      %v2084 = vpop.f32.mrf.mxu0
      %v2085 = vadd.f32 %v1780, %v2084
      %v2086 = vpop.f32.mrf.mxu0
      %v2087 = vpop.f32.mrf.mxu0
      %v2088 = vadd.f32 %v1783, %v2087
      %v2089 = vpop.f32.mrf.mxu0
      %2090 = vmatprep.mubr.bf16.mxu0 %v1135
      %2091 = vmatmul.mubr.bf16.gmra.mxu0 %v1134
      %v2092 = vpop.f32.mrf.mxu0
      %v2093 = vadd.f32 %v1788, %v2092
      %v2094 = vpop.f32.mrf.mxu0
      %v2095 = vpop.f32.mrf.mxu0
      %v2096 = vadd.f32 %v1791, %v2095
      %v2097 = vpop.f32.mrf.mxu0
      %2098 = vmatprep.mubr.bf16.mxu0 %v1138
      %2099 = vmatmul.mubr.bf16.gmra.mxu0 %v1137
      %v2100 = vpop.f32.mrf.mxu0
      %v2101 = vadd.f32 %v1796, %v2100
      %v2102 = vpop.f32.mrf.mxu0
      %v2103 = vpop.f32.mrf.mxu0
      %v2104 = vadd.f32 %v1799, %v2103
      %v2105 = vpop.f32.mrf.mxu0
      %2106 = vmatprep.mubr.bf16.mxu0 %v1141
      %2107 = vmatmul.mubr.bf16.gmra.mxu0 %v1140
      %v2108 = vpop.f32.mrf.mxu0
      %v2109 = vadd.f32 %v1804, %v2108
      %v2110 = vpop.f32.mrf.mxu0
      %v2111 = vpop.f32.mrf.mxu0
      %v2112 = vadd.f32 %v1807, %v2111
      %v2113 = vpop.f32.mrf.mxu0
      %2114 = vmatprep.mubr.bf16.mxu0 %v1144
      %2115 = vmatmul.mubr.bf16.gmra.mxu0 %v1143
      %v2116 = vpop.f32.mrf.mxu0
      %v2117 = vadd.f32 %v1812, %v2116
      %v2118 = vpop.f32.mrf.mxu0
      %v2119 = vpop.f32.mrf.mxu0
      %v2120 = vadd.f32 %v1815, %v2119
      %v2121 = vpop.f32.mrf.mxu0
      %2122 = vmatprep.mubr.bf16.mxu0 %v1147
      %2123 = vmatmul.mubr.bf16.gmra.mxu0 %v1146
      %v2124 = vpop.f32.mrf.mxu0
      %v2125 = vadd.f32 %v1820, %v2124
      %v2126 = vpop.f32.mrf.mxu0
      %v2127 = vpop.f32.mrf.mxu0
      %v2128 = vadd.f32 %v1823, %v2127
      %v2129 = vpop.f32.mrf.mxu0
      %2130 = vmatprep.mubr.bf16.mxu0 %v1150
      %2131 = vmatmul.mubr.bf16.gmra.mxu0 %v1149
      %v2132 = vpop.f32.mrf.mxu0
      %v2133 = vadd.f32 %v1828, %v2132
      %v2134 = vpop.f32.mrf.mxu0
      %v2135 = vpop.f32.mrf.mxu0
      %v2136 = vadd.f32 %v1831, %v2135
      %v2137 = vpop.f32.mrf.mxu0
      %2138 = vmatprep.mubr.bf16.mxu0 %v1153
      %2139 = vmatmul.mubr.bf16.gmra.mxu0 %v1152
      %v2140 = vpop.f32.mrf.mxu0
      %v2141 = vadd.f32 %v1836, %v2140
      %v2142 = vpop.f32.mrf.mxu0
      %v2143 = vpop.f32.mrf.mxu0
      %v2144 = vadd.f32 %v1839, %v2143
      %v2145 = vpop.f32.mrf.mxu0
      %2146 = vmatprep.mubr.bf16.mxu0 %v1156
      %2147 = vmatmul.mubr.bf16.gmra.mxu0 %v1155
      %v2148 = vpop.f32.mrf.mxu0
      %v2149 = vadd.f32 %v1844, %v2148
      %v2150 = vpop.f32.mrf.mxu0
      %v2151 = vpop.f32.mrf.mxu0
      %v2152 = vadd.f32 %v1847, %v2151
      %v2153 = vpop.f32.mrf.mxu0
      %2154 = vmatprep.mubr.bf16.mxu0 %v1159
      %2155 = vmatmul.mubr.bf16.gmra.mxu0 %v1158
      %v2156 = vpop.f32.mrf.mxu0
      %v2157 = vadd.f32 %v1852, %v2156
      %v2158 = vpop.f32.mrf.mxu0
      %v2159 = vpop.f32.mrf.mxu0
      %v2160 = vadd.f32 %v1855, %v2159
      %v2161 = vpop.f32.mrf.mxu0
      %2162 = vmatprep.mubr.bf16.mxu0 %v1162
      %2163 = vmatmul.mubr.bf16.gmra.mxu0 %v1161
      %v2164 = vpop.f32.mrf.mxu0
      %v2165 = vadd.f32 %v1860, %v2164
      %v2166 = vpop.f32.mrf.mxu0
      %v2167 = vpop.f32.mrf.mxu0
      %v2168 = vadd.f32 %v1863, %v2167
      %v2169 = vpop.f32.mrf.mxu0
      %2170 = vmatprep.mubr.bf16.mxu0 %v1165
      %2171 = vmatmul.mubr.bf16.gmra.mxu0 %v1164
      %v2172 = vpop.f32.mrf.mxu0
      %v2173 = vadd.f32 %v1868, %v2172
      %v2174 = vpop.f32.mrf.mxu0
      %v2175 = vpop.f32.mrf.mxu0
      %v2176 = vadd.f32 %v1871, %v2175
      %v2177 = vpop.f32.mrf.mxu0
      %2178 = vdwg.mxu0
      %2179 = vmatprep.subr.bf16.mxu0 0
      %2180 = vmatpush1.bf16.msra.mxu0 %v1993
      %2181 = vmatprep.subr.bf16.mxu0 0
      %2182 = vmatpush1.bf16.msra.mxu0 %v1992
      %2183 = vmatprep.subr.bf16.mxu0 0
      %2184 = vmatpush1.bf16.msra.mxu0 %v1991
      %2185 = vmatprep.subr.bf16.mxu0 0
      %2186 = vmatpush1.bf16.msra.mxu0 %v1990
      %2187 = vmatprep.subr.bf16.mxu0 0
      %2188 = vmatpush1.bf16.msra.mxu0 %v1989
      %2189 = vmatprep.subr.bf16.mxu0 0
      %2190 = vmatpush1.bf16.msra.mxu0 %v1988
      %2191 = vmatprep.subr.bf16.mxu0 0
      %2192 = vmatpush1.bf16.msra.mxu0 %v1987
      %2193 = vmatprep.subr.bf16.mxu0 0
      %2194 = vmatpush1.bf16.msra.mxu0 %v1986
      %2195 = vmatprep.subr.bf16.mxu0 0
      %2196 = vmatpush2.bf16.msra.mxu0 0
      %2197 = vmatprep.subr.bf16.mxu0 0
      %2198 = vmatpush2.bf16.msra.mxu0 0
      %2199 = vmatprep.subr.bf16.mxu0 0
      %2200 = vmatpush2.bf16.msra.mxu0 0
      %2201 = vmatprep.subr.bf16.mxu0 0
      %2202 = vmatpush2.bf16.msra.mxu0 0
      %2203 = vmatprep.subr.bf16.mxu0 0
      %2204 = vmatpush2.bf16.msra.mxu0 0
      %2205 = vmatprep.subr.bf16.mxu0 0
      %2206 = vmatpush2.bf16.msra.mxu0 0
      %2207 = vmatprep.subr.bf16.mxu0 0
      %2208 = vmatpush2.bf16.msra.mxu0 0
      %2209 = vmatprep.subr.bf16.mxu0 0
      %2210 = vmatpush2.bf16.msra.mxu0 0
      %2211 = vmatprep.mubr.bf16.mxu0 0
      %2212 = vmatmul.mubr.bf16.gmra.mxu0 %v1121
      %v2213 = vpop.f32.mrf.mxu0
      %v2214 = vadd.f32 %v2053, %v2213
      %v2215 = vpop.f32.mrf.mxu0
      %v2216 = vpop.f32.mrf.mxu0
      %v2217 = vadd.f32 %v2056, %v2216
      %v2218 = vpop.f32.mrf.mxu0
      %2219 = vmatprep.mubr.bf16.mxu0 0
      %2220 = vmatmul.mubr.bf16.gmra.mxu0 %v1124
      %v2221 = vpop.f32.mrf.mxu0
      %v2222 = vadd.f32 %v2061, %v2221
      %v2223 = vpop.f32.mrf.mxu0
      %v2224 = vpop.f32.mrf.mxu0
      %v2225 = vadd.f32 %v2064, %v2224
      %v2226 = vpop.f32.mrf.mxu0
      %2227 = vmatprep.mubr.bf16.mxu0 0
      %2228 = vmatmul.mubr.bf16.gmra.mxu0 %v1127
      %v2229 = vpop.f32.mrf.mxu0
      %v2230 = vadd.f32 %v2069, %v2229
      %v2231 = vpop.f32.mrf.mxu0
      %v2232 = vpop.f32.mrf.mxu0
      %v2233 = vadd.f32 %v2072, %v2232
      %v2234 = vpop.f32.mrf.mxu0
      %2235 = vmatprep.mubr.bf16.mxu0 0
      %2236 = vmatmul.mubr.bf16.gmra.mxu0 %v1130
      %v2237 = vpop.f32.mrf.mxu0
      %v2238 = vadd.f32 %v2077, %v2237
      %v2239 = vpop.f32.mrf.mxu0
      %v2240 = vpop.f32.mrf.mxu0
      %v2241 = vadd.f32 %v2080, %v2240
      %v2242 = vpop.f32.mrf.mxu0
      %2243 = vmatprep.mubr.bf16.mxu0 0
      %2244 = vmatmul.mubr.bf16.gmra.mxu0 %v1133
      %v2245 = vpop.f32.mrf.mxu0
      %v2246 = vadd.f32 %v2085, %v2245
      %v2247 = vpop.f32.mrf.mxu0
      %v2248 = vpop.f32.mrf.mxu0
      %v2249 = vadd.f32 %v2088, %v2248
      %v2250 = vpop.f32.mrf.mxu0
      %2251 = vmatprep.mubr.bf16.mxu0 0
      %2252 = vmatmul.mubr.bf16.gmra.mxu0 %v1136
      %v2253 = vpop.f32.mrf.mxu0
      %v2254 = vadd.f32 %v2093, %v2253
      %v2255 = vpop.f32.mrf.mxu0
      %v2256 = vpop.f32.mrf.mxu0
      %v2257 = vadd.f32 %v2096, %v2256
      %v2258 = vpop.f32.mrf.mxu0
      %2259 = vmatprep.mubr.bf16.mxu0 0
      %2260 = vmatmul.mubr.bf16.gmra.mxu0 %v1139
      %v2261 = vpop.f32.mrf.mxu0
      %v2262 = vadd.f32 %v2101, %v2261
      %v2263 = vpop.f32.mrf.mxu0
      %v2264 = vpop.f32.mrf.mxu0
      %v2265 = vadd.f32 %v2104, %v2264
      %v2266 = vpop.f32.mrf.mxu0
      %2267 = vmatprep.mubr.bf16.mxu0 0
      %2268 = vmatmul.mubr.bf16.gmra.mxu0 %v1142
      %v2269 = vpop.f32.mrf.mxu0
      %v2270 = vadd.f32 %v2109, %v2269
      %v2271 = vpop.f32.mrf.mxu0
      %v2272 = vpop.f32.mrf.mxu0
      %v2273 = vadd.f32 %v2112, %v2272
      %v2274 = vpop.f32.mrf.mxu0
      %2275 = vmatprep.mubr.bf16.mxu0 0
      %2276 = vmatmul.mubr.bf16.gmra.mxu0 %v1145
      %v2277 = vpop.f32.mrf.mxu0
      %v2278 = vadd.f32 %v2117, %v2277
      %v2279 = vpop.f32.mrf.mxu0
      %v2280 = vpop.f32.mrf.mxu0
      %v2281 = vadd.f32 %v2120, %v2280
      %v2282 = vpop.f32.mrf.mxu0
      %2283 = vmatprep.mubr.bf16.mxu0 0
      %2284 = vmatmul.mubr.bf16.gmra.mxu0 %v1148
      %v2285 = vpop.f32.mrf.mxu0
      %v2286 = vadd.f32 %v2125, %v2285
      %v2287 = vpop.f32.mrf.mxu0
      %v2288 = vpop.f32.mrf.mxu0
      %v2289 = vadd.f32 %v2128, %v2288
      %v2290 = vpop.f32.mrf.mxu0
      %2291 = vmatprep.mubr.bf16.mxu0 0
      %2292 = vmatmul.mubr.bf16.gmra.mxu0 %v1151
      %v2293 = vpop.f32.mrf.mxu0
      %v2294 = vadd.f32 %v2133, %v2293
      %v2295 = vpop.f32.mrf.mxu0
      %v2296 = vpop.f32.mrf.mxu0
      %v2297 = vadd.f32 %v2136, %v2296
      %v2298 = vpop.f32.mrf.mxu0
      %2299 = vmatprep.mubr.bf16.mxu0 0
      %2300 = vmatmul.mubr.bf16.gmra.mxu0 %v1154
      %v2301 = vpop.f32.mrf.mxu0
      %v2302 = vadd.f32 %v2141, %v2301
      %v2303 = vpop.f32.mrf.mxu0
      %v2304 = vpop.f32.mrf.mxu0
      %v2305 = vadd.f32 %v2144, %v2304
      %v2306 = vpop.f32.mrf.mxu0
      %2307 = vmatprep.mubr.bf16.mxu0 0
      %2308 = vmatmul.mubr.bf16.gmra.mxu0 %v1157
      %v2309 = vpop.f32.mrf.mxu0
      %v2310 = vadd.f32 %v2149, %v2309
      %v2311 = vpop.f32.mrf.mxu0
      %v2312 = vpop.f32.mrf.mxu0
      %v2313 = vadd.f32 %v2152, %v2312
      %v2314 = vpop.f32.mrf.mxu0
      %2315 = vmatprep.mubr.bf16.mxu0 0
      %2316 = vmatmul.mubr.bf16.gmra.mxu0 %v1160
      %v2317 = vpop.f32.mrf.mxu0
      %v2318 = vadd.f32 %v2157, %v2317
      %v2319 = vpop.f32.mrf.mxu0
      %v2320 = vpop.f32.mrf.mxu0
      %v2321 = vadd.f32 %v2160, %v2320
      %v2322 = vpop.f32.mrf.mxu0
      %2323 = vmatprep.mubr.bf16.mxu0 0
      %2324 = vmatmul.mubr.bf16.gmra.mxu0 %v1163
      %v2325 = vpop.f32.mrf.mxu0
      %v2326 = vadd.f32 %v2165, %v2325
      %v2327 = vpop.f32.mrf.mxu0
      %v2328 = vpop.f32.mrf.mxu0
      %v2329 = vadd.f32 %v2168, %v2328
      %v2330 = vpop.f32.mrf.mxu0
      %2331 = vmatprep.mubr.bf16.mxu0 0
      %2332 = vmatmul.mubr.bf16.gmra.mxu0 %v1166
      %v2333 = vpop.f32.mrf.mxu0
      %v2334 = vadd.f32 %v2173, %v2333
      %v2335 = vpop.f32.mrf.mxu0
      %v2336 = vpop.f32.mrf.mxu0
      %v2337 = vadd.f32 %v2176, %v2336
      %v2338 = vpop.f32.mrf.mxu0
      %2339 = vdwg.mxu0
      %s2340 = scalar_lea.vmem [#allocation2], 96
      %v2341 = vld [vmem:[%s2340] sm:$0xff]
      %v2342 = vld [vmem:[%s2340 + $0x8] sm:$0xff]
      %v2343 = vld [vmem:[%s2340 + $0x10] sm:$0xff]
      %v2344 = vld [vmem:[%s2340 + $0x18] sm:$0xff]
      %v2345 = vld [vmem:[%s2340 + $0x20] sm:$0xff]
      %v2346 = vld [vmem:[%s2340 + $0x28] sm:$0xff]
      %v2347 = vld [vmem:[%s2340 + $0x30] sm:$0xff]
      %v2348 = vld [vmem:[%s2340 + $0x38] sm:$0xff]
      %v2349 = vld [vmem:[%s2340 + $0x40] sm:$0xff]
      %v2350 = vld [vmem:[%s2340 + $0x48] sm:$0xff]
      %v2351 = vld [vmem:[%s2340 + $0x50] sm:$0xff]
      %v2352 = vld [vmem:[%s2340 + $0x58] sm:$0xff]
      %v2353 = vld [vmem:[%s2340 + $0x60] sm:$0xff]
      %v2354 = vld [vmem:[%s2340 + $0x68] sm:$0xff]
      %v2355 = vld [vmem:[%s2340 + $0x70] sm:$0xff]
      %v2356 = vld [vmem:[%s2340 + $0x78] sm:$0xff]
      %v2357 = vld [vmem:[%s2340 + $0x80] sm:$0xff]
      %v2358 = vld [vmem:[%s2340 + $0x88] sm:$0xff]
      %v2359 = vld [vmem:[%s2340 + $0x90] sm:$0xff]
      %v2360 = vld [vmem:[%s2340 + $0x98] sm:$0xff]
      %v2361 = vld [vmem:[%s2340 + $0xa0] sm:$0xff]
      %v2362 = vld [vmem:[%s2340 + $0xa8] sm:$0xff]
      %v2363 = vld [vmem:[%s2340 + $0xb0] sm:$0xff]
      %v2364 = vld [vmem:[%s2340 + $0xb8] sm:$0xff]
      %v2365 = vld [vmem:[%s2340 + $0xc0] sm:$0xff]
      %v2366 = vld [vmem:[%s2340 + $0xc8] sm:$0xff]
      %v2367 = vld [vmem:[%s2340 + $0xd0] sm:$0xff]
      %v2368 = vld [vmem:[%s2340 + $0xd8] sm:$0xff]
      %v2369 = vld [vmem:[%s2340 + $0xe0] sm:$0xff]
      %v2370 = vld [vmem:[%s2340 + $0xe8] sm:$0xff]
      %v2371 = vld [vmem:[%s2340 + $0xf0] sm:$0xff]
      %v2372 = vld [vmem:[%s2340 + $0xf8] sm:$0xff]
      %v2373 = vld [vmem:[%s2340 + $0x100] sm:$0xff]
      %v2374 = vld [vmem:[%s2340 + $0x108] sm:$0xff]
      %v2375 = vld [vmem:[%s2340 + $0x110] sm:$0xff]
      %v2376 = vld [vmem:[%s2340 + $0x118] sm:$0xff]
      %v2377 = vld [vmem:[%s2340 + $0x120] sm:$0xff]
      %v2378 = vld [vmem:[%s2340 + $0x128] sm:$0xff]
      %v2379 = vld [vmem:[%s2340 + $0x130] sm:$0xff]
      %v2380 = vld [vmem:[%s2340 + $0x138] sm:$0xff]
      %v2381 = vld [vmem:[%s2340 + $0x140] sm:$0xff]
      %v2382 = vld [vmem:[%s2340 + $0x148] sm:$0xff]
      %v2383 = vld [vmem:[%s2340 + $0x150] sm:$0xff]
      %v2384 = vld [vmem:[%s2340 + $0x158] sm:$0xff]
      %v2385 = vld [vmem:[%s2340 + $0x160] sm:$0xff]
      %v2386 = vld [vmem:[%s2340 + $0x168] sm:$0xff]
      %v2387 = vld [vmem:[%s2340 + $0x170] sm:$0xff]
      %v2388 = vld [vmem:[%s2340 + $0x178] sm:$0xff]
      %v2389 = vld [vmem:[%s2340 + $0x180] sm:$0xff]
      %v2390 = vld [vmem:[%s2340 + $0x188] sm:$0xff]
      %v2391 = vld [vmem:[%s2340 + $0x190] sm:$0xff]
      %v2392 = vld [vmem:[%s2340 + $0x198] sm:$0xff]
      %v2393 = vld [vmem:[%s2340 + $0x1a0] sm:$0xff]
      %v2394 = vld [vmem:[%s2340 + $0x1a8] sm:$0xff]
      %v2395 = vld [vmem:[%s2340 + $0x1b0] sm:$0xff]
      %v2396 = vld [vmem:[%s2340 + $0x1b8] sm:$0xff]
      %v2397 = vld [vmem:[%s2340 + $0x1c0] sm:$0xff]
      %v2398 = vld [vmem:[%s2340 + $0x1c8] sm:$0xff]
      %v2399 = vld [vmem:[%s2340 + $0x1d0] sm:$0xff]
      %v2400 = vld [vmem:[%s2340 + $0x1d8] sm:$0xff]
      %v2401 = vld [vmem:[%s2340 + $0x1e0] sm:$0xff]
      %v2402 = vld [vmem:[%s2340 + $0x1e8] sm:$0xff]
      %v2403 = vld [vmem:[%s2340 + $0x1f0] sm:$0xff]
      %v2404 = vld [vmem:[%s2340 + $0x1f8] sm:$0xff]
      %v2405 = vld [vmem:[%s2340 + $0x200] sm:$0xff]
      %v2406 = vld [vmem:[%s2340 + $0x208] sm:$0xff]
      %v2407 = vld [vmem:[%s2340 + $0x210] sm:$0xff]
      %v2408 = vld [vmem:[%s2340 + $0x218] sm:$0xff]
      %v2409 = vld [vmem:[%s2340 + $0x220] sm:$0xff]
      %v2410 = vld [vmem:[%s2340 + $0x228] sm:$0xff]
      %v2411 = vld [vmem:[%s2340 + $0x230] sm:$0xff]
      %v2412 = vld [vmem:[%s2340 + $0x238] sm:$0xff]
      %v2413 = vld [vmem:[%s2340 + $0x240] sm:$0xff]
      %v2414 = vld [vmem:[%s2340 + $0x248] sm:$0xff]
      %v2415 = vld [vmem:[%s2340 + $0x250] sm:$0xff]
      %v2416 = vld [vmem:[%s2340 + $0x258] sm:$0xff]
      %v2417 = vld [vmem:[%s2340 + $0x260] sm:$0xff]
      %v2418 = vld [vmem:[%s2340 + $0x268] sm:$0xff]
      %v2419 = vld [vmem:[%s2340 + $0x270] sm:$0xff]
      %v2420 = vld [vmem:[%s2340 + $0x278] sm:$0xff]
      %v2421 = vld [vmem:[%s2340 + $0x280] sm:$0xff]
      %v2422 = vld [vmem:[%s2340 + $0x288] sm:$0xff]
      %v2423 = vld [vmem:[%s2340 + $0x290] sm:$0xff]
      %v2424 = vld [vmem:[%s2340 + $0x298] sm:$0xff]
      %v2425 = vld [vmem:[%s2340 + $0x2a0] sm:$0xff]
      %v2426 = vld [vmem:[%s2340 + $0x2a8] sm:$0xff]
      %v2427 = vld [vmem:[%s2340 + $0x2b0] sm:$0xff]
      %v2428 = vld [vmem:[%s2340 + $0x2b8] sm:$0xff]
      %v2429 = vld [vmem:[%s2340 + $0x2c0] sm:$0xff]
      %v2430 = vld [vmem:[%s2340 + $0x2c8] sm:$0xff]
      %v2431 = vld [vmem:[%s2340 + $0x2d0] sm:$0xff]
      %v2432 = vld [vmem:[%s2340 + $0x2d8] sm:$0xff]
      %v2433 = vld [vmem:[%s2340 + $0x2e0] sm:$0xff]
      %v2434 = vld [vmem:[%s2340 + $0x2e8] sm:$0xff]
      %v2435 = vld [vmem:[%s2340 + $0x2f0] sm:$0xff]
      %v2436 = vld [vmem:[%s2340 + $0x2f8] sm:$0xff]
      %v2437 = vpack.c.bf16 %v2344, %v2341
      %v2438 = vpack.c.bf16 %v2345, %v2342
      %v2439 = vpack.c.bf16 %v2346, %v2343
      %v2440 = vpack.c.bf16 %v2350, %v2347
      %v2441 = vpack.c.bf16 %v2351, %v2348
      %v2442 = vpack.c.bf16 %v2352, %v2349
      %v2443 = vpack.c.bf16 %v2356, %v2353
      %v2444 = vpack.c.bf16 %v2357, %v2354
      %v2445 = vpack.c.bf16 %v2358, %v2355
      %v2446 = vpack.c.bf16 %v2362, %v2359
      %v2447 = vpack.c.bf16 %v2363, %v2360
      %v2448 = vpack.c.bf16 %v2364, %v2361
      %v2449 = vpack.c.bf16 %v2368, %v2365
      %v2450 = vpack.c.bf16 %v2369, %v2366
      %v2451 = vpack.c.bf16 %v2370, %v2367
      %v2452 = vpack.c.bf16 %v2374, %v2371
      %v2453 = vpack.c.bf16 %v2375, %v2372
      %v2454 = vpack.c.bf16 %v2376, %v2373
      %v2455 = vpack.c.bf16 %v2380, %v2377
      %v2456 = vpack.c.bf16 %v2381, %v2378
      %v2457 = vpack.c.bf16 %v2382, %v2379
      %v2458 = vpack.c.bf16 %v2386, %v2383
      %v2459 = vpack.c.bf16 %v2387, %v2384
      %v2460 = vpack.c.bf16 %v2388, %v2385
      %v2461 = vpack.c.bf16 %v2392, %v2389
      %v2462 = vpack.c.bf16 %v2393, %v2390
      %v2463 = vpack.c.bf16 %v2394, %v2391
      %v2464 = vpack.c.bf16 %v2398, %v2395
      %v2465 = vpack.c.bf16 %v2399, %v2396
      %v2466 = vpack.c.bf16 %v2400, %v2397
      %v2467 = vpack.c.bf16 %v2404, %v2401
      %v2468 = vpack.c.bf16 %v2405, %v2402
      %v2469 = vpack.c.bf16 %v2406, %v2403
      %v2470 = vpack.c.bf16 %v2410, %v2407
      %v2471 = vpack.c.bf16 %v2411, %v2408
      %v2472 = vpack.c.bf16 %v2412, %v2409
      %v2473 = vpack.c.bf16 %v2416, %v2413
      %v2474 = vpack.c.bf16 %v2417, %v2414
      %v2475 = vpack.c.bf16 %v2418, %v2415
      %v2476 = vpack.c.bf16 %v2422, %v2419
      %v2477 = vpack.c.bf16 %v2423, %v2420
      %v2478 = vpack.c.bf16 %v2424, %v2421
      %v2479 = vpack.c.bf16 %v2428, %v2425
      %v2480 = vpack.c.bf16 %v2429, %v2426
      %v2481 = vpack.c.bf16 %v2430, %v2427
      %v2482 = vpack.c.bf16 %v2434, %v2431
      %v2483 = vpack.c.bf16 %v2435, %v2432
      %v2484 = vpack.c.bf16 %v2436, %v2433
      %s2485 = scalar_lea.vmem %s2, 384
      %v2486 = vld [vmem:[%s2485] sm:$0xf]
      %v2487 = vld [vmem:[%s2485 + $0x4] sm:$0xf]
      %v2488 = vld [vmem:[%s2485 + $0x8] sm:$0xf]
      %v2489 = vld [vmem:[%s2485 + $0xc] sm:$0xf]
      %v2490 = vld [vmem:[%s2485 + $0x10] sm:$0xf]
      %v2491 = vld [vmem:[%s2485 + $0x14] sm:$0xf]
      %v2492 = vld [vmem:[%s2485 + $0x18] sm:$0xf]
      %v2493 = vld [vmem:[%s2485 + $0x1c] sm:$0xf]
      %v2494 = vld [vmem:[%s2485 + $0x20] sm:$0xf]
      %v2495 = vld [vmem:[%s2485 + $0x24] sm:$0xf]
      %v2496 = vld [vmem:[%s2485 + $0x28] sm:$0xf]
      %v2497 = vld [vmem:[%s2485 + $0x2c] sm:$0xf]
      %v2498 = vld [vmem:[%s2485 + $0x30] sm:$0xf]
      %v2499 = vld [vmem:[%s2485 + $0x34] sm:$0xf]
      %v2500 = vld [vmem:[%s2485 + $0x38] sm:$0xf]
      %v2501 = vld [vmem:[%s2485 + $0x3c] sm:$0xf]
      %v2502 = vld [vmem:[%s2485 + $0x40] sm:$0xf]
      %v2503 = vld [vmem:[%s2485 + $0x44] sm:$0xf]
      %v2504 = vld [vmem:[%s2485 + $0x48] sm:$0xf]
      %v2505 = vld [vmem:[%s2485 + $0x4c] sm:$0xf]
      %v2506 = vld [vmem:[%s2485 + $0x50] sm:$0xf]
      %v2507 = vld [vmem:[%s2485 + $0x54] sm:$0xf]
      %v2508 = vld [vmem:[%s2485 + $0x58] sm:$0xf]
      %v2509 = vld [vmem:[%s2485 + $0x5c] sm:$0xf]
      %v2510 = vld [vmem:[%s2485 + $0x60] sm:$0xf]
      %v2511 = vld [vmem:[%s2485 + $0x64] sm:$0xf]
      %v2512 = vld [vmem:[%s2485 + $0x68] sm:$0xf]
      %v2513 = vld [vmem:[%s2485 + $0x6c] sm:$0xf]
      %v2514 = vld [vmem:[%s2485 + $0x70] sm:$0xf]
      %v2515 = vld [vmem:[%s2485 + $0x74] sm:$0xf]
      %v2516 = vld [vmem:[%s2485 + $0x78] sm:$0xf]
      %v2517 = vld [vmem:[%s2485 + $0x7c] sm:$0xf]
      %v2518 = vld [vmem:[%s2485 + $0x80] sm:$0xf]
      %v2519 = vld [vmem:[%s2485 + $0x84] sm:$0xf]
      %v2520 = vld [vmem:[%s2485 + $0x88] sm:$0xf]
      %v2521 = vld [vmem:[%s2485 + $0x8c] sm:$0xf]
      %v2522 = vld [vmem:[%s2485 + $0x90] sm:$0xf]
      %v2523 = vld [vmem:[%s2485 + $0x94] sm:$0xf]
      %v2524 = vld [vmem:[%s2485 + $0x98] sm:$0xf]
      %v2525 = vld [vmem:[%s2485 + $0x9c] sm:$0xf]
      %v2526 = vld [vmem:[%s2485 + $0xa0] sm:$0xf]
      %v2527 = vld [vmem:[%s2485 + $0xa4] sm:$0xf]
      %v2528 = vld [vmem:[%s2485 + $0xa8] sm:$0xf]
      %v2529 = vld [vmem:[%s2485 + $0xac] sm:$0xf]
      %v2530 = vld [vmem:[%s2485 + $0xb0] sm:$0xf]
      %v2531 = vld [vmem:[%s2485 + $0xb4] sm:$0xf]
      %v2532 = vld [vmem:[%s2485 + $0xb8] sm:$0xf]
      %v2533 = vld [vmem:[%s2485 + $0xbc] sm:$0xf]
      %v2582 = vunpack.c.l.b16 %v2486
      %v2583 = vunpack.c.l.b16 %v2487
      %v2584 = vunpack.c.l.b16 %v2488
      %v2585 = vunpack.c.l.b16 %v2489
      %v2586 = vunpack.c.l.b16 %v2490
      %v2587 = vunpack.c.l.b16 %v2491
      %v2588 = vunpack.c.l.b16 %v2492
      %v2589 = vunpack.c.l.b16 %v2493
      %v2590 = vunpack.c.l.b16 %v2494
      %v2591 = vunpack.c.l.b16 %v2495
      %v2592 = vunpack.c.l.b16 %v2496
      %v2593 = vunpack.c.l.b16 %v2497
      %v2594 = vunpack.c.l.b16 %v2498
      %v2595 = vunpack.c.l.b16 %v2499
      %v2596 = vunpack.c.l.b16 %v2500
      %v2597 = vunpack.c.l.b16 %v2501
      %v2598 = vunpack.c.l.b16 %v2502
      %v2599 = vunpack.c.l.b16 %v2503
      %v2600 = vunpack.c.l.b16 %v2504
      %v2601 = vunpack.c.l.b16 %v2505
      %v2602 = vunpack.c.l.b16 %v2506
      %v2603 = vunpack.c.l.b16 %v2507
      %v2604 = vunpack.c.l.b16 %v2508
      %v2605 = vunpack.c.l.b16 %v2509
      %v2606 = vunpack.c.l.b16 %v2510
      %v2607 = vunpack.c.l.b16 %v2511
      %v2608 = vunpack.c.l.b16 %v2512
      %v2609 = vunpack.c.l.b16 %v2513
      %v2610 = vunpack.c.l.b16 %v2514
      %v2611 = vunpack.c.l.b16 %v2515
      %v2612 = vunpack.c.l.b16 %v2516
      %v2613 = vunpack.c.l.b16 %v2517
      %v2614 = vunpack.c.l.b16 %v2518
      %v2615 = vunpack.c.l.b16 %v2519
      %v2616 = vunpack.c.l.b16 %v2520
      %v2617 = vunpack.c.l.b16 %v2521
      %v2618 = vunpack.c.l.b16 %v2522
      %v2619 = vunpack.c.l.b16 %v2523
      %v2620 = vunpack.c.l.b16 %v2524
      %v2621 = vunpack.c.l.b16 %v2525
      %v2622 = vunpack.c.l.b16 %v2526
      %v2623 = vunpack.c.l.b16 %v2527
      %v2624 = vunpack.c.l.b16 %v2528
      %v2625 = vunpack.c.l.b16 %v2529
      %v2626 = vunpack.c.l.b16 %v2530
      %v2627 = vunpack.c.l.b16 %v2531
      %v2628 = vunpack.c.l.b16 %v2532
      %v2629 = vunpack.c.l.b16 %v2533
      %v2630 = vpack.c.b16 %v2583, %v2582
      %v2631 = vpack.c.b16 %v2585, %v2584
      %v2632 = vpack.c.b16 %v2587, %v2586
      %v2633 = vpack.c.b16 %v2589, %v2588
      %v2634 = vpack.c.b16 %v2591, %v2590
      %v2635 = vpack.c.b16 %v2593, %v2592
      %v2636 = vpack.c.b16 %v2595, %v2594
      %v2637 = vpack.c.b16 %v2597, %v2596
      %v2638 = vpack.c.b16 %v2599, %v2598
      %v2639 = vpack.c.b16 %v2601, %v2600
      %v2640 = vpack.c.b16 %v2603, %v2602
      %v2641 = vpack.c.b16 %v2605, %v2604
      %v2642 = vpack.c.b16 %v2607, %v2606
      %v2643 = vpack.c.b16 %v2609, %v2608
      %v2644 = vpack.c.b16 %v2611, %v2610
      %v2645 = vpack.c.b16 %v2613, %v2612
      %v2646 = vpack.c.b16 %v2615, %v2614
      %v2647 = vpack.c.b16 %v2617, %v2616
      %v2648 = vpack.c.b16 %v2619, %v2618
      %v2649 = vpack.c.b16 %v2621, %v2620
      %v2650 = vpack.c.b16 %v2623, %v2622
      %v2651 = vpack.c.b16 %v2625, %v2624
      %v2652 = vpack.c.b16 %v2627, %v2626
      %v2653 = vpack.c.b16 %v2629, %v2628
      %2678 = vmatprep.subr.bf16.mxu0 0
      %2679 = vmatpush1.bf16.msra.mxu0 %v2637
      %2680 = vmatprep.subr.bf16.mxu0 0
      %2681 = vmatpush1.bf16.msra.mxu0 %v2636
      %2682 = vmatprep.subr.bf16.mxu0 0
      %2683 = vmatpush1.bf16.msra.mxu0 %v2635
      %2684 = vmatprep.subr.bf16.mxu0 0
      %2685 = vmatpush1.bf16.msra.mxu0 %v2634
      %2686 = vmatprep.subr.bf16.mxu0 0
      %2687 = vmatpush1.bf16.msra.mxu0 %v2633
      %2688 = vmatprep.subr.bf16.mxu0 0
      %2689 = vmatpush1.bf16.msra.mxu0 %v2632
      %2690 = vmatprep.subr.bf16.mxu0 0
      %2691 = vmatpush1.bf16.msra.mxu0 %v2631
      %2692 = vmatprep.subr.bf16.mxu0 0
      %2693 = vmatpush1.bf16.msra.mxu0 %v2630
      %2694 = vmatprep.subr.bf16.mxu0 0
      %2695 = vmatpush2.bf16.msra.mxu0 %v2645
      %2696 = vmatprep.subr.bf16.mxu0 0
      %2697 = vmatpush2.bf16.msra.mxu0 %v2644
      %2698 = vmatprep.subr.bf16.mxu0 0
      %2699 = vmatpush2.bf16.msra.mxu0 %v2643
      %2700 = vmatprep.subr.bf16.mxu0 0
      %2701 = vmatpush2.bf16.msra.mxu0 %v2642
      %2702 = vmatprep.subr.bf16.mxu0 0
      %2703 = vmatpush2.bf16.msra.mxu0 %v2641
      %2704 = vmatprep.subr.bf16.mxu0 0
      %2705 = vmatpush2.bf16.msra.mxu0 %v2640
      %2706 = vmatprep.subr.bf16.mxu0 0
      %2707 = vmatpush2.bf16.msra.mxu0 %v2639
      %2708 = vmatprep.subr.bf16.mxu0 0
      %2709 = vmatpush2.bf16.msra.mxu0 %v2638
      %2710 = vmatprep.mubr.bf16.mxu0 %v2438
      %2711 = vmatmul.mubr.bf16.gmra.mxu0 %v2437
      %v2712 = vpop.f32.mrf.mxu0
      %v2713 = vadd.f32 0.0, %v2712
      %v2714 = vpop.f32.mrf.mxu0
      %v2715 = vpop.f32.mrf.mxu0
      %v2716 = vadd.f32 0.0, %v2715
      %v2717 = vpop.f32.mrf.mxu0
      %2718 = vmatprep.mubr.bf16.mxu0 %v2441
      %2719 = vmatmul.mubr.bf16.gmra.mxu0 %v2440
      %v2720 = vpop.f32.mrf.mxu0
      %v2721 = vadd.f32 0.0, %v2720
      %v2722 = vpop.f32.mrf.mxu0
      %v2723 = vpop.f32.mrf.mxu0
      %v2724 = vadd.f32 0.0, %v2723
      %v2725 = vpop.f32.mrf.mxu0
      %2726 = vmatprep.mubr.bf16.mxu0 %v2444
      %2727 = vmatmul.mubr.bf16.gmra.mxu0 %v2443
      %v2728 = vpop.f32.mrf.mxu0
      %v2729 = vadd.f32 0.0, %v2728
      %v2730 = vpop.f32.mrf.mxu0
      %v2731 = vpop.f32.mrf.mxu0
      %v2732 = vadd.f32 0.0, %v2731
      %v2733 = vpop.f32.mrf.mxu0
      %2734 = vmatprep.mubr.bf16.mxu0 %v2447
      %2735 = vmatmul.mubr.bf16.gmra.mxu0 %v2446
      %v2736 = vpop.f32.mrf.mxu0
      %v2737 = vadd.f32 0.0, %v2736
      %v2738 = vpop.f32.mrf.mxu0
      %v2739 = vpop.f32.mrf.mxu0
      %v2740 = vadd.f32 0.0, %v2739
      %v2741 = vpop.f32.mrf.mxu0
      %2742 = vmatprep.mubr.bf16.mxu0 %v2450
      %2743 = vmatmul.mubr.bf16.gmra.mxu0 %v2449
      %v2744 = vpop.f32.mrf.mxu0
      %v2745 = vadd.f32 0.0, %v2744
      %v2746 = vpop.f32.mrf.mxu0
      %v2747 = vpop.f32.mrf.mxu0
      %v2748 = vadd.f32 0.0, %v2747
      %v2749 = vpop.f32.mrf.mxu0
      %2750 = vmatprep.mubr.bf16.mxu0 %v2453
      %2751 = vmatmul.mubr.bf16.gmra.mxu0 %v2452
      %v2752 = vpop.f32.mrf.mxu0
      %v2753 = vadd.f32 0.0, %v2752
      %v2754 = vpop.f32.mrf.mxu0
      %v2755 = vpop.f32.mrf.mxu0
      %v2756 = vadd.f32 0.0, %v2755
      %v2757 = vpop.f32.mrf.mxu0
      %2758 = vmatprep.mubr.bf16.mxu0 %v2456
      %2759 = vmatmul.mubr.bf16.gmra.mxu0 %v2455
      %v2760 = vpop.f32.mrf.mxu0
      %v2761 = vadd.f32 0.0, %v2760
      %v2762 = vpop.f32.mrf.mxu0
      %v2763 = vpop.f32.mrf.mxu0
      %v2764 = vadd.f32 0.0, %v2763
      %v2765 = vpop.f32.mrf.mxu0
      %2766 = vmatprep.mubr.bf16.mxu0 %v2459
      %2767 = vmatmul.mubr.bf16.gmra.mxu0 %v2458
      %v2768 = vpop.f32.mrf.mxu0
      %v2769 = vadd.f32 0.0, %v2768
      %v2770 = vpop.f32.mrf.mxu0
      %v2771 = vpop.f32.mrf.mxu0
      %v2772 = vadd.f32 0.0, %v2771
      %v2773 = vpop.f32.mrf.mxu0
      %2774 = vmatprep.mubr.bf16.mxu0 %v2462
      %2775 = vmatmul.mubr.bf16.gmra.mxu0 %v2461
      %v2776 = vpop.f32.mrf.mxu0
      %v2777 = vadd.f32 0.0, %v2776
      %v2778 = vpop.f32.mrf.mxu0
      %v2779 = vpop.f32.mrf.mxu0
      %v2780 = vadd.f32 0.0, %v2779
      %v2781 = vpop.f32.mrf.mxu0
      %2782 = vmatprep.mubr.bf16.mxu0 %v2465
      %2783 = vmatmul.mubr.bf16.gmra.mxu0 %v2464
      %v2784 = vpop.f32.mrf.mxu0
      %v2785 = vadd.f32 0.0, %v2784
      %v2786 = vpop.f32.mrf.mxu0
      %v2787 = vpop.f32.mrf.mxu0
      %v2788 = vadd.f32 0.0, %v2787
      %v2789 = vpop.f32.mrf.mxu0
      %2790 = vmatprep.mubr.bf16.mxu0 %v2468
      %2791 = vmatmul.mubr.bf16.gmra.mxu0 %v2467
      %v2792 = vpop.f32.mrf.mxu0
      %v2793 = vadd.f32 0.0, %v2792
      %v2794 = vpop.f32.mrf.mxu0
      %v2795 = vpop.f32.mrf.mxu0
      %v2796 = vadd.f32 0.0, %v2795
      %v2797 = vpop.f32.mrf.mxu0
      %2798 = vmatprep.mubr.bf16.mxu0 %v2471
      %2799 = vmatmul.mubr.bf16.gmra.mxu0 %v2470
      %v2800 = vpop.f32.mrf.mxu0
      %v2801 = vadd.f32 0.0, %v2800
      %v2802 = vpop.f32.mrf.mxu0
      %v2803 = vpop.f32.mrf.mxu0
      %v2804 = vadd.f32 0.0, %v2803
      %v2805 = vpop.f32.mrf.mxu0
      %2806 = vmatprep.mubr.bf16.mxu0 %v2474
      %2807 = vmatmul.mubr.bf16.gmra.mxu0 %v2473
      %v2808 = vpop.f32.mrf.mxu0
      %v2809 = vadd.f32 0.0, %v2808
      %v2810 = vpop.f32.mrf.mxu0
      %v2811 = vpop.f32.mrf.mxu0
      %v2812 = vadd.f32 0.0, %v2811
      %v2813 = vpop.f32.mrf.mxu0
      %2814 = vmatprep.mubr.bf16.mxu0 %v2477
      %2815 = vmatmul.mubr.bf16.gmra.mxu0 %v2476
      %v2816 = vpop.f32.mrf.mxu0
      %v2817 = vadd.f32 0.0, %v2816
      %v2818 = vpop.f32.mrf.mxu0
      %v2819 = vpop.f32.mrf.mxu0
      %v2820 = vadd.f32 0.0, %v2819
      %v2821 = vpop.f32.mrf.mxu0
      %2822 = vmatprep.mubr.bf16.mxu0 %v2480
      %2823 = vmatmul.mubr.bf16.gmra.mxu0 %v2479
      %v2824 = vpop.f32.mrf.mxu0
      %v2825 = vadd.f32 0.0, %v2824
      %v2826 = vpop.f32.mrf.mxu0
      %v2827 = vpop.f32.mrf.mxu0
      %v2828 = vadd.f32 0.0, %v2827
      %v2829 = vpop.f32.mrf.mxu0
      %2830 = vmatprep.mubr.bf16.mxu0 %v2483
      %2831 = vmatmul.mubr.bf16.gmra.mxu0 %v2482
      %v2832 = vpop.f32.mrf.mxu0
      %v2833 = vadd.f32 0.0, %v2832
      %v2834 = vpop.f32.mrf.mxu0
      %v2835 = vpop.f32.mrf.mxu0
      %v2836 = vadd.f32 0.0, %v2835
      %v2837 = vpop.f32.mrf.mxu0
      %2838 = vdwg.mxu0
      %2839 = vmatprep.subr.bf16.mxu0 0
      %2840 = vmatpush1.bf16.msra.mxu0 %v2653
      %2841 = vmatprep.subr.bf16.mxu0 0
      %2842 = vmatpush1.bf16.msra.mxu0 %v2652
      %2843 = vmatprep.subr.bf16.mxu0 0
      %2844 = vmatpush1.bf16.msra.mxu0 %v2651
      %2845 = vmatprep.subr.bf16.mxu0 0
      %2846 = vmatpush1.bf16.msra.mxu0 %v2650
      %2847 = vmatprep.subr.bf16.mxu0 0
      %2848 = vmatpush1.bf16.msra.mxu0 %v2649
      %2849 = vmatprep.subr.bf16.mxu0 0
      %2850 = vmatpush1.bf16.msra.mxu0 %v2648
      %2851 = vmatprep.subr.bf16.mxu0 0
      %2852 = vmatpush1.bf16.msra.mxu0 %v2647
      %2853 = vmatprep.subr.bf16.mxu0 0
      %2854 = vmatpush1.bf16.msra.mxu0 %v2646
      %2855 = vmatprep.subr.bf16.mxu0 0
      %2856 = vmatpush2.bf16.msra.mxu0 0
      %2857 = vmatprep.subr.bf16.mxu0 0
      %2858 = vmatpush2.bf16.msra.mxu0 0
      %2859 = vmatprep.subr.bf16.mxu0 0
      %2860 = vmatpush2.bf16.msra.mxu0 0
      %2861 = vmatprep.subr.bf16.mxu0 0
      %2862 = vmatpush2.bf16.msra.mxu0 0
      %2863 = vmatprep.subr.bf16.mxu0 0
      %2864 = vmatpush2.bf16.msra.mxu0 0
      %2865 = vmatprep.subr.bf16.mxu0 0
      %2866 = vmatpush2.bf16.msra.mxu0 0
      %2867 = vmatprep.subr.bf16.mxu0 0
      %2868 = vmatpush2.bf16.msra.mxu0 0
      %2869 = vmatprep.subr.bf16.mxu0 0
      %2870 = vmatpush2.bf16.msra.mxu0 0
      %2871 = vmatprep.mubr.bf16.mxu0 0
      %2872 = vmatmul.mubr.bf16.gmra.mxu0 %v2439
      %v2873 = vpop.f32.mrf.mxu0
      %v2874 = vadd.f32 %v2713, %v2873
      %v2875 = vpop.f32.mrf.mxu0
      %v2876 = vpop.f32.mrf.mxu0
      %v2877 = vadd.f32 %v2716, %v2876
      %v2878 = vpop.f32.mrf.mxu0
      %2879 = vmatprep.mubr.bf16.mxu0 0
      %2880 = vmatmul.mubr.bf16.gmra.mxu0 %v2442
      %v2881 = vpop.f32.mrf.mxu0
      %v2882 = vadd.f32 %v2721, %v2881
      %v2883 = vpop.f32.mrf.mxu0
      %v2884 = vpop.f32.mrf.mxu0
      %v2885 = vadd.f32 %v2724, %v2884
      %v2886 = vpop.f32.mrf.mxu0
      %2887 = vmatprep.mubr.bf16.mxu0 0
      %2888 = vmatmul.mubr.bf16.gmra.mxu0 %v2445
      %v2889 = vpop.f32.mrf.mxu0
      %v2890 = vadd.f32 %v2729, %v2889
      %v2891 = vpop.f32.mrf.mxu0
      %v2892 = vpop.f32.mrf.mxu0
      %v2893 = vadd.f32 %v2732, %v2892
      %v2894 = vpop.f32.mrf.mxu0
      %2895 = vmatprep.mubr.bf16.mxu0 0
      %2896 = vmatmul.mubr.bf16.gmra.mxu0 %v2448
      %v2897 = vpop.f32.mrf.mxu0
      %v2898 = vadd.f32 %v2737, %v2897
      %v2899 = vpop.f32.mrf.mxu0
      %v2900 = vpop.f32.mrf.mxu0
      %v2901 = vadd.f32 %v2740, %v2900
      %v2902 = vpop.f32.mrf.mxu0
      %2903 = vmatprep.mubr.bf16.mxu0 0
      %2904 = vmatmul.mubr.bf16.gmra.mxu0 %v2451
      %v2905 = vpop.f32.mrf.mxu0
      %v2906 = vadd.f32 %v2745, %v2905
      %v2907 = vpop.f32.mrf.mxu0
      %v2908 = vpop.f32.mrf.mxu0
      %v2909 = vadd.f32 %v2748, %v2908
      %v2910 = vpop.f32.mrf.mxu0
      %2911 = vmatprep.mubr.bf16.mxu0 0
      %2912 = vmatmul.mubr.bf16.gmra.mxu0 %v2454
      %v2913 = vpop.f32.mrf.mxu0
      %v2914 = vadd.f32 %v2753, %v2913
      %v2915 = vpop.f32.mrf.mxu0
      %v2916 = vpop.f32.mrf.mxu0
      %v2917 = vadd.f32 %v2756, %v2916
      %v2918 = vpop.f32.mrf.mxu0
      %2919 = vmatprep.mubr.bf16.mxu0 0
      %2920 = vmatmul.mubr.bf16.gmra.mxu0 %v2457
      %v2921 = vpop.f32.mrf.mxu0
      %v2922 = vadd.f32 %v2761, %v2921
      %v2923 = vpop.f32.mrf.mxu0
      %v2924 = vpop.f32.mrf.mxu0
      %v2925 = vadd.f32 %v2764, %v2924
      %v2926 = vpop.f32.mrf.mxu0
      %2927 = vmatprep.mubr.bf16.mxu0 0
      %2928 = vmatmul.mubr.bf16.gmra.mxu0 %v2460
      %v2929 = vpop.f32.mrf.mxu0
      %v2930 = vadd.f32 %v2769, %v2929
      %v2931 = vpop.f32.mrf.mxu0
      %v2932 = vpop.f32.mrf.mxu0
      %v2933 = vadd.f32 %v2772, %v2932
      %v2934 = vpop.f32.mrf.mxu0
      %2935 = vmatprep.mubr.bf16.mxu0 0
      %2936 = vmatmul.mubr.bf16.gmra.mxu0 %v2463
      %v2937 = vpop.f32.mrf.mxu0
      %v2938 = vadd.f32 %v2777, %v2937
      %v2939 = vpop.f32.mrf.mxu0
      %v2940 = vpop.f32.mrf.mxu0
      %v2941 = vadd.f32 %v2780, %v2940
      %v2942 = vpop.f32.mrf.mxu0
      %2943 = vmatprep.mubr.bf16.mxu0 0
      %2944 = vmatmul.mubr.bf16.gmra.mxu0 %v2466
      %v2945 = vpop.f32.mrf.mxu0
      %v2946 = vadd.f32 %v2785, %v2945
      %v2947 = vpop.f32.mrf.mxu0
      %v2948 = vpop.f32.mrf.mxu0
      %v2949 = vadd.f32 %v2788, %v2948
      %v2950 = vpop.f32.mrf.mxu0
      %2951 = vmatprep.mubr.bf16.mxu0 0
      %2952 = vmatmul.mubr.bf16.gmra.mxu0 %v2469
      %v2953 = vpop.f32.mrf.mxu0
      %v2954 = vadd.f32 %v2793, %v2953
      %v2955 = vpop.f32.mrf.mxu0
      %v2956 = vpop.f32.mrf.mxu0
      %v2957 = vadd.f32 %v2796, %v2956
      %v2958 = vpop.f32.mrf.mxu0
      %2959 = vmatprep.mubr.bf16.mxu0 0
      %2960 = vmatmul.mubr.bf16.gmra.mxu0 %v2472
      %v2961 = vpop.f32.mrf.mxu0
      %v2962 = vadd.f32 %v2801, %v2961
      %v2963 = vpop.f32.mrf.mxu0
      %v2964 = vpop.f32.mrf.mxu0
      %v2965 = vadd.f32 %v2804, %v2964
      %v2966 = vpop.f32.mrf.mxu0
      %2967 = vmatprep.mubr.bf16.mxu0 0
      %2968 = vmatmul.mubr.bf16.gmra.mxu0 %v2475
      %v2969 = vpop.f32.mrf.mxu0
      %v2970 = vadd.f32 %v2809, %v2969
      %v2971 = vpop.f32.mrf.mxu0
      %v2972 = vpop.f32.mrf.mxu0
      %v2973 = vadd.f32 %v2812, %v2972
      %v2974 = vpop.f32.mrf.mxu0
      %2975 = vmatprep.mubr.bf16.mxu0 0
      %2976 = vmatmul.mubr.bf16.gmra.mxu0 %v2478
      %v2977 = vpop.f32.mrf.mxu0
      %v2978 = vadd.f32 %v2817, %v2977
      %v2979 = vpop.f32.mrf.mxu0
      %v2980 = vpop.f32.mrf.mxu0
      %v2981 = vadd.f32 %v2820, %v2980
      %v2982 = vpop.f32.mrf.mxu0
      %2983 = vmatprep.mubr.bf16.mxu0 0
      %2984 = vmatmul.mubr.bf16.gmra.mxu0 %v2481
      %v2985 = vpop.f32.mrf.mxu0
      %v2986 = vadd.f32 %v2825, %v2985
      %v2987 = vpop.f32.mrf.mxu0
      %v2988 = vpop.f32.mrf.mxu0
      %v2989 = vadd.f32 %v2828, %v2988
      %v2990 = vpop.f32.mrf.mxu0
      %2991 = vmatprep.mubr.bf16.mxu0 0
      %2992 = vmatmul.mubr.bf16.gmra.mxu0 %v2484
      %v2993 = vpop.f32.mrf.mxu0
      %v2994 = vadd.f32 %v2833, %v2993
      %v2995 = vpop.f32.mrf.mxu0
      %v2996 = vpop.f32.mrf.mxu0
      %v2997 = vadd.f32 %v2836, %v2996
      %v2998 = vpop.f32.mrf.mxu0
      %2999 = vdwg.mxu0
      %v3000 = vadd.f32 %v2214, %v2874
      %v3001 = vadd.f32 %v2217, %v2877
      %v3002 = vadd.f32 %v2222, %v2882
      %v3003 = vadd.f32 %v2225, %v2885
      %v3004 = vadd.f32 %v2230, %v2890
      %v3005 = vadd.f32 %v2233, %v2893
      %v3006 = vadd.f32 %v2238, %v2898
      %v3007 = vadd.f32 %v2241, %v2901
      %v3008 = vadd.f32 %v2246, %v2906
      %v3009 = vadd.f32 %v2249, %v2909
      %v3010 = vadd.f32 %v2254, %v2914
      %v3011 = vadd.f32 %v2257, %v2917
      %v3012 = vadd.f32 %v2262, %v2922
      %v3013 = vadd.f32 %v2265, %v2925
      %v3014 = vadd.f32 %v2270, %v2930
      %v3015 = vadd.f32 %v2273, %v2933
      %v3016 = vadd.f32 %v2278, %v2938
      %v3017 = vadd.f32 %v2281, %v2941
      %v3018 = vadd.f32 %v2286, %v2946
      %v3019 = vadd.f32 %v2289, %v2949
      %v3020 = vadd.f32 %v2294, %v2954
      %v3021 = vadd.f32 %v2297, %v2957
      %v3022 = vadd.f32 %v2302, %v2962
      %v3023 = vadd.f32 %v2305, %v2965
      %v3024 = vadd.f32 %v2310, %v2970
      %v3025 = vadd.f32 %v2313, %v2973
      %v3026 = vadd.f32 %v2318, %v2978
      %v3027 = vadd.f32 %v2321, %v2981
      %v3028 = vadd.f32 %v2326, %v2986
      %v3029 = vadd.f32 %v2329, %v2989
      %v3030 = vadd.f32 %v2334, %v2994
      %v3031 = vadd.f32 %v2337, %v2997
      %v3032 = vld [vmem:[%s3] sm:$0x1]
      %v3034 = vlaneseq
      %v3035 = vshrl.u32 %v3034, 7
      %v3036 = vsub.s32 0, %v3035
      %v3037 = vrot.slane %v3032, %v3036
      %v3039 = vadd.f32 %v3000, %v3037
      %v3040 = vadd.f32 %v3001, %v3037
      %v3041 = vadd.f32 %v3002, %v3037
      %v3042 = vadd.f32 %v3003, %v3037
      %v3043 = vadd.f32 %v3004, %v3037
      %v3044 = vadd.f32 %v3005, %v3037
      %v3045 = vadd.f32 %v3006, %v3037
      %v3046 = vadd.f32 %v3007, %v3037
      %v3047 = vadd.f32 %v3008, %v3037
      %v3048 = vadd.f32 %v3009, %v3037
      %v3049 = vadd.f32 %v3010, %v3037
      %v3050 = vadd.f32 %v3011, %v3037
      %v3051 = vadd.f32 %v3012, %v3037
      %v3052 = vadd.f32 %v3013, %v3037
      %v3053 = vadd.f32 %v3014, %v3037
      %v3054 = vadd.f32 %v3015, %v3037
      %v3055 = vadd.f32 %v3016, %v3037
      %v3056 = vadd.f32 %v3017, %v3037
      %v3057 = vadd.f32 %v3018, %v3037
      %v3058 = vadd.f32 %v3019, %v3037
      %v3059 = vadd.f32 %v3020, %v3037
      %v3060 = vadd.f32 %v3021, %v3037
      %v3061 = vadd.f32 %v3022, %v3037
      %v3062 = vadd.f32 %v3023, %v3037
      %v3063 = vadd.f32 %v3024, %v3037
      %v3064 = vadd.f32 %v3025, %v3037
      %v3065 = vadd.f32 %v3026, %v3037
      %v3066 = vadd.f32 %v3027, %v3037
      %v3067 = vadd.f32 %v3028, %v3037
      %v3068 = vadd.f32 %v3029, %v3037
      %v3069 = vadd.f32 %v3030, %v3037
      %v3070 = vadd.f32 %v3031, %v3037
      %v3071 = vld [vmem:[%s4] sm:$0x1]
      %v3072 = vld [vmem:[%s5] sm:$0x1]
      %v3073 = vadd.f32 %v3039, %v3040
      %v3074 = vadd.f32 %v3073, %v3041
      %v3075 = vadd.f32 %v3074, %v3042
      %v3076 = vadd.f32 %v3075, %v3043
      %v3077 = vadd.f32 %v3076, %v3044
      %v3078 = vadd.f32 %v3077, %v3045
      %v3079 = vadd.f32 %v3078, %v3046
      %v3080 = vadd.f32 %v3079, %v3047
      %v3081 = vadd.f32 %v3080, %v3048
      %v3082 = vadd.f32 %v3081, %v3049
      %v3083 = vadd.f32 %v3082, %v3050
      %v3084 = vadd.f32 %v3083, %v3051
      %v3085 = vadd.f32 %v3084, %v3052
      %v3086 = vadd.f32 %v3085, %v3053
      %v3087 = vadd.f32 %v3086, %v3054
      %v3088 = vadd.f32 %v3087, %v3055
      %v3089 = vadd.f32 %v3088, %v3056
      %v3090 = vadd.f32 %v3089, %v3057
      %v3091 = vadd.f32 %v3090, %v3058
      %v3092 = vadd.f32 %v3091, %v3059
      %v3093 = vadd.f32 %v3092, %v3060
      %v3094 = vadd.f32 %v3093, %v3061
      %v3095 = vadd.f32 %v3094, %v3062
      %v3096 = vadd.f32 %v3095, %v3063
      %v3097 = vadd.f32 %v3096, %v3064
      %v3098 = vadd.f32 %v3097, %v3065
      %v3099 = vadd.f32 %v3098, %v3066
      %v3100 = vadd.f32 %v3099, %v3067
      %v3101 = vadd.f32 %v3100, %v3068
      %v3102 = vadd.f32 %v3101, %v3069
      %v3103 = vadd.f32 %v3102, %v3070
      %v3104 = vrot.slane %v3103, 4
      %v3105 = vadd.f32 %v3103, %v3104
      %v3106 = vrot.slane %v3105, 2
      %v3107 = vadd.f32 %v3105, %v3106
      %v3108 = vrot.slane %v3107, 1
      %v3109 = vadd.f32 %v3107, %v3108
      %v3110 = vlaneseq
      %v3111 = vand.u32 %v3110, 127
      %3112 = vrot.lane.b32.xlu0 %v3109, 127
      %v3113 = vpop.permute.xlu0 %3112
      %3114 = vrot.lane.b32.xlu0 %v3109, 1
      %v3115 = vpop.permute.xlu0 %3114
      %v3116 = vand.u32 %v3111, 1
      %vm3117 = vcmp.eq.s32.totalorder %v3116, 0
      %v3118 = vsel %vm3117, %v3113, %v3115
      %v3119 = vadd.f32 %v3109, %v3118
      %v3120 = vmul.f32 %v3119, 0.001953125
      %v3121 = vlaneseq
      %v3122 = vshrl.u32 %v3121, 7
      %v3123 = vsub.s32 0, %v3122
      %v3124 = vrot.slane %v3120, %v3123
      %v3125 = vsub.f32 %v3039, %v3124
      %v3126 = vsub.f32 %v3040, %v3124
      %v3127 = vsub.f32 %v3041, %v3124
      %v3128 = vsub.f32 %v3042, %v3124
      %v3129 = vsub.f32 %v3043, %v3124
      %v3130 = vsub.f32 %v3044, %v3124
      %v3131 = vsub.f32 %v3045, %v3124
      %v3132 = vsub.f32 %v3046, %v3124
      %v3133 = vsub.f32 %v3047, %v3124
      %v3134 = vsub.f32 %v3048, %v3124
      %v3135 = vsub.f32 %v3049, %v3124
      %v3136 = vsub.f32 %v3050, %v3124
      %v3137 = vsub.f32 %v3051, %v3124
      %v3138 = vsub.f32 %v3052, %v3124
      %v3139 = vsub.f32 %v3053, %v3124
      %v3140 = vsub.f32 %v3054, %v3124
      %v3141 = vsub.f32 %v3055, %v3124
      %v3142 = vsub.f32 %v3056, %v3124
      %v3143 = vsub.f32 %v3057, %v3124
      %v3144 = vsub.f32 %v3058, %v3124
      %v3145 = vsub.f32 %v3059, %v3124
      %v3146 = vsub.f32 %v3060, %v3124
      %v3147 = vsub.f32 %v3061, %v3124
      %v3148 = vsub.f32 %v3062, %v3124
      %v3149 = vsub.f32 %v3063, %v3124
      %v3150 = vsub.f32 %v3064, %v3124
      %v3151 = vsub.f32 %v3065, %v3124
      %v3152 = vsub.f32 %v3066, %v3124
      %v3153 = vsub.f32 %v3067, %v3124
      %v3154 = vsub.f32 %v3068, %v3124
      %v3155 = vsub.f32 %v3069, %v3124
      %v3156 = vsub.f32 %v3070, %v3124
      %v3157 = vmul.f32 %v3125, %v3125
      %v3158 = vmul.f32 %v3126, %v3126
      %v3159 = vmul.f32 %v3127, %v3127
      %v3160 = vmul.f32 %v3128, %v3128
      %v3161 = vmul.f32 %v3129, %v3129
      %v3162 = vmul.f32 %v3130, %v3130
      %v3163 = vmul.f32 %v3131, %v3131
      %v3164 = vmul.f32 %v3132, %v3132
      %v3165 = vmul.f32 %v3133, %v3133
      %v3166 = vmul.f32 %v3134, %v3134
      %v3167 = vmul.f32 %v3135, %v3135
      %v3168 = vmul.f32 %v3136, %v3136
      %v3169 = vmul.f32 %v3137, %v3137
      %v3170 = vmul.f32 %v3138, %v3138
      %v3171 = vmul.f32 %v3139, %v3139
      %v3172 = vmul.f32 %v3140, %v3140
      %v3173 = vmul.f32 %v3141, %v3141
      %v3174 = vmul.f32 %v3142, %v3142
      %v3175 = vmul.f32 %v3143, %v3143
      %v3176 = vmul.f32 %v3144, %v3144
      %v3177 = vmul.f32 %v3145, %v3145
      %v3178 = vmul.f32 %v3146, %v3146
      %v3179 = vmul.f32 %v3147, %v3147
      %v3180 = vmul.f32 %v3148, %v3148
      %v3181 = vmul.f32 %v3149, %v3149
      %v3182 = vmul.f32 %v3150, %v3150
      %v3183 = vmul.f32 %v3151, %v3151
      %v3184 = vmul.f32 %v3152, %v3152
      %v3185 = vmul.f32 %v3153, %v3153
      %v3186 = vmul.f32 %v3154, %v3154
      %v3187 = vmul.f32 %v3155, %v3155
      %v3188 = vmul.f32 %v3156, %v3156
      %v3189 = vadd.f32 %v3157, %v3158
      %v3190 = vadd.f32 %v3189, %v3159
      %v3191 = vadd.f32 %v3190, %v3160
      %v3192 = vadd.f32 %v3191, %v3161
      %v3193 = vadd.f32 %v3192, %v3162
      %v3194 = vadd.f32 %v3193, %v3163
      %v3195 = vadd.f32 %v3194, %v3164
      %v3196 = vadd.f32 %v3195, %v3165
      %v3197 = vadd.f32 %v3196, %v3166
      %v3198 = vadd.f32 %v3197, %v3167
      %v3199 = vadd.f32 %v3198, %v3168
      %v3200 = vadd.f32 %v3199, %v3169
      %v3201 = vadd.f32 %v3200, %v3170
      %v3202 = vadd.f32 %v3201, %v3171
      %v3203 = vadd.f32 %v3202, %v3172
      %v3204 = vadd.f32 %v3203, %v3173
      %v3205 = vadd.f32 %v3204, %v3174
      %v3206 = vadd.f32 %v3205, %v3175
      %v3207 = vadd.f32 %v3206, %v3176
      %v3208 = vadd.f32 %v3207, %v3177
      %v3209 = vadd.f32 %v3208, %v3178
      %v3210 = vadd.f32 %v3209, %v3179
      %v3211 = vadd.f32 %v3210, %v3180
      %v3212 = vadd.f32 %v3211, %v3181
      %v3213 = vadd.f32 %v3212, %v3182
      %v3214 = vadd.f32 %v3213, %v3183
      %v3215 = vadd.f32 %v3214, %v3184
      %v3216 = vadd.f32 %v3215, %v3185
      %v3217 = vadd.f32 %v3216, %v3186
      %v3218 = vadd.f32 %v3217, %v3187
      %v3219 = vadd.f32 %v3218, %v3188
      %v3220 = vrot.slane %v3219, 4
      %v3221 = vadd.f32 %v3219, %v3220
      %v3222 = vrot.slane %v3221, 2
      %v3223 = vadd.f32 %v3221, %v3222
      %v3224 = vrot.slane %v3223, 1
      %v3225 = vadd.f32 %v3223, %v3224
      %3226 = vrot.lane.b32.xlu0 %v3225, 127
      %v3227 = vpop.permute.xlu0 %3226
      %3228 = vrot.lane.b32.xlu0 %v3225, 1
      %v3229 = vpop.permute.xlu0 %3228
      %v3230 = vsel %vm3117, %v3227, %v3229
      %v3231 = vadd.f32 %v3225, %v3230
      %v3232 = vmul.f32 %v3231, 0.001953125
      %v3233 = vadd.f32 %v3232, 1e-05
      %v3234 = vrsqrt.pop %v3233
      %v3235 = vmul.f32 %v3071, %v3234
      %v3237 = vlaneseq
      %v3238 = vshrl.u32 %v3237, 7
      %v3239 = vsub.s32 0, %v3238
      %v3240 = vrot.slane %v3235, %v3239
      %v3242 = vmul.f32 %v3125, %v3240
      %v3243 = vmul.f32 %v3126, %v3240
      %v3244 = vmul.f32 %v3127, %v3240
      %v3245 = vmul.f32 %v3128, %v3240
      %v3246 = vmul.f32 %v3129, %v3240
      %v3247 = vmul.f32 %v3130, %v3240
      %v3248 = vmul.f32 %v3131, %v3240
      %v3249 = vmul.f32 %v3132, %v3240
      %v3250 = vmul.f32 %v3133, %v3240
      %v3251 = vmul.f32 %v3134, %v3240
      %v3252 = vmul.f32 %v3135, %v3240
      %v3253 = vmul.f32 %v3136, %v3240
      %v3254 = vmul.f32 %v3137, %v3240
      %v3255 = vmul.f32 %v3138, %v3240
      %v3256 = vmul.f32 %v3139, %v3240
      %v3257 = vmul.f32 %v3140, %v3240
      %v3258 = vmul.f32 %v3141, %v3240
      %v3259 = vmul.f32 %v3142, %v3240
      %v3260 = vmul.f32 %v3143, %v3240
      %v3261 = vmul.f32 %v3144, %v3240
      %v3262 = vmul.f32 %v3145, %v3240
      %v3263 = vmul.f32 %v3146, %v3240
      %v3264 = vmul.f32 %v3147, %v3240
      %v3265 = vmul.f32 %v3148, %v3240
      %v3266 = vmul.f32 %v3149, %v3240
      %v3267 = vmul.f32 %v3150, %v3240
      %v3268 = vmul.f32 %v3151, %v3240
      %v3269 = vmul.f32 %v3152, %v3240
      %v3270 = vmul.f32 %v3153, %v3240
      %v3271 = vmul.f32 %v3154, %v3240
      %v3272 = vmul.f32 %v3155, %v3240
      %v3273 = vmul.f32 %v3156, %v3240
      %v3275 = vlaneseq
      %v3276 = vshrl.u32 %v3275, 7
      %v3277 = vsub.s32 0, %v3276
      %v3278 = vrot.slane %v3072, %v3277
      %v3280 = vadd.f32 %v3242, %v3278
      %v3281 = vadd.f32 %v3243, %v3278
      %v3282 = vadd.f32 %v3244, %v3278
      %v3283 = vadd.f32 %v3245, %v3278
      %v3284 = vadd.f32 %v3246, %v3278
      %v3285 = vadd.f32 %v3247, %v3278
      %v3286 = vadd.f32 %v3248, %v3278
      %v3287 = vadd.f32 %v3249, %v3278
      %v3288 = vadd.f32 %v3250, %v3278
      %v3289 = vadd.f32 %v3251, %v3278
      %v3290 = vadd.f32 %v3252, %v3278
      %v3291 = vadd.f32 %v3253, %v3278
      %v3292 = vadd.f32 %v3254, %v3278
      %v3293 = vadd.f32 %v3255, %v3278
      %v3294 = vadd.f32 %v3256, %v3278
      %v3295 = vadd.f32 %v3257, %v3278
      %v3296 = vadd.f32 %v3258, %v3278
      %v3297 = vadd.f32 %v3259, %v3278
      %v3298 = vadd.f32 %v3260, %v3278
      %v3299 = vadd.f32 %v3261, %v3278
      %v3300 = vadd.f32 %v3262, %v3278
      %v3301 = vadd.f32 %v3263, %v3278
      %v3302 = vadd.f32 %v3264, %v3278
      %v3303 = vadd.f32 %v3265, %v3278
      %v3304 = vadd.f32 %v3266, %v3278
      %v3305 = vadd.f32 %v3267, %v3278
      %v3306 = vadd.f32 %v3268, %v3278
      %v3307 = vadd.f32 %v3269, %v3278
      %v3308 = vadd.f32 %v3270, %v3278
      %v3309 = vadd.f32 %v3271, %v3278
      %v3310 = vadd.f32 %v3272, %v3278
      %v3311 = vadd.f32 %v3273, %v3278
      %v3312 = vmax.f32 %v3280, 0.0
      %v3313 = vmax.f32 %v3281, 0.0
      %v3314 = vmax.f32 %v3282, 0.0
      %v3315 = vmax.f32 %v3283, 0.0
      %v3316 = vmax.f32 %v3284, 0.0
      %v3317 = vmax.f32 %v3285, 0.0
      %v3318 = vmax.f32 %v3286, 0.0
      %v3319 = vmax.f32 %v3287, 0.0
      %v3320 = vmax.f32 %v3288, 0.0
      %v3321 = vmax.f32 %v3289, 0.0
      %v3322 = vmax.f32 %v3290, 0.0
      %v3323 = vmax.f32 %v3291, 0.0
      %v3324 = vmax.f32 %v3292, 0.0
      %v3325 = vmax.f32 %v3293, 0.0
      %v3326 = vmax.f32 %v3294, 0.0
      %v3327 = vmax.f32 %v3295, 0.0
      %v3328 = vmax.f32 %v3296, 0.0
      %v3329 = vmax.f32 %v3297, 0.0
      %v3330 = vmax.f32 %v3298, 0.0
      %v3331 = vmax.f32 %v3299, 0.0
      %v3332 = vmax.f32 %v3300, 0.0
      %v3333 = vmax.f32 %v3301, 0.0
      %v3334 = vmax.f32 %v3302, 0.0
      %v3335 = vmax.f32 %v3303, 0.0
      %v3336 = vmax.f32 %v3304, 0.0
      %v3337 = vmax.f32 %v3305, 0.0
      %v3338 = vmax.f32 %v3306, 0.0
      %v3339 = vmax.f32 %v3307, 0.0
      %v3340 = vmax.f32 %v3308, 0.0
      %v3341 = vmax.f32 %v3309, 0.0
      %v3342 = vmax.f32 %v3310, 0.0
      %v3343 = vmax.f32 %v3311, 0.0
      %3344 = vst [vmem:[#allocation3 + $0x8] sm:$0xff] 0.0
      %3345 = vst [vmem:[#allocation3 + $0x20] sm:$0xff] 0.0
      %s3346 = scalar_lea.vmem [#allocation3], 816
      %3347 = vst [vmem:[%s3346 + $0x8] sm:$0xff] 0.0
      %3348 = vst [vmem:[%s3346 + $0x20] sm:$0xff] 0.0
      %s3349 = scalar_lea.vmem [#allocation3], 48
      %3350 = vst [vmem:[%s3349 + $0x8] sm:$0xff] %v3312
      %3351 = vst [vmem:[%s3349 + $0x20] sm:$0xff] %v3313
      %3352 = vst [vmem:[%s3349 + $0x38] sm:$0xff] %v3314
      %3353 = vst [vmem:[%s3349 + $0x50] sm:$0xff] %v3315
      %3354 = vst [vmem:[%s3349 + $0x68] sm:$0xff] %v3316
      %3355 = vst [vmem:[%s3349 + $0x80] sm:$0xff] %v3317
      %3356 = vst [vmem:[%s3349 + $0x98] sm:$0xff] %v3318
      %3357 = vst [vmem:[%s3349 + $0xb0] sm:$0xff] %v3319
      %3358 = vst [vmem:[%s3349 + $0xc8] sm:$0xff] %v3320
      %3359 = vst [vmem:[%s3349 + $0xe0] sm:$0xff] %v3321
      %3360 = vst [vmem:[%s3349 + $0xf8] sm:$0xff] %v3322
      %3361 = vst [vmem:[%s3349 + $0x110] sm:$0xff] %v3323
      %3362 = vst [vmem:[%s3349 + $0x128] sm:$0xff] %v3324
      %3363 = vst [vmem:[%s3349 + $0x140] sm:$0xff] %v3325
      %3364 = vst [vmem:[%s3349 + $0x158] sm:$0xff] %v3326
      %3365 = vst [vmem:[%s3349 + $0x170] sm:$0xff] %v3327
      %3366 = vst [vmem:[%s3349 + $0x188] sm:$0xff] %v3328
      %3367 = vst [vmem:[%s3349 + $0x1a0] sm:$0xff] %v3329
      %3368 = vst [vmem:[%s3349 + $0x1b8] sm:$0xff] %v3330
      %3369 = vst [vmem:[%s3349 + $0x1d0] sm:$0xff] %v3331
      %3370 = vst [vmem:[%s3349 + $0x1e8] sm:$0xff] %v3332
      %3371 = vst [vmem:[%s3349 + $0x200] sm:$0xff] %v3333
      %3372 = vst [vmem:[%s3349 + $0x218] sm:$0xff] %v3334
      %3373 = vst [vmem:[%s3349 + $0x230] sm:$0xff] %v3335
      %3374 = vst [vmem:[%s3349 + $0x248] sm:$0xff] %v3336
      %3375 = vst [vmem:[%s3349 + $0x260] sm:$0xff] %v3337
      %3376 = vst [vmem:[%s3349 + $0x278] sm:$0xff] %v3338
      %3377 = vst [vmem:[%s3349 + $0x290] sm:$0xff] %v3339
      %3378 = vst [vmem:[%s3349 + $0x2a8] sm:$0xff] %v3340
      %3379 = vst [vmem:[%s3349 + $0x2c0] sm:$0xff] %v3341
      %3380 = vst [vmem:[%s3349 + $0x2d8] sm:$0xff] %v3342
      %3381 = vst [vmem:[%s3349 + $0x2f0] sm:$0xff] %v3343
      %v3382 = vld [vmem:[#allocation3 + $0x8] sm:$0xff]
      %v3383 = vld [vmem:[#allocation3 + $0x20] sm:$0xff]
      %v3384 = vld [vmem:[#allocation3 + $0x38] sm:$0xff]
      %v3385 = vld [vmem:[#allocation3 + $0x50] sm:$0xff]
      %v3386 = vld [vmem:[#allocation3 + $0x68] sm:$0xff]
      %v3387 = vld [vmem:[#allocation3 + $0x80] sm:$0xff]
      %v3388 = vld [vmem:[#allocation3 + $0x98] sm:$0xff]
      %v3389 = vld [vmem:[#allocation3 + $0xb0] sm:$0xff]
      %v3390 = vld [vmem:[#allocation3 + $0xc8] sm:$0xff]
      %v3391 = vld [vmem:[#allocation3 + $0xe0] sm:$0xff]
      %v3392 = vld [vmem:[#allocation3 + $0xf8] sm:$0xff]
      %v3393 = vld [vmem:[#allocation3 + $0x110] sm:$0xff]
      %v3394 = vld [vmem:[#allocation3 + $0x128] sm:$0xff]
      %v3395 = vld [vmem:[#allocation3 + $0x140] sm:$0xff]
      %v3396 = vld [vmem:[#allocation3 + $0x158] sm:$0xff]
      %v3397 = vld [vmem:[#allocation3 + $0x170] sm:$0xff]
      %v3398 = vld [vmem:[#allocation3 + $0x188] sm:$0xff]
      %v3399 = vld [vmem:[#allocation3 + $0x1a0] sm:$0xff]
      %v3400 = vld [vmem:[#allocation3 + $0x1b8] sm:$0xff]
      %v3401 = vld [vmem:[#allocation3 + $0x1d0] sm:$0xff]
      %v3402 = vld [vmem:[#allocation3 + $0x1e8] sm:$0xff]
      %v3403 = vld [vmem:[#allocation3 + $0x200] sm:$0xff]
      %v3404 = vld [vmem:[#allocation3 + $0x218] sm:$0xff]
      %v3405 = vld [vmem:[#allocation3 + $0x230] sm:$0xff]
      %v3406 = vld [vmem:[#allocation3 + $0x248] sm:$0xff]
      %v3407 = vld [vmem:[#allocation3 + $0x260] sm:$0xff]
      %v3408 = vld [vmem:[#allocation3 + $0x278] sm:$0xff]
      %v3409 = vld [vmem:[#allocation3 + $0x290] sm:$0xff]
      %v3410 = vld [vmem:[#allocation3 + $0x2a8] sm:$0xff]
      %v3411 = vld [vmem:[#allocation3 + $0x2c0] sm:$0xff]
      %v3412 = vld [vmem:[#allocation3 + $0x2d8] sm:$0xff]
      %v3413 = vld [vmem:[#allocation3 + $0x2f0] sm:$0xff]
      %v3414 = vld [vmem:[#allocation3 + $0x308] sm:$0xff]
      %v3415 = vld [vmem:[#allocation3 + $0x320] sm:$0xff]
      %v3416 = vld [vmem:[#allocation3 + $0x338] sm:$0xff]
      %v3417 = vld [vmem:[#allocation3 + $0x350] sm:$0xff]
      %v3418 = vrot.slane %v3382, 7
      %v3419 = vrot.slane %v3384, 7
      %v3420 = vrot.slane %v3386, 7
      %v3421 = vrot.slane %v3388, 7
      %v3422 = vrot.slane %v3390, 7
      %v3423 = vrot.slane %v3392, 7
      %v3424 = vrot.slane %v3394, 7
      %v3425 = vrot.slane %v3396, 7
      %v3426 = vrot.slane %v3398, 7
      %v3427 = vrot.slane %v3400, 7
      %v3428 = vrot.slane %v3402, 7
      %v3429 = vrot.slane %v3404, 7
      %v3430 = vrot.slane %v3406, 7
      %v3431 = vrot.slane %v3408, 7
      %v3432 = vrot.slane %v3410, 7
      %v3433 = vrot.slane %v3412, 7
      %v3434 = vrot.slane %v3414, 7
      %v3435 = vrot.slane %v3416, 7
      %v3436 = vrot.slane %v3383, 7
      %v3437 = vrot.slane %v3385, 7
      %v3438 = vrot.slane %v3387, 7
      %v3439 = vrot.slane %v3389, 7
      %v3440 = vrot.slane %v3391, 7
      %v3441 = vrot.slane %v3393, 7
      %v3442 = vrot.slane %v3395, 7
      %v3443 = vrot.slane %v3397, 7
      %v3444 = vrot.slane %v3399, 7
      %v3445 = vrot.slane %v3401, 7
      %v3446 = vrot.slane %v3403, 7
      %v3447 = vrot.slane %v3405, 7
      %v3448 = vrot.slane %v3407, 7
      %v3449 = vrot.slane %v3409, 7
      %v3450 = vrot.slane %v3411, 7
      %v3451 = vrot.slane %v3413, 7
      %v3452 = vrot.slane %v3415, 7
      %v3453 = vrot.slane %v3417, 7
      %v3454 = vsel %vm805, %v3418, %v3436
      %v3455 = vsel %vm805, %v3419, %v3437
      %v3456 = vsel %vm805, %v3420, %v3438
      %v3457 = vsel %vm805, %v3421, %v3439
      %v3458 = vsel %vm805, %v3422, %v3440
      %v3459 = vsel %vm805, %v3423, %v3441
      %v3460 = vsel %vm805, %v3424, %v3442
      %v3461 = vsel %vm805, %v3425, %v3443
      %v3462 = vsel %vm805, %v3426, %v3444
      %v3463 = vsel %vm805, %v3427, %v3445
      %v3464 = vsel %vm805, %v3428, %v3446
      %v3465 = vsel %vm805, %v3429, %v3447
      %v3466 = vsel %vm805, %v3430, %v3448
      %v3467 = vsel %vm805, %v3431, %v3449
      %v3468 = vsel %vm805, %v3432, %v3450
      %v3469 = vsel %vm805, %v3433, %v3451
      %v3470 = vsel %vm805, %v3434, %v3452
      %v3471 = vsel %vm805, %v3435, %v3453
      %v3472 = vsel %vm805, %v3436, %v3418
      %v3473 = vsel %vm805, %v3437, %v3419
      %v3474 = vsel %vm805, %v3438, %v3420
      %v3475 = vsel %vm805, %v3439, %v3421
      %v3476 = vsel %vm805, %v3440, %v3422
      %v3477 = vsel %vm805, %v3441, %v3423
      %v3478 = vsel %vm805, %v3442, %v3424
      %v3479 = vsel %vm805, %v3443, %v3425
      %v3480 = vsel %vm805, %v3444, %v3426
      %v3481 = vsel %vm805, %v3445, %v3427
      %v3482 = vsel %vm805, %v3446, %v3428
      %v3483 = vsel %vm805, %v3447, %v3429
      %v3484 = vsel %vm805, %v3448, %v3430
      %v3485 = vsel %vm805, %v3449, %v3431
      %v3486 = vsel %vm805, %v3450, %v3432
      %v3487 = vsel %vm805, %v3451, %v3433
      %v3488 = vsel %vm805, %v3452, %v3434
      %v3489 = vsel %vm805, %v3453, %v3435
      %3490 = vst [vmem:[#allocation3] sm:$0xff] %v3472
      %3491 = vst [vmem:[#allocation3 + $0x18] sm:$0xff] %v3454
      %3492 = vst [vmem:[#allocation3 + $0x30] sm:$0xff] %v3473
      %3493 = vst [vmem:[#allocation3 + $0x48] sm:$0xff] %v3455
      %3494 = vst [vmem:[#allocation3 + $0x60] sm:$0xff] %v3474
      %3495 = vst [vmem:[#allocation3 + $0x78] sm:$0xff] %v3456
      %3496 = vst [vmem:[#allocation3 + $0x90] sm:$0xff] %v3475
      %3497 = vst [vmem:[#allocation3 + $0xa8] sm:$0xff] %v3457
      %3498 = vst [vmem:[#allocation3 + $0xc0] sm:$0xff] %v3476
      %3499 = vst [vmem:[#allocation3 + $0xd8] sm:$0xff] %v3458
      %3500 = vst [vmem:[#allocation3 + $0xf0] sm:$0xff] %v3477
      %3501 = vst [vmem:[#allocation3 + $0x108] sm:$0xff] %v3459
      %3502 = vst [vmem:[#allocation3 + $0x120] sm:$0xff] %v3478
      %3503 = vst [vmem:[#allocation3 + $0x138] sm:$0xff] %v3460
      %3504 = vst [vmem:[#allocation3 + $0x150] sm:$0xff] %v3479
      %3505 = vst [vmem:[#allocation3 + $0x168] sm:$0xff] %v3461
      %3506 = vst [vmem:[#allocation3 + $0x180] sm:$0xff] %v3480
      %3507 = vst [vmem:[#allocation3 + $0x198] sm:$0xff] %v3462
      %3508 = vst [vmem:[#allocation3 + $0x1b0] sm:$0xff] %v3481
      %3509 = vst [vmem:[#allocation3 + $0x1c8] sm:$0xff] %v3463
      %3510 = vst [vmem:[#allocation3 + $0x1e0] sm:$0xff] %v3482
      %3511 = vst [vmem:[#allocation3 + $0x1f8] sm:$0xff] %v3464
      %3512 = vst [vmem:[#allocation3 + $0x210] sm:$0xff] %v3483
      %3513 = vst [vmem:[#allocation3 + $0x228] sm:$0xff] %v3465
      %3514 = vst [vmem:[#allocation3 + $0x240] sm:$0xff] %v3484
      %3515 = vst [vmem:[#allocation3 + $0x258] sm:$0xff] %v3466
      %3516 = vst [vmem:[#allocation3 + $0x270] sm:$0xff] %v3485
      %3517 = vst [vmem:[#allocation3 + $0x288] sm:$0xff] %v3467
      %3518 = vst [vmem:[#allocation3 + $0x2a0] sm:$0xff] %v3486
      %3519 = vst [vmem:[#allocation3 + $0x2b8] sm:$0xff] %v3468
      %3520 = vst [vmem:[#allocation3 + $0x2d0] sm:$0xff] %v3487
      %3521 = vst [vmem:[#allocation3 + $0x2e8] sm:$0xff] %v3469
      %3522 = vst [vmem:[#allocation3 + $0x300] sm:$0xff] %v3488
      %3523 = vst [vmem:[#allocation3 + $0x318] sm:$0xff] %v3470
      %3524 = vst [vmem:[#allocation3 + $0x330] sm:$0xff] %v3489
      %3525 = vst [vmem:[#allocation3 + $0x348] sm:$0xff] %v3471
      %3526 = vst [vmem:[#allocation3] sm:$0x1] 0.0
      %3527 = vst [vmem:[#allocation3 + $0x30] sm:$0x1] 0.0
      %3528 = vst [vmem:[#allocation3 + $0x60] sm:$0x1] 0.0
      %3529 = vst [vmem:[#allocation3 + $0x90] sm:$0x1] 0.0
      %3530 = vst [vmem:[#allocation3 + $0xc0] sm:$0x1] 0.0
      %3531 = vst [vmem:[#allocation3 + $0xf0] sm:$0x1] 0.0
      %3532 = vst [vmem:[#allocation3 + $0x120] sm:$0x1] 0.0
      %3533 = vst [vmem:[#allocation3 + $0x150] sm:$0x1] 0.0
      %3534 = vst [vmem:[#allocation3 + $0x180] sm:$0x1] 0.0
      %3535 = vst [vmem:[#allocation3 + $0x1b0] sm:$0x1] 0.0
      %3536 = vst [vmem:[#allocation3 + $0x1e0] sm:$0x1] 0.0
      %3537 = vst [vmem:[#allocation3 + $0x210] sm:$0x1] 0.0
      %3538 = vst [vmem:[#allocation3 + $0x240] sm:$0x1] 0.0
      %3539 = vst [vmem:[#allocation3 + $0x270] sm:$0x1] 0.0
      %3540 = vst [vmem:[#allocation3 + $0x2a0] sm:$0x1] 0.0
      %3541 = vst [vmem:[#allocation3 + $0x2d0] sm:$0x1] 0.0
      %3542 = vst [vmem:[#allocation3 + $0x300] sm:$0x1] 0.0
      %3543 = vst [vmem:[#allocation3 + $0x330] sm:$0x1] 0.0
      %v3544 = vrot.slane %v3382, 1
      %v3545 = vrot.slane %v3384, 1
      %v3546 = vrot.slane %v3386, 1
      %v3547 = vrot.slane %v3388, 1
      %v3548 = vrot.slane %v3390, 1
      %v3549 = vrot.slane %v3392, 1
      %v3550 = vrot.slane %v3394, 1
      %v3551 = vrot.slane %v3396, 1
      %v3552 = vrot.slane %v3398, 1
      %v3553 = vrot.slane %v3400, 1
      %v3554 = vrot.slane %v3402, 1
      %v3555 = vrot.slane %v3404, 1
      %v3556 = vrot.slane %v3406, 1
      %v3557 = vrot.slane %v3408, 1
      %v3558 = vrot.slane %v3410, 1
      %v3559 = vrot.slane %v3412, 1
      %v3560 = vrot.slane %v3414, 1
      %v3561 = vrot.slane %v3416, 1
      %v3562 = vrot.slane %v3383, 1
      %v3563 = vrot.slane %v3385, 1
      %v3564 = vrot.slane %v3387, 1
      %v3565 = vrot.slane %v3389, 1
      %v3566 = vrot.slane %v3391, 1
      %v3567 = vrot.slane %v3393, 1
      %v3568 = vrot.slane %v3395, 1
      %v3569 = vrot.slane %v3397, 1
      %v3570 = vrot.slane %v3399, 1
      %v3571 = vrot.slane %v3401, 1
      %v3572 = vrot.slane %v3403, 1
      %v3573 = vrot.slane %v3405, 1
      %v3574 = vrot.slane %v3407, 1
      %v3575 = vrot.slane %v3409, 1
      %v3576 = vrot.slane %v3411, 1
      %v3577 = vrot.slane %v3413, 1
      %v3578 = vrot.slane %v3415, 1
      %v3579 = vrot.slane %v3417, 1
      %v3580 = vsel %vm932, %v3544, %v3562
      %v3581 = vsel %vm932, %v3545, %v3563
      %v3582 = vsel %vm932, %v3546, %v3564
      %v3583 = vsel %vm932, %v3547, %v3565
      %v3584 = vsel %vm932, %v3548, %v3566
      %v3585 = vsel %vm932, %v3549, %v3567
      %v3586 = vsel %vm932, %v3550, %v3568
      %v3587 = vsel %vm932, %v3551, %v3569
      %v3588 = vsel %vm932, %v3552, %v3570
      %v3589 = vsel %vm932, %v3553, %v3571
      %v3590 = vsel %vm932, %v3554, %v3572
      %v3591 = vsel %vm932, %v3555, %v3573
      %v3592 = vsel %vm932, %v3556, %v3574
      %v3593 = vsel %vm932, %v3557, %v3575
      %v3594 = vsel %vm932, %v3558, %v3576
      %v3595 = vsel %vm932, %v3559, %v3577
      %v3596 = vsel %vm932, %v3560, %v3578
      %v3597 = vsel %vm932, %v3561, %v3579
      %v3598 = vsel %vm932, %v3562, %v3544
      %v3599 = vsel %vm932, %v3563, %v3545
      %v3600 = vsel %vm932, %v3564, %v3546
      %v3601 = vsel %vm932, %v3565, %v3547
      %v3602 = vsel %vm932, %v3566, %v3548
      %v3603 = vsel %vm932, %v3567, %v3549
      %v3604 = vsel %vm932, %v3568, %v3550
      %v3605 = vsel %vm932, %v3569, %v3551
      %v3606 = vsel %vm932, %v3570, %v3552
      %v3607 = vsel %vm932, %v3571, %v3553
      %v3608 = vsel %vm932, %v3572, %v3554
      %v3609 = vsel %vm932, %v3573, %v3555
      %v3610 = vsel %vm932, %v3574, %v3556
      %v3611 = vsel %vm932, %v3575, %v3557
      %v3612 = vsel %vm932, %v3576, %v3558
      %v3613 = vsel %vm932, %v3577, %v3559
      %v3614 = vsel %vm932, %v3578, %v3560
      %v3615 = vsel %vm932, %v3579, %v3561
      %3616 = vst [vmem:[#allocation3 + $0x10] sm:$0xff] %v3580
      %3617 = vst [vmem:[#allocation3 + $0x28] sm:$0xff] %v3598
      %3618 = vst [vmem:[#allocation3 + $0x40] sm:$0xff] %v3581
      %3619 = vst [vmem:[#allocation3 + $0x58] sm:$0xff] %v3599
      %3620 = vst [vmem:[#allocation3 + $0x70] sm:$0xff] %v3582
      %3621 = vst [vmem:[#allocation3 + $0x88] sm:$0xff] %v3600
      %3622 = vst [vmem:[#allocation3 + $0xa0] sm:$0xff] %v3583
      %3623 = vst [vmem:[#allocation3 + $0xb8] sm:$0xff] %v3601
      %3624 = vst [vmem:[#allocation3 + $0xd0] sm:$0xff] %v3584
      %3625 = vst [vmem:[#allocation3 + $0xe8] sm:$0xff] %v3602
      %3626 = vst [vmem:[#allocation3 + $0x100] sm:$0xff] %v3585
      %3627 = vst [vmem:[#allocation3 + $0x118] sm:$0xff] %v3603
      %3628 = vst [vmem:[#allocation3 + $0x130] sm:$0xff] %v3586
      %3629 = vst [vmem:[#allocation3 + $0x148] sm:$0xff] %v3604
      %3630 = vst [vmem:[#allocation3 + $0x160] sm:$0xff] %v3587
      %3631 = vst [vmem:[#allocation3 + $0x178] sm:$0xff] %v3605
      %3632 = vst [vmem:[#allocation3 + $0x190] sm:$0xff] %v3588
      %3633 = vst [vmem:[#allocation3 + $0x1a8] sm:$0xff] %v3606
      %3634 = vst [vmem:[#allocation3 + $0x1c0] sm:$0xff] %v3589
      %3635 = vst [vmem:[#allocation3 + $0x1d8] sm:$0xff] %v3607
      %3636 = vst [vmem:[#allocation3 + $0x1f0] sm:$0xff] %v3590
      %3637 = vst [vmem:[#allocation3 + $0x208] sm:$0xff] %v3608
      %3638 = vst [vmem:[#allocation3 + $0x220] sm:$0xff] %v3591
      %3639 = vst [vmem:[#allocation3 + $0x238] sm:$0xff] %v3609
      %3640 = vst [vmem:[#allocation3 + $0x250] sm:$0xff] %v3592
      %3641 = vst [vmem:[#allocation3 + $0x268] sm:$0xff] %v3610
      %3642 = vst [vmem:[#allocation3 + $0x280] sm:$0xff] %v3593
      %3643 = vst [vmem:[#allocation3 + $0x298] sm:$0xff] %v3611
      %3644 = vst [vmem:[#allocation3 + $0x2b0] sm:$0xff] %v3594
      %3645 = vst [vmem:[#allocation3 + $0x2c8] sm:$0xff] %v3612
      %3646 = vst [vmem:[#allocation3 + $0x2e0] sm:$0xff] %v3595
      %3647 = vst [vmem:[#allocation3 + $0x2f8] sm:$0xff] %v3613
      %3648 = vst [vmem:[#allocation3 + $0x310] sm:$0xff] %v3596
      %3649 = vst [vmem:[#allocation3 + $0x328] sm:$0xff] %v3614
      %3650 = vst [vmem:[#allocation3 + $0x340] sm:$0xff] %v3597
      %3651 = vst [vmem:[#allocation3 + $0x358] sm:$0xff] %v3615
      %3652 = vst [vmem:[#allocation3 + $0x2f] sm:$0x1] 0.0
      %3653 = vst [vmem:[#allocation3 + $0x5f] sm:$0x1] 0.0
      %3654 = vst [vmem:[#allocation3 + $0x8f] sm:$0x1] 0.0
      %3655 = vst [vmem:[#allocation3 + $0xbf] sm:$0x1] 0.0
      %3656 = vst [vmem:[#allocation3 + $0xef] sm:$0x1] 0.0
      %3657 = vst [vmem:[#allocation3 + $0x11f] sm:$0x1] 0.0
      %3658 = vst [vmem:[#allocation3 + $0x14f] sm:$0x1] 0.0
      %3659 = vst [vmem:[#allocation3 + $0x17f] sm:$0x1] 0.0
      %3660 = vst [vmem:[#allocation3 + $0x1af] sm:$0x1] 0.0
      %3661 = vst [vmem:[#allocation3 + $0x1df] sm:$0x1] 0.0
      %3662 = vst [vmem:[#allocation3 + $0x20f] sm:$0x1] 0.0
      %3663 = vst [vmem:[#allocation3 + $0x23f] sm:$0x1] 0.0
      %3664 = vst [vmem:[#allocation3 + $0x26f] sm:$0x1] 0.0
      %3665 = vst [vmem:[#allocation3 + $0x29f] sm:$0x1] 0.0
      %3666 = vst [vmem:[#allocation3 + $0x2cf] sm:$0x1] 0.0
      %3667 = vst [vmem:[#allocation3 + $0x2ff] sm:$0x1] 0.0
      %3668 = vst [vmem:[#allocation3 + $0x32f] sm:$0x1] 0.0
      %3669 = vst [vmem:[#allocation3 + $0x35f] sm:$0x1] 0.0
      %v3670 = vld [vmem:[#allocation3] sm:$0xff]
      %v3671 = vld [vmem:[#allocation3 + $0x8] sm:$0xff]
      %v3672 = vld [vmem:[#allocation3 + $0x10] sm:$0xff]
      %v3673 = vld [vmem:[#allocation3 + $0x18] sm:$0xff]
      %v3674 = vld [vmem:[#allocation3 + $0x20] sm:$0xff]
      %v3675 = vld [vmem:[#allocation3 + $0x28] sm:$0xff]
      %v3676 = vld [vmem:[#allocation3 + $0x30] sm:$0xff]
      %v3677 = vld [vmem:[#allocation3 + $0x38] sm:$0xff]
      %v3678 = vld [vmem:[#allocation3 + $0x40] sm:$0xff]
      %v3679 = vld [vmem:[#allocation3 + $0x48] sm:$0xff]
      %v3680 = vld [vmem:[#allocation3 + $0x50] sm:$0xff]
      %v3681 = vld [vmem:[#allocation3 + $0x58] sm:$0xff]
      %v3682 = vld [vmem:[#allocation3 + $0x60] sm:$0xff]
      %v3683 = vld [vmem:[#allocation3 + $0x68] sm:$0xff]
      %v3684 = vld [vmem:[#allocation3 + $0x70] sm:$0xff]
      %v3685 = vld [vmem:[#allocation3 + $0x78] sm:$0xff]
      %v3686 = vld [vmem:[#allocation3 + $0x80] sm:$0xff]
      %v3687 = vld [vmem:[#allocation3 + $0x88] sm:$0xff]
      %v3688 = vld [vmem:[#allocation3 + $0x90] sm:$0xff]
      %v3689 = vld [vmem:[#allocation3 + $0x98] sm:$0xff]
      %v3690 = vld [vmem:[#allocation3 + $0xa0] sm:$0xff]
      %v3691 = vld [vmem:[#allocation3 + $0xa8] sm:$0xff]
      %v3692 = vld [vmem:[#allocation3 + $0xb0] sm:$0xff]
      %v3693 = vld [vmem:[#allocation3 + $0xb8] sm:$0xff]
      %v3694 = vld [vmem:[#allocation3 + $0xc0] sm:$0xff]
      %v3695 = vld [vmem:[#allocation3 + $0xc8] sm:$0xff]
      %v3696 = vld [vmem:[#allocation3 + $0xd0] sm:$0xff]
      %v3697 = vld [vmem:[#allocation3 + $0xd8] sm:$0xff]
      %v3698 = vld [vmem:[#allocation3 + $0xe0] sm:$0xff]
      %v3699 = vld [vmem:[#allocation3 + $0xe8] sm:$0xff]
      %v3700 = vld [vmem:[#allocation3 + $0xf0] sm:$0xff]
      %v3701 = vld [vmem:[#allocation3 + $0xf8] sm:$0xff]
      %v3702 = vld [vmem:[#allocation3 + $0x100] sm:$0xff]
      %v3703 = vld [vmem:[#allocation3 + $0x108] sm:$0xff]
      %v3704 = vld [vmem:[#allocation3 + $0x110] sm:$0xff]
      %v3705 = vld [vmem:[#allocation3 + $0x118] sm:$0xff]
      %v3706 = vld [vmem:[#allocation3 + $0x120] sm:$0xff]
      %v3707 = vld [vmem:[#allocation3 + $0x128] sm:$0xff]
      %v3708 = vld [vmem:[#allocation3 + $0x130] sm:$0xff]
      %v3709 = vld [vmem:[#allocation3 + $0x138] sm:$0xff]
      %v3710 = vld [vmem:[#allocation3 + $0x140] sm:$0xff]
      %v3711 = vld [vmem:[#allocation3 + $0x148] sm:$0xff]
      %v3712 = vld [vmem:[#allocation3 + $0x150] sm:$0xff]
      %v3713 = vld [vmem:[#allocation3 + $0x158] sm:$0xff]
      %v3714 = vld [vmem:[#allocation3 + $0x160] sm:$0xff]
      %v3715 = vld [vmem:[#allocation3 + $0x168] sm:$0xff]
      %v3716 = vld [vmem:[#allocation3 + $0x170] sm:$0xff]
      %v3717 = vld [vmem:[#allocation3 + $0x178] sm:$0xff]
      %v3718 = vld [vmem:[#allocation3 + $0x180] sm:$0xff]
      %v3719 = vld [vmem:[#allocation3 + $0x188] sm:$0xff]
      %v3720 = vld [vmem:[#allocation3 + $0x190] sm:$0xff]
      %v3721 = vld [vmem:[#allocation3 + $0x198] sm:$0xff]
      %v3722 = vld [vmem:[#allocation3 + $0x1a0] sm:$0xff]
      %v3723 = vld [vmem:[#allocation3 + $0x1a8] sm:$0xff]
      %v3724 = vld [vmem:[#allocation3 + $0x1b0] sm:$0xff]
      %v3725 = vld [vmem:[#allocation3 + $0x1b8] sm:$0xff]
      %v3726 = vld [vmem:[#allocation3 + $0x1c0] sm:$0xff]
      %v3727 = vld [vmem:[#allocation3 + $0x1c8] sm:$0xff]
      %v3728 = vld [vmem:[#allocation3 + $0x1d0] sm:$0xff]
      %v3729 = vld [vmem:[#allocation3 + $0x1d8] sm:$0xff]
      %v3730 = vld [vmem:[#allocation3 + $0x1e0] sm:$0xff]
      %v3731 = vld [vmem:[#allocation3 + $0x1e8] sm:$0xff]
      %v3732 = vld [vmem:[#allocation3 + $0x1f0] sm:$0xff]
      %v3733 = vld [vmem:[#allocation3 + $0x1f8] sm:$0xff]
      %v3734 = vld [vmem:[#allocation3 + $0x200] sm:$0xff]
      %v3735 = vld [vmem:[#allocation3 + $0x208] sm:$0xff]
      %v3736 = vld [vmem:[#allocation3 + $0x210] sm:$0xff]
      %v3737 = vld [vmem:[#allocation3 + $0x218] sm:$0xff]
      %v3738 = vld [vmem:[#allocation3 + $0x220] sm:$0xff]
      %v3739 = vld [vmem:[#allocation3 + $0x228] sm:$0xff]
      %v3740 = vld [vmem:[#allocation3 + $0x230] sm:$0xff]
      %v3741 = vld [vmem:[#allocation3 + $0x238] sm:$0xff]
      %v3742 = vld [vmem:[#allocation3 + $0x240] sm:$0xff]
      %v3743 = vld [vmem:[#allocation3 + $0x248] sm:$0xff]
      %v3744 = vld [vmem:[#allocation3 + $0x250] sm:$0xff]
      %v3745 = vld [vmem:[#allocation3 + $0x258] sm:$0xff]
      %v3746 = vld [vmem:[#allocation3 + $0x260] sm:$0xff]
      %v3747 = vld [vmem:[#allocation3 + $0x268] sm:$0xff]
      %v3748 = vld [vmem:[#allocation3 + $0x270] sm:$0xff]
      %v3749 = vld [vmem:[#allocation3 + $0x278] sm:$0xff]
      %v3750 = vld [vmem:[#allocation3 + $0x280] sm:$0xff]
      %v3751 = vld [vmem:[#allocation3 + $0x288] sm:$0xff]
      %v3752 = vld [vmem:[#allocation3 + $0x290] sm:$0xff]
      %v3753 = vld [vmem:[#allocation3 + $0x298] sm:$0xff]
      %v3754 = vld [vmem:[#allocation3 + $0x2a0] sm:$0xff]
      %v3755 = vld [vmem:[#allocation3 + $0x2a8] sm:$0xff]
      %v3756 = vld [vmem:[#allocation3 + $0x2b0] sm:$0xff]
      %v3757 = vld [vmem:[#allocation3 + $0x2b8] sm:$0xff]
      %v3758 = vld [vmem:[#allocation3 + $0x2c0] sm:$0xff]
      %v3759 = vld [vmem:[#allocation3 + $0x2c8] sm:$0xff]
      %v3760 = vld [vmem:[#allocation3 + $0x2d0] sm:$0xff]
      %v3761 = vld [vmem:[#allocation3 + $0x2d8] sm:$0xff]
      %v3762 = vld [vmem:[#allocation3 + $0x2e0] sm:$0xff]
      %v3763 = vld [vmem:[#allocation3 + $0x2e8] sm:$0xff]
      %v3764 = vld [vmem:[#allocation3 + $0x2f0] sm:$0xff]
      %v3765 = vld [vmem:[#allocation3 + $0x2f8] sm:$0xff]
      %v3766 = vpack.c.bf16 %v3673, %v3670
      %v3767 = vpack.c.bf16 %v3674, %v3671
      %v3768 = vpack.c.bf16 %v3675, %v3672
      %v3769 = vpack.c.bf16 %v3679, %v3676
      %v3770 = vpack.c.bf16 %v3680, %v3677
      %v3771 = vpack.c.bf16 %v3681, %v3678
      %v3772 = vpack.c.bf16 %v3685, %v3682
      %v3773 = vpack.c.bf16 %v3686, %v3683
      %v3774 = vpack.c.bf16 %v3687, %v3684
      %v3775 = vpack.c.bf16 %v3691, %v3688
      %v3776 = vpack.c.bf16 %v3692, %v3689
      %v3777 = vpack.c.bf16 %v3693, %v3690
      %v3778 = vpack.c.bf16 %v3697, %v3694
      %v3779 = vpack.c.bf16 %v3698, %v3695
      %v3780 = vpack.c.bf16 %v3699, %v3696
      %v3781 = vpack.c.bf16 %v3703, %v3700
      %v3782 = vpack.c.bf16 %v3704, %v3701
      %v3783 = vpack.c.bf16 %v3705, %v3702
      %v3784 = vpack.c.bf16 %v3709, %v3706
      %v3785 = vpack.c.bf16 %v3710, %v3707
      %v3786 = vpack.c.bf16 %v3711, %v3708
      %v3787 = vpack.c.bf16 %v3715, %v3712
      %v3788 = vpack.c.bf16 %v3716, %v3713
      %v3789 = vpack.c.bf16 %v3717, %v3714
      %v3790 = vpack.c.bf16 %v3721, %v3718
      %v3791 = vpack.c.bf16 %v3722, %v3719
      %v3792 = vpack.c.bf16 %v3723, %v3720
      %v3793 = vpack.c.bf16 %v3727, %v3724
      %v3794 = vpack.c.bf16 %v3728, %v3725
      %v3795 = vpack.c.bf16 %v3729, %v3726
      %v3796 = vpack.c.bf16 %v3733, %v3730
      %v3797 = vpack.c.bf16 %v3734, %v3731
      %v3798 = vpack.c.bf16 %v3735, %v3732
      %v3799 = vpack.c.bf16 %v3739, %v3736
      %v3800 = vpack.c.bf16 %v3740, %v3737
      %v3801 = vpack.c.bf16 %v3741, %v3738
      %v3802 = vpack.c.bf16 %v3745, %v3742
      %v3803 = vpack.c.bf16 %v3746, %v3743
      %v3804 = vpack.c.bf16 %v3747, %v3744
      %v3805 = vpack.c.bf16 %v3751, %v3748
      %v3806 = vpack.c.bf16 %v3752, %v3749
      %v3807 = vpack.c.bf16 %v3753, %v3750
      %v3808 = vpack.c.bf16 %v3757, %v3754
      %v3809 = vpack.c.bf16 %v3758, %v3755
      %v3810 = vpack.c.bf16 %v3759, %v3756
      %v3811 = vpack.c.bf16 %v3763, %v3760
      %v3812 = vpack.c.bf16 %v3764, %v3761
      %v3813 = vpack.c.bf16 %v3765, %v3762
      %v3814 = vld [vmem:[%s6] sm:$0xf]
      %v3815 = vld [vmem:[%s6 + $0x4] sm:$0xf]
      %v3816 = vld [vmem:[%s6 + $0x8] sm:$0xf]
      %v3817 = vld [vmem:[%s6 + $0xc] sm:$0xf]
      %v3818 = vld [vmem:[%s6 + $0x10] sm:$0xf]
      %v3819 = vld [vmem:[%s6 + $0x14] sm:$0xf]
      %v3820 = vld [vmem:[%s6 + $0x18] sm:$0xf]
      %v3821 = vld [vmem:[%s6 + $0x1c] sm:$0xf]
      %v3822 = vld [vmem:[%s6 + $0x20] sm:$0xf]
      %v3823 = vld [vmem:[%s6 + $0x24] sm:$0xf]
      %v3824 = vld [vmem:[%s6 + $0x28] sm:$0xf]
      %v3825 = vld [vmem:[%s6 + $0x2c] sm:$0xf]
      %v3826 = vld [vmem:[%s6 + $0x30] sm:$0xf]
      %v3827 = vld [vmem:[%s6 + $0x34] sm:$0xf]
      %v3828 = vld [vmem:[%s6 + $0x38] sm:$0xf]
      %v3829 = vld [vmem:[%s6 + $0x3c] sm:$0xf]
      %v3830 = vld [vmem:[%s6 + $0x40] sm:$0xf]
      %v3831 = vld [vmem:[%s6 + $0x44] sm:$0xf]
      %v3832 = vld [vmem:[%s6 + $0x48] sm:$0xf]
      %v3833 = vld [vmem:[%s6 + $0x4c] sm:$0xf]
      %v3834 = vld [vmem:[%s6 + $0x50] sm:$0xf]
      %v3835 = vld [vmem:[%s6 + $0x54] sm:$0xf]
      %v3836 = vld [vmem:[%s6 + $0x58] sm:$0xf]
      %v3837 = vld [vmem:[%s6 + $0x5c] sm:$0xf]
      %v3838 = vld [vmem:[%s6 + $0x60] sm:$0xf]
      %v3839 = vld [vmem:[%s6 + $0x64] sm:$0xf]
      %v3840 = vld [vmem:[%s6 + $0x68] sm:$0xf]
      %v3841 = vld [vmem:[%s6 + $0x6c] sm:$0xf]
      %v3842 = vld [vmem:[%s6 + $0x70] sm:$0xf]
      %v3843 = vld [vmem:[%s6 + $0x74] sm:$0xf]
      %v3844 = vld [vmem:[%s6 + $0x78] sm:$0xf]
      %v3845 = vld [vmem:[%s6 + $0x7c] sm:$0xf]
      %v3846 = vld [vmem:[%s6 + $0x80] sm:$0xf]
      %v3847 = vld [vmem:[%s6 + $0x84] sm:$0xf]
      %v3848 = vld [vmem:[%s6 + $0x88] sm:$0xf]
      %v3849 = vld [vmem:[%s6 + $0x8c] sm:$0xf]
      %v3850 = vld [vmem:[%s6 + $0x90] sm:$0xf]
      %v3851 = vld [vmem:[%s6 + $0x94] sm:$0xf]
      %v3852 = vld [vmem:[%s6 + $0x98] sm:$0xf]
      %v3853 = vld [vmem:[%s6 + $0x9c] sm:$0xf]
      %v3854 = vld [vmem:[%s6 + $0xa0] sm:$0xf]
      %v3855 = vld [vmem:[%s6 + $0xa4] sm:$0xf]
      %v3856 = vld [vmem:[%s6 + $0xa8] sm:$0xf]
      %v3857 = vld [vmem:[%s6 + $0xac] sm:$0xf]
      %v3858 = vld [vmem:[%s6 + $0xb0] sm:$0xf]
      %v3859 = vld [vmem:[%s6 + $0xb4] sm:$0xf]
      %v3860 = vld [vmem:[%s6 + $0xb8] sm:$0xf]
      %v3861 = vld [vmem:[%s6 + $0xbc] sm:$0xf]
      %v3862 = vld [vmem:[%s3349] sm:$0xff]
      %v3863 = vld [vmem:[%s3349 + $0x8] sm:$0xff]
      %v3864 = vld [vmem:[%s3349 + $0x10] sm:$0xff]
      %v3865 = vld [vmem:[%s3349 + $0x18] sm:$0xff]
      %v3866 = vld [vmem:[%s3349 + $0x20] sm:$0xff]
      %v3867 = vld [vmem:[%s3349 + $0x28] sm:$0xff]
      %v3868 = vld [vmem:[%s3349 + $0x30] sm:$0xff]
      %v3869 = vld [vmem:[%s3349 + $0x38] sm:$0xff]
      %v3870 = vld [vmem:[%s3349 + $0x40] sm:$0xff]
      %v3871 = vld [vmem:[%s3349 + $0x48] sm:$0xff]
      %v3872 = vld [vmem:[%s3349 + $0x50] sm:$0xff]
      %v3873 = vld [vmem:[%s3349 + $0x58] sm:$0xff]
      %v3874 = vld [vmem:[%s3349 + $0x60] sm:$0xff]
      %v3875 = vld [vmem:[%s3349 + $0x68] sm:$0xff]
      %v3876 = vld [vmem:[%s3349 + $0x70] sm:$0xff]
      %v3877 = vld [vmem:[%s3349 + $0x78] sm:$0xff]
      %v3878 = vld [vmem:[%s3349 + $0x80] sm:$0xff]
      %v3879 = vld [vmem:[%s3349 + $0x88] sm:$0xff]
      %v3880 = vld [vmem:[%s3349 + $0x90] sm:$0xff]
      %v3881 = vld [vmem:[%s3349 + $0x98] sm:$0xff]
      %v3882 = vld [vmem:[%s3349 + $0xa0] sm:$0xff]
      %v3883 = vld [vmem:[%s3349 + $0xa8] sm:$0xff]
      %v3884 = vld [vmem:[%s3349 + $0xb0] sm:$0xff]
      %v3885 = vld [vmem:[%s3349 + $0xb8] sm:$0xff]
      %v3886 = vld [vmem:[%s3349 + $0xc0] sm:$0xff]
      %v3887 = vld [vmem:[%s3349 + $0xc8] sm:$0xff]
      %v3888 = vld [vmem:[%s3349 + $0xd0] sm:$0xff]
      %v3889 = vld [vmem:[%s3349 + $0xd8] sm:$0xff]
      %v3890 = vld [vmem:[%s3349 + $0xe0] sm:$0xff]
      %v3891 = vld [vmem:[%s3349 + $0xe8] sm:$0xff]
      %v3892 = vld [vmem:[%s3349 + $0xf0] sm:$0xff]
      %v3893 = vld [vmem:[%s3349 + $0xf8] sm:$0xff]
      %v3894 = vld [vmem:[%s3349 + $0x100] sm:$0xff]
      %v3895 = vld [vmem:[%s3349 + $0x108] sm:$0xff]
      %v3896 = vld [vmem:[%s3349 + $0x110] sm:$0xff]
      %v3897 = vld [vmem:[%s3349 + $0x118] sm:$0xff]
      %v3898 = vld [vmem:[%s3349 + $0x120] sm:$0xff]
      %v3899 = vld [vmem:[%s3349 + $0x128] sm:$0xff]
      %v3900 = vld [vmem:[%s3349 + $0x130] sm:$0xff]
      %v3901 = vld [vmem:[%s3349 + $0x138] sm:$0xff]
      %v3902 = vld [vmem:[%s3349 + $0x140] sm:$0xff]
      %v3903 = vld [vmem:[%s3349 + $0x148] sm:$0xff]
      %v3904 = vld [vmem:[%s3349 + $0x150] sm:$0xff]
      %v3905 = vld [vmem:[%s3349 + $0x158] sm:$0xff]
      %v3906 = vld [vmem:[%s3349 + $0x160] sm:$0xff]
      %v3907 = vld [vmem:[%s3349 + $0x168] sm:$0xff]
      %v3908 = vld [vmem:[%s3349 + $0x170] sm:$0xff]
      %v3909 = vld [vmem:[%s3349 + $0x178] sm:$0xff]
      %v3910 = vld [vmem:[%s3349 + $0x180] sm:$0xff]
      %v3911 = vld [vmem:[%s3349 + $0x188] sm:$0xff]
      %v3912 = vld [vmem:[%s3349 + $0x190] sm:$0xff]
      %v3913 = vld [vmem:[%s3349 + $0x198] sm:$0xff]
      %v3914 = vld [vmem:[%s3349 + $0x1a0] sm:$0xff]
      %v3915 = vld [vmem:[%s3349 + $0x1a8] sm:$0xff]
      %v3916 = vld [vmem:[%s3349 + $0x1b0] sm:$0xff]
      %v3917 = vld [vmem:[%s3349 + $0x1b8] sm:$0xff]
      %v3918 = vld [vmem:[%s3349 + $0x1c0] sm:$0xff]
      %v3919 = vld [vmem:[%s3349 + $0x1c8] sm:$0xff]
      %v3920 = vld [vmem:[%s3349 + $0x1d0] sm:$0xff]
      %v3921 = vld [vmem:[%s3349 + $0x1d8] sm:$0xff]
      %v3922 = vld [vmem:[%s3349 + $0x1e0] sm:$0xff]
      %v3923 = vld [vmem:[%s3349 + $0x1e8] sm:$0xff]
      %v3924 = vld [vmem:[%s3349 + $0x1f0] sm:$0xff]
      %v3925 = vld [vmem:[%s3349 + $0x1f8] sm:$0xff]
      %v3926 = vld [vmem:[%s3349 + $0x200] sm:$0xff]
      %v3927 = vld [vmem:[%s3349 + $0x208] sm:$0xff]
      %v3928 = vld [vmem:[%s3349 + $0x210] sm:$0xff]
      %v3929 = vld [vmem:[%s3349 + $0x218] sm:$0xff]
      %v3930 = vld [vmem:[%s3349 + $0x220] sm:$0xff]
      %v3931 = vld [vmem:[%s3349 + $0x228] sm:$0xff]
      %v3932 = vld [vmem:[%s3349 + $0x230] sm:$0xff]
      %v3933 = vld [vmem:[%s3349 + $0x238] sm:$0xff]
      %v3934 = vld [vmem:[%s3349 + $0x240] sm:$0xff]
      %v3935 = vld [vmem:[%s3349 + $0x248] sm:$0xff]
      %v3936 = vld [vmem:[%s3349 + $0x250] sm:$0xff]
      %v3937 = vld [vmem:[%s3349 + $0x258] sm:$0xff]
      %v3938 = vld [vmem:[%s3349 + $0x260] sm:$0xff]
      %v3939 = vld [vmem:[%s3349 + $0x268] sm:$0xff]
      %v3940 = vld [vmem:[%s3349 + $0x270] sm:$0xff]
      %v3941 = vld [vmem:[%s3349 + $0x278] sm:$0xff]
      %v3942 = vld [vmem:[%s3349 + $0x280] sm:$0xff]
      %v3943 = vld [vmem:[%s3349 + $0x288] sm:$0xff]
      %v3944 = vld [vmem:[%s3349 + $0x290] sm:$0xff]
      %v3945 = vld [vmem:[%s3349 + $0x298] sm:$0xff]
      %v3946 = vld [vmem:[%s3349 + $0x2a0] sm:$0xff]
      %v3947 = vld [vmem:[%s3349 + $0x2a8] sm:$0xff]
      %v3948 = vld [vmem:[%s3349 + $0x2b0] sm:$0xff]
      %v3949 = vld [vmem:[%s3349 + $0x2b8] sm:$0xff]
      %v3950 = vld [vmem:[%s3349 + $0x2c0] sm:$0xff]
      %v3951 = vld [vmem:[%s3349 + $0x2c8] sm:$0xff]
      %v3952 = vld [vmem:[%s3349 + $0x2d0] sm:$0xff]
      %v3953 = vld [vmem:[%s3349 + $0x2d8] sm:$0xff]
      %v3954 = vld [vmem:[%s3349 + $0x2e0] sm:$0xff]
      %v3955 = vld [vmem:[%s3349 + $0x2e8] sm:$0xff]
      %v3956 = vld [vmem:[%s3349 + $0x2f0] sm:$0xff]
      %v3957 = vld [vmem:[%s3349 + $0x2f8] sm:$0xff]
      %v3958 = vpack.c.bf16 %v3865, %v3862
      %v3959 = vpack.c.bf16 %v3866, %v3863
      %v3960 = vpack.c.bf16 %v3867, %v3864
      %v3961 = vpack.c.bf16 %v3871, %v3868
      %v3962 = vpack.c.bf16 %v3872, %v3869
      %v3963 = vpack.c.bf16 %v3873, %v3870
      %v3964 = vpack.c.bf16 %v3877, %v3874
      %v3965 = vpack.c.bf16 %v3878, %v3875
      %v3966 = vpack.c.bf16 %v3879, %v3876
      %v3967 = vpack.c.bf16 %v3883, %v3880
      %v3968 = vpack.c.bf16 %v3884, %v3881
      %v3969 = vpack.c.bf16 %v3885, %v3882
      %v3970 = vpack.c.bf16 %v3889, %v3886
      %v3971 = vpack.c.bf16 %v3890, %v3887
      %v3972 = vpack.c.bf16 %v3891, %v3888
      %v3973 = vpack.c.bf16 %v3895, %v3892
      %v3974 = vpack.c.bf16 %v3896, %v3893
      %v3975 = vpack.c.bf16 %v3897, %v3894
      %v3976 = vpack.c.bf16 %v3901, %v3898
      %v3977 = vpack.c.bf16 %v3902, %v3899
      %v3978 = vpack.c.bf16 %v3903, %v3900
      %v3979 = vpack.c.bf16 %v3907, %v3904
      %v3980 = vpack.c.bf16 %v3908, %v3905
      %v3981 = vpack.c.bf16 %v3909, %v3906
      %v3982 = vpack.c.bf16 %v3913, %v3910
      %v3983 = vpack.c.bf16 %v3914, %v3911
      %v3984 = vpack.c.bf16 %v3915, %v3912
      %v3985 = vpack.c.bf16 %v3919, %v3916
      %v3986 = vpack.c.bf16 %v3920, %v3917
      %v3987 = vpack.c.bf16 %v3921, %v3918
      %v3988 = vpack.c.bf16 %v3925, %v3922
      %v3989 = vpack.c.bf16 %v3926, %v3923
      %v3990 = vpack.c.bf16 %v3927, %v3924
      %v3991 = vpack.c.bf16 %v3931, %v3928
      %v3992 = vpack.c.bf16 %v3932, %v3929
      %v3993 = vpack.c.bf16 %v3933, %v3930
      %v3994 = vpack.c.bf16 %v3937, %v3934
      %v3995 = vpack.c.bf16 %v3938, %v3935
      %v3996 = vpack.c.bf16 %v3939, %v3936
      %v3997 = vpack.c.bf16 %v3943, %v3940
      %v3998 = vpack.c.bf16 %v3944, %v3941
      %v3999 = vpack.c.bf16 %v3945, %v3942
      %v4000 = vpack.c.bf16 %v3949, %v3946
      %v4001 = vpack.c.bf16 %v3950, %v3947
      %v4002 = vpack.c.bf16 %v3951, %v3948
      %v4003 = vpack.c.bf16 %v3955, %v3952
      %v4004 = vpack.c.bf16 %v3956, %v3953
      %v4005 = vpack.c.bf16 %v3957, %v3954
      %s4006 = scalar_lea.vmem %s6, 192
      %v4007 = vld [vmem:[%s4006] sm:$0xf]
      %v4008 = vld [vmem:[%s4006 + $0x4] sm:$0xf]
      %v4009 = vld [vmem:[%s4006 + $0x8] sm:$0xf]
      %v4010 = vld [vmem:[%s4006 + $0xc] sm:$0xf]
      %v4011 = vld [vmem:[%s4006 + $0x10] sm:$0xf]
      %v4012 = vld [vmem:[%s4006 + $0x14] sm:$0xf]
      %v4013 = vld [vmem:[%s4006 + $0x18] sm:$0xf]
      %v4014 = vld [vmem:[%s4006 + $0x1c] sm:$0xf]
      %v4015 = vld [vmem:[%s4006 + $0x20] sm:$0xf]
      %v4016 = vld [vmem:[%s4006 + $0x24] sm:$0xf]
      %v4017 = vld [vmem:[%s4006 + $0x28] sm:$0xf]
      %v4018 = vld [vmem:[%s4006 + $0x2c] sm:$0xf]
      %v4019 = vld [vmem:[%s4006 + $0x30] sm:$0xf]
      %v4020 = vld [vmem:[%s4006 + $0x34] sm:$0xf]
      %v4021 = vld [vmem:[%s4006 + $0x38] sm:$0xf]
      %v4022 = vld [vmem:[%s4006 + $0x3c] sm:$0xf]
      %v4023 = vld [vmem:[%s4006 + $0x40] sm:$0xf]
      %v4024 = vld [vmem:[%s4006 + $0x44] sm:$0xf]
      %v4025 = vld [vmem:[%s4006 + $0x48] sm:$0xf]
      %v4026 = vld [vmem:[%s4006 + $0x4c] sm:$0xf]
      %v4027 = vld [vmem:[%s4006 + $0x50] sm:$0xf]
      %v4028 = vld [vmem:[%s4006 + $0x54] sm:$0xf]
      %v4029 = vld [vmem:[%s4006 + $0x58] sm:$0xf]
      %v4030 = vld [vmem:[%s4006 + $0x5c] sm:$0xf]
      %v4031 = vld [vmem:[%s4006 + $0x60] sm:$0xf]
      %v4032 = vld [vmem:[%s4006 + $0x64] sm:$0xf]
      %v4033 = vld [vmem:[%s4006 + $0x68] sm:$0xf]
      %v4034 = vld [vmem:[%s4006 + $0x6c] sm:$0xf]
      %v4035 = vld [vmem:[%s4006 + $0x70] sm:$0xf]
      %v4036 = vld [vmem:[%s4006 + $0x74] sm:$0xf]
      %v4037 = vld [vmem:[%s4006 + $0x78] sm:$0xf]
      %v4038 = vld [vmem:[%s4006 + $0x7c] sm:$0xf]
      %v4039 = vld [vmem:[%s4006 + $0x80] sm:$0xf]
      %v4040 = vld [vmem:[%s4006 + $0x84] sm:$0xf]
      %v4041 = vld [vmem:[%s4006 + $0x88] sm:$0xf]
      %v4042 = vld [vmem:[%s4006 + $0x8c] sm:$0xf]
      %v4043 = vld [vmem:[%s4006 + $0x90] sm:$0xf]
      %v4044 = vld [vmem:[%s4006 + $0x94] sm:$0xf]
      %v4045 = vld [vmem:[%s4006 + $0x98] sm:$0xf]
      %v4046 = vld [vmem:[%s4006 + $0x9c] sm:$0xf]
      %v4047 = vld [vmem:[%s4006 + $0xa0] sm:$0xf]
      %v4048 = vld [vmem:[%s4006 + $0xa4] sm:$0xf]
      %v4049 = vld [vmem:[%s4006 + $0xa8] sm:$0xf]
      %v4050 = vld [vmem:[%s4006 + $0xac] sm:$0xf]
      %v4051 = vld [vmem:[%s4006 + $0xb0] sm:$0xf]
      %v4052 = vld [vmem:[%s4006 + $0xb4] sm:$0xf]
      %v4053 = vld [vmem:[%s4006 + $0xb8] sm:$0xf]
      %v4054 = vld [vmem:[%s4006 + $0xbc] sm:$0xf]
      %v4103 = vunpack.c.l.b16 %v4007
      %v4104 = vunpack.c.l.b16 %v4008
      %v4105 = vunpack.c.l.b16 %v4009
      %v4106 = vunpack.c.l.b16 %v4010
      %v4107 = vunpack.c.l.b16 %v4011
      %v4108 = vunpack.c.l.b16 %v4012
      %v4109 = vunpack.c.l.b16 %v4013
      %v4110 = vunpack.c.l.b16 %v4014
      %v4111 = vunpack.c.l.b16 %v4015
      %v4112 = vunpack.c.l.b16 %v4016
      %v4113 = vunpack.c.l.b16 %v4017
      %v4114 = vunpack.c.l.b16 %v4018
      %v4115 = vunpack.c.l.b16 %v4019
      %v4116 = vunpack.c.l.b16 %v4020
      %v4117 = vunpack.c.l.b16 %v4021
      %v4118 = vunpack.c.l.b16 %v4022
      %v4119 = vunpack.c.l.b16 %v4023
      %v4120 = vunpack.c.l.b16 %v4024
      %v4121 = vunpack.c.l.b16 %v4025
      %v4122 = vunpack.c.l.b16 %v4026
      %v4123 = vunpack.c.l.b16 %v4027
      %v4124 = vunpack.c.l.b16 %v4028
      %v4125 = vunpack.c.l.b16 %v4029
      %v4126 = vunpack.c.l.b16 %v4030
      %v4127 = vunpack.c.l.b16 %v4031
      %v4128 = vunpack.c.l.b16 %v4032
      %v4129 = vunpack.c.l.b16 %v4033
      %v4130 = vunpack.c.l.b16 %v4034
      %v4131 = vunpack.c.l.b16 %v4035
      %v4132 = vunpack.c.l.b16 %v4036
      %v4133 = vunpack.c.l.b16 %v4037
      %v4134 = vunpack.c.l.b16 %v4038
      %v4135 = vunpack.c.l.b16 %v4039
      %v4136 = vunpack.c.l.b16 %v4040
      %v4137 = vunpack.c.l.b16 %v4041
      %v4138 = vunpack.c.l.b16 %v4042
      %v4139 = vunpack.c.l.b16 %v4043
      %v4140 = vunpack.c.l.b16 %v4044
      %v4141 = vunpack.c.l.b16 %v4045
      %v4142 = vunpack.c.l.b16 %v4046
      %v4143 = vunpack.c.l.b16 %v4047
      %v4144 = vunpack.c.l.b16 %v4048
      %v4145 = vunpack.c.l.b16 %v4049
      %v4146 = vunpack.c.l.b16 %v4050
      %v4147 = vunpack.c.l.b16 %v4051
      %v4148 = vunpack.c.l.b16 %v4052
      %v4149 = vunpack.c.l.b16 %v4053
      %v4150 = vunpack.c.l.b16 %v4054
      %v4151 = vpack.c.b16 %v4104, %v4103
      %v4152 = vpack.c.b16 %v4106, %v4105
      %v4153 = vpack.c.b16 %v4108, %v4107
      %v4154 = vpack.c.b16 %v4110, %v4109
      %v4155 = vpack.c.b16 %v4112, %v4111
      %v4156 = vpack.c.b16 %v4114, %v4113
      %v4157 = vpack.c.b16 %v4116, %v4115
      %v4158 = vpack.c.b16 %v4118, %v4117
      %v4159 = vpack.c.b16 %v4120, %v4119
      %v4160 = vpack.c.b16 %v4122, %v4121
      %v4161 = vpack.c.b16 %v4124, %v4123
      %v4162 = vpack.c.b16 %v4126, %v4125
      %v4163 = vpack.c.b16 %v4128, %v4127
      %v4164 = vpack.c.b16 %v4130, %v4129
      %v4165 = vpack.c.b16 %v4132, %v4131
      %v4166 = vpack.c.b16 %v4134, %v4133
      %v4167 = vpack.c.b16 %v4136, %v4135
      %v4168 = vpack.c.b16 %v4138, %v4137
      %v4169 = vpack.c.b16 %v4140, %v4139
      %v4170 = vpack.c.b16 %v4142, %v4141
      %v4171 = vpack.c.b16 %v4144, %v4143
      %v4172 = vpack.c.b16 %v4146, %v4145
      %v4173 = vpack.c.b16 %v4148, %v4147
      %v4174 = vpack.c.b16 %v4150, %v4149
      %4199 = vmatprep.subr.bf16.mxu0 0
      %4200 = vmatpush1.bf16.msra.mxu0 %v4158
      %4201 = vmatprep.subr.bf16.mxu0 0
      %4202 = vmatpush1.bf16.msra.mxu0 %v4157
      %4203 = vmatprep.subr.bf16.mxu0 0
      %4204 = vmatpush1.bf16.msra.mxu0 %v4156
      %4205 = vmatprep.subr.bf16.mxu0 0
      %4206 = vmatpush1.bf16.msra.mxu0 %v4155
      %4207 = vmatprep.subr.bf16.mxu0 0
      %4208 = vmatpush1.bf16.msra.mxu0 %v4154
      %4209 = vmatprep.subr.bf16.mxu0 0
      %4210 = vmatpush1.bf16.msra.mxu0 %v4153
      %4211 = vmatprep.subr.bf16.mxu0 0
      %4212 = vmatpush1.bf16.msra.mxu0 %v4152
      %4213 = vmatprep.subr.bf16.mxu0 0
      %4214 = vmatpush1.bf16.msra.mxu0 %v4151
      %4215 = vmatprep.subr.bf16.mxu0 0
      %4216 = vmatpush2.bf16.msra.mxu0 %v4166
      %4217 = vmatprep.subr.bf16.mxu0 0
      %4218 = vmatpush2.bf16.msra.mxu0 %v4165
      %4219 = vmatprep.subr.bf16.mxu0 0
      %4220 = vmatpush2.bf16.msra.mxu0 %v4164
      %4221 = vmatprep.subr.bf16.mxu0 0
      %4222 = vmatpush2.bf16.msra.mxu0 %v4163
      %4223 = vmatprep.subr.bf16.mxu0 0
      %4224 = vmatpush2.bf16.msra.mxu0 %v4162
      %4225 = vmatprep.subr.bf16.mxu0 0
      %4226 = vmatpush2.bf16.msra.mxu0 %v4161
      %4227 = vmatprep.subr.bf16.mxu0 0
      %4228 = vmatpush2.bf16.msra.mxu0 %v4160
      %4229 = vmatprep.subr.bf16.mxu0 0
      %4230 = vmatpush2.bf16.msra.mxu0 %v4159
      %4231 = vmatprep.mubr.bf16.mxu0 %v3959
      %4232 = vmatmul.mubr.bf16.gmra.mxu0 %v3958
      %v4233 = vpop.f32.mrf.mxu0
      %v4234 = vadd.f32 0.0, %v4233
      %v4235 = vpop.f32.mrf.mxu0
      %v4236 = vpop.f32.mrf.mxu0
      %v4237 = vadd.f32 0.0, %v4236
      %v4238 = vpop.f32.mrf.mxu0
      %4239 = vmatprep.mubr.bf16.mxu0 %v3962
      %4240 = vmatmul.mubr.bf16.gmra.mxu0 %v3961
      %v4241 = vpop.f32.mrf.mxu0
      %v4242 = vadd.f32 0.0, %v4241
      %v4243 = vpop.f32.mrf.mxu0
      %v4244 = vpop.f32.mrf.mxu0
      %v4245 = vadd.f32 0.0, %v4244
      %v4246 = vpop.f32.mrf.mxu0
      %4247 = vmatprep.mubr.bf16.mxu0 %v3965
      %4248 = vmatmul.mubr.bf16.gmra.mxu0 %v3964
      %v4249 = vpop.f32.mrf.mxu0
      %v4250 = vadd.f32 0.0, %v4249
      %v4251 = vpop.f32.mrf.mxu0
      %v4252 = vpop.f32.mrf.mxu0
      %v4253 = vadd.f32 0.0, %v4252
      %v4254 = vpop.f32.mrf.mxu0
      %4255 = vmatprep.mubr.bf16.mxu0 %v3968
      %4256 = vmatmul.mubr.bf16.gmra.mxu0 %v3967
      %v4257 = vpop.f32.mrf.mxu0
      %v4258 = vadd.f32 0.0, %v4257
      %v4259 = vpop.f32.mrf.mxu0
      %v4260 = vpop.f32.mrf.mxu0
      %v4261 = vadd.f32 0.0, %v4260
      %v4262 = vpop.f32.mrf.mxu0
      %4263 = vmatprep.mubr.bf16.mxu0 %v3971
      %4264 = vmatmul.mubr.bf16.gmra.mxu0 %v3970
      %v4265 = vpop.f32.mrf.mxu0
      %v4266 = vadd.f32 0.0, %v4265
      %v4267 = vpop.f32.mrf.mxu0
      %v4268 = vpop.f32.mrf.mxu0
      %v4269 = vadd.f32 0.0, %v4268
      %v4270 = vpop.f32.mrf.mxu0
      %4271 = vmatprep.mubr.bf16.mxu0 %v3974
      %4272 = vmatmul.mubr.bf16.gmra.mxu0 %v3973
      %v4273 = vpop.f32.mrf.mxu0
      %v4274 = vadd.f32 0.0, %v4273
      %v4275 = vpop.f32.mrf.mxu0
      %v4276 = vpop.f32.mrf.mxu0
      %v4277 = vadd.f32 0.0, %v4276
      %v4278 = vpop.f32.mrf.mxu0
      %4279 = vmatprep.mubr.bf16.mxu0 %v3977
      %4280 = vmatmul.mubr.bf16.gmra.mxu0 %v3976
      %v4281 = vpop.f32.mrf.mxu0
      %v4282 = vadd.f32 0.0, %v4281
      %v4283 = vpop.f32.mrf.mxu0
      %v4284 = vpop.f32.mrf.mxu0
      %v4285 = vadd.f32 0.0, %v4284
      %v4286 = vpop.f32.mrf.mxu0
      %4287 = vmatprep.mubr.bf16.mxu0 %v3980
      %4288 = vmatmul.mubr.bf16.gmra.mxu0 %v3979
      %v4289 = vpop.f32.mrf.mxu0
      %v4290 = vadd.f32 0.0, %v4289
      %v4291 = vpop.f32.mrf.mxu0
      %v4292 = vpop.f32.mrf.mxu0
      %v4293 = vadd.f32 0.0, %v4292
      %v4294 = vpop.f32.mrf.mxu0
      %4295 = vmatprep.mubr.bf16.mxu0 %v3983
      %4296 = vmatmul.mubr.bf16.gmra.mxu0 %v3982
      %v4297 = vpop.f32.mrf.mxu0
      %v4298 = vadd.f32 0.0, %v4297
      %v4299 = vpop.f32.mrf.mxu0
      %v4300 = vpop.f32.mrf.mxu0
      %v4301 = vadd.f32 0.0, %v4300
      %v4302 = vpop.f32.mrf.mxu0
      %4303 = vmatprep.mubr.bf16.mxu0 %v3986
      %4304 = vmatmul.mubr.bf16.gmra.mxu0 %v3985
      %v4305 = vpop.f32.mrf.mxu0
      %v4306 = vadd.f32 0.0, %v4305
      %v4307 = vpop.f32.mrf.mxu0
      %v4308 = vpop.f32.mrf.mxu0
      %v4309 = vadd.f32 0.0, %v4308
      %v4310 = vpop.f32.mrf.mxu0
      %4311 = vmatprep.mubr.bf16.mxu0 %v3989
      %4312 = vmatmul.mubr.bf16.gmra.mxu0 %v3988
      %v4313 = vpop.f32.mrf.mxu0
      %v4314 = vadd.f32 0.0, %v4313
      %v4315 = vpop.f32.mrf.mxu0
      %v4316 = vpop.f32.mrf.mxu0
      %v4317 = vadd.f32 0.0, %v4316
      %v4318 = vpop.f32.mrf.mxu0
      %4319 = vmatprep.mubr.bf16.mxu0 %v3992
      %4320 = vmatmul.mubr.bf16.gmra.mxu0 %v3991
      %v4321 = vpop.f32.mrf.mxu0
      %v4322 = vadd.f32 0.0, %v4321
      %v4323 = vpop.f32.mrf.mxu0
      %v4324 = vpop.f32.mrf.mxu0
      %v4325 = vadd.f32 0.0, %v4324
      %v4326 = vpop.f32.mrf.mxu0
      %4327 = vmatprep.mubr.bf16.mxu0 %v3995
      %4328 = vmatmul.mubr.bf16.gmra.mxu0 %v3994
      %v4329 = vpop.f32.mrf.mxu0
      %v4330 = vadd.f32 0.0, %v4329
      %v4331 = vpop.f32.mrf.mxu0
      %v4332 = vpop.f32.mrf.mxu0
      %v4333 = vadd.f32 0.0, %v4332
      %v4334 = vpop.f32.mrf.mxu0
      %4335 = vmatprep.mubr.bf16.mxu0 %v3998
      %4336 = vmatmul.mubr.bf16.gmra.mxu0 %v3997
      %v4337 = vpop.f32.mrf.mxu0
      %v4338 = vadd.f32 0.0, %v4337
      %v4339 = vpop.f32.mrf.mxu0
      %v4340 = vpop.f32.mrf.mxu0
      %v4341 = vadd.f32 0.0, %v4340
      %v4342 = vpop.f32.mrf.mxu0
      %4343 = vmatprep.mubr.bf16.mxu0 %v4001
      %4344 = vmatmul.mubr.bf16.gmra.mxu0 %v4000
      %v4345 = vpop.f32.mrf.mxu0
      %v4346 = vadd.f32 0.0, %v4345
      %v4347 = vpop.f32.mrf.mxu0
      %v4348 = vpop.f32.mrf.mxu0
      %v4349 = vadd.f32 0.0, %v4348
      %v4350 = vpop.f32.mrf.mxu0
      %4351 = vmatprep.mubr.bf16.mxu0 %v4004
      %4352 = vmatmul.mubr.bf16.gmra.mxu0 %v4003
      %v4353 = vpop.f32.mrf.mxu0
      %v4354 = vadd.f32 0.0, %v4353
      %v4355 = vpop.f32.mrf.mxu0
      %v4356 = vpop.f32.mrf.mxu0
      %v4357 = vadd.f32 0.0, %v4356
      %v4358 = vpop.f32.mrf.mxu0
      %4359 = vdwg.mxu0
      %4360 = vmatprep.subr.bf16.mxu0 0
      %4361 = vmatpush1.bf16.msra.mxu0 %v4174
      %4362 = vmatprep.subr.bf16.mxu0 0
      %4363 = vmatpush1.bf16.msra.mxu0 %v4173
      %4364 = vmatprep.subr.bf16.mxu0 0
      %4365 = vmatpush1.bf16.msra.mxu0 %v4172
      %4366 = vmatprep.subr.bf16.mxu0 0
      %4367 = vmatpush1.bf16.msra.mxu0 %v4171
      %4368 = vmatprep.subr.bf16.mxu0 0
      %4369 = vmatpush1.bf16.msra.mxu0 %v4170
      %4370 = vmatprep.subr.bf16.mxu0 0
      %4371 = vmatpush1.bf16.msra.mxu0 %v4169
      %4372 = vmatprep.subr.bf16.mxu0 0
      %4373 = vmatpush1.bf16.msra.mxu0 %v4168
      %4374 = vmatprep.subr.bf16.mxu0 0
      %4375 = vmatpush1.bf16.msra.mxu0 %v4167
      %4376 = vmatprep.subr.bf16.mxu0 0
      %4377 = vmatpush2.bf16.msra.mxu0 0
      %4378 = vmatprep.subr.bf16.mxu0 0
      %4379 = vmatpush2.bf16.msra.mxu0 0
      %4380 = vmatprep.subr.bf16.mxu0 0
      %4381 = vmatpush2.bf16.msra.mxu0 0
      %4382 = vmatprep.subr.bf16.mxu0 0
      %4383 = vmatpush2.bf16.msra.mxu0 0
      %4384 = vmatprep.subr.bf16.mxu0 0
      %4385 = vmatpush2.bf16.msra.mxu0 0
      %4386 = vmatprep.subr.bf16.mxu0 0
      %4387 = vmatpush2.bf16.msra.mxu0 0
      %4388 = vmatprep.subr.bf16.mxu0 0
      %4389 = vmatpush2.bf16.msra.mxu0 0
      %4390 = vmatprep.subr.bf16.mxu0 0
      %4391 = vmatpush2.bf16.msra.mxu0 0
      %4392 = vmatprep.mubr.bf16.mxu0 0
      %4393 = vmatmul.mubr.bf16.gmra.mxu0 %v3960
      %v4394 = vpop.f32.mrf.mxu0
      %v4395 = vadd.f32 %v4234, %v4394
      %v4396 = vpop.f32.mrf.mxu0
      %v4397 = vpop.f32.mrf.mxu0
      %v4398 = vadd.f32 %v4237, %v4397
      %v4399 = vpop.f32.mrf.mxu0
      %4400 = vmatprep.mubr.bf16.mxu0 0
      %4401 = vmatmul.mubr.bf16.gmra.mxu0 %v3963
      %v4402 = vpop.f32.mrf.mxu0
      %v4403 = vadd.f32 %v4242, %v4402
      %v4404 = vpop.f32.mrf.mxu0
      %v4405 = vpop.f32.mrf.mxu0
      %v4406 = vadd.f32 %v4245, %v4405
      %v4407 = vpop.f32.mrf.mxu0
      %4408 = vmatprep.mubr.bf16.mxu0 0
      %4409 = vmatmul.mubr.bf16.gmra.mxu0 %v3966
      %v4410 = vpop.f32.mrf.mxu0
      %v4411 = vadd.f32 %v4250, %v4410
      %v4412 = vpop.f32.mrf.mxu0
      %v4413 = vpop.f32.mrf.mxu0
      %v4414 = vadd.f32 %v4253, %v4413
      %v4415 = vpop.f32.mrf.mxu0
      %4416 = vmatprep.mubr.bf16.mxu0 0
      %4417 = vmatmul.mubr.bf16.gmra.mxu0 %v3969
      %v4418 = vpop.f32.mrf.mxu0
      %v4419 = vadd.f32 %v4258, %v4418
      %v4420 = vpop.f32.mrf.mxu0
      %v4421 = vpop.f32.mrf.mxu0
      %v4422 = vadd.f32 %v4261, %v4421
      %v4423 = vpop.f32.mrf.mxu0
      %4424 = vmatprep.mubr.bf16.mxu0 0
      %4425 = vmatmul.mubr.bf16.gmra.mxu0 %v3972
      %v4426 = vpop.f32.mrf.mxu0
      %v4427 = vadd.f32 %v4266, %v4426
      %v4428 = vpop.f32.mrf.mxu0
      %v4429 = vpop.f32.mrf.mxu0
      %v4430 = vadd.f32 %v4269, %v4429
      %v4431 = vpop.f32.mrf.mxu0
      %4432 = vmatprep.mubr.bf16.mxu0 0
      %4433 = vmatmul.mubr.bf16.gmra.mxu0 %v3975
      %v4434 = vpop.f32.mrf.mxu0
      %v4435 = vadd.f32 %v4274, %v4434
      %v4436 = vpop.f32.mrf.mxu0
      %v4437 = vpop.f32.mrf.mxu0
      %v4438 = vadd.f32 %v4277, %v4437
      %v4439 = vpop.f32.mrf.mxu0
      %4440 = vmatprep.mubr.bf16.mxu0 0
      %4441 = vmatmul.mubr.bf16.gmra.mxu0 %v3978
      %v4442 = vpop.f32.mrf.mxu0
      %v4443 = vadd.f32 %v4282, %v4442
      %v4444 = vpop.f32.mrf.mxu0
      %v4445 = vpop.f32.mrf.mxu0
      %v4446 = vadd.f32 %v4285, %v4445
      %v4447 = vpop.f32.mrf.mxu0
      %4448 = vmatprep.mubr.bf16.mxu0 0
      %4449 = vmatmul.mubr.bf16.gmra.mxu0 %v3981
      %v4450 = vpop.f32.mrf.mxu0
      %v4451 = vadd.f32 %v4290, %v4450
      %v4452 = vpop.f32.mrf.mxu0
      %v4453 = vpop.f32.mrf.mxu0
      %v4454 = vadd.f32 %v4293, %v4453
      %v4455 = vpop.f32.mrf.mxu0
      %4456 = vmatprep.mubr.bf16.mxu0 0
      %4457 = vmatmul.mubr.bf16.gmra.mxu0 %v3984
      %v4458 = vpop.f32.mrf.mxu0
      %v4459 = vadd.f32 %v4298, %v4458
      %v4460 = vpop.f32.mrf.mxu0
      %v4461 = vpop.f32.mrf.mxu0
      %v4462 = vadd.f32 %v4301, %v4461
      %v4463 = vpop.f32.mrf.mxu0
      %4464 = vmatprep.mubr.bf16.mxu0 0
      %4465 = vmatmul.mubr.bf16.gmra.mxu0 %v3987
      %v4466 = vpop.f32.mrf.mxu0
      %v4467 = vadd.f32 %v4306, %v4466
      %v4468 = vpop.f32.mrf.mxu0
      %v4469 = vpop.f32.mrf.mxu0
      %v4470 = vadd.f32 %v4309, %v4469
      %v4471 = vpop.f32.mrf.mxu0
      %4472 = vmatprep.mubr.bf16.mxu0 0
      %4473 = vmatmul.mubr.bf16.gmra.mxu0 %v3990
      %v4474 = vpop.f32.mrf.mxu0
      %v4475 = vadd.f32 %v4314, %v4474
      %v4476 = vpop.f32.mrf.mxu0
      %v4477 = vpop.f32.mrf.mxu0
      %v4478 = vadd.f32 %v4317, %v4477
      %v4479 = vpop.f32.mrf.mxu0
      %4480 = vmatprep.mubr.bf16.mxu0 0
      %4481 = vmatmul.mubr.bf16.gmra.mxu0 %v3993
      %v4482 = vpop.f32.mrf.mxu0
      %v4483 = vadd.f32 %v4322, %v4482
      %v4484 = vpop.f32.mrf.mxu0
      %v4485 = vpop.f32.mrf.mxu0
      %v4486 = vadd.f32 %v4325, %v4485
      %v4487 = vpop.f32.mrf.mxu0
      %4488 = vmatprep.mubr.bf16.mxu0 0
      %4489 = vmatmul.mubr.bf16.gmra.mxu0 %v3996
      %v4490 = vpop.f32.mrf.mxu0
      %v4491 = vadd.f32 %v4330, %v4490
      %v4492 = vpop.f32.mrf.mxu0
      %v4493 = vpop.f32.mrf.mxu0
      %v4494 = vadd.f32 %v4333, %v4493
      %v4495 = vpop.f32.mrf.mxu0
      %4496 = vmatprep.mubr.bf16.mxu0 0
      %4497 = vmatmul.mubr.bf16.gmra.mxu0 %v3999
      %v4498 = vpop.f32.mrf.mxu0
      %v4499 = vadd.f32 %v4338, %v4498
      %v4500 = vpop.f32.mrf.mxu0
      %v4501 = vpop.f32.mrf.mxu0
      %v4502 = vadd.f32 %v4341, %v4501
      %v4503 = vpop.f32.mrf.mxu0
      %4504 = vmatprep.mubr.bf16.mxu0 0
      %4505 = vmatmul.mubr.bf16.gmra.mxu0 %v4002
      %v4506 = vpop.f32.mrf.mxu0
      %v4507 = vadd.f32 %v4346, %v4506
      %v4508 = vpop.f32.mrf.mxu0
      %v4509 = vpop.f32.mrf.mxu0
      %v4510 = vadd.f32 %v4349, %v4509
      %v4511 = vpop.f32.mrf.mxu0
      %4512 = vmatprep.mubr.bf16.mxu0 0
      %4513 = vmatmul.mubr.bf16.gmra.mxu0 %v4005
      %v4514 = vpop.f32.mrf.mxu0
      %v4515 = vadd.f32 %v4354, %v4514
      %v4516 = vpop.f32.mrf.mxu0
      %v4517 = vpop.f32.mrf.mxu0
      %v4518 = vadd.f32 %v4357, %v4517
      %v4519 = vpop.f32.mrf.mxu0
      %4520 = vdwg.mxu0
      %v4569 = vunpack.c.l.b16 %v3814
      %v4570 = vunpack.c.l.b16 %v3815
      %v4571 = vunpack.c.l.b16 %v3816
      %v4572 = vunpack.c.l.b16 %v3817
      %v4573 = vunpack.c.l.b16 %v3818
      %v4574 = vunpack.c.l.b16 %v3819
      %v4575 = vunpack.c.l.b16 %v3820
      %v4576 = vunpack.c.l.b16 %v3821
      %v4577 = vunpack.c.l.b16 %v3822
      %v4578 = vunpack.c.l.b16 %v3823
      %v4579 = vunpack.c.l.b16 %v3824
      %v4580 = vunpack.c.l.b16 %v3825
      %v4581 = vunpack.c.l.b16 %v3826
      %v4582 = vunpack.c.l.b16 %v3827
      %v4583 = vunpack.c.l.b16 %v3828
      %v4584 = vunpack.c.l.b16 %v3829
      %v4585 = vunpack.c.l.b16 %v3830
      %v4586 = vunpack.c.l.b16 %v3831
      %v4587 = vunpack.c.l.b16 %v3832
      %v4588 = vunpack.c.l.b16 %v3833
      %v4589 = vunpack.c.l.b16 %v3834
      %v4590 = vunpack.c.l.b16 %v3835
      %v4591 = vunpack.c.l.b16 %v3836
      %v4592 = vunpack.c.l.b16 %v3837
      %v4593 = vunpack.c.l.b16 %v3838
      %v4594 = vunpack.c.l.b16 %v3839
      %v4595 = vunpack.c.l.b16 %v3840
      %v4596 = vunpack.c.l.b16 %v3841
      %v4597 = vunpack.c.l.b16 %v3842
      %v4598 = vunpack.c.l.b16 %v3843
      %v4599 = vunpack.c.l.b16 %v3844
      %v4600 = vunpack.c.l.b16 %v3845
      %v4601 = vunpack.c.l.b16 %v3846
      %v4602 = vunpack.c.l.b16 %v3847
      %v4603 = vunpack.c.l.b16 %v3848
      %v4604 = vunpack.c.l.b16 %v3849
      %v4605 = vunpack.c.l.b16 %v3850
      %v4606 = vunpack.c.l.b16 %v3851
      %v4607 = vunpack.c.l.b16 %v3852
      %v4608 = vunpack.c.l.b16 %v3853
      %v4609 = vunpack.c.l.b16 %v3854
      %v4610 = vunpack.c.l.b16 %v3855
      %v4611 = vunpack.c.l.b16 %v3856
      %v4612 = vunpack.c.l.b16 %v3857
      %v4613 = vunpack.c.l.b16 %v3858
      %v4614 = vunpack.c.l.b16 %v3859
      %v4615 = vunpack.c.l.b16 %v3860
      %v4616 = vunpack.c.l.b16 %v3861
      %v4617 = vpack.c.b16 %v4570, %v4569
      %v4618 = vpack.c.b16 %v4572, %v4571
      %v4619 = vpack.c.b16 %v4574, %v4573
      %v4620 = vpack.c.b16 %v4576, %v4575
      %v4621 = vpack.c.b16 %v4578, %v4577
      %v4622 = vpack.c.b16 %v4580, %v4579
      %v4623 = vpack.c.b16 %v4582, %v4581
      %v4624 = vpack.c.b16 %v4584, %v4583
      %v4625 = vpack.c.b16 %v4586, %v4585
      %v4626 = vpack.c.b16 %v4588, %v4587
      %v4627 = vpack.c.b16 %v4590, %v4589
      %v4628 = vpack.c.b16 %v4592, %v4591
      %v4629 = vpack.c.b16 %v4594, %v4593
      %v4630 = vpack.c.b16 %v4596, %v4595
      %v4631 = vpack.c.b16 %v4598, %v4597
      %v4632 = vpack.c.b16 %v4600, %v4599
      %v4633 = vpack.c.b16 %v4602, %v4601
      %v4634 = vpack.c.b16 %v4604, %v4603
      %v4635 = vpack.c.b16 %v4606, %v4605
      %v4636 = vpack.c.b16 %v4608, %v4607
      %v4637 = vpack.c.b16 %v4610, %v4609
      %v4638 = vpack.c.b16 %v4612, %v4611
      %v4639 = vpack.c.b16 %v4614, %v4613
      %v4640 = vpack.c.b16 %v4616, %v4615
      %4665 = vmatprep.subr.bf16.mxu0 0
      %4666 = vmatpush1.bf16.msra.mxu0 %v4624
      %4667 = vmatprep.subr.bf16.mxu0 0
      %4668 = vmatpush1.bf16.msra.mxu0 %v4623
      %4669 = vmatprep.subr.bf16.mxu0 0
      %4670 = vmatpush1.bf16.msra.mxu0 %v4622
      %4671 = vmatprep.subr.bf16.mxu0 0
      %4672 = vmatpush1.bf16.msra.mxu0 %v4621
      %4673 = vmatprep.subr.bf16.mxu0 0
      %4674 = vmatpush1.bf16.msra.mxu0 %v4620
      %4675 = vmatprep.subr.bf16.mxu0 0
      %4676 = vmatpush1.bf16.msra.mxu0 %v4619
      %4677 = vmatprep.subr.bf16.mxu0 0
      %4678 = vmatpush1.bf16.msra.mxu0 %v4618
      %4679 = vmatprep.subr.bf16.mxu0 0
      %4680 = vmatpush1.bf16.msra.mxu0 %v4617
      %4681 = vmatprep.subr.bf16.mxu0 0
      %4682 = vmatpush2.bf16.msra.mxu0 %v4632
      %4683 = vmatprep.subr.bf16.mxu0 0
      %4684 = vmatpush2.bf16.msra.mxu0 %v4631
      %4685 = vmatprep.subr.bf16.mxu0 0
      %4686 = vmatpush2.bf16.msra.mxu0 %v4630
      %4687 = vmatprep.subr.bf16.mxu0 0
      %4688 = vmatpush2.bf16.msra.mxu0 %v4629
      %4689 = vmatprep.subr.bf16.mxu0 0
      %4690 = vmatpush2.bf16.msra.mxu0 %v4628
      %4691 = vmatprep.subr.bf16.mxu0 0
      %4692 = vmatpush2.bf16.msra.mxu0 %v4627
      %4693 = vmatprep.subr.bf16.mxu0 0
      %4694 = vmatpush2.bf16.msra.mxu0 %v4626
      %4695 = vmatprep.subr.bf16.mxu0 0
      %4696 = vmatpush2.bf16.msra.mxu0 %v4625
      %4697 = vmatprep.mubr.bf16.mxu0 %v3767
      %4698 = vmatmul.mubr.bf16.gmra.mxu0 %v3766
      %v4699 = vpop.f32.mrf.mxu0
      %v4700 = vadd.f32 %v4395, %v4699
      %v4701 = vpop.f32.mrf.mxu0
      %v4702 = vpop.f32.mrf.mxu0
      %v4703 = vadd.f32 %v4398, %v4702
      %v4704 = vpop.f32.mrf.mxu0
      %4705 = vmatprep.mubr.bf16.mxu0 %v3770
      %4706 = vmatmul.mubr.bf16.gmra.mxu0 %v3769
      %v4707 = vpop.f32.mrf.mxu0
      %v4708 = vadd.f32 %v4403, %v4707
      %v4709 = vpop.f32.mrf.mxu0
      %v4710 = vpop.f32.mrf.mxu0
      %v4711 = vadd.f32 %v4406, %v4710
      %v4712 = vpop.f32.mrf.mxu0
      %4713 = vmatprep.mubr.bf16.mxu0 %v3773
      %4714 = vmatmul.mubr.bf16.gmra.mxu0 %v3772
      %v4715 = vpop.f32.mrf.mxu0
      %v4716 = vadd.f32 %v4411, %v4715
      %v4717 = vpop.f32.mrf.mxu0
      %v4718 = vpop.f32.mrf.mxu0
      %v4719 = vadd.f32 %v4414, %v4718
      %v4720 = vpop.f32.mrf.mxu0
      %4721 = vmatprep.mubr.bf16.mxu0 %v3776
      %4722 = vmatmul.mubr.bf16.gmra.mxu0 %v3775
      %v4723 = vpop.f32.mrf.mxu0
      %v4724 = vadd.f32 %v4419, %v4723
      %v4725 = vpop.f32.mrf.mxu0
      %v4726 = vpop.f32.mrf.mxu0
      %v4727 = vadd.f32 %v4422, %v4726
      %v4728 = vpop.f32.mrf.mxu0
      %4729 = vmatprep.mubr.bf16.mxu0 %v3779
      %4730 = vmatmul.mubr.bf16.gmra.mxu0 %v3778
      %v4731 = vpop.f32.mrf.mxu0
      %v4732 = vadd.f32 %v4427, %v4731
      %v4733 = vpop.f32.mrf.mxu0
      %v4734 = vpop.f32.mrf.mxu0
      %v4735 = vadd.f32 %v4430, %v4734
      %v4736 = vpop.f32.mrf.mxu0
      %4737 = vmatprep.mubr.bf16.mxu0 %v3782
      %4738 = vmatmul.mubr.bf16.gmra.mxu0 %v3781
      %v4739 = vpop.f32.mrf.mxu0
      %v4740 = vadd.f32 %v4435, %v4739
      %v4741 = vpop.f32.mrf.mxu0
      %v4742 = vpop.f32.mrf.mxu0
      %v4743 = vadd.f32 %v4438, %v4742
      %v4744 = vpop.f32.mrf.mxu0
      %4745 = vmatprep.mubr.bf16.mxu0 %v3785
      %4746 = vmatmul.mubr.bf16.gmra.mxu0 %v3784
      %v4747 = vpop.f32.mrf.mxu0
      %v4748 = vadd.f32 %v4443, %v4747
      %v4749 = vpop.f32.mrf.mxu0
      %v4750 = vpop.f32.mrf.mxu0
      %v4751 = vadd.f32 %v4446, %v4750
      %v4752 = vpop.f32.mrf.mxu0
      %4753 = vmatprep.mubr.bf16.mxu0 %v3788
      %4754 = vmatmul.mubr.bf16.gmra.mxu0 %v3787
      %v4755 = vpop.f32.mrf.mxu0
      %v4756 = vadd.f32 %v4451, %v4755
      %v4757 = vpop.f32.mrf.mxu0
      %v4758 = vpop.f32.mrf.mxu0
      %v4759 = vadd.f32 %v4454, %v4758
      %v4760 = vpop.f32.mrf.mxu0
      %4761 = vmatprep.mubr.bf16.mxu0 %v3791
      %4762 = vmatmul.mubr.bf16.gmra.mxu0 %v3790
      %v4763 = vpop.f32.mrf.mxu0
      %v4764 = vadd.f32 %v4459, %v4763
      %v4765 = vpop.f32.mrf.mxu0
      %v4766 = vpop.f32.mrf.mxu0
      %v4767 = vadd.f32 %v4462, %v4766
      %v4768 = vpop.f32.mrf.mxu0
      %4769 = vmatprep.mubr.bf16.mxu0 %v3794
      %4770 = vmatmul.mubr.bf16.gmra.mxu0 %v3793
      %v4771 = vpop.f32.mrf.mxu0
      %v4772 = vadd.f32 %v4467, %v4771
      %v4773 = vpop.f32.mrf.mxu0
      %v4774 = vpop.f32.mrf.mxu0
      %v4775 = vadd.f32 %v4470, %v4774
      %v4776 = vpop.f32.mrf.mxu0
      %4777 = vmatprep.mubr.bf16.mxu0 %v3797
      %4778 = vmatmul.mubr.bf16.gmra.mxu0 %v3796
      %v4779 = vpop.f32.mrf.mxu0
      %v4780 = vadd.f32 %v4475, %v4779
      %v4781 = vpop.f32.mrf.mxu0
      %v4782 = vpop.f32.mrf.mxu0
      %v4783 = vadd.f32 %v4478, %v4782
      %v4784 = vpop.f32.mrf.mxu0
      %4785 = vmatprep.mubr.bf16.mxu0 %v3800
      %4786 = vmatmul.mubr.bf16.gmra.mxu0 %v3799
      %v4787 = vpop.f32.mrf.mxu0
      %v4788 = vadd.f32 %v4483, %v4787
      %v4789 = vpop.f32.mrf.mxu0
      %v4790 = vpop.f32.mrf.mxu0
      %v4791 = vadd.f32 %v4486, %v4790
      %v4792 = vpop.f32.mrf.mxu0
      %4793 = vmatprep.mubr.bf16.mxu0 %v3803
      %4794 = vmatmul.mubr.bf16.gmra.mxu0 %v3802
      %v4795 = vpop.f32.mrf.mxu0
      %v4796 = vadd.f32 %v4491, %v4795
      %v4797 = vpop.f32.mrf.mxu0
      %v4798 = vpop.f32.mrf.mxu0
      %v4799 = vadd.f32 %v4494, %v4798
      %v4800 = vpop.f32.mrf.mxu0
      %4801 = vmatprep.mubr.bf16.mxu0 %v3806
      %4802 = vmatmul.mubr.bf16.gmra.mxu0 %v3805
      %v4803 = vpop.f32.mrf.mxu0
      %v4804 = vadd.f32 %v4499, %v4803
      %v4805 = vpop.f32.mrf.mxu0
      %v4806 = vpop.f32.mrf.mxu0
      %v4807 = vadd.f32 %v4502, %v4806
      %v4808 = vpop.f32.mrf.mxu0
      %4809 = vmatprep.mubr.bf16.mxu0 %v3809
      %4810 = vmatmul.mubr.bf16.gmra.mxu0 %v3808
      %v4811 = vpop.f32.mrf.mxu0
      %v4812 = vadd.f32 %v4507, %v4811
      %v4813 = vpop.f32.mrf.mxu0
      %v4814 = vpop.f32.mrf.mxu0
      %v4815 = vadd.f32 %v4510, %v4814
      %v4816 = vpop.f32.mrf.mxu0
      %4817 = vmatprep.mubr.bf16.mxu0 %v3812
      %4818 = vmatmul.mubr.bf16.gmra.mxu0 %v3811
      %v4819 = vpop.f32.mrf.mxu0
      %v4820 = vadd.f32 %v4515, %v4819
      %v4821 = vpop.f32.mrf.mxu0
      %v4822 = vpop.f32.mrf.mxu0
      %v4823 = vadd.f32 %v4518, %v4822
      %v4824 = vpop.f32.mrf.mxu0
      %4825 = vdwg.mxu0
      %4826 = vmatprep.subr.bf16.mxu0 0
      %4827 = vmatpush1.bf16.msra.mxu0 %v4640
      %4828 = vmatprep.subr.bf16.mxu0 0
      %4829 = vmatpush1.bf16.msra.mxu0 %v4639
      %4830 = vmatprep.subr.bf16.mxu0 0
      %4831 = vmatpush1.bf16.msra.mxu0 %v4638
      %4832 = vmatprep.subr.bf16.mxu0 0
      %4833 = vmatpush1.bf16.msra.mxu0 %v4637
      %4834 = vmatprep.subr.bf16.mxu0 0
      %4835 = vmatpush1.bf16.msra.mxu0 %v4636
      %4836 = vmatprep.subr.bf16.mxu0 0
      %4837 = vmatpush1.bf16.msra.mxu0 %v4635
      %4838 = vmatprep.subr.bf16.mxu0 0
      %4839 = vmatpush1.bf16.msra.mxu0 %v4634
      %4840 = vmatprep.subr.bf16.mxu0 0
      %4841 = vmatpush1.bf16.msra.mxu0 %v4633
      %4842 = vmatprep.subr.bf16.mxu0 0
      %4843 = vmatpush2.bf16.msra.mxu0 0
      %4844 = vmatprep.subr.bf16.mxu0 0
      %4845 = vmatpush2.bf16.msra.mxu0 0
      %4846 = vmatprep.subr.bf16.mxu0 0
      %4847 = vmatpush2.bf16.msra.mxu0 0
      %4848 = vmatprep.subr.bf16.mxu0 0
      %4849 = vmatpush2.bf16.msra.mxu0 0
      %4850 = vmatprep.subr.bf16.mxu0 0
      %4851 = vmatpush2.bf16.msra.mxu0 0
      %4852 = vmatprep.subr.bf16.mxu0 0
      %4853 = vmatpush2.bf16.msra.mxu0 0
      %4854 = vmatprep.subr.bf16.mxu0 0
      %4855 = vmatpush2.bf16.msra.mxu0 0
      %4856 = vmatprep.subr.bf16.mxu0 0
      %4857 = vmatpush2.bf16.msra.mxu0 0
      %4858 = vmatprep.mubr.bf16.mxu0 0
      %4859 = vmatmul.mubr.bf16.gmra.mxu0 %v3768
      %v4860 = vpop.f32.mrf.mxu0
      %v4861 = vadd.f32 %v4700, %v4860
      %v4862 = vpop.f32.mrf.mxu0
      %v4863 = vpop.f32.mrf.mxu0
      %v4864 = vadd.f32 %v4703, %v4863
      %v4865 = vpop.f32.mrf.mxu0
      %4866 = vmatprep.mubr.bf16.mxu0 0
      %4867 = vmatmul.mubr.bf16.gmra.mxu0 %v3771
      %v4868 = vpop.f32.mrf.mxu0
      %v4869 = vadd.f32 %v4708, %v4868
      %v4870 = vpop.f32.mrf.mxu0
      %v4871 = vpop.f32.mrf.mxu0
      %v4872 = vadd.f32 %v4711, %v4871
      %v4873 = vpop.f32.mrf.mxu0
      %4874 = vmatprep.mubr.bf16.mxu0 0
      %4875 = vmatmul.mubr.bf16.gmra.mxu0 %v3774
      %v4876 = vpop.f32.mrf.mxu0
      %v4877 = vadd.f32 %v4716, %v4876
      %v4878 = vpop.f32.mrf.mxu0
      %v4879 = vpop.f32.mrf.mxu0
      %v4880 = vadd.f32 %v4719, %v4879
      %v4881 = vpop.f32.mrf.mxu0
      %4882 = vmatprep.mubr.bf16.mxu0 0
      %4883 = vmatmul.mubr.bf16.gmra.mxu0 %v3777
      %v4884 = vpop.f32.mrf.mxu0
      %v4885 = vadd.f32 %v4724, %v4884
      %v4886 = vpop.f32.mrf.mxu0
      %v4887 = vpop.f32.mrf.mxu0
      %v4888 = vadd.f32 %v4727, %v4887
      %v4889 = vpop.f32.mrf.mxu0
      %4890 = vmatprep.mubr.bf16.mxu0 0
      %4891 = vmatmul.mubr.bf16.gmra.mxu0 %v3780
      %v4892 = vpop.f32.mrf.mxu0
      %v4893 = vadd.f32 %v4732, %v4892
      %v4894 = vpop.f32.mrf.mxu0
      %v4895 = vpop.f32.mrf.mxu0
      %v4896 = vadd.f32 %v4735, %v4895
      %v4897 = vpop.f32.mrf.mxu0
      %4898 = vmatprep.mubr.bf16.mxu0 0
      %4899 = vmatmul.mubr.bf16.gmra.mxu0 %v3783
      %v4900 = vpop.f32.mrf.mxu0
      %v4901 = vadd.f32 %v4740, %v4900
      %v4902 = vpop.f32.mrf.mxu0
      %v4903 = vpop.f32.mrf.mxu0
      %v4904 = vadd.f32 %v4743, %v4903
      %v4905 = vpop.f32.mrf.mxu0
      %4906 = vmatprep.mubr.bf16.mxu0 0
      %4907 = vmatmul.mubr.bf16.gmra.mxu0 %v3786
      %v4908 = vpop.f32.mrf.mxu0
      %v4909 = vadd.f32 %v4748, %v4908
      %v4910 = vpop.f32.mrf.mxu0
      %v4911 = vpop.f32.mrf.mxu0
      %v4912 = vadd.f32 %v4751, %v4911
      %v4913 = vpop.f32.mrf.mxu0
      %4914 = vmatprep.mubr.bf16.mxu0 0
      %4915 = vmatmul.mubr.bf16.gmra.mxu0 %v3789
      %v4916 = vpop.f32.mrf.mxu0
      %v4917 = vadd.f32 %v4756, %v4916
      %v4918 = vpop.f32.mrf.mxu0
      %v4919 = vpop.f32.mrf.mxu0
      %v4920 = vadd.f32 %v4759, %v4919
      %v4921 = vpop.f32.mrf.mxu0
      %4922 = vmatprep.mubr.bf16.mxu0 0
      %4923 = vmatmul.mubr.bf16.gmra.mxu0 %v3792
      %v4924 = vpop.f32.mrf.mxu0
      %v4925 = vadd.f32 %v4764, %v4924
      %v4926 = vpop.f32.mrf.mxu0
      %v4927 = vpop.f32.mrf.mxu0
      %v4928 = vadd.f32 %v4767, %v4927
      %v4929 = vpop.f32.mrf.mxu0
      %4930 = vmatprep.mubr.bf16.mxu0 0
      %4931 = vmatmul.mubr.bf16.gmra.mxu0 %v3795
      %v4932 = vpop.f32.mrf.mxu0
      %v4933 = vadd.f32 %v4772, %v4932
      %v4934 = vpop.f32.mrf.mxu0
      %v4935 = vpop.f32.mrf.mxu0
      %v4936 = vadd.f32 %v4775, %v4935
      %v4937 = vpop.f32.mrf.mxu0
      %4938 = vmatprep.mubr.bf16.mxu0 0
      %4939 = vmatmul.mubr.bf16.gmra.mxu0 %v3798
      %v4940 = vpop.f32.mrf.mxu0
      %v4941 = vadd.f32 %v4780, %v4940
      %v4942 = vpop.f32.mrf.mxu0
      %v4943 = vpop.f32.mrf.mxu0
      %v4944 = vadd.f32 %v4783, %v4943
      %v4945 = vpop.f32.mrf.mxu0
      %4946 = vmatprep.mubr.bf16.mxu0 0
      %4947 = vmatmul.mubr.bf16.gmra.mxu0 %v3801
      %v4948 = vpop.f32.mrf.mxu0
      %v4949 = vadd.f32 %v4788, %v4948
      %v4950 = vpop.f32.mrf.mxu0
      %v4951 = vpop.f32.mrf.mxu0
      %v4952 = vadd.f32 %v4791, %v4951
      %v4953 = vpop.f32.mrf.mxu0
      %4954 = vmatprep.mubr.bf16.mxu0 0
      %4955 = vmatmul.mubr.bf16.gmra.mxu0 %v3804
      %v4956 = vpop.f32.mrf.mxu0
      %v4957 = vadd.f32 %v4796, %v4956
      %v4958 = vpop.f32.mrf.mxu0
      %v4959 = vpop.f32.mrf.mxu0
      %v4960 = vadd.f32 %v4799, %v4959
      %v4961 = vpop.f32.mrf.mxu0
      %4962 = vmatprep.mubr.bf16.mxu0 0
      %4963 = vmatmul.mubr.bf16.gmra.mxu0 %v3807
      %v4964 = vpop.f32.mrf.mxu0
      %v4965 = vadd.f32 %v4804, %v4964
      %v4966 = vpop.f32.mrf.mxu0
      %v4967 = vpop.f32.mrf.mxu0
      %v4968 = vadd.f32 %v4807, %v4967
      %v4969 = vpop.f32.mrf.mxu0
      %4970 = vmatprep.mubr.bf16.mxu0 0
      %4971 = vmatmul.mubr.bf16.gmra.mxu0 %v3810
      %v4972 = vpop.f32.mrf.mxu0
      %v4973 = vadd.f32 %v4812, %v4972
      %v4974 = vpop.f32.mrf.mxu0
      %v4975 = vpop.f32.mrf.mxu0
      %v4976 = vadd.f32 %v4815, %v4975
      %v4977 = vpop.f32.mrf.mxu0
      %4978 = vmatprep.mubr.bf16.mxu0 0
      %4979 = vmatmul.mubr.bf16.gmra.mxu0 %v3813
      %v4980 = vpop.f32.mrf.mxu0
      %v4981 = vadd.f32 %v4820, %v4980
      %v4982 = vpop.f32.mrf.mxu0
      %v4983 = vpop.f32.mrf.mxu0
      %v4984 = vadd.f32 %v4823, %v4983
      %v4985 = vpop.f32.mrf.mxu0
      %4986 = vdwg.mxu0
      %s4987 = scalar_lea.vmem [#allocation3], 96
      %v4988 = vld [vmem:[%s4987] sm:$0xff]
      %v4989 = vld [vmem:[%s4987 + $0x8] sm:$0xff]
      %v4990 = vld [vmem:[%s4987 + $0x10] sm:$0xff]
      %v4991 = vld [vmem:[%s4987 + $0x18] sm:$0xff]
      %v4992 = vld [vmem:[%s4987 + $0x20] sm:$0xff]
      %v4993 = vld [vmem:[%s4987 + $0x28] sm:$0xff]
      %v4994 = vld [vmem:[%s4987 + $0x30] sm:$0xff]
      %v4995 = vld [vmem:[%s4987 + $0x38] sm:$0xff]
      %v4996 = vld [vmem:[%s4987 + $0x40] sm:$0xff]
      %v4997 = vld [vmem:[%s4987 + $0x48] sm:$0xff]
      %v4998 = vld [vmem:[%s4987 + $0x50] sm:$0xff]
      %v4999 = vld [vmem:[%s4987 + $0x58] sm:$0xff]
      %v5000 = vld [vmem:[%s4987 + $0x60] sm:$0xff]
      %v5001 = vld [vmem:[%s4987 + $0x68] sm:$0xff]
      %v5002 = vld [vmem:[%s4987 + $0x70] sm:$0xff]
      %v5003 = vld [vmem:[%s4987 + $0x78] sm:$0xff]
      %v5004 = vld [vmem:[%s4987 + $0x80] sm:$0xff]
      %v5005 = vld [vmem:[%s4987 + $0x88] sm:$0xff]
      %v5006 = vld [vmem:[%s4987 + $0x90] sm:$0xff]
      %v5007 = vld [vmem:[%s4987 + $0x98] sm:$0xff]
      %v5008 = vld [vmem:[%s4987 + $0xa0] sm:$0xff]
      %v5009 = vld [vmem:[%s4987 + $0xa8] sm:$0xff]
      %v5010 = vld [vmem:[%s4987 + $0xb0] sm:$0xff]
      %v5011 = vld [vmem:[%s4987 + $0xb8] sm:$0xff]
      %v5012 = vld [vmem:[%s4987 + $0xc0] sm:$0xff]
      %v5013 = vld [vmem:[%s4987 + $0xc8] sm:$0xff]
      %v5014 = vld [vmem:[%s4987 + $0xd0] sm:$0xff]
      %v5015 = vld [vmem:[%s4987 + $0xd8] sm:$0xff]
      %v5016 = vld [vmem:[%s4987 + $0xe0] sm:$0xff]
      %v5017 = vld [vmem:[%s4987 + $0xe8] sm:$0xff]
      %v5018 = vld [vmem:[%s4987 + $0xf0] sm:$0xff]
      %v5019 = vld [vmem:[%s4987 + $0xf8] sm:$0xff]
      %v5020 = vld [vmem:[%s4987 + $0x100] sm:$0xff]
      %v5021 = vld [vmem:[%s4987 + $0x108] sm:$0xff]
      %v5022 = vld [vmem:[%s4987 + $0x110] sm:$0xff]
      %v5023 = vld [vmem:[%s4987 + $0x118] sm:$0xff]
      %v5024 = vld [vmem:[%s4987 + $0x120] sm:$0xff]
      %v5025 = vld [vmem:[%s4987 + $0x128] sm:$0xff]
      %v5026 = vld [vmem:[%s4987 + $0x130] sm:$0xff]
      %v5027 = vld [vmem:[%s4987 + $0x138] sm:$0xff]
      %v5028 = vld [vmem:[%s4987 + $0x140] sm:$0xff]
      %v5029 = vld [vmem:[%s4987 + $0x148] sm:$0xff]
      %v5030 = vld [vmem:[%s4987 + $0x150] sm:$0xff]
      %v5031 = vld [vmem:[%s4987 + $0x158] sm:$0xff]
      %v5032 = vld [vmem:[%s4987 + $0x160] sm:$0xff]
      %v5033 = vld [vmem:[%s4987 + $0x168] sm:$0xff]
      %v5034 = vld [vmem:[%s4987 + $0x170] sm:$0xff]
      %v5035 = vld [vmem:[%s4987 + $0x178] sm:$0xff]
      %v5036 = vld [vmem:[%s4987 + $0x180] sm:$0xff]
      %v5037 = vld [vmem:[%s4987 + $0x188] sm:$0xff]
      %v5038 = vld [vmem:[%s4987 + $0x190] sm:$0xff]
      %v5039 = vld [vmem:[%s4987 + $0x198] sm:$0xff]
      %v5040 = vld [vmem:[%s4987 + $0x1a0] sm:$0xff]
      %v5041 = vld [vmem:[%s4987 + $0x1a8] sm:$0xff]
      %v5042 = vld [vmem:[%s4987 + $0x1b0] sm:$0xff]
      %v5043 = vld [vmem:[%s4987 + $0x1b8] sm:$0xff]
      %v5044 = vld [vmem:[%s4987 + $0x1c0] sm:$0xff]
      %v5045 = vld [vmem:[%s4987 + $0x1c8] sm:$0xff]
      %v5046 = vld [vmem:[%s4987 + $0x1d0] sm:$0xff]
      %v5047 = vld [vmem:[%s4987 + $0x1d8] sm:$0xff]
      %v5048 = vld [vmem:[%s4987 + $0x1e0] sm:$0xff]
      %v5049 = vld [vmem:[%s4987 + $0x1e8] sm:$0xff]
      %v5050 = vld [vmem:[%s4987 + $0x1f0] sm:$0xff]
      %v5051 = vld [vmem:[%s4987 + $0x1f8] sm:$0xff]
      %v5052 = vld [vmem:[%s4987 + $0x200] sm:$0xff]
      %v5053 = vld [vmem:[%s4987 + $0x208] sm:$0xff]
      %v5054 = vld [vmem:[%s4987 + $0x210] sm:$0xff]
      %v5055 = vld [vmem:[%s4987 + $0x218] sm:$0xff]
      %v5056 = vld [vmem:[%s4987 + $0x220] sm:$0xff]
      %v5057 = vld [vmem:[%s4987 + $0x228] sm:$0xff]
      %v5058 = vld [vmem:[%s4987 + $0x230] sm:$0xff]
      %v5059 = vld [vmem:[%s4987 + $0x238] sm:$0xff]
      %v5060 = vld [vmem:[%s4987 + $0x240] sm:$0xff]
      %v5061 = vld [vmem:[%s4987 + $0x248] sm:$0xff]
      %v5062 = vld [vmem:[%s4987 + $0x250] sm:$0xff]
      %v5063 = vld [vmem:[%s4987 + $0x258] sm:$0xff]
      %v5064 = vld [vmem:[%s4987 + $0x260] sm:$0xff]
      %v5065 = vld [vmem:[%s4987 + $0x268] sm:$0xff]
      %v5066 = vld [vmem:[%s4987 + $0x270] sm:$0xff]
      %v5067 = vld [vmem:[%s4987 + $0x278] sm:$0xff]
      %v5068 = vld [vmem:[%s4987 + $0x280] sm:$0xff]
      %v5069 = vld [vmem:[%s4987 + $0x288] sm:$0xff]
      %v5070 = vld [vmem:[%s4987 + $0x290] sm:$0xff]
      %v5071 = vld [vmem:[%s4987 + $0x298] sm:$0xff]
      %v5072 = vld [vmem:[%s4987 + $0x2a0] sm:$0xff]
      %v5073 = vld [vmem:[%s4987 + $0x2a8] sm:$0xff]
      %v5074 = vld [vmem:[%s4987 + $0x2b0] sm:$0xff]
      %v5075 = vld [vmem:[%s4987 + $0x2b8] sm:$0xff]
      %v5076 = vld [vmem:[%s4987 + $0x2c0] sm:$0xff]
      %v5077 = vld [vmem:[%s4987 + $0x2c8] sm:$0xff]
      %v5078 = vld [vmem:[%s4987 + $0x2d0] sm:$0xff]
      %v5079 = vld [vmem:[%s4987 + $0x2d8] sm:$0xff]
      %v5080 = vld [vmem:[%s4987 + $0x2e0] sm:$0xff]
      %v5081 = vld [vmem:[%s4987 + $0x2e8] sm:$0xff]
      %v5082 = vld [vmem:[%s4987 + $0x2f0] sm:$0xff]
      %v5083 = vld [vmem:[%s4987 + $0x2f8] sm:$0xff]
      %v5084 = vpack.c.bf16 %v4991, %v4988
      %v5085 = vpack.c.bf16 %v4992, %v4989
      %v5086 = vpack.c.bf16 %v4993, %v4990
      %v5087 = vpack.c.bf16 %v4997, %v4994
      %v5088 = vpack.c.bf16 %v4998, %v4995
      %v5089 = vpack.c.bf16 %v4999, %v4996
      %v5090 = vpack.c.bf16 %v5003, %v5000
      %v5091 = vpack.c.bf16 %v5004, %v5001
      %v5092 = vpack.c.bf16 %v5005, %v5002
      %v5093 = vpack.c.bf16 %v5009, %v5006
      %v5094 = vpack.c.bf16 %v5010, %v5007
      %v5095 = vpack.c.bf16 %v5011, %v5008
      %v5096 = vpack.c.bf16 %v5015, %v5012
      %v5097 = vpack.c.bf16 %v5016, %v5013
      %v5098 = vpack.c.bf16 %v5017, %v5014
      %v5099 = vpack.c.bf16 %v5021, %v5018
      %v5100 = vpack.c.bf16 %v5022, %v5019
      %v5101 = vpack.c.bf16 %v5023, %v5020
      %v5102 = vpack.c.bf16 %v5027, %v5024
      %v5103 = vpack.c.bf16 %v5028, %v5025
      %v5104 = vpack.c.bf16 %v5029, %v5026
      %v5105 = vpack.c.bf16 %v5033, %v5030
      %v5106 = vpack.c.bf16 %v5034, %v5031
      %v5107 = vpack.c.bf16 %v5035, %v5032
      %v5108 = vpack.c.bf16 %v5039, %v5036
      %v5109 = vpack.c.bf16 %v5040, %v5037
      %v5110 = vpack.c.bf16 %v5041, %v5038
      %v5111 = vpack.c.bf16 %v5045, %v5042
      %v5112 = vpack.c.bf16 %v5046, %v5043
      %v5113 = vpack.c.bf16 %v5047, %v5044
      %v5114 = vpack.c.bf16 %v5051, %v5048
      %v5115 = vpack.c.bf16 %v5052, %v5049
      %v5116 = vpack.c.bf16 %v5053, %v5050
      %v5117 = vpack.c.bf16 %v5057, %v5054
      %v5118 = vpack.c.bf16 %v5058, %v5055
      %v5119 = vpack.c.bf16 %v5059, %v5056
      %v5120 = vpack.c.bf16 %v5063, %v5060
      %v5121 = vpack.c.bf16 %v5064, %v5061
      %v5122 = vpack.c.bf16 %v5065, %v5062
      %v5123 = vpack.c.bf16 %v5069, %v5066
      %v5124 = vpack.c.bf16 %v5070, %v5067
      %v5125 = vpack.c.bf16 %v5071, %v5068
      %v5126 = vpack.c.bf16 %v5075, %v5072
      %v5127 = vpack.c.bf16 %v5076, %v5073
      %v5128 = vpack.c.bf16 %v5077, %v5074
      %v5129 = vpack.c.bf16 %v5081, %v5078
      %v5130 = vpack.c.bf16 %v5082, %v5079
      %v5131 = vpack.c.bf16 %v5083, %v5080
      %s5132 = scalar_lea.vmem %s6, 384
      %v5133 = vld [vmem:[%s5132] sm:$0xf]
      %v5134 = vld [vmem:[%s5132 + $0x4] sm:$0xf]
      %v5135 = vld [vmem:[%s5132 + $0x8] sm:$0xf]
      %v5136 = vld [vmem:[%s5132 + $0xc] sm:$0xf]
      %v5137 = vld [vmem:[%s5132 + $0x10] sm:$0xf]
      %v5138 = vld [vmem:[%s5132 + $0x14] sm:$0xf]
      %v5139 = vld [vmem:[%s5132 + $0x18] sm:$0xf]
      %v5140 = vld [vmem:[%s5132 + $0x1c] sm:$0xf]
      %v5141 = vld [vmem:[%s5132 + $0x20] sm:$0xf]
      %v5142 = vld [vmem:[%s5132 + $0x24] sm:$0xf]
      %v5143 = vld [vmem:[%s5132 + $0x28] sm:$0xf]
      %v5144 = vld [vmem:[%s5132 + $0x2c] sm:$0xf]
      %v5145 = vld [vmem:[%s5132 + $0x30] sm:$0xf]
      %v5146 = vld [vmem:[%s5132 + $0x34] sm:$0xf]
      %v5147 = vld [vmem:[%s5132 + $0x38] sm:$0xf]
      %v5148 = vld [vmem:[%s5132 + $0x3c] sm:$0xf]
      %v5149 = vld [vmem:[%s5132 + $0x40] sm:$0xf]
      %v5150 = vld [vmem:[%s5132 + $0x44] sm:$0xf]
      %v5151 = vld [vmem:[%s5132 + $0x48] sm:$0xf]
      %v5152 = vld [vmem:[%s5132 + $0x4c] sm:$0xf]
      %v5153 = vld [vmem:[%s5132 + $0x50] sm:$0xf]
      %v5154 = vld [vmem:[%s5132 + $0x54] sm:$0xf]
      %v5155 = vld [vmem:[%s5132 + $0x58] sm:$0xf]
      %v5156 = vld [vmem:[%s5132 + $0x5c] sm:$0xf]
      %v5157 = vld [vmem:[%s5132 + $0x60] sm:$0xf]
      %v5158 = vld [vmem:[%s5132 + $0x64] sm:$0xf]
      %v5159 = vld [vmem:[%s5132 + $0x68] sm:$0xf]
      %v5160 = vld [vmem:[%s5132 + $0x6c] sm:$0xf]
      %v5161 = vld [vmem:[%s5132 + $0x70] sm:$0xf]
      %v5162 = vld [vmem:[%s5132 + $0x74] sm:$0xf]
      %v5163 = vld [vmem:[%s5132 + $0x78] sm:$0xf]
      %v5164 = vld [vmem:[%s5132 + $0x7c] sm:$0xf]
      %v5165 = vld [vmem:[%s5132 + $0x80] sm:$0xf]
      %v5166 = vld [vmem:[%s5132 + $0x84] sm:$0xf]
      %v5167 = vld [vmem:[%s5132 + $0x88] sm:$0xf]
      %v5168 = vld [vmem:[%s5132 + $0x8c] sm:$0xf]
      %v5169 = vld [vmem:[%s5132 + $0x90] sm:$0xf]
      %v5170 = vld [vmem:[%s5132 + $0x94] sm:$0xf]
      %v5171 = vld [vmem:[%s5132 + $0x98] sm:$0xf]
      %v5172 = vld [vmem:[%s5132 + $0x9c] sm:$0xf]
      %v5173 = vld [vmem:[%s5132 + $0xa0] sm:$0xf]
      %v5174 = vld [vmem:[%s5132 + $0xa4] sm:$0xf]
      %v5175 = vld [vmem:[%s5132 + $0xa8] sm:$0xf]
      %v5176 = vld [vmem:[%s5132 + $0xac] sm:$0xf]
      %v5177 = vld [vmem:[%s5132 + $0xb0] sm:$0xf]
      %v5178 = vld [vmem:[%s5132 + $0xb4] sm:$0xf]
      %v5179 = vld [vmem:[%s5132 + $0xb8] sm:$0xf]
      %v5180 = vld [vmem:[%s5132 + $0xbc] sm:$0xf]
      %v5229 = vunpack.c.l.b16 %v5133
      %v5230 = vunpack.c.l.b16 %v5134
      %v5231 = vunpack.c.l.b16 %v5135
      %v5232 = vunpack.c.l.b16 %v5136
      %v5233 = vunpack.c.l.b16 %v5137
      %v5234 = vunpack.c.l.b16 %v5138
      %v5235 = vunpack.c.l.b16 %v5139
      %v5236 = vunpack.c.l.b16 %v5140
      %v5237 = vunpack.c.l.b16 %v5141
      %v5238 = vunpack.c.l.b16 %v5142
      %v5239 = vunpack.c.l.b16 %v5143
      %v5240 = vunpack.c.l.b16 %v5144
      %v5241 = vunpack.c.l.b16 %v5145
      %v5242 = vunpack.c.l.b16 %v5146
      %v5243 = vunpack.c.l.b16 %v5147
      %v5244 = vunpack.c.l.b16 %v5148
      %v5245 = vunpack.c.l.b16 %v5149
      %v5246 = vunpack.c.l.b16 %v5150
      %v5247 = vunpack.c.l.b16 %v5151
      %v5248 = vunpack.c.l.b16 %v5152
      %v5249 = vunpack.c.l.b16 %v5153
      %v5250 = vunpack.c.l.b16 %v5154
      %v5251 = vunpack.c.l.b16 %v5155
      %v5252 = vunpack.c.l.b16 %v5156
      %v5253 = vunpack.c.l.b16 %v5157
      %v5254 = vunpack.c.l.b16 %v5158
      %v5255 = vunpack.c.l.b16 %v5159
      %v5256 = vunpack.c.l.b16 %v5160
      %v5257 = vunpack.c.l.b16 %v5161
      %v5258 = vunpack.c.l.b16 %v5162
      %v5259 = vunpack.c.l.b16 %v5163
      %v5260 = vunpack.c.l.b16 %v5164
      %v5261 = vunpack.c.l.b16 %v5165
      %v5262 = vunpack.c.l.b16 %v5166
      %v5263 = vunpack.c.l.b16 %v5167
      %v5264 = vunpack.c.l.b16 %v5168
      %v5265 = vunpack.c.l.b16 %v5169
      %v5266 = vunpack.c.l.b16 %v5170
      %v5267 = vunpack.c.l.b16 %v5171
      %v5268 = vunpack.c.l.b16 %v5172
      %v5269 = vunpack.c.l.b16 %v5173
      %v5270 = vunpack.c.l.b16 %v5174
      %v5271 = vunpack.c.l.b16 %v5175
      %v5272 = vunpack.c.l.b16 %v5176
      %v5273 = vunpack.c.l.b16 %v5177
      %v5274 = vunpack.c.l.b16 %v5178
      %v5275 = vunpack.c.l.b16 %v5179
      %v5276 = vunpack.c.l.b16 %v5180
      %v5277 = vpack.c.b16 %v5230, %v5229
      %v5278 = vpack.c.b16 %v5232, %v5231
      %v5279 = vpack.c.b16 %v5234, %v5233
      %v5280 = vpack.c.b16 %v5236, %v5235
      %v5281 = vpack.c.b16 %v5238, %v5237
      %v5282 = vpack.c.b16 %v5240, %v5239
      %v5283 = vpack.c.b16 %v5242, %v5241
      %v5284 = vpack.c.b16 %v5244, %v5243
      %v5285 = vpack.c.b16 %v5246, %v5245
      %v5286 = vpack.c.b16 %v5248, %v5247
      %v5287 = vpack.c.b16 %v5250, %v5249
      %v5288 = vpack.c.b16 %v5252, %v5251
      %v5289 = vpack.c.b16 %v5254, %v5253
      %v5290 = vpack.c.b16 %v5256, %v5255
      %v5291 = vpack.c.b16 %v5258, %v5257
      %v5292 = vpack.c.b16 %v5260, %v5259
      %v5293 = vpack.c.b16 %v5262, %v5261
      %v5294 = vpack.c.b16 %v5264, %v5263
      %v5295 = vpack.c.b16 %v5266, %v5265
      %v5296 = vpack.c.b16 %v5268, %v5267
      %v5297 = vpack.c.b16 %v5270, %v5269
      %v5298 = vpack.c.b16 %v5272, %v5271
      %v5299 = vpack.c.b16 %v5274, %v5273
      %v5300 = vpack.c.b16 %v5276, %v5275
      %5325 = vmatprep.subr.bf16.mxu0 0
      %5326 = vmatpush1.bf16.msra.mxu0 %v5284
      %5327 = vmatprep.subr.bf16.mxu0 0
      %5328 = vmatpush1.bf16.msra.mxu0 %v5283
      %5329 = vmatprep.subr.bf16.mxu0 0
      %5330 = vmatpush1.bf16.msra.mxu0 %v5282
      %5331 = vmatprep.subr.bf16.mxu0 0
      %5332 = vmatpush1.bf16.msra.mxu0 %v5281
      %5333 = vmatprep.subr.bf16.mxu0 0
      %5334 = vmatpush1.bf16.msra.mxu0 %v5280
      %5335 = vmatprep.subr.bf16.mxu0 0
      %5336 = vmatpush1.bf16.msra.mxu0 %v5279
      %5337 = vmatprep.subr.bf16.mxu0 0
      %5338 = vmatpush1.bf16.msra.mxu0 %v5278
      %5339 = vmatprep.subr.bf16.mxu0 0
      %5340 = vmatpush1.bf16.msra.mxu0 %v5277
      %5341 = vmatprep.subr.bf16.mxu0 0
      %5342 = vmatpush2.bf16.msra.mxu0 %v5292
      %5343 = vmatprep.subr.bf16.mxu0 0
      %5344 = vmatpush2.bf16.msra.mxu0 %v5291
      %5345 = vmatprep.subr.bf16.mxu0 0
      %5346 = vmatpush2.bf16.msra.mxu0 %v5290
      %5347 = vmatprep.subr.bf16.mxu0 0
      %5348 = vmatpush2.bf16.msra.mxu0 %v5289
      %5349 = vmatprep.subr.bf16.mxu0 0
      %5350 = vmatpush2.bf16.msra.mxu0 %v5288
      %5351 = vmatprep.subr.bf16.mxu0 0
      %5352 = vmatpush2.bf16.msra.mxu0 %v5287
      %5353 = vmatprep.subr.bf16.mxu0 0
      %5354 = vmatpush2.bf16.msra.mxu0 %v5286
      %5355 = vmatprep.subr.bf16.mxu0 0
      %5356 = vmatpush2.bf16.msra.mxu0 %v5285
      %5357 = vmatprep.mubr.bf16.mxu0 %v5085
      %5358 = vmatmul.mubr.bf16.gmra.mxu0 %v5084
      %v5359 = vpop.f32.mrf.mxu0
      %v5360 = vadd.f32 0.0, %v5359
      %v5361 = vpop.f32.mrf.mxu0
      %v5362 = vpop.f32.mrf.mxu0
      %v5363 = vadd.f32 0.0, %v5362
      %v5364 = vpop.f32.mrf.mxu0
      %5365 = vmatprep.mubr.bf16.mxu0 %v5088
      %5366 = vmatmul.mubr.bf16.gmra.mxu0 %v5087
      %v5367 = vpop.f32.mrf.mxu0
      %v5368 = vadd.f32 0.0, %v5367
      %v5369 = vpop.f32.mrf.mxu0
      %v5370 = vpop.f32.mrf.mxu0
      %v5371 = vadd.f32 0.0, %v5370
      %v5372 = vpop.f32.mrf.mxu0
      %5373 = vmatprep.mubr.bf16.mxu0 %v5091
      %5374 = vmatmul.mubr.bf16.gmra.mxu0 %v5090
      %v5375 = vpop.f32.mrf.mxu0
      %v5376 = vadd.f32 0.0, %v5375
      %v5377 = vpop.f32.mrf.mxu0
      %v5378 = vpop.f32.mrf.mxu0
      %v5379 = vadd.f32 0.0, %v5378
      %v5380 = vpop.f32.mrf.mxu0
      %5381 = vmatprep.mubr.bf16.mxu0 %v5094
      %5382 = vmatmul.mubr.bf16.gmra.mxu0 %v5093
      %v5383 = vpop.f32.mrf.mxu0
      %v5384 = vadd.f32 0.0, %v5383
      %v5385 = vpop.f32.mrf.mxu0
      %v5386 = vpop.f32.mrf.mxu0
      %v5387 = vadd.f32 0.0, %v5386
      %v5388 = vpop.f32.mrf.mxu0
      %5389 = vmatprep.mubr.bf16.mxu0 %v5097
      %5390 = vmatmul.mubr.bf16.gmra.mxu0 %v5096
      %v5391 = vpop.f32.mrf.mxu0
      %v5392 = vadd.f32 0.0, %v5391
      %v5393 = vpop.f32.mrf.mxu0
      %v5394 = vpop.f32.mrf.mxu0
      %v5395 = vadd.f32 0.0, %v5394
      %v5396 = vpop.f32.mrf.mxu0
      %5397 = vmatprep.mubr.bf16.mxu0 %v5100
      %5398 = vmatmul.mubr.bf16.gmra.mxu0 %v5099
      %v5399 = vpop.f32.mrf.mxu0
      %v5400 = vadd.f32 0.0, %v5399
      %v5401 = vpop.f32.mrf.mxu0
      %v5402 = vpop.f32.mrf.mxu0
      %v5403 = vadd.f32 0.0, %v5402
      %v5404 = vpop.f32.mrf.mxu0
      %5405 = vmatprep.mubr.bf16.mxu0 %v5103
      %5406 = vmatmul.mubr.bf16.gmra.mxu0 %v5102
      %v5407 = vpop.f32.mrf.mxu0
      %v5408 = vadd.f32 0.0, %v5407
      %v5409 = vpop.f32.mrf.mxu0
      %v5410 = vpop.f32.mrf.mxu0
      %v5411 = vadd.f32 0.0, %v5410
      %v5412 = vpop.f32.mrf.mxu0
      %5413 = vmatprep.mubr.bf16.mxu0 %v5106
      %5414 = vmatmul.mubr.bf16.gmra.mxu0 %v5105
      %v5415 = vpop.f32.mrf.mxu0
      %v5416 = vadd.f32 0.0, %v5415
      %v5417 = vpop.f32.mrf.mxu0
      %v5418 = vpop.f32.mrf.mxu0
      %v5419 = vadd.f32 0.0, %v5418
      %v5420 = vpop.f32.mrf.mxu0
      %5421 = vmatprep.mubr.bf16.mxu0 %v5109
      %5422 = vmatmul.mubr.bf16.gmra.mxu0 %v5108
      %v5423 = vpop.f32.mrf.mxu0
      %v5424 = vadd.f32 0.0, %v5423
      %v5425 = vpop.f32.mrf.mxu0
      %v5426 = vpop.f32.mrf.mxu0
      %v5427 = vadd.f32 0.0, %v5426
      %v5428 = vpop.f32.mrf.mxu0
      %5429 = vmatprep.mubr.bf16.mxu0 %v5112
      %5430 = vmatmul.mubr.bf16.gmra.mxu0 %v5111
      %v5431 = vpop.f32.mrf.mxu0
      %v5432 = vadd.f32 0.0, %v5431
      %v5433 = vpop.f32.mrf.mxu0
      %v5434 = vpop.f32.mrf.mxu0
      %v5435 = vadd.f32 0.0, %v5434
      %v5436 = vpop.f32.mrf.mxu0
      %5437 = vmatprep.mubr.bf16.mxu0 %v5115
      %5438 = vmatmul.mubr.bf16.gmra.mxu0 %v5114
      %v5439 = vpop.f32.mrf.mxu0
      %v5440 = vadd.f32 0.0, %v5439
      %v5441 = vpop.f32.mrf.mxu0
      %v5442 = vpop.f32.mrf.mxu0
      %v5443 = vadd.f32 0.0, %v5442
      %v5444 = vpop.f32.mrf.mxu0
      %5445 = vmatprep.mubr.bf16.mxu0 %v5118
      %5446 = vmatmul.mubr.bf16.gmra.mxu0 %v5117
      %v5447 = vpop.f32.mrf.mxu0
      %v5448 = vadd.f32 0.0, %v5447
      %v5449 = vpop.f32.mrf.mxu0
      %v5450 = vpop.f32.mrf.mxu0
      %v5451 = vadd.f32 0.0, %v5450
      %v5452 = vpop.f32.mrf.mxu0
      %5453 = vmatprep.mubr.bf16.mxu0 %v5121
      %5454 = vmatmul.mubr.bf16.gmra.mxu0 %v5120
      %v5455 = vpop.f32.mrf.mxu0
      %v5456 = vadd.f32 0.0, %v5455
      %v5457 = vpop.f32.mrf.mxu0
      %v5458 = vpop.f32.mrf.mxu0
      %v5459 = vadd.f32 0.0, %v5458
      %v5460 = vpop.f32.mrf.mxu0
      %5461 = vmatprep.mubr.bf16.mxu0 %v5124
      %5462 = vmatmul.mubr.bf16.gmra.mxu0 %v5123
      %v5463 = vpop.f32.mrf.mxu0
      %v5464 = vadd.f32 0.0, %v5463
      %v5465 = vpop.f32.mrf.mxu0
      %v5466 = vpop.f32.mrf.mxu0
      %v5467 = vadd.f32 0.0, %v5466
      %v5468 = vpop.f32.mrf.mxu0
      %5469 = vmatprep.mubr.bf16.mxu0 %v5127
      %5470 = vmatmul.mubr.bf16.gmra.mxu0 %v5126
      %v5471 = vpop.f32.mrf.mxu0
      %v5472 = vadd.f32 0.0, %v5471
      %v5473 = vpop.f32.mrf.mxu0
      %v5474 = vpop.f32.mrf.mxu0
      %v5475 = vadd.f32 0.0, %v5474
      %v5476 = vpop.f32.mrf.mxu0
      %5477 = vmatprep.mubr.bf16.mxu0 %v5130
      %5478 = vmatmul.mubr.bf16.gmra.mxu0 %v5129
      %v5479 = vpop.f32.mrf.mxu0
      %v5480 = vadd.f32 0.0, %v5479
      %v5481 = vpop.f32.mrf.mxu0
      %v5482 = vpop.f32.mrf.mxu0
      %v5483 = vadd.f32 0.0, %v5482
      %v5484 = vpop.f32.mrf.mxu0
      %5485 = vdwg.mxu0
      %5486 = vmatprep.subr.bf16.mxu0 0
      %5487 = vmatpush1.bf16.msra.mxu0 %v5300
      %5488 = vmatprep.subr.bf16.mxu0 0
      %5489 = vmatpush1.bf16.msra.mxu0 %v5299
      %5490 = vmatprep.subr.bf16.mxu0 0
      %5491 = vmatpush1.bf16.msra.mxu0 %v5298
      %5492 = vmatprep.subr.bf16.mxu0 0
      %5493 = vmatpush1.bf16.msra.mxu0 %v5297
      %5494 = vmatprep.subr.bf16.mxu0 0
      %5495 = vmatpush1.bf16.msra.mxu0 %v5296
      %5496 = vmatprep.subr.bf16.mxu0 0
      %5497 = vmatpush1.bf16.msra.mxu0 %v5295
      %5498 = vmatprep.subr.bf16.mxu0 0
      %5499 = vmatpush1.bf16.msra.mxu0 %v5294
      %5500 = vmatprep.subr.bf16.mxu0 0
      %5501 = vmatpush1.bf16.msra.mxu0 %v5293
      %5502 = vmatprep.subr.bf16.mxu0 0
      %5503 = vmatpush2.bf16.msra.mxu0 0
      %5504 = vmatprep.subr.bf16.mxu0 0
      %5505 = vmatpush2.bf16.msra.mxu0 0
      %5506 = vmatprep.subr.bf16.mxu0 0
      %5507 = vmatpush2.bf16.msra.mxu0 0
      %5508 = vmatprep.subr.bf16.mxu0 0
      %5509 = vmatpush2.bf16.msra.mxu0 0
      %5510 = vmatprep.subr.bf16.mxu0 0
      %5511 = vmatpush2.bf16.msra.mxu0 0
      %5512 = vmatprep.subr.bf16.mxu0 0
      %5513 = vmatpush2.bf16.msra.mxu0 0
      %5514 = vmatprep.subr.bf16.mxu0 0
      %5515 = vmatpush2.bf16.msra.mxu0 0
      %5516 = vmatprep.subr.bf16.mxu0 0
      %5517 = vmatpush2.bf16.msra.mxu0 0
      %5518 = vmatprep.mubr.bf16.mxu0 0
      %5519 = vmatmul.mubr.bf16.gmra.mxu0 %v5086
      %v5520 = vpop.f32.mrf.mxu0
      %v5521 = vadd.f32 %v5360, %v5520
      %v5522 = vpop.f32.mrf.mxu0
      %v5523 = vpop.f32.mrf.mxu0
      %v5524 = vadd.f32 %v5363, %v5523
      %v5525 = vpop.f32.mrf.mxu0
      %5526 = vmatprep.mubr.bf16.mxu0 0
      %5527 = vmatmul.mubr.bf16.gmra.mxu0 %v5089
      %v5528 = vpop.f32.mrf.mxu0
      %v5529 = vadd.f32 %v5368, %v5528
      %v5530 = vpop.f32.mrf.mxu0
      %v5531 = vpop.f32.mrf.mxu0
      %v5532 = vadd.f32 %v5371, %v5531
      %v5533 = vpop.f32.mrf.mxu0
      %5534 = vmatprep.mubr.bf16.mxu0 0
      %5535 = vmatmul.mubr.bf16.gmra.mxu0 %v5092
      %v5536 = vpop.f32.mrf.mxu0
      %v5537 = vadd.f32 %v5376, %v5536
      %v5538 = vpop.f32.mrf.mxu0
      %v5539 = vpop.f32.mrf.mxu0
      %v5540 = vadd.f32 %v5379, %v5539
      %v5541 = vpop.f32.mrf.mxu0
      %5542 = vmatprep.mubr.bf16.mxu0 0
      %5543 = vmatmul.mubr.bf16.gmra.mxu0 %v5095
      %v5544 = vpop.f32.mrf.mxu0
      %v5545 = vadd.f32 %v5384, %v5544
      %v5546 = vpop.f32.mrf.mxu0
      %v5547 = vpop.f32.mrf.mxu0
      %v5548 = vadd.f32 %v5387, %v5547
      %v5549 = vpop.f32.mrf.mxu0
      %5550 = vmatprep.mubr.bf16.mxu0 0
      %5551 = vmatmul.mubr.bf16.gmra.mxu0 %v5098
      %v5552 = vpop.f32.mrf.mxu0
      %v5553 = vadd.f32 %v5392, %v5552
      %v5554 = vpop.f32.mrf.mxu0
      %v5555 = vpop.f32.mrf.mxu0
      %v5556 = vadd.f32 %v5395, %v5555
      %v5557 = vpop.f32.mrf.mxu0
      %5558 = vmatprep.mubr.bf16.mxu0 0
      %5559 = vmatmul.mubr.bf16.gmra.mxu0 %v5101
      %v5560 = vpop.f32.mrf.mxu0
      %v5561 = vadd.f32 %v5400, %v5560
      %v5562 = vpop.f32.mrf.mxu0
      %v5563 = vpop.f32.mrf.mxu0
      %v5564 = vadd.f32 %v5403, %v5563
      %v5565 = vpop.f32.mrf.mxu0
      %5566 = vmatprep.mubr.bf16.mxu0 0
      %5567 = vmatmul.mubr.bf16.gmra.mxu0 %v5104
      %v5568 = vpop.f32.mrf.mxu0
      %v5569 = vadd.f32 %v5408, %v5568
      %v5570 = vpop.f32.mrf.mxu0
      %v5571 = vpop.f32.mrf.mxu0
      %v5572 = vadd.f32 %v5411, %v5571
      %v5573 = vpop.f32.mrf.mxu0
      %5574 = vmatprep.mubr.bf16.mxu0 0
      %5575 = vmatmul.mubr.bf16.gmra.mxu0 %v5107
      %v5576 = vpop.f32.mrf.mxu0
      %v5577 = vadd.f32 %v5416, %v5576
      %v5578 = vpop.f32.mrf.mxu0
      %v5579 = vpop.f32.mrf.mxu0
      %v5580 = vadd.f32 %v5419, %v5579
      %v5581 = vpop.f32.mrf.mxu0
      %5582 = vmatprep.mubr.bf16.mxu0 0
      %5583 = vmatmul.mubr.bf16.gmra.mxu0 %v5110
      %v5584 = vpop.f32.mrf.mxu0
      %v5585 = vadd.f32 %v5424, %v5584
      %v5586 = vpop.f32.mrf.mxu0
      %v5587 = vpop.f32.mrf.mxu0
      %v5588 = vadd.f32 %v5427, %v5587
      %v5589 = vpop.f32.mrf.mxu0
      %5590 = vmatprep.mubr.bf16.mxu0 0
      %5591 = vmatmul.mubr.bf16.gmra.mxu0 %v5113
      %v5592 = vpop.f32.mrf.mxu0
      %v5593 = vadd.f32 %v5432, %v5592
      %v5594 = vpop.f32.mrf.mxu0
      %v5595 = vpop.f32.mrf.mxu0
      %v5596 = vadd.f32 %v5435, %v5595
      %v5597 = vpop.f32.mrf.mxu0
      %5598 = vmatprep.mubr.bf16.mxu0 0
      %5599 = vmatmul.mubr.bf16.gmra.mxu0 %v5116
      %v5600 = vpop.f32.mrf.mxu0
      %v5601 = vadd.f32 %v5440, %v5600
      %v5602 = vpop.f32.mrf.mxu0
      %v5603 = vpop.f32.mrf.mxu0
      %v5604 = vadd.f32 %v5443, %v5603
      %v5605 = vpop.f32.mrf.mxu0
      %5606 = vmatprep.mubr.bf16.mxu0 0
      %5607 = vmatmul.mubr.bf16.gmra.mxu0 %v5119
      %v5608 = vpop.f32.mrf.mxu0
      %v5609 = vadd.f32 %v5448, %v5608
      %v5610 = vpop.f32.mrf.mxu0
      %v5611 = vpop.f32.mrf.mxu0
      %v5612 = vadd.f32 %v5451, %v5611
      %v5613 = vpop.f32.mrf.mxu0
      %5614 = vmatprep.mubr.bf16.mxu0 0
      %5615 = vmatmul.mubr.bf16.gmra.mxu0 %v5122
      %v5616 = vpop.f32.mrf.mxu0
      %v5617 = vadd.f32 %v5456, %v5616
      %v5618 = vpop.f32.mrf.mxu0
      %v5619 = vpop.f32.mrf.mxu0
      %v5620 = vadd.f32 %v5459, %v5619
      %v5621 = vpop.f32.mrf.mxu0
      %5622 = vmatprep.mubr.bf16.mxu0 0
      %5623 = vmatmul.mubr.bf16.gmra.mxu0 %v5125
      %v5624 = vpop.f32.mrf.mxu0
      %v5625 = vadd.f32 %v5464, %v5624
      %v5626 = vpop.f32.mrf.mxu0
      %v5627 = vpop.f32.mrf.mxu0
      %v5628 = vadd.f32 %v5467, %v5627
      %v5629 = vpop.f32.mrf.mxu0
      %5630 = vmatprep.mubr.bf16.mxu0 0
      %5631 = vmatmul.mubr.bf16.gmra.mxu0 %v5128
      %v5632 = vpop.f32.mrf.mxu0
      %v5633 = vadd.f32 %v5472, %v5632
      %v5634 = vpop.f32.mrf.mxu0
      %v5635 = vpop.f32.mrf.mxu0
      %v5636 = vadd.f32 %v5475, %v5635
      %v5637 = vpop.f32.mrf.mxu0
      %5638 = vmatprep.mubr.bf16.mxu0 0
      %5639 = vmatmul.mubr.bf16.gmra.mxu0 %v5131
      %v5640 = vpop.f32.mrf.mxu0
      %v5641 = vadd.f32 %v5480, %v5640
      %v5642 = vpop.f32.mrf.mxu0
      %v5643 = vpop.f32.mrf.mxu0
      %v5644 = vadd.f32 %v5483, %v5643
      %v5645 = vpop.f32.mrf.mxu0
      %5646 = vdwg.mxu0
      %v5647 = vadd.f32 %v4861, %v5521
      %v5648 = vadd.f32 %v4864, %v5524
      %v5649 = vadd.f32 %v4869, %v5529
      %v5650 = vadd.f32 %v4872, %v5532
      %v5651 = vadd.f32 %v4877, %v5537
      %v5652 = vadd.f32 %v4880, %v5540
      %v5653 = vadd.f32 %v4885, %v5545
      %v5654 = vadd.f32 %v4888, %v5548
      %v5655 = vadd.f32 %v4893, %v5553
      %v5656 = vadd.f32 %v4896, %v5556
      %v5657 = vadd.f32 %v4901, %v5561
      %v5658 = vadd.f32 %v4904, %v5564
      %v5659 = vadd.f32 %v4909, %v5569
      %v5660 = vadd.f32 %v4912, %v5572
      %v5661 = vadd.f32 %v4917, %v5577
      %v5662 = vadd.f32 %v4920, %v5580
      %v5663 = vadd.f32 %v4925, %v5585
      %v5664 = vadd.f32 %v4928, %v5588
      %v5665 = vadd.f32 %v4933, %v5593
      %v5666 = vadd.f32 %v4936, %v5596
      %v5667 = vadd.f32 %v4941, %v5601
      %v5668 = vadd.f32 %v4944, %v5604
      %v5669 = vadd.f32 %v4949, %v5609
      %v5670 = vadd.f32 %v4952, %v5612
      %v5671 = vadd.f32 %v4957, %v5617
      %v5672 = vadd.f32 %v4960, %v5620
      %v5673 = vadd.f32 %v4965, %v5625
      %v5674 = vadd.f32 %v4968, %v5628
      %v5675 = vadd.f32 %v4973, %v5633
      %v5676 = vadd.f32 %v4976, %v5636
      %v5677 = vadd.f32 %v4981, %v5641
      %v5678 = vadd.f32 %v4984, %v5644
      %v5679 = vld [vmem:[%s7] sm:$0x1]
      %v5681 = vlaneseq
      %v5682 = vshrl.u32 %v5681, 7
      %v5683 = vsub.s32 0, %v5682
      %v5684 = vrot.slane %v5679, %v5683
      %v5686 = vadd.f32 %v5647, %v5684
      %v5687 = vadd.f32 %v5648, %v5684
      %v5688 = vadd.f32 %v5649, %v5684
      %v5689 = vadd.f32 %v5650, %v5684
      %v5690 = vadd.f32 %v5651, %v5684
      %v5691 = vadd.f32 %v5652, %v5684
      %v5692 = vadd.f32 %v5653, %v5684
      %v5693 = vadd.f32 %v5654, %v5684
      %v5694 = vadd.f32 %v5655, %v5684
      %v5695 = vadd.f32 %v5656, %v5684
      %v5696 = vadd.f32 %v5657, %v5684
      %v5697 = vadd.f32 %v5658, %v5684
      %v5698 = vadd.f32 %v5659, %v5684
      %v5699 = vadd.f32 %v5660, %v5684
      %v5700 = vadd.f32 %v5661, %v5684
      %v5701 = vadd.f32 %v5662, %v5684
      %v5702 = vadd.f32 %v5663, %v5684
      %v5703 = vadd.f32 %v5664, %v5684
      %v5704 = vadd.f32 %v5665, %v5684
      %v5705 = vadd.f32 %v5666, %v5684
      %v5706 = vadd.f32 %v5667, %v5684
      %v5707 = vadd.f32 %v5668, %v5684
      %v5708 = vadd.f32 %v5669, %v5684
      %v5709 = vadd.f32 %v5670, %v5684
      %v5710 = vadd.f32 %v5671, %v5684
      %v5711 = vadd.f32 %v5672, %v5684
      %v5712 = vadd.f32 %v5673, %v5684
      %v5713 = vadd.f32 %v5674, %v5684
      %v5714 = vadd.f32 %v5675, %v5684
      %v5715 = vadd.f32 %v5676, %v5684
      %v5716 = vadd.f32 %v5677, %v5684
      %v5717 = vadd.f32 %v5678, %v5684
      %v5718 = vld [vmem:[%s8] sm:$0x1]
      %v5719 = vld [vmem:[%s9] sm:$0x1]
      %v5720 = vadd.f32 %v5686, %v5687
      %v5721 = vadd.f32 %v5720, %v5688
      %v5722 = vadd.f32 %v5721, %v5689
      %v5723 = vadd.f32 %v5722, %v5690
      %v5724 = vadd.f32 %v5723, %v5691
      %v5725 = vadd.f32 %v5724, %v5692
      %v5726 = vadd.f32 %v5725, %v5693
      %v5727 = vadd.f32 %v5726, %v5694
      %v5728 = vadd.f32 %v5727, %v5695
      %v5729 = vadd.f32 %v5728, %v5696
      %v5730 = vadd.f32 %v5729, %v5697
      %v5731 = vadd.f32 %v5730, %v5698
      %v5732 = vadd.f32 %v5731, %v5699
      %v5733 = vadd.f32 %v5732, %v5700
      %v5734 = vadd.f32 %v5733, %v5701
      %v5735 = vadd.f32 %v5734, %v5702
      %v5736 = vadd.f32 %v5735, %v5703
      %v5737 = vadd.f32 %v5736, %v5704
      %v5738 = vadd.f32 %v5737, %v5705
      %v5739 = vadd.f32 %v5738, %v5706
      %v5740 = vadd.f32 %v5739, %v5707
      %v5741 = vadd.f32 %v5740, %v5708
      %v5742 = vadd.f32 %v5741, %v5709
      %v5743 = vadd.f32 %v5742, %v5710
      %v5744 = vadd.f32 %v5743, %v5711
      %v5745 = vadd.f32 %v5744, %v5712
      %v5746 = vadd.f32 %v5745, %v5713
      %v5747 = vadd.f32 %v5746, %v5714
      %v5748 = vadd.f32 %v5747, %v5715
      %v5749 = vadd.f32 %v5748, %v5716
      %v5750 = vadd.f32 %v5749, %v5717
      %v5751 = vrot.slane %v5750, 4
      %v5752 = vadd.f32 %v5750, %v5751
      %v5753 = vrot.slane %v5752, 2
      %v5754 = vadd.f32 %v5752, %v5753
      %v5755 = vrot.slane %v5754, 1
      %v5756 = vadd.f32 %v5754, %v5755
      %5757 = vrot.lane.b32.xlu0 %v5756, 127
      %v5758 = vpop.permute.xlu0 %5757
      %5759 = vrot.lane.b32.xlu0 %v5756, 1
      %v5760 = vpop.permute.xlu0 %5759
      %v5761 = vsel %vm3117, %v5758, %v5760
      %v5762 = vadd.f32 %v5756, %v5761
      %v5763 = vmul.f32 %v5762, 0.001953125
      %v5764 = vlaneseq
      %v5765 = vshrl.u32 %v5764, 7
      %v5766 = vsub.s32 0, %v5765
      %v5767 = vrot.slane %v5763, %v5766
      %v5768 = vsub.f32 %v5686, %v5767
      %v5769 = vsub.f32 %v5687, %v5767
      %v5770 = vsub.f32 %v5688, %v5767
      %v5771 = vsub.f32 %v5689, %v5767
      %v5772 = vsub.f32 %v5690, %v5767
      %v5773 = vsub.f32 %v5691, %v5767
      %v5774 = vsub.f32 %v5692, %v5767
      %v5775 = vsub.f32 %v5693, %v5767
      %v5776 = vsub.f32 %v5694, %v5767
      %v5777 = vsub.f32 %v5695, %v5767
      %v5778 = vsub.f32 %v5696, %v5767
      %v5779 = vsub.f32 %v5697, %v5767
      %v5780 = vsub.f32 %v5698, %v5767
      %v5781 = vsub.f32 %v5699, %v5767
      %v5782 = vsub.f32 %v5700, %v5767
      %v5783 = vsub.f32 %v5701, %v5767
      %v5784 = vsub.f32 %v5702, %v5767
      %v5785 = vsub.f32 %v5703, %v5767
      %v5786 = vsub.f32 %v5704, %v5767
      %v5787 = vsub.f32 %v5705, %v5767
      %v5788 = vsub.f32 %v5706, %v5767
      %v5789 = vsub.f32 %v5707, %v5767
      %v5790 = vsub.f32 %v5708, %v5767
      %v5791 = vsub.f32 %v5709, %v5767
      %v5792 = vsub.f32 %v5710, %v5767
      %v5793 = vsub.f32 %v5711, %v5767
      %v5794 = vsub.f32 %v5712, %v5767
      %v5795 = vsub.f32 %v5713, %v5767
      %v5796 = vsub.f32 %v5714, %v5767
      %v5797 = vsub.f32 %v5715, %v5767
      %v5798 = vsub.f32 %v5716, %v5767
      %v5799 = vsub.f32 %v5717, %v5767
      %v5800 = vmul.f32 %v5768, %v5768
      %v5801 = vmul.f32 %v5769, %v5769
      %v5802 = vmul.f32 %v5770, %v5770
      %v5803 = vmul.f32 %v5771, %v5771
      %v5804 = vmul.f32 %v5772, %v5772
      %v5805 = vmul.f32 %v5773, %v5773
      %v5806 = vmul.f32 %v5774, %v5774
      %v5807 = vmul.f32 %v5775, %v5775
      %v5808 = vmul.f32 %v5776, %v5776
      %v5809 = vmul.f32 %v5777, %v5777
      %v5810 = vmul.f32 %v5778, %v5778
      %v5811 = vmul.f32 %v5779, %v5779
      %v5812 = vmul.f32 %v5780, %v5780
      %v5813 = vmul.f32 %v5781, %v5781
      %v5814 = vmul.f32 %v5782, %v5782
      %v5815 = vmul.f32 %v5783, %v5783
      %v5816 = vmul.f32 %v5784, %v5784
      %v5817 = vmul.f32 %v5785, %v5785
      %v5818 = vmul.f32 %v5786, %v5786
      %v5819 = vmul.f32 %v5787, %v5787
      %v5820 = vmul.f32 %v5788, %v5788
      %v5821 = vmul.f32 %v5789, %v5789
      %v5822 = vmul.f32 %v5790, %v5790
      %v5823 = vmul.f32 %v5791, %v5791
      %v5824 = vmul.f32 %v5792, %v5792
      %v5825 = vmul.f32 %v5793, %v5793
      %v5826 = vmul.f32 %v5794, %v5794
      %v5827 = vmul.f32 %v5795, %v5795
      %v5828 = vmul.f32 %v5796, %v5796
      %v5829 = vmul.f32 %v5797, %v5797
      %v5830 = vmul.f32 %v5798, %v5798
      %v5831 = vmul.f32 %v5799, %v5799
      %v5832 = vadd.f32 %v5800, %v5801
      %v5833 = vadd.f32 %v5832, %v5802
      %v5834 = vadd.f32 %v5833, %v5803
      %v5835 = vadd.f32 %v5834, %v5804
      %v5836 = vadd.f32 %v5835, %v5805
      %v5837 = vadd.f32 %v5836, %v5806
      %v5838 = vadd.f32 %v5837, %v5807
      %v5839 = vadd.f32 %v5838, %v5808
      %v5840 = vadd.f32 %v5839, %v5809
      %v5841 = vadd.f32 %v5840, %v5810
      %v5842 = vadd.f32 %v5841, %v5811
      %v5843 = vadd.f32 %v5842, %v5812
      %v5844 = vadd.f32 %v5843, %v5813
      %v5845 = vadd.f32 %v5844, %v5814
      %v5846 = vadd.f32 %v5845, %v5815
      %v5847 = vadd.f32 %v5846, %v5816
      %v5848 = vadd.f32 %v5847, %v5817
      %v5849 = vadd.f32 %v5848, %v5818
      %v5850 = vadd.f32 %v5849, %v5819
      %v5851 = vadd.f32 %v5850, %v5820
      %v5852 = vadd.f32 %v5851, %v5821
      %v5853 = vadd.f32 %v5852, %v5822
      %v5854 = vadd.f32 %v5853, %v5823
      %v5855 = vadd.f32 %v5854, %v5824
      %v5856 = vadd.f32 %v5855, %v5825
      %v5857 = vadd.f32 %v5856, %v5826
      %v5858 = vadd.f32 %v5857, %v5827
      %v5859 = vadd.f32 %v5858, %v5828
      %v5860 = vadd.f32 %v5859, %v5829
      %v5861 = vadd.f32 %v5860, %v5830
      %v5862 = vadd.f32 %v5861, %v5831
      %v5863 = vrot.slane %v5862, 4
      %v5864 = vadd.f32 %v5862, %v5863
      %v5865 = vrot.slane %v5864, 2
      %v5866 = vadd.f32 %v5864, %v5865
      %v5867 = vrot.slane %v5866, 1
      %v5868 = vadd.f32 %v5866, %v5867
      %5869 = vrot.lane.b32.xlu0 %v5868, 127
      %v5870 = vpop.permute.xlu0 %5869
      %5871 = vrot.lane.b32.xlu0 %v5868, 1
      %v5872 = vpop.permute.xlu0 %5871
      %v5873 = vsel %vm3117, %v5870, %v5872
      %v5874 = vadd.f32 %v5868, %v5873
      %v5875 = vmul.f32 %v5874, 0.001953125
      %v5876 = vadd.f32 %v5875, 1e-05
      %v5877 = vrsqrt.pop %v5876
      %v5878 = vmul.f32 %v5718, %v5877
      %v5880 = vlaneseq
      %v5881 = vshrl.u32 %v5880, 7
      %v5882 = vsub.s32 0, %v5881
      %v5883 = vrot.slane %v5878, %v5882
      %v5885 = vmul.f32 %v5768, %v5883
      %v5886 = vmul.f32 %v5769, %v5883
      %v5887 = vmul.f32 %v5770, %v5883
      %v5888 = vmul.f32 %v5771, %v5883
      %v5889 = vmul.f32 %v5772, %v5883
      %v5890 = vmul.f32 %v5773, %v5883
      %v5891 = vmul.f32 %v5774, %v5883
      %v5892 = vmul.f32 %v5775, %v5883
      %v5893 = vmul.f32 %v5776, %v5883
      %v5894 = vmul.f32 %v5777, %v5883
      %v5895 = vmul.f32 %v5778, %v5883
      %v5896 = vmul.f32 %v5779, %v5883
      %v5897 = vmul.f32 %v5780, %v5883
      %v5898 = vmul.f32 %v5781, %v5883
      %v5899 = vmul.f32 %v5782, %v5883
      %v5900 = vmul.f32 %v5783, %v5883
      %v5901 = vmul.f32 %v5784, %v5883
      %v5902 = vmul.f32 %v5785, %v5883
      %v5903 = vmul.f32 %v5786, %v5883
      %v5904 = vmul.f32 %v5787, %v5883
      %v5905 = vmul.f32 %v5788, %v5883
      %v5906 = vmul.f32 %v5789, %v5883
      %v5907 = vmul.f32 %v5790, %v5883
      %v5908 = vmul.f32 %v5791, %v5883
      %v5909 = vmul.f32 %v5792, %v5883
      %v5910 = vmul.f32 %v5793, %v5883
      %v5911 = vmul.f32 %v5794, %v5883
      %v5912 = vmul.f32 %v5795, %v5883
      %v5913 = vmul.f32 %v5796, %v5883
      %v5914 = vmul.f32 %v5797, %v5883
      %v5915 = vmul.f32 %v5798, %v5883
      %v5916 = vmul.f32 %v5799, %v5883
      %v5918 = vlaneseq
      %v5919 = vshrl.u32 %v5918, 7
      %v5920 = vsub.s32 0, %v5919
      %v5921 = vrot.slane %v5719, %v5920
      %v5923 = vadd.f32 %v5885, %v5921
      %v5924 = vadd.f32 %v5886, %v5921
      %v5925 = vadd.f32 %v5887, %v5921
      %v5926 = vadd.f32 %v5888, %v5921
      %v5927 = vadd.f32 %v5889, %v5921
      %v5928 = vadd.f32 %v5890, %v5921
      %v5929 = vadd.f32 %v5891, %v5921
      %v5930 = vadd.f32 %v5892, %v5921
      %v5931 = vadd.f32 %v5893, %v5921
      %v5932 = vadd.f32 %v5894, %v5921
      %v5933 = vadd.f32 %v5895, %v5921
      %v5934 = vadd.f32 %v5896, %v5921
      %v5935 = vadd.f32 %v5897, %v5921
      %v5936 = vadd.f32 %v5898, %v5921
      %v5937 = vadd.f32 %v5899, %v5921
      %v5938 = vadd.f32 %v5900, %v5921
      %v5939 = vadd.f32 %v5901, %v5921
      %v5940 = vadd.f32 %v5902, %v5921
      %v5941 = vadd.f32 %v5903, %v5921
      %v5942 = vadd.f32 %v5904, %v5921
      %v5943 = vadd.f32 %v5905, %v5921
      %v5944 = vadd.f32 %v5906, %v5921
      %v5945 = vadd.f32 %v5907, %v5921
      %v5946 = vadd.f32 %v5908, %v5921
      %v5947 = vadd.f32 %v5909, %v5921
      %v5948 = vadd.f32 %v5910, %v5921
      %v5949 = vadd.f32 %v5911, %v5921
      %v5950 = vadd.f32 %v5912, %v5921
      %v5951 = vadd.f32 %v5913, %v5921
      %v5952 = vadd.f32 %v5914, %v5921
      %v5953 = vadd.f32 %v5915, %v5921
      %v5954 = vadd.f32 %v5916, %v5921
      %v5955 = vld [vmem:[%s698 + $0x8] sm:$0xff]
      %v5956 = vld [vmem:[%s698 + $0x20] sm:$0xff]
      %v5957 = vld [vmem:[%s698 + $0x38] sm:$0xff]
      %v5958 = vld [vmem:[%s698 + $0x50] sm:$0xff]
      %v5959 = vld [vmem:[%s698 + $0x68] sm:$0xff]
      %v5960 = vld [vmem:[%s698 + $0x80] sm:$0xff]
      %v5961 = vld [vmem:[%s698 + $0x98] sm:$0xff]
      %v5962 = vld [vmem:[%s698 + $0xb0] sm:$0xff]
      %v5963 = vld [vmem:[%s698 + $0xc8] sm:$0xff]
      %v5964 = vld [vmem:[%s698 + $0xe0] sm:$0xff]
      %v5965 = vld [vmem:[%s698 + $0xf8] sm:$0xff]
      %v5966 = vld [vmem:[%s698 + $0x110] sm:$0xff]
      %v5967 = vld [vmem:[%s698 + $0x128] sm:$0xff]
      %v5968 = vld [vmem:[%s698 + $0x140] sm:$0xff]
      %v5969 = vld [vmem:[%s698 + $0x158] sm:$0xff]
      %v5970 = vld [vmem:[%s698 + $0x170] sm:$0xff]
      %v5971 = vld [vmem:[%s698 + $0x188] sm:$0xff]
      %v5972 = vld [vmem:[%s698 + $0x1a0] sm:$0xff]
      %v5973 = vld [vmem:[%s698 + $0x1b8] sm:$0xff]
      %v5974 = vld [vmem:[%s698 + $0x1d0] sm:$0xff]
      %v5975 = vld [vmem:[%s698 + $0x1e8] sm:$0xff]
      %v5976 = vld [vmem:[%s698 + $0x200] sm:$0xff]
      %v5977 = vld [vmem:[%s698 + $0x218] sm:$0xff]
      %v5978 = vld [vmem:[%s698 + $0x230] sm:$0xff]
      %v5979 = vld [vmem:[%s698 + $0x248] sm:$0xff]
      %v5980 = vld [vmem:[%s698 + $0x260] sm:$0xff]
      %v5981 = vld [vmem:[%s698 + $0x278] sm:$0xff]
      %v5982 = vld [vmem:[%s698 + $0x290] sm:$0xff]
      %v5983 = vld [vmem:[%s698 + $0x2a8] sm:$0xff]
      %v5984 = vld [vmem:[%s698 + $0x2c0] sm:$0xff]
      %v5985 = vld [vmem:[%s698 + $0x2d8] sm:$0xff]
      %v5986 = vld [vmem:[%s698 + $0x2f0] sm:$0xff]
      %v5987 = vpack.c.bf16 %v5956, %v5955
      %v5988 = vpack.c.bf16 %v5958, %v5957
      %v5989 = vpack.c.bf16 %v5960, %v5959
      %v5990 = vpack.c.bf16 %v5962, %v5961
      %v5991 = vpack.c.bf16 %v5964, %v5963
      %v5992 = vpack.c.bf16 %v5966, %v5965
      %v5993 = vpack.c.bf16 %v5968, %v5967
      %v5994 = vpack.c.bf16 %v5970, %v5969
      %v5995 = vpack.c.bf16 %v5972, %v5971
      %v5996 = vpack.c.bf16 %v5974, %v5973
      %v5997 = vpack.c.bf16 %v5976, %v5975
      %v5998 = vpack.c.bf16 %v5978, %v5977
      %v5999 = vpack.c.bf16 %v5980, %v5979
      %v6000 = vpack.c.bf16 %v5982, %v5981
      %v6001 = vpack.c.bf16 %v5984, %v5983
      %v6002 = vpack.c.bf16 %v5986, %v5985
      %v6003 = vld [vmem:[%s10] sm:$0xf]
      %v6004 = vld [vmem:[%s10 + $0x4] sm:$0xf]
      %v6005 = vld [vmem:[%s10 + $0x8] sm:$0xf]
      %v6006 = vld [vmem:[%s10 + $0xc] sm:$0xf]
      %v6007 = vld [vmem:[%s10 + $0x10] sm:$0xf]
      %v6008 = vld [vmem:[%s10 + $0x14] sm:$0xf]
      %v6009 = vld [vmem:[%s10 + $0x18] sm:$0xf]
      %v6010 = vld [vmem:[%s10 + $0x1c] sm:$0xf]
      %v6011 = vld [vmem:[%s10 + $0x20] sm:$0xf]
      %v6012 = vld [vmem:[%s10 + $0x24] sm:$0xf]
      %v6013 = vld [vmem:[%s10 + $0x28] sm:$0xf]
      %v6014 = vld [vmem:[%s10 + $0x2c] sm:$0xf]
      %v6015 = vld [vmem:[%s10 + $0x30] sm:$0xf]
      %v6016 = vld [vmem:[%s10 + $0x34] sm:$0xf]
      %v6017 = vld [vmem:[%s10 + $0x38] sm:$0xf]
      %v6018 = vld [vmem:[%s10 + $0x3c] sm:$0xf]
      %v6019 = vld [vmem:[%s11] sm:$0x1]
      %v6021 = vlaneseq
      %v6022 = vshrl.u32 %v6021, 7
      %v6023 = vsub.s32 0, %v6022
      %v6024 = vrot.slane %v6019, %v6023
      %v6042 = vunpack.c.l.b16 %v6003
      %v6043 = vunpack.c.l.b16 %v6004
      %v6044 = vunpack.c.l.b16 %v6005
      %v6045 = vunpack.c.l.b16 %v6006
      %v6046 = vunpack.c.l.b16 %v6007
      %v6047 = vunpack.c.l.b16 %v6008
      %v6048 = vunpack.c.l.b16 %v6009
      %v6049 = vunpack.c.l.b16 %v6010
      %v6050 = vunpack.c.l.b16 %v6011
      %v6051 = vunpack.c.l.b16 %v6012
      %v6052 = vunpack.c.l.b16 %v6013
      %v6053 = vunpack.c.l.b16 %v6014
      %v6054 = vunpack.c.l.b16 %v6015
      %v6055 = vunpack.c.l.b16 %v6016
      %v6056 = vunpack.c.l.b16 %v6017
      %v6057 = vunpack.c.l.b16 %v6018
      %v6058 = vpack.c.b16 %v6043, %v6042
      %v6059 = vpack.c.b16 %v6045, %v6044
      %v6060 = vpack.c.b16 %v6047, %v6046
      %v6061 = vpack.c.b16 %v6049, %v6048
      %v6062 = vpack.c.b16 %v6051, %v6050
      %v6063 = vpack.c.b16 %v6053, %v6052
      %v6064 = vpack.c.b16 %v6055, %v6054
      %v6065 = vpack.c.b16 %v6057, %v6056
      %6074 = vmatprep.subr.bf16.mxu0 0
      %6075 = vmatpush1.bf16.msra.mxu0 %v6065
      %6076 = vmatprep.subr.bf16.mxu0 0
      %6077 = vmatpush1.bf16.msra.mxu0 %v6064
      %6078 = vmatprep.subr.bf16.mxu0 0
      %6079 = vmatpush1.bf16.msra.mxu0 %v6063
      %6080 = vmatprep.subr.bf16.mxu0 0
      %6081 = vmatpush1.bf16.msra.mxu0 %v6062
      %6082 = vmatprep.subr.bf16.mxu0 0
      %6083 = vmatpush1.bf16.msra.mxu0 %v6061
      %6084 = vmatprep.subr.bf16.mxu0 0
      %6085 = vmatpush1.bf16.msra.mxu0 %v6060
      %6086 = vmatprep.subr.bf16.mxu0 0
      %6087 = vmatpush1.bf16.msra.mxu0 %v6059
      %6088 = vmatprep.subr.bf16.mxu0 0
      %6089 = vmatpush1.bf16.msra.mxu0 %v6058
      %6090 = vmatprep.subr.bf16.mxu0 0
      %6091 = vmatpush2.bf16.msra.mxu0 0
      %6092 = vmatprep.subr.bf16.mxu0 0
      %6093 = vmatpush2.bf16.msra.mxu0 0
      %6094 = vmatprep.subr.bf16.mxu0 0
      %6095 = vmatpush2.bf16.msra.mxu0 0
      %6096 = vmatprep.subr.bf16.mxu0 0
      %6097 = vmatpush2.bf16.msra.mxu0 0
      %6098 = vmatprep.subr.bf16.mxu0 0
      %6099 = vmatpush2.bf16.msra.mxu0 0
      %6100 = vmatprep.subr.bf16.mxu0 0
      %6101 = vmatpush2.bf16.msra.mxu0 0
      %6102 = vmatprep.subr.bf16.mxu0 0
      %6103 = vmatpush2.bf16.msra.mxu0 0
      %6104 = vmatprep.subr.bf16.mxu0 0
      %6105 = vmatpush2.bf16.msra.mxu0 0
      %6106 = vmatprep.mubr.bf16.mxu0 0
      %6107 = vmatmul.mubr.bf16.gmra.mxu0 %v5987
      %v6108 = vpop.f32.mrf.mxu0
      %v6109 = vadd.f32 %v6024, %v6108
      %v6110 = vpop.f32.mrf.mxu0
      %v6111 = vpop.f32.mrf.mxu0
      %v6112 = vadd.f32 %v6024, %v6111
      %v6113 = vpop.f32.mrf.mxu0
      %6114 = vmatprep.mubr.bf16.mxu0 0
      %6115 = vmatmul.mubr.bf16.gmra.mxu0 %v5988
      %v6116 = vpop.f32.mrf.mxu0
      %v6117 = vadd.f32 %v6024, %v6116
      %v6118 = vpop.f32.mrf.mxu0
      %v6119 = vpop.f32.mrf.mxu0
      %v6120 = vadd.f32 %v6024, %v6119
      %v6121 = vpop.f32.mrf.mxu0
      %6122 = vmatprep.mubr.bf16.mxu0 0
      %6123 = vmatmul.mubr.bf16.gmra.mxu0 %v5989
      %v6124 = vpop.f32.mrf.mxu0
      %v6125 = vadd.f32 %v6024, %v6124
      %v6126 = vpop.f32.mrf.mxu0
      %v6127 = vpop.f32.mrf.mxu0
      %v6128 = vadd.f32 %v6024, %v6127
      %v6129 = vpop.f32.mrf.mxu0
      %6130 = vmatprep.mubr.bf16.mxu0 0
      %6131 = vmatmul.mubr.bf16.gmra.mxu0 %v5990
      %v6132 = vpop.f32.mrf.mxu0
      %v6133 = vadd.f32 %v6024, %v6132
      %v6134 = vpop.f32.mrf.mxu0
      %v6135 = vpop.f32.mrf.mxu0
      %v6136 = vadd.f32 %v6024, %v6135
      %v6137 = vpop.f32.mrf.mxu0
      %6138 = vmatprep.mubr.bf16.mxu0 0
      %6139 = vmatmul.mubr.bf16.gmra.mxu0 %v5991
      %v6140 = vpop.f32.mrf.mxu0
      %v6141 = vadd.f32 %v6024, %v6140
      %v6142 = vpop.f32.mrf.mxu0
      %v6143 = vpop.f32.mrf.mxu0
      %v6144 = vadd.f32 %v6024, %v6143
      %v6145 = vpop.f32.mrf.mxu0
      %6146 = vmatprep.mubr.bf16.mxu0 0
      %6147 = vmatmul.mubr.bf16.gmra.mxu0 %v5992
      %v6148 = vpop.f32.mrf.mxu0
      %v6149 = vadd.f32 %v6024, %v6148
      %v6150 = vpop.f32.mrf.mxu0
      %v6151 = vpop.f32.mrf.mxu0
      %v6152 = vadd.f32 %v6024, %v6151
      %v6153 = vpop.f32.mrf.mxu0
      %6154 = vmatprep.mubr.bf16.mxu0 0
      %6155 = vmatmul.mubr.bf16.gmra.mxu0 %v5993
      %v6156 = vpop.f32.mrf.mxu0
      %v6157 = vadd.f32 %v6024, %v6156
      %v6158 = vpop.f32.mrf.mxu0
      %v6159 = vpop.f32.mrf.mxu0
      %v6160 = vadd.f32 %v6024, %v6159
      %v6161 = vpop.f32.mrf.mxu0
      %6162 = vmatprep.mubr.bf16.mxu0 0
      %6163 = vmatmul.mubr.bf16.gmra.mxu0 %v5994
      %v6164 = vpop.f32.mrf.mxu0
      %v6165 = vadd.f32 %v6024, %v6164
      %v6166 = vpop.f32.mrf.mxu0
      %v6167 = vpop.f32.mrf.mxu0
      %v6168 = vadd.f32 %v6024, %v6167
      %v6169 = vpop.f32.mrf.mxu0
      %6170 = vmatprep.mubr.bf16.mxu0 0
      %6171 = vmatmul.mubr.bf16.gmra.mxu0 %v5995
      %v6172 = vpop.f32.mrf.mxu0
      %v6173 = vadd.f32 %v6024, %v6172
      %v6174 = vpop.f32.mrf.mxu0
      %v6175 = vpop.f32.mrf.mxu0
      %v6176 = vadd.f32 %v6024, %v6175
      %v6177 = vpop.f32.mrf.mxu0
      %6178 = vmatprep.mubr.bf16.mxu0 0
      %6179 = vmatmul.mubr.bf16.gmra.mxu0 %v5996
      %v6180 = vpop.f32.mrf.mxu0
      %v6181 = vadd.f32 %v6024, %v6180
      %v6182 = vpop.f32.mrf.mxu0
      %v6183 = vpop.f32.mrf.mxu0
      %v6184 = vadd.f32 %v6024, %v6183
      %v6185 = vpop.f32.mrf.mxu0
      %6186 = vmatprep.mubr.bf16.mxu0 0
      %6187 = vmatmul.mubr.bf16.gmra.mxu0 %v5997
      %v6188 = vpop.f32.mrf.mxu0
      %v6189 = vadd.f32 %v6024, %v6188
      %v6190 = vpop.f32.mrf.mxu0
      %v6191 = vpop.f32.mrf.mxu0
      %v6192 = vadd.f32 %v6024, %v6191
      %v6193 = vpop.f32.mrf.mxu0
      %6194 = vmatprep.mubr.bf16.mxu0 0
      %6195 = vmatmul.mubr.bf16.gmra.mxu0 %v5998
      %v6196 = vpop.f32.mrf.mxu0
      %v6197 = vadd.f32 %v6024, %v6196
      %v6198 = vpop.f32.mrf.mxu0
      %v6199 = vpop.f32.mrf.mxu0
      %v6200 = vadd.f32 %v6024, %v6199
      %v6201 = vpop.f32.mrf.mxu0
      %6202 = vmatprep.mubr.bf16.mxu0 0
      %6203 = vmatmul.mubr.bf16.gmra.mxu0 %v5999
      %v6204 = vpop.f32.mrf.mxu0
      %v6205 = vadd.f32 %v6024, %v6204
      %v6206 = vpop.f32.mrf.mxu0
      %v6207 = vpop.f32.mrf.mxu0
      %v6208 = vadd.f32 %v6024, %v6207
      %v6209 = vpop.f32.mrf.mxu0
      %6210 = vmatprep.mubr.bf16.mxu0 0
      %6211 = vmatmul.mubr.bf16.gmra.mxu0 %v6000
      %v6212 = vpop.f32.mrf.mxu0
      %v6213 = vadd.f32 %v6024, %v6212
      %v6214 = vpop.f32.mrf.mxu0
      %v6215 = vpop.f32.mrf.mxu0
      %v6216 = vadd.f32 %v6024, %v6215
      %v6217 = vpop.f32.mrf.mxu0
      %6218 = vmatprep.mubr.bf16.mxu0 0
      %6219 = vmatmul.mubr.bf16.gmra.mxu0 %v6001
      %v6220 = vpop.f32.mrf.mxu0
      %v6221 = vadd.f32 %v6024, %v6220
      %v6222 = vpop.f32.mrf.mxu0
      %v6223 = vpop.f32.mrf.mxu0
      %v6224 = vadd.f32 %v6024, %v6223
      %v6225 = vpop.f32.mrf.mxu0
      %6226 = vmatprep.mubr.bf16.mxu0 0
      %6227 = vmatmul.mubr.bf16.gmra.mxu0 %v6002
      %v6228 = vpop.f32.mrf.mxu0
      %v6229 = vadd.f32 %v6024, %v6228
      %v6230 = vpop.f32.mrf.mxu0
      %v6231 = vpop.f32.mrf.mxu0
      %v6232 = vadd.f32 %v6024, %v6231
      %v6233 = vpop.f32.mrf.mxu0
      %6234 = vdwg.mxu0
      %v6235 = vadd.f32 %v5923, %v6109
      %v6236 = vadd.f32 %v5924, %v6112
      %v6237 = vadd.f32 %v5925, %v6117
      %v6238 = vadd.f32 %v5926, %v6120
      %v6239 = vadd.f32 %v5927, %v6125
      %v6240 = vadd.f32 %v5928, %v6128
      %v6241 = vadd.f32 %v5929, %v6133
      %v6242 = vadd.f32 %v5930, %v6136
      %v6243 = vadd.f32 %v5931, %v6141
      %v6244 = vadd.f32 %v5932, %v6144
      %v6245 = vadd.f32 %v5933, %v6149
      %v6246 = vadd.f32 %v5934, %v6152
      %v6247 = vadd.f32 %v5935, %v6157
      %v6248 = vadd.f32 %v5936, %v6160
      %v6249 = vadd.f32 %v5937, %v6165
      %v6250 = vadd.f32 %v5938, %v6168
      %v6251 = vadd.f32 %v5939, %v6173
      %v6252 = vadd.f32 %v5940, %v6176
      %v6253 = vadd.f32 %v5941, %v6181
      %v6254 = vadd.f32 %v5942, %v6184
      %v6255 = vadd.f32 %v5943, %v6189
      %v6256 = vadd.f32 %v5944, %v6192
      %v6257 = vadd.f32 %v5945, %v6197
      %v6258 = vadd.f32 %v5946, %v6200
      %v6259 = vadd.f32 %v5947, %v6205
      %v6260 = vadd.f32 %v5948, %v6208
      %v6261 = vadd.f32 %v5949, %v6213
      %v6262 = vadd.f32 %v5950, %v6216
      %v6263 = vadd.f32 %v5951, %v6221
      %v6264 = vadd.f32 %v5952, %v6224
      %v6265 = vadd.f32 %v5953, %v6229
      %v6266 = vadd.f32 %v5954, %v6232
      %v6267 = vmax.f32 %v6235, 0.0
      %v6268 = vmax.f32 %v6236, 0.0
      %v6269 = vmax.f32 %v6237, 0.0
      %v6270 = vmax.f32 %v6238, 0.0
      %v6271 = vmax.f32 %v6239, 0.0
      %v6272 = vmax.f32 %v6240, 0.0
      %v6273 = vmax.f32 %v6241, 0.0
      %v6274 = vmax.f32 %v6242, 0.0
      %v6275 = vmax.f32 %v6243, 0.0
      %v6276 = vmax.f32 %v6244, 0.0
      %v6277 = vmax.f32 %v6245, 0.0
      %v6278 = vmax.f32 %v6246, 0.0
      %v6279 = vmax.f32 %v6247, 0.0
      %v6280 = vmax.f32 %v6248, 0.0
      %v6281 = vmax.f32 %v6249, 0.0
      %v6282 = vmax.f32 %v6250, 0.0
      %v6283 = vmax.f32 %v6251, 0.0
      %v6284 = vmax.f32 %v6252, 0.0
      %v6285 = vmax.f32 %v6253, 0.0
      %v6286 = vmax.f32 %v6254, 0.0
      %v6287 = vmax.f32 %v6255, 0.0
      %v6288 = vmax.f32 %v6256, 0.0
      %v6289 = vmax.f32 %v6257, 0.0
      %v6290 = vmax.f32 %v6258, 0.0
      %v6291 = vmax.f32 %v6259, 0.0
      %v6292 = vmax.f32 %v6260, 0.0
      %v6293 = vmax.f32 %v6261, 0.0
      %v6294 = vmax.f32 %v6262, 0.0
      %v6295 = vmax.f32 %v6263, 0.0
      %v6296 = vmax.f32 %v6264, 0.0
      %v6297 = vmax.f32 %v6265, 0.0
      %v6298 = vmax.f32 %v6266, 0.0
      %6299 = vst [vmem:[%s433] sm:$0xff] %v6267
      %6300 = vst [vmem:[%s433 + $0x8] sm:$0xff] %v6268
      %6301 = vst [vmem:[%s433 + $0x10] sm:$0xff] %v6269
      %6302 = vst [vmem:[%s433 + $0x18] sm:$0xff] %v6270
      %6303 = vst [vmem:[%s433 + $0x20] sm:$0xff] %v6271
      %6304 = vst [vmem:[%s433 + $0x28] sm:$0xff] %v6272
      %6305 = vst [vmem:[%s433 + $0x30] sm:$0xff] %v6273
      %6306 = vst [vmem:[%s433 + $0x38] sm:$0xff] %v6274
      %6307 = vst [vmem:[%s433 + $0x40] sm:$0xff] %v6275
      %6308 = vst [vmem:[%s433 + $0x48] sm:$0xff] %v6276
      %6309 = vst [vmem:[%s433 + $0x50] sm:$0xff] %v6277
      %6310 = vst [vmem:[%s433 + $0x58] sm:$0xff] %v6278
      %6311 = vst [vmem:[%s433 + $0x60] sm:$0xff] %v6279
      %6312 = vst [vmem:[%s433 + $0x68] sm:$0xff] %v6280
      %6313 = vst [vmem:[%s433 + $0x70] sm:$0xff] %v6281
      %6314 = vst [vmem:[%s433 + $0x78] sm:$0xff] %v6282
      %6315 = vst [vmem:[%s433 + $0x80] sm:$0xff] %v6283
      %6316 = vst [vmem:[%s433 + $0x88] sm:$0xff] %v6284
      %6317 = vst [vmem:[%s433 + $0x90] sm:$0xff] %v6285
      %6318 = vst [vmem:[%s433 + $0x98] sm:$0xff] %v6286
      %6319 = vst [vmem:[%s433 + $0xa0] sm:$0xff] %v6287
      %6320 = vst [vmem:[%s433 + $0xa8] sm:$0xff] %v6288
      %6321 = vst [vmem:[%s433 + $0xb0] sm:$0xff] %v6289
      %6322 = vst [vmem:[%s433 + $0xb8] sm:$0xff] %v6290
      %6323 = vst [vmem:[%s433 + $0xc0] sm:$0xff] %v6291
      %6324 = vst [vmem:[%s433 + $0xc8] sm:$0xff] %v6292
      %6325 = vst [vmem:[%s433 + $0xd0] sm:$0xff] %v6293
      %6326 = vst [vmem:[%s433 + $0xd8] sm:$0xff] %v6294
      %6327 = vst [vmem:[%s433 + $0xe0] sm:$0xff] %v6295
      %6328 = vst [vmem:[%s433 + $0xe8] sm:$0xff] %v6296
      %6329 = vst [vmem:[%s433 + $0xf0] sm:$0xff] %v6297
      %6330 = vst [vmem:[%s433 + $0xf8] sm:$0xff] %v6298
      %p6331 = scmp.lt.s32.totalorder %s23, 1
      %s6332 = scalar_select %p6331, %s23, 1
      %s6333 = smul.addr %s6332, 32
      %s6334 = smul.addr %s6333, 8
      %s6335 = scalar_lea.vmem %s12, %s6334
      // Predicated region
      $region69: #{_lambda_.1} parent=67 // pred_check
        %p6336 = pneg %p303
      $region70: #{_lambda_.1} parent=67 // pred_check_branch
        %6338 = sbr.rel (%p6336) target = $region72
      $region71: #{_lambda_.1} parent=67 // pred_region
        _
      $region72: #{_lambda_.1} parent=67 // pred_fallthru
        _
    $region68: #{_lambda_.1} parent=5 // pred_fallthru
      _
    %p6339 = scmp.le.s32.totalorder 2, %s18
    // Predicated region
    $region73: #{_lambda_.1} parent=5 // pred_check
      %p6340 = pneg %p6339
    $region74: #{_lambda_.1} parent=5 // pred_check_branch
      %6342 = sbr.rel (%p6340) target = $region76
    $region75: #{_lambda_.1} parent=5 // pred_region
      %s6343 = ssub.s32 %s18, 2
      // Predicated region
      $region77: #{_lambda_.1} parent=75 // pred_check
        %p6344 = pneg %p309
      $region78: #{_lambda_.1} parent=75 // pred_check_branch
        %6346 = sbr.rel (%p6344) target = $region80
      $region79: #{_lambda_.1} parent=75 // pred_region
        %p6347 = scmp.lt.s32.totalorder %s24, 1
        %s6348 = scalar_select %p6347, %s24, 1
        %s6349 = smul.addr %s6348, 32
        %s6350 = smul.addr %s6349, 8
        %s6351 = scalar_lea.vmem %s12, %s6350
      $region80: #{_lambda_.1} parent=75 // pred_fallthru
        _
    $region76: #{_lambda_.1} parent=5 // pred_fallthru
      _
  $region6: #{_lambda_.1} parent=0 // loop_footer
    %s22 = sadd.s32 1, %s18
  $region7: #{_lambda_.1} parent=0 // loop_footer_branch
    %17 = sbr.rel target = $region3
  $region8: #{_lambda_.1} parent=0 // loop_exit
    _

</llo_original>
